<compile_context>
chip_gen: v6e
topology: v6e:2x2x1
jax: 0.10.0
libtpu: 0.0.40
codegen_flags: <defaults>
</compile_context>

<pallas_src>
import functools
import math

import jax
import jax.numpy as jnp
from jax import lax
from jax.experimental import pallas as pl
from jax.experimental.pallas import tpu as pltpu


def _round_up(x, m):
    return (x + m - 1) // m * m


# ----------------------------------------------------------------------------
# Kernel 1: fused conv3x3 (+bias, ReLU) + 2x2 maxpool with in-kernel im2col.
#
# Inputs per grid step (n, ho):
#   a0_ref / a1_ref : ((H+2)*Cp, WL) bf16 — even / odd input-column parity
#                     planes of the zero-padded input, rows = h*Cp + c.
#   w_ref           : (3, Coutp, 3*Cp) bf16 — per-kw weight matrices, row
#                     index kh*Cp + c.
#   b_ref           : (Coutp, 1) f32
# Output: one pooled row (Coutp, WOL) bf16 (columns >= Wo are don't-care).
#
# maxpool(relu(conv + b)) == relu(max_quadrants(conv) + b)  (shared bias,
# monotone ReLU).
# ----------------------------------------------------------------------------
def _conv_pool_kernel(a0_ref, a1_ref, w_ref, b_ref, o_ref, *, cp, wol):
    ho = pl.program_id(1)
    best = None
    for dh in (0, 1):
        row_start = pl.multiple_of((2 * ho + dh) * cp, cp)
        a_even = a0_ref[pl.ds(row_start, 3 * cp), :]          # (3Cp, WL) bf16
        a_odd = a1_ref[pl.ds(row_start, 3 * cp), :]
        planes = (a_even, a_odd)
        for dw in (0, 1):
            acc = None
            for kw in range(3):
                t = dw + kw                                   # column = 2*(wo+s)+p
                p, s = t & 1, t >> 1
                rhs = planes[p][:, s:s + wol]                 # (3Cp, WOL) bf16
                part = jnp.dot(w_ref[kw], rhs,
                               preferred_element_type=jnp.float32)
                acc = part if acc is None else acc + part
            best = acc if best is None else jnp.maximum(best, acc)
    o_ref[...] = jnp.maximum(best + b_ref[...], 0.0).astype(o_ref.dtype)


def _make_planes(x_nhcw):
    """x_nhcw: (N, H, Cp, W), channel dim pre-padded to Cp (multiple of 8).
    Returns even/odd parity planes (N, (H+2)*Cp, WL) bf16 and WOL."""
    N, H, Cp, W = x_nhcw.shape
    Wo = W // 2
    WOL = _round_up(Wo, 128)
    WL = WOL + 128                                            # room for +1 lane shift
    xp = jnp.pad(x_nhcw, ((0, 0), (1, 1), (0, 0), (1, 1)))    # zero halo on H and W
    even = xp[..., 0::2]                                      # (N, H+2, Cp, Wo+1)
    odd = xp[..., 1::2]

    def flat(p):
        p = p.reshape(N, (H + 2) * Cp, Wo + 1)
        p = jnp.pad(p, ((0, 0), (0, 0), (0, WL - (Wo + 1))))
        return p.astype(jnp.bfloat16)

    return flat(even), flat(odd), WOL


def conv3x3_relu_pool(x_nhcw, w, b):
    """x_nhcw: (N, H, Cp, W) (channel-padded, h-major/c-minor layout).
    w: (Cout, C, 3, 3) f32, b: (Cout,) f32.  Conv pad=1 stride=1, ReLU, 2x2
    maxpool.  Returns (N, Ho, Coutp, WOL) bf16; valid region [:, :, :Cout, :Wo]."""
    N, H, Cp, W = x_nhcw.shape
    Cout, C = w.shape[0], w.shape[1]
    assert H % 2 == 0 and W % 2 == 0
    assert Cp % 8 == 0 and Cp >= C
    Ho, Wo = H // 2, W // 2
    Coutp = _round_up(Cout, 8)

    a0, a1, WOL = _make_planes(x_nhcw)
    WL = a0.shape[-1]
    HpCp = (H + 2) * Cp

    # weights: (3, Coutp, 3*Cp), column index kh*Cp + c  (matches plane rows)
    wt = jnp.transpose(w, (3, 0, 2, 1))                       # (kw, co, kh, c)
    wt = jnp.pad(wt, ((0, 0), (0, Coutp - Cout), (0, 0), (0, Cp - C)))
    w_mat = wt.reshape(3, Coutp, 3 * Cp).astype(jnp.bfloat16)
    b_col = jnp.pad(b, (0, Coutp - Cout)).reshape(Coutp, 1).astype(jnp.float32)

    flops = int(2 * N * H * W * Cout * C * 9)
    bytes_accessed = int(2 * a0.size * 2 + w_mat.size * 2
                         + N * Ho * Coutp * WOL * 2)

    plane_spec = pl.BlockSpec((None, HpCp, WL), lambda n, ho: (n, 0, 0))
    return pl.pallas_call(
        functools.partial(_conv_pool_kernel, cp=Cp, wol=WOL),
        grid=(N, Ho),
        in_specs=[plane_spec, plane_spec,
                  pl.BlockSpec((3, Coutp, 3 * Cp), lambda n, ho: (0, 0, 0)),
                  pl.BlockSpec((Coutp, 1), lambda n, ho: (0, 0))],
        out_specs=pl.BlockSpec((None, None, Coutp, WOL),
                               lambda n, ho: (n, ho, 0, 0)),
        out_shape=jax.ShapeDtypeStruct((N, Ho, Coutp, WOL), jnp.bfloat16),
        compiler_params=pltpu.CompilerParams(
            dimension_semantics=("parallel", "parallel")),
        cost_estimate=pl.CostEstimate(flops=flops, transcendentals=0,
                                      bytes_accessed=bytes_accessed),
    )(a0, a1, w_mat, b_col)


# ----------------------------------------------------------------------------
# Kernel 2: projection to d_model with the positional-encoding add fused in the
# epilogue (PE broadcast across batch via a constant index_map).
# ----------------------------------------------------------------------------
def _proj_pe_kernel(feat_ref, w_ref, b_ref, pe_ref, o_ref):
    y = jnp.dot(feat_ref[...], w_ref[...], preferred_element_type=jnp.float32)
    o_ref[...] = (y + b_ref[...] + pe_ref[...]).astype(o_ref.dtype)


def project_add_pe(feat, w, b, pe, B, S):
    M, K = feat.shape
    D = w.shape[1]
    return pl.pallas_call(
        _proj_pe_kernel,
        grid=(B,),
        in_specs=[pl.BlockSpec((S, K), lambda i: (i, 0)),
                  pl.BlockSpec((K, D), lambda i: (0, 0)),
                  pl.BlockSpec((1, D), lambda i: (0, 0)),
                  pl.BlockSpec((S, D), lambda i: (0, 0))],
        out_specs=pl.BlockSpec((S, D), lambda i: (i, 0)),
        out_shape=jax.ShapeDtypeStruct((M, D), jnp.bfloat16),
        compiler_params=pltpu.CompilerParams(dimension_semantics=("parallel",)),
        cost_estimate=pl.CostEstimate(
            flops=int(2 * M * K * D), transcendentals=0,
            bytes_accessed=int(feat.size * 2 + w.size * 2 + pe.size * 4 + M * D * 2)),
    )(feat, w, b.reshape(1, D), pe)


# ----------------------------------------------------------------------------
# Kernel 3: one FULL post-norm transformer encoder layer per pallas_call
# (grid over batch).  Optional fused classifier head in the epilogue.
# ----------------------------------------------------------------------------
def _encoder_layer_kernel(x_ref, wqkv_ref, bqkv_ref, wo_ref, bo_ref,
                          ln1g_ref, ln1b_ref, w1_ref, b1_ref, w2_ref, b2_ref,
                          ln2g_ref, ln2b_ref, *rest, nhead, eps, fuse_cls):
    if fuse_cls:
        cls_w_ref, cls_b_ref, o_ref = rest
    else:
        (o_ref,) = rest

    xb = x_ref[...]                                           # (S, D) bf16
    x = xb.astype(jnp.float32)
    S, D = x.shape
    Dh = D // nhead
    scale = 1.0 / math.sqrt(Dh)

    # packed QKV projection, single bf16 cast of the result
    qkv = jnp.dot(xb, wqkv_ref[...],
                  preferred_element_type=jnp.float32) + bqkv_ref[...]
    qkvb = qkv.astype(jnp.bfloat16)                           # (S, 3D)

    # multi-head attention; per-head result accumulated straight into the
    # output projection (static row slices of wo) — no lane concatenate.
    attn = None
    for h in range(nhead):
        qh = qkvb[:, h * Dh:(h + 1) * Dh]
        kh = qkvb[:, D + h * Dh:D + (h + 1) * Dh]
        vh = qkvb[:, 2 * D + h * Dh:2 * D + (h + 1) * Dh]
        s = lax.dot_general(qh, kh, (((1,), (1,)), ((), ())),
                            preferred_element_type=jnp.float32) * scale
        m = jnp.max(s, axis=-1, keepdims=True)
        p = jnp.exp(s - m)
        p = p * pl.reciprocal(jnp.sum(p, axis=-1, keepdims=True), approx=True)
        head = jnp.dot(p.astype(jnp.bfloat16), vh,
                       preferred_element_type=jnp.float32)    # (S, Dh)
        part = jnp.dot(head.astype(jnp.bfloat16),
                       wo_ref[h * Dh:(h + 1) * Dh, :],
                       preferred_element_type=jnp.float32)    # (S, D)
        attn = part if attn is None else attn + part
    attn = attn + bo_ref[...]

    # residual + LayerNorm 1 (f32)
    y = x + attn
    mu = jnp.mean(y, axis=-1, keepdims=True)
    yc = y - mu
    var = jnp.mean(yc * yc, axis=-1, keepdims=True)
    y = yc * lax.rsqrt(var + eps) * ln1g_ref[...] + ln1b_ref[...]

    # fused FFN (hidden stays in VMEM/vregs)
    hdn = jnp.maximum(
        jnp.dot(y.astype(jnp.bfloat16), w1_ref[...],
                preferred_element_type=jnp.float32) + b1_ref[...], 0.0)
    ff = jnp.dot(hdn.astype(jnp.bfloat16), w2_ref[...],
                 preferred_element_type=jnp.float32) + b2_ref[...]

    # residual + LayerNorm 2 (f32)
    z = y + ff
    mu2 = jnp.mean(z, axis=-1, keepdims=True)
    zc = z - mu2
    var2 = jnp.mean(zc * zc, axis=-1, keepdims=True)
    zn = zc * lax.rsqrt(var2 + eps) * ln2g_ref[...] + ln2b_ref[...]

    if fuse_cls:
        # classifier head fused into the last layer's epilogue
        # TODO(synk): original repo may apply log_softmax for CTC; raw logits.
        logits = jnp.dot(zn.astype(jnp.bfloat16), cls_w_ref[...],
                         preferred_element_type=jnp.float32) + cls_b_ref[...]
        o_ref[...] = logits.astype(o_ref.dtype)
    else:
        o_ref[...] = zn.astype(o_ref.dtype)


def encoder_layer(x_flat, B, S, D, nhead, p, cls_w=None, cls_b=None):
    d_ff = p["w1"].shape[1]
    fuse_cls = cls_w is not None

    def full(shape):
        n = len(shape)
        return pl.BlockSpec(shape, lambda i, _n=n: (0,) * _n)

    in_specs = [pl.BlockSpec((S, D), lambda i: (i, 0)),
                full((D, 3 * D)), full((1, 3 * D)),
                full((D, D)), full((1, D)),
                full((1, D)), full((1, D)),
                full((D, d_ff)), full((1, d_ff)),
                full((d_ff, D)), full((1, D)),
                full((1, D)), full((1, D))]
    args = [x_flat, p["wqkv"], p["bqkv"], p["wo"], p["bo"],
            p["ln1_g"], p["ln1_b"], p["w1"], p["b1"], p["w2"], p["b2"],
            p["ln2_g"], p["ln2_b"]]

    if fuse_cls:
        Vp = cls_w.shape[1]
        in_specs += [full((D, Vp)), full((1, Vp))]
        args += [cls_w, cls_b.reshape(1, Vp)]
        out_spec = pl.BlockSpec((S, Vp), lambda i: (i, 0))
        out_shape = jax.ShapeDtypeStruct((B * S, Vp), jnp.float32)
        out_elems = B * S * Vp
        out_itemsize = 4
    else:
        out_spec = pl.BlockSpec((S, D), lambda i: (i, 0))
        out_shape = jax.ShapeDtypeStruct((B * S, D), jnp.bfloat16)
        out_elems = B * S * D
        out_itemsize = 2

    # explicit scoped-VMEM budget: double-buffered weights + f32 intermediates
    weight_bytes = sum(int(a.size) * a.dtype.itemsize for a in args[1:])
    act_bytes = S * (3 * D + 6 * D + d_ff + 2 * S) * 4
    vmem_limit = int(min(110 * (1 << 20),
                         2 * weight_bytes + 4 * act_bytes + (4 << 20)))

    flops = 2 * B * S * (3 * D * D + D * D + 2 * D * d_ff) \
        + 4 * B * nhead * S * S * (D // nhead)
    if fuse_cls:
        flops += 2 * B * S * D * cls_w.shape[1]
    trans = 2 * B * nhead * S * S
    bytes_accessed = int(weight_bytes + x_flat.size * x_flat.dtype.itemsize
                         + out_elems * out_itemsize)

    return pl.pallas_call(
        functools.partial(_encoder_layer_kernel, nhead=nhead, eps=1e-5,
                          fuse_cls=fuse_cls),
        grid=(B,),
        in_specs=in_specs,
        out_specs=out_spec,
        out_shape=out_shape,
        compiler_params=pltpu.CompilerParams(
            dimension_semantics=("parallel",),
            vmem_limit_bytes=vmem_limit),
        cost_estimate=pl.CostEstimate(flops=int(flops), transcendentals=int(trans),
                                      bytes_accessed=bytes_accessed),
    )(*args)


# ----------------------------------------------------------------------------
# Glue: positional encoding + full forward pass
# ----------------------------------------------------------------------------
def sinusoidal_pe(S, D):
    pos = jnp.arange(S, dtype=jnp.float32)[:, None]
    div = jnp.exp(jnp.arange(0, D, 2, dtype=jnp.float32) * (-math.log(10000.0) / D))
    pe = jnp.zeros((S, D), dtype=jnp.float32)
    pe = pe.at[:, 0::2].set(jnp.sin(pos * div))
    pe = pe.at[:, 1::2].set(jnp.cos(pos * div))
    return pe


def transformer_ocr_forward(x, params, *, d_model, nhead, vocab):
    B, C_in, H, W = x.shape
    assert H % 4 == 0 and W % 4 == 0, "two 2x2 pools require H, W % 4 == 0"
    assert d_model % nhead == 0, "d_model must be divisible by nhead"

    C1 = params["conv1_w"].shape[0]
    C2 = params["conv2_w"].shape[0]

    # --- FeatureExtraction: two fused conv3x3+ReLU+maxpool2x2 kernels ---
    # stage-1 input re-laid out once (h-major / c-minor, channels padded to 8)
    Cinp = _round_up(C_in, 8)
    x_nhcw = jnp.pad(jnp.transpose(x, (0, 2, 1, 3)),
                     ((0, 0), (0, 0), (0, Cinp - C_in), (0, 0)))
    h1 = conv3x3_relu_pool(x_nhcw, params["conv1_w"], params["conv1_b"])
    H1, W1 = H // 2, W // 2

    # stage 2 consumes stage-1 output layout directly (no NCHW transpose)
    h2 = conv3x3_relu_pool(h1[..., :W1], params["conv2_w"], params["conv2_b"])
    Hf, Wf = H1 // 2, W1 // 2
    S = Wf                                                   # width -> sequence

    # per (b, w) position: features = (C2, Hf) flattened, C2-major
    feat = jnp.transpose(h2[:, :, :C2, :Wf], (0, 3, 2, 1)).reshape(B * S, C2 * Hf)

    # --- projection + positional encoding (fused epilogue) ---
    # TODO(synk): some reference impls scale by sqrt(d_model) before adding PE.
    pe = sinusoidal_pe(S, d_model)
    src = project_add_pe(feat, params["proj_w"], params["proj_b"], pe, B, S)

    # --- TransformerEncoder: ONE fused Pallas kernel per layer; classifier
    #     head fused into the last layer's epilogue ---
    layers = params["layers"]
    assert len(layers) >= 1
    for layer_p in layers[:-1]:
        src = encoder_layer(src, B, S, d_model, nhead, layer_p)
    logits = encoder_layer(src, B, S, d_model, nhead, layers[-1],
                           cls_w=params["cls_w"], cls_b=params["cls_b"])
    return logits[:, :vocab].reshape(B, S, vocab)


# ----------------------------------------------------------------------------
# Deterministic parameter construction (matmul weights stored in bf16)
# ----------------------------------------------------------------------------
def make_params(key, *, c_in, c1, c2, hf, d_model, d_ff, nhead, n_layers, vocab):
    keys = iter(jax.random.split(key, 64))

    def w(shape, scale=0.05):
        return jax.random.normal(next(keys), shape, dtype=jnp.float32) * scale

    vocab_pad = _round_up(vocab, 128)
    params = {
        "conv1_w": w((c1, c_in, 3, 3)),
        "conv1_b": jnp.zeros((c1,), jnp.float32),
        "conv2_w": w((c2, c1, 3, 3)),
        "conv2_b": jnp.zeros((c2,), jnp.float32),
        "proj_w": w((c2 * hf, d_model)).astype(jnp.bfloat16),
        "proj_b": jnp.zeros((d_model,), jnp.float32),
        # classifier weights lane-padded to a multiple of 128 (extra cols zero)
        "cls_w": jnp.pad(w((d_model, vocab)),
                         ((0, 0), (0, vocab_pad - vocab))).astype(jnp.bfloat16),
        "cls_b": jnp.zeros((vocab_pad,), jnp.float32),
        "layers": [],
    }
    for _ in range(n_layers):
        params["layers"].append({
            "wqkv": w((d_model, 3 * d_model)).astype(jnp.bfloat16),  # packed q|k|v
            "bqkv": jnp.zeros((1, 3 * d_model), jnp.float32),
            "wo": w((d_model, d_model)).astype(jnp.bfloat16),
            "bo": jnp.zeros((1, d_model), jnp.float32),
            "ln1_g": jnp.ones((1, d_model), jnp.float32),
            "ln1_b": jnp.zeros((1, d_model), jnp.float32),
            "w1": w((d_model, d_ff)).astype(jnp.bfloat16),
            "b1": jnp.zeros((1, d_ff), jnp.float32),
            "w2": w((d_ff, d_model)).astype(jnp.bfloat16),
            "b2": jnp.zeros((1, d_model), jnp.float32),
            "ln2_g": jnp.ones((1, d_model), jnp.float32),
            "ln2_b": jnp.zeros((1, d_model), jnp.float32),
        })
    return params


# ----------------------------------------------------------------------------
# Main
# ----------------------------------------------------------------------------
if __name__ == "__main__":
    # small but forward-consistent shapes
    B, C_IN, H, W = 2, 3, 16, 64        # NCHW OCR line image
    C1, C2 = 8, 16                      # CNN channels
    D_MODEL, D_FF, NHEAD, N_LAYERS = 32, 64, 4, 2
    VOCAB = 16
    HF = H // 4                         # feature height after two 2x2 pools

    key = jax.random.PRNGKey(0)
    kx, kp = jax.random.split(key)
    x = jax.random.normal(kx, (B, C_IN, H, W), dtype=jnp.float32)
    params = make_params(kp, c_in=C_IN, c1=C1, c2=C2, hf=HF,
                         d_model=D_MODEL, d_ff=D_FF, nhead=NHEAD,
                         n_layers=N_LAYERS, vocab=VOCAB)

    fwd = jax.jit(functools.partial(transformer_ocr_forward,
                                    d_model=D_MODEL, nhead=NHEAD, vocab=VOCAB))
    out = jax.block_until_ready(fwd(x, params))

    assert out.shape == (B, W // 4, VOCAB), out.shape
    assert jnp.all(jnp.isfinite(out))
    print("KERNEL_OK")
</pallas_src>

<mosaic_0001>
module attributes {stable_mosaic.version = 11 : i64} {
  func.func @_conv_pool_kernel(%arg0: i32, %arg1: i32, %arg2: memref<1x144x256xbf16, #tpu.memory_space<vmem>>, %arg3: memref<1x144x256xbf16, #tpu.memory_space<vmem>>, %arg4: memref<3x8x24xbf16, #tpu.memory_space<vmem>>, %arg5: memref<8x1xf32, #tpu.memory_space<vmem>>, %arg6: memref<1x1x8x128xbf16, #tpu.memory_space<vmem>>) attributes {dimension_semantics = [#tpu.dimension_semantics<parallel>, #tpu.dimension_semantics<parallel>], iteration_bounds = array<i64: 2, 8>, scalar_prefetch = 0 : i64, scratch_operands = 0 : i64, tpu.core_type = #tpu.core_type<tc>, window_params = [{transform_indices = @transform_0, window_bounds = array<i64: 1, 144, 256>}, {transform_indices = @transform_1, window_bounds = array<i64: 1, 144, 256>}, {pipeline_mode = #tpu.pipeline_mode<synchronous>, transform_indices = @transform_2, window_bounds = array<i64: 3, 8, 24>}, {pipeline_mode = #tpu.pipeline_mode<synchronous>, transform_indices = @transform_3, window_bounds = array<i64: 8, 1>}, {transform_indices = @transform_4, window_bounds = array<i64: 1, 1, 8, 128>}]} {
    %c2_i32 = arith.constant 2 : i32
    %0 = arith.muli %c2_i32, %arg1 : i32
    %c0_i32 = arith.constant 0 : i32
    %1 = arith.addi %0, %c0_i32 : i32
    %c8_i32 = arith.constant 8 : i32
    %2 = arith.muli %1, %c8_i32 : i32
    %3 = tpu.assume_multiple %2, 8 : i32
    %c0 = arith.constant 0 : index
    %4 = arith.index_cast %3 : i32 to index
    %c0_0 = arith.constant 0 : index
    %5 = vector.load %arg2[%c0, %4, %c0_0] : memref<1x144x256xbf16, #tpu.memory_space<vmem>>, vector<1x24x256xbf16>
    %6 = vector.shape_cast %5 : vector<1x24x256xbf16> to vector<24x256xbf16>
    %c0_1 = arith.constant 0 : index
    %7 = arith.index_cast %3 : i32 to index
    %c0_2 = arith.constant 0 : index
    %8 = vector.load %arg3[%c0_1, %7, %c0_2] : memref<1x144x256xbf16, #tpu.memory_space<vmem>>, vector<1x24x256xbf16>
    %9 = vector.shape_cast %8 : vector<1x24x256xbf16> to vector<24x256xbf16>
    %10 = vector.extract_strided_slice %6 {offsets = [0, 0], sizes = [24, 128], strides = [1, 1]} : vector<24x256xbf16> to vector<24x128xbf16>
    %c0_3 = arith.constant 0 : index
    %c0_4 = arith.constant 0 : index
    %c0_5 = arith.constant 0 : index
    %11 = vector.load %arg4[%c0_3, %c0_4, %c0_5] : memref<3x8x24xbf16, #tpu.memory_space<vmem>>, vector<1x8x24xbf16>
    %12 = vector.shape_cast %11 : vector<1x8x24xbf16> to vector<8x24xbf16>
    %cst = arith.constant dense<0.000000e+00> : vector<8x128xf32>
    %13 = tpu.matmul %12, %10, %cst {dimension_numbers = #tpu.dot_dimension_numbers<[1], [0], [0], [1], [0, 0, 1, 1], [], []>} : vector<8x24xbf16>, vector<24x128xbf16>, vector<8x128xf32> -> vector<8x128xf32>
    %14 = vector.extract_strided_slice %9 {offsets = [0, 0], sizes = [24, 128], strides = [1, 1]} : vector<24x256xbf16> to vector<24x128xbf16>
    %c1 = arith.constant 1 : index
    %c0_6 = arith.constant 0 : index
    %c0_7 = arith.constant 0 : index
    %15 = vector.load %arg4[%c1, %c0_6, %c0_7] : memref<3x8x24xbf16, #tpu.memory_space<vmem>>, vector<1x8x24xbf16>
    %16 = vector.shape_cast %15 : vector<1x8x24xbf16> to vector<8x24xbf16>
    %cst_8 = arith.constant dense<0.000000e+00> : vector<8x128xf32>
    %17 = tpu.matmul %16, %14, %cst_8 {dimension_numbers = #tpu.dot_dimension_numbers<[1], [0], [0], [1], [0, 0, 1, 1], [], []>} : vector<8x24xbf16>, vector<24x128xbf16>, vector<8x128xf32> -> vector<8x128xf32>
    %18 = arith.addf %13, %17 : vector<8x128xf32>
    %19 = vector.extract_strided_slice %6 {offsets = [0, 1], sizes = [24, 128], strides = [1, 1]} : vector<24x256xbf16> to vector<24x128xbf16>
    %c2 = arith.constant 2 : index
    %c0_9 = arith.constant 0 : index
    %c0_10 = arith.constant 0 : index
    %20 = vector.load %arg4[%c2, %c0_9, %c0_10] : memref<3x8x24xbf16, #tpu.memory_space<vmem>>, vector<1x8x24xbf16>
    %21 = vector.shape_cast %20 : vector<1x8x24xbf16> to vector<8x24xbf16>
    %cst_11 = arith.constant dense<0.000000e+00> : vector<8x128xf32>
    %22 = tpu.matmul %21, %19, %cst_11 {dimension_numbers = #tpu.dot_dimension_numbers<[1], [0], [0], [1], [0, 0, 1, 1], [], []>} : vector<8x24xbf16>, vector<24x128xbf16>, vector<8x128xf32> -> vector<8x128xf32>
    %23 = arith.addf %18, %22 : vector<8x128xf32>
    %24 = vector.extract_strided_slice %9 {offsets = [0, 0], sizes = [24, 128], strides = [1, 1]} : vector<24x256xbf16> to vector<24x128xbf16>
    %c0_12 = arith.constant 0 : index
    %c0_13 = arith.constant 0 : index
    %c0_14 = arith.constant 0 : index
    %25 = vector.load %arg4[%c0_12, %c0_13, %c0_14] : memref<3x8x24xbf16, #tpu.memory_space<vmem>>, vector<1x8x24xbf16>
    %26 = vector.shape_cast %25 : vector<1x8x24xbf16> to vector<8x24xbf16>
    %cst_15 = arith.constant dense<0.000000e+00> : vector<8x128xf32>
    %27 = tpu.matmul %26, %24, %cst_15 {dimension_numbers = #tpu.dot_dimension_numbers<[1], [0], [0], [1], [0, 0, 1, 1], [], []>} : vector<8x24xbf16>, vector<24x128xbf16>, vector<8x128xf32> -> vector<8x128xf32>
    %28 = vector.extract_strided_slice %6 {offsets = [0, 1], sizes = [24, 128], strides = [1, 1]} : vector<24x256xbf16> to vector<24x128xbf16>
    %c1_16 = arith.constant 1 : index
    %c0_17 = arith.constant 0 : index
    %c0_18 = arith.constant 0 : index
    %29 = vector.load %arg4[%c1_16, %c0_17, %c0_18] : memref<3x8x24xbf16, #tpu.memory_space<vmem>>, vector<1x8x24xbf16>
    %30 = vector.shape_cast %29 : vector<1x8x24xbf16> to vector<8x24xbf16>
    %cst_19 = arith.constant dense<0.000000e+00> : vector<8x128xf32>
    %31 = tpu.matmul %30, %28, %cst_19 {dimension_numbers = #tpu.dot_dimension_numbers<[1], [0], [0], [1], [0, 0, 1, 1], [], []>} : vector<8x24xbf16>, vector<24x128xbf16>, vector<8x128xf32> -> vector<8x128xf32>
    %32 = arith.addf %27, %31 : vector<8x128xf32>
    %33 = vector.extract_strided_slice %9 {offsets = [0, 1], sizes = [24, 128], strides = [1, 1]} : vector<24x256xbf16> to vector<24x128xbf16>
    %c2_20 = arith.constant 2 : index
    %c0_21 = arith.constant 0 : index
    %c0_22 = arith.constant 0 : index
    %34 = vector.load %arg4[%c2_20, %c0_21, %c0_22] : memref<3x8x24xbf16, #tpu.memory_space<vmem>>, vector<1x8x24xbf16>
    %35 = vector.shape_cast %34 : vector<1x8x24xbf16> to vector<8x24xbf16>
    %cst_23 = arith.constant dense<0.000000e+00> : vector<8x128xf32>
    %36 = tpu.matmul %35, %33, %cst_23 {dimension_numbers = #tpu.dot_dimension_numbers<[1], [0], [0], [1], [0, 0, 1, 1], [], []>} : vector<8x24xbf16>, vector<24x128xbf16>, vector<8x128xf32> -> vector<8x128xf32>
    %37 = arith.addf %32, %36 : vector<8x128xf32>
    %38 = arith.maximumf %23, %37 : vector<8x128xf32>
    %c2_i32_24 = arith.constant 2 : i32
    %39 = arith.muli %c2_i32_24, %arg1 : i32
    %c1_i32 = arith.constant 1 : i32
    %40 = arith.addi %39, %c1_i32 : i32
    %c8_i32_25 = arith.constant 8 : i32
    %41 = arith.muli %40, %c8_i32_25 : i32
    %42 = tpu.assume_multiple %41, 8 : i32
    %c0_26 = arith.constant 0 : index
    %43 = arith.index_cast %42 : i32 to index
    %c0_27 = arith.constant 0 : index
    %44 = vector.load %arg2[%c0_26, %43, %c0_27] : memref<1x144x256xbf16, #tpu.memory_space<vmem>>, vector<1x24x256xbf16>
    %45 = vector.shape_cast %44 : vector<1x24x256xbf16> to vector<24x256xbf16>
    %c0_28 = arith.constant 0 : index
    %46 = arith.index_cast %42 : i32 to index
    %c0_29 = arith.constant 0 : index
    %47 = vector.load %arg3[%c0_28, %46, %c0_29] : memref<1x144x256xbf16, #tpu.memory_space<vmem>>, vector<1x24x256xbf16>
    %48 = vector.shape_cast %47 : vector<1x24x256xbf16> to vector<24x256xbf16>
    %49 = vector.extract_strided_slice %45 {offsets = [0, 0], sizes = [24, 128], strides = [1, 1]} : vector<24x256xbf16> to vector<24x128xbf16>
    %c0_30 = arith.constant 0 : index
    %c0_31 = arith.constant 0 : index
    %c0_32 = arith.constant 0 : index
    %50 = vector.load %arg4[%c0_30, %c0_31, %c0_32] : memref<3x8x24xbf16, #tpu.memory_space<vmem>>, vector<1x8x24xbf16>
    %51 = vector.shape_cast %50 : vector<1x8x24xbf16> to vector<8x24xbf16>
    %cst_33 = arith.constant dense<0.000000e+00> : vector<8x128xf32>
    %52 = tpu.matmul %51, %49, %cst_33 {dimension_numbers = #tpu.dot_dimension_numbers<[1], [0], [0], [1], [0, 0, 1, 1], [], []>} : vector<8x24xbf16>, vector<24x128xbf16>, vector<8x128xf32> -> vector<8x128xf32>
    %53 = vector.extract_strided_slice %48 {offsets = [0, 0], sizes = [24, 128], strides = [1, 1]} : vector<24x256xbf16> to vector<24x128xbf16>
    %c1_34 = arith.constant 1 : index
    %c0_35 = arith.constant 0 : index
    %c0_36 = arith.constant 0 : index
    %54 = vector.load %arg4[%c1_34, %c0_35, %c0_36] : memref<3x8x24xbf16, #tpu.memory_space<vmem>>, vector<1x8x24xbf16>
    %55 = vector.shape_cast %54 : vector<1x8x24xbf16> to vector<8x24xbf16>
    %cst_37 = arith.constant dense<0.000000e+00> : vector<8x128xf32>
    %56 = tpu.matmul %55, %53, %cst_37 {dimension_numbers = #tpu.dot_dimension_numbers<[1], [0], [0], [1], [0, 0, 1, 1], [], []>} : vector<8x24xbf16>, vector<24x128xbf16>, vector<8x128xf32> -> vector<8x128xf32>
    %57 = arith.addf %52, %56 : vector<8x128xf32>
    %58 = vector.extract_strided_slice %45 {offsets = [0, 1], sizes = [24, 128], strides = [1, 1]} : vector<24x256xbf16> to vector<24x128xbf16>
    %c2_38 = arith.constant 2 : index
    %c0_39 = arith.constant 0 : index
    %c0_40 = arith.constant 0 : index
    %59 = vector.load %arg4[%c2_38, %c0_39, %c0_40] : memref<3x8x24xbf16, #tpu.memory_space<vmem>>, vector<1x8x24xbf16>
    %60 = vector.shape_cast %59 : vector<1x8x24xbf16> to vector<8x24xbf16>
    %cst_41 = arith.constant dense<0.000000e+00> : vector<8x128xf32>
    %61 = tpu.matmul %60, %58, %cst_41 {dimension_numbers = #tpu.dot_dimension_numbers<[1], [0], [0], [1], [0, 0, 1, 1], [], []>} : vector<8x24xbf16>, vector<24x128xbf16>, vector<8x128xf32> -> vector<8x128xf32>
    %62 = arith.addf %57, %61 : vector<8x128xf32>
    %63 = arith.maximumf %38, %62 : vector<8x128xf32>
    %64 = vector.extract_strided_slice %48 {offsets = [0, 0], sizes = [24, 128], strides = [1, 1]} : vector<24x256xbf16> to vector<24x128xbf16>
    %c0_42 = arith.constant 0 : index
    %c0_43 = arith.constant 0 : index
    %c0_44 = arith.constant 0 : index
    %65 = vector.load %arg4[%c0_42, %c0_43, %c0_44] : memref<3x8x24xbf16, #tpu.memory_space<vmem>>, vector<1x8x24xbf16>
    %66 = vector.shape_cast %65 : vector<1x8x24xbf16> to vector<8x24xbf16>
    %cst_45 = arith.constant dense<0.000000e+00> : vector<8x128xf32>
    %67 = tpu.matmul %66, %64, %cst_45 {dimension_numbers = #tpu.dot_dimension_numbers<[1], [0], [0], [1], [0, 0, 1, 1], [], []>} : vector<8x24xbf16>, vector<24x128xbf16>, vector<8x128xf32> -> vector<8x128xf32>
    %68 = vector.extract_strided_slice %45 {offsets = [0, 1], sizes = [24, 128], strides = [1, 1]} : vector<24x256xbf16> to vector<24x128xbf16>
    %c1_46 = arith.constant 1 : index
    %c0_47 = arith.constant 0 : index
    %c0_48 = arith.constant 0 : index
    %69 = vector.load %arg4[%c1_46, %c0_47, %c0_48] : memref<3x8x24xbf16, #tpu.memory_space<vmem>>, vector<1x8x24xbf16>
    %70 = vector.shape_cast %69 : vector<1x8x24xbf16> to vector<8x24xbf16>
    %cst_49 = arith.constant dense<0.000000e+00> : vector<8x128xf32>
    %71 = tpu.matmul %70, %68, %cst_49 {dimension_numbers = #tpu.dot_dimension_numbers<[1], [0], [0], [1], [0, 0, 1, 1], [], []>} : vector<8x24xbf16>, vector<24x128xbf16>, vector<8x128xf32> -> vector<8x128xf32>
    %72 = arith.addf %67, %71 : vector<8x128xf32>
    %73 = vector.extract_strided_slice %48 {offsets = [0, 1], sizes = [24, 128], strides = [1, 1]} : vector<24x256xbf16> to vector<24x128xbf16>
    %c2_50 = arith.constant 2 : index
    %c0_51 = arith.constant 0 : index
    %c0_52 = arith.constant 0 : index
    %74 = vector.load %arg4[%c2_50, %c0_51, %c0_52] : memref<3x8x24xbf16, #tpu.memory_space<vmem>>, vector<1x8x24xbf16>
    %75 = vector.shape_cast %74 : vector<1x8x24xbf16> to vector<8x24xbf16>
    %cst_53 = arith.constant dense<0.000000e+00> : vector<8x128xf32>
    %76 = tpu.matmul %75, %73, %cst_53 {dimension_numbers = #tpu.dot_dimension_numbers<[1], [0], [0], [1], [0, 0, 1, 1], [], []>} : vector<8x24xbf16>, vector<24x128xbf16>, vector<8x128xf32> -> vector<8x128xf32>
    %77 = arith.addf %72, %76 : vector<8x128xf32>
    %78 = arith.maximumf %63, %77 : vector<8x128xf32>
    %c0_54 = arith.constant 0 : index
    %c0_55 = arith.constant 0 : index
    %79 = vector.load %arg5[%c0_54, %c0_55] : memref<8x1xf32, #tpu.memory_space<vmem>>, vector<8x1xf32>
    %80 = vector.broadcast %79 : vector<8x1xf32> to vector<8x128xf32>
    %81 = arith.addf %78, %80 : vector<8x128xf32>
    %cst_56 = arith.constant 0.000000e+00 : f32
    %82 = vector.broadcast %cst_56 : f32 to vector<8x128xf32>
    %83 = arith.maximumf %81, %82 : vector<8x128xf32>
    %84 = arith.truncf %83 : vector<8x128xf32> to vector<8x128xbf16>
    %c0_57 = arith.constant 0 : index
    %c0_58 = arith.constant 0 : index
    %c0_59 = arith.constant 0 : index
    %c0_60 = arith.constant 0 : index
    %85 = vector.load %arg6[%c0_57, %c0_58, %c0_59, %c0_60] : memref<1x1x8x128xbf16, #tpu.memory_space<vmem>>, vector<1x1x8x128xbf16>
    %86 = vector.shape_cast %85 : vector<1x1x8x128xbf16> to vector<8x128xbf16>
    %87 = vector.shape_cast %84 : vector<8x128xbf16> to vector<1x1x8x128xbf16>
    tpu.vector_store %arg6[%c0_57, %c0_58, %c0_59, %c0_60], %87 {strides = array<i32>} : memref<1x1x8x128xbf16, #tpu.memory_space<vmem>>, vector<1x1x8x128xbf16>,
    return
  }
  func.func @transform_0(%arg0: i32, %arg1: i32) -> (i32, i32, i32) {
    %c0_i32 = arith.constant 0 : i32
    %c0_i32_0 = arith.constant 0 : i32
    %c0_i32_1 = arith.constant 0 : i32
    return %arg0, %c0_i32, %c0_i32_0 : i32, i32, i32
  }
  func.func @transform_1(%arg0: i32, %arg1: i32) -> (i32, i32, i32) {
    %c0_i32 = arith.constant 0 : i32
    %c0_i32_0 = arith.constant 0 : i32
    %c0_i32_1 = arith.constant 0 : i32
    return %arg0, %c0_i32, %c0_i32_0 : i32, i32, i32
  }
  func.func @transform_2(%arg0: i32, %arg1: i32) -> (i32, i32, i32) {
    %c0_i32 = arith.constant 0 : i32
    %c0_i32_0 = arith.constant 0 : i32
    %c0_i32_1 = arith.constant 0 : i32
    %c0_i32_2 = arith.constant 0 : i32
    return %c0_i32, %c0_i32_0, %c0_i32_1 : i32, i32, i32
  }
  func.func @transform_3(%arg0: i32, %arg1: i32) -> (i32, i32) {
    %c0_i32 = arith.constant 0 : i32
    %c0_i32_0 = arith.constant 0 : i32
    %c0_i32_1 = arith.constant 0 : i32
    return %c0_i32, %c0_i32_0 : i32, i32
  }
  func.func @transform_4(%arg0: i32, %arg1: i32) -> (i32, i32, i32, i32) {
    %c0_i32 = arith.constant 0 : i32
    %c0_i32_0 = arith.constant 0 : i32
    %c0_i32_1 = arith.constant 0 : i32
    return %arg0, %arg1, %c0_i32, %c0_i32_0 : i32, i32, i32, i32
  }
}

module attributes {stable_mosaic.version = 11 : i64} {
  func.func @_conv_pool_kernel(%arg0: i32, %arg1: i32, %arg2: memref<1x80x256xbf16, #tpu.memory_space<vmem>>, %arg3: memref<1x80x256xbf16, #tpu.memory_space<vmem>>, %arg4: memref<3x16x24xbf16, #tpu.memory_space<vmem>>, %arg5: memref<16x1xf32, #tpu.memory_space<vmem>>, %arg6: memref<1x1x16x128xbf16, #tpu.memory_space<vmem>>) attributes {dimension_semantics = [#tpu.dimension_semantics<parallel>, #tpu.dimension_semantics<parallel>], iteration_bounds = array<i64: 2, 4>, scalar_prefetch = 0 : i64, scratch_operands = 0 : i64, tpu.core_type = #tpu.core_type<tc>, window_params = [{transform_indices = @transform_0, window_bounds = array<i64: 1, 80, 256>}, {transform_indices = @transform_1, window_bounds = array<i64: 1, 80, 256>}, {pipeline_mode = #tpu.pipeline_mode<synchronous>, transform_indices = @transform_2, window_bounds = array<i64: 3, 16, 24>}, {pipeline_mode = #tpu.pipeline_mode<synchronous>, transform_indices = @transform_3, window_bounds = array<i64: 16, 1>}, {transform_indices = @transform_4, window_bounds = array<i64: 1, 1, 16, 128>}]} {
    %c2_i32 = arith.constant 2 : i32
    %0 = arith.muli %c2_i32, %arg1 : i32
    %c0_i32 = arith.constant 0 : i32
    %1 = arith.addi %0, %c0_i32 : i32
    %c8_i32 = arith.constant 8 : i32
    %2 = arith.muli %1, %c8_i32 : i32
    %3 = tpu.assume_multiple %2, 8 : i32
    %c0 = arith.constant 0 : index
    %4 = arith.index_cast %3 : i32 to index
    %c0_0 = arith.constant 0 : index
    %5 = vector.load %arg2[%c0, %4, %c0_0] : memref<1x80x256xbf16, #tpu.memory_space<vmem>>, vector<1x24x256xbf16>
    %6 = vector.shape_cast %5 : vector<1x24x256xbf16> to vector<24x256xbf16>
    %c0_1 = arith.constant 0 : index
    %7 = arith.index_cast %3 : i32 to index
    %c0_2 = arith.constant 0 : index
    %8 = vector.load %arg3[%c0_1, %7, %c0_2] : memref<1x80x256xbf16, #tpu.memory_space<vmem>>, vector<1x24x256xbf16>
    %9 = vector.shape_cast %8 : vector<1x24x256xbf16> to vector<24x256xbf16>
    %10 = vector.extract_strided_slice %6 {offsets = [0, 0], sizes = [24, 128], strides = [1, 1]} : vector<24x256xbf16> to vector<24x128xbf16>
    %c0_3 = arith.constant 0 : index
    %c0_4 = arith.constant 0 : index
    %c0_5 = arith.constant 0 : index
    %11 = vector.load %arg4[%c0_3, %c0_4, %c0_5] : memref<3x16x24xbf16, #tpu.memory_space<vmem>>, vector<1x16x24xbf16>
    %12 = vector.shape_cast %11 : vector<1x16x24xbf16> to vector<16x24xbf16>
    %cst = arith.constant dense<0.000000e+00> : vector<16x128xf32>
    %13 = tpu.matmul %12, %10, %cst {dimension_numbers = #tpu.dot_dimension_numbers<[1], [0], [0], [1], [0, 0, 1, 1], [], []>} : vector<16x24xbf16>, vector<24x128xbf16>, vector<16x128xf32> -> vector<16x128xf32>
    %14 = vector.extract_strided_slice %9 {offsets = [0, 0], sizes = [24, 128], strides = [1, 1]} : vector<24x256xbf16> to vector<24x128xbf16>
    %c1 = arith.constant 1 : index
    %c0_6 = arith.constant 0 : index
    %c0_7 = arith.constant 0 : index
    %15 = vector.load %arg4[%c1, %c0_6, %c0_7] : memref<3x16x24xbf16, #tpu.memory_space<vmem>>, vector<1x16x24xbf16>
    %16 = vector.shape_cast %15 : vector<1x16x24xbf16> to vector<16x24xbf16>
    %cst_8 = arith.constant dense<0.000000e+00> : vector<16x128xf32>
    %17 = tpu.matmul %16, %14, %cst_8 {dimension_numbers = #tpu.dot_dimension_numbers<[1], [0], [0], [1], [0, 0, 1, 1], [], []>} : vector<16x24xbf16>, vector<24x128xbf16>, vector<16x128xf32> -> vector<16x128xf32>
    %18 = arith.addf %13, %17 : vector<16x128xf32>
    %19 = vector.extract_strided_slice %6 {offsets = [0, 1], sizes = [24, 128], strides = [1, 1]} : vector<24x256xbf16> to vector<24x128xbf16>
    %c2 = arith.constant 2 : index
    %c0_9 = arith.constant 0 : index
    %c0_10 = arith.constant 0 : index
    %20 = vector.load %arg4[%c2, %c0_9, %c0_10] : memref<3x16x24xbf16, #tpu.memory_space<vmem>>, vector<1x16x24xbf16>
    %21 = vector.shape_cast %20 : vector<1x16x24xbf16> to vector<16x24xbf16>
    %cst_11 = arith.constant dense<0.000000e+00> : vector<16x128xf32>
    %22 = tpu.matmul %21, %19, %cst_11 {dimension_numbers = #tpu.dot_dimension_numbers<[1], [0], [0], [1], [0, 0, 1, 1], [], []>} : vector<16x24xbf16>, vector<24x128xbf16>, vector<16x128xf32> -> vector<16x128xf32>
    %23 = arith.addf %18, %22 : vector<16x128xf32>
    %24 = vector.extract_strided_slice %9 {offsets = [0, 0], sizes = [24, 128], strides = [1, 1]} : vector<24x256xbf16> to vector<24x128xbf16>
    %c0_12 = arith.constant 0 : index
    %c0_13 = arith.constant 0 : index
    %c0_14 = arith.constant 0 : index
    %25 = vector.load %arg4[%c0_12, %c0_13, %c0_14] : memref<3x16x24xbf16, #tpu.memory_space<vmem>>, vector<1x16x24xbf16>
    %26 = vector.shape_cast %25 : vector<1x16x24xbf16> to vector<16x24xbf16>
    %cst_15 = arith.constant dense<0.000000e+00> : vector<16x128xf32>
    %27 = tpu.matmul %26, %24, %cst_15 {dimension_numbers = #tpu.dot_dimension_numbers<[1], [0], [0], [1], [0, 0, 1, 1], [], []>} : vector<16x24xbf16>, vector<24x128xbf16>, vector<16x128xf32> -> vector<16x128xf32>
    %28 = vector.extract_strided_slice %6 {offsets = [0, 1], sizes = [24, 128], strides = [1, 1]} : vector<24x256xbf16> to vector<24x128xbf16>
    %c1_16 = arith.constant 1 : index
    %c0_17 = arith.constant 0 : index
    %c0_18 = arith.constant 0 : index
    %29 = vector.load %arg4[%c1_16, %c0_17, %c0_18] : memref<3x16x24xbf16, #tpu.memory_space<vmem>>, vector<1x16x24xbf16>
    %30 = vector.shape_cast %29 : vector<1x16x24xbf16> to vector<16x24xbf16>
    %cst_19 = arith.constant dense<0.000000e+00> : vector<16x128xf32>
    %31 = tpu.matmul %30, %28, %cst_19 {dimension_numbers = #tpu.dot_dimension_numbers<[1], [0], [0], [1], [0, 0, 1, 1], [], []>} : vector<16x24xbf16>, vector<24x128xbf16>, vector<16x128xf32> -> vector<16x128xf32>
    %32 = arith.addf %27, %31 : vector<16x128xf32>
    %33 = vector.extract_strided_slice %9 {offsets = [0, 1], sizes = [24, 128], strides = [1, 1]} : vector<24x256xbf16> to vector<24x128xbf16>
    %c2_20 = arith.constant 2 : index
    %c0_21 = arith.constant 0 : index
    %c0_22 = arith.constant 0 : index
    %34 = vector.load %arg4[%c2_20, %c0_21, %c0_22] : memref<3x16x24xbf16, #tpu.memory_space<vmem>>, vector<1x16x24xbf16>
    %35 = vector.shape_cast %34 : vector<1x16x24xbf16> to vector<16x24xbf16>
    %cst_23 = arith.constant dense<0.000000e+00> : vector<16x128xf32>
    %36 = tpu.matmul %35, %33, %cst_23 {dimension_numbers = #tpu.dot_dimension_numbers<[1], [0], [0], [1], [0, 0, 1, 1], [], []>} : vector<16x24xbf16>, vector<24x128xbf16>, vector<16x128xf32> -> vector<16x128xf32>
    %37 = arith.addf %32, %36 : vector<16x128xf32>
    %38 = arith.maximumf %23, %37 : vector<16x128xf32>
    %c2_i32_24 = arith.constant 2 : i32
    %39 = arith.muli %c2_i32_24, %arg1 : i32
    %c1_i32 = arith.constant 1 : i32
    %40 = arith.addi %39, %c1_i32 : i32
    %c8_i32_25 = arith.constant 8 : i32
    %41 = arith.muli %40, %c8_i32_25 : i32
    %42 = tpu.assume_multiple %41, 8 : i32
    %c0_26 = arith.constant 0 : index
    %43 = arith.index_cast %42 : i32 to index
    %c0_27 = arith.constant 0 : index
    %44 = vector.load %arg2[%c0_26, %43, %c0_27] : memref<1x80x256xbf16, #tpu.memory_space<vmem>>, vector<1x24x256xbf16>
    %45 = vector.shape_cast %44 : vector<1x24x256xbf16> to vector<24x256xbf16>
    %c0_28 = arith.constant 0 : index
    %46 = arith.index_cast %42 : i32 to index
    %c0_29 = arith.constant 0 : index
    %47 = vector.load %arg3[%c0_28, %46, %c0_29] : memref<1x80x256xbf16, #tpu.memory_space<vmem>>, vector<1x24x256xbf16>
    %48 = vector.shape_cast %47 : vector<1x24x256xbf16> to vector<24x256xbf16>
    %49 = vector.extract_strided_slice %45 {offsets = [0, 0], sizes = [24, 128], strides = [1, 1]} : vector<24x256xbf16> to vector<24x128xbf16>
    %c0_30 = arith.constant 0 : index
    %c0_31 = arith.constant 0 : index
    %c0_32 = arith.constant 0 : index
    %50 = vector.load %arg4[%c0_30, %c0_31, %c0_32] : memref<3x16x24xbf16, #tpu.memory_space<vmem>>, vector<1x16x24xbf16>
    %51 = vector.shape_cast %50 : vector<1x16x24xbf16> to vector<16x24xbf16>
    %cst_33 = arith.constant dense<0.000000e+00> : vector<16x128xf32>
    %52 = tpu.matmul %51, %49, %cst_33 {dimension_numbers = #tpu.dot_dimension_numbers<[1], [0], [0], [1], [0, 0, 1, 1], [], []>} : vector<16x24xbf16>, vector<24x128xbf16>, vector<16x128xf32> -> vector<16x128xf32>
    %53 = vector.extract_strided_slice %48 {offsets = [0, 0], sizes = [24, 128], strides = [1, 1]} : vector<24x256xbf16> to vector<24x128xbf16>
    %c1_34 = arith.constant 1 : index
    %c0_35 = arith.constant 0 : index
    %c0_36 = arith.constant 0 : index
    %54 = vector.load %arg4[%c1_34, %c0_35, %c0_36] : memref<3x16x24xbf16, #tpu.memory_space<vmem>>, vector<1x16x24xbf16>
    %55 = vector.shape_cast %54 : vector<1x16x24xbf16> to vector<16x24xbf16>
    %cst_37 = arith.constant dense<0.000000e+00> : vector<16x128xf32>
    %56 = tpu.matmul %55, %53, %cst_37 {dimension_numbers = #tpu.dot_dimension_numbers<[1], [0], [0], [1], [0, 0, 1, 1], [], []>} : vector<16x24xbf16>, vector<24x128xbf16>, vector<16x128xf32> -> vector<16x128xf32>
    %57 = arith.addf %52, %56 : vector<16x128xf32>
    %58 = vector.extract_strided_slice %45 {offsets = [0, 1], sizes = [24, 128], strides = [1, 1]} : vector<24x256xbf16> to vector<24x128xbf16>
    %c2_38 = arith.constant 2 : index
    %c0_39 = arith.constant 0 : index
    %c0_40 = arith.constant 0 : index
    %59 = vector.load %arg4[%c2_38, %c0_39, %c0_40] : memref<3x16x24xbf16, #tpu.memory_space<vmem>>, vector<1x16x24xbf16>
    %60 = vector.shape_cast %59 : vector<1x16x24xbf16> to vector<16x24xbf16>
    %cst_41 = arith.constant dense<0.000000e+00> : vector<16x128xf32>
    %61 = tpu.matmul %60, %58, %cst_41 {dimension_numbers = #tpu.dot_dimension_numbers<[1], [0], [0], [1], [0, 0, 1, 1], [], []>} : vector<16x24xbf16>, vector<24x128xbf16>, vector<16x128xf32> -> vector<16x128xf32>
    %62 = arith.addf %57, %61 : vector<16x128xf32>
    %63 = arith.maximumf %38, %62 : vector<16x128xf32>
    %64 = vector.extract_strided_slice %48 {offsets = [0, 0], sizes = [24, 128], strides = [1, 1]} : vector<24x256xbf16> to vector<24x128xbf16>
    %c0_42 = arith.constant 0 : index
    %c0_43 = arith.constant 0 : index
    %c0_44 = arith.constant 0 : index
    %65 = vector.load %arg4[%c0_42, %c0_43, %c0_44] : memref<3x16x24xbf16, #tpu.memory_space<vmem>>, vector<1x16x24xbf16>
    %66 = vector.shape_cast %65 : vector<1x16x24xbf16> to vector<16x24xbf16>
    %cst_45 = arith.constant dense<0.000000e+00> : vector<16x128xf32>
    %67 = tpu.matmul %66, %64, %cst_45 {dimension_numbers = #tpu.dot_dimension_numbers<[1], [0], [0], [1], [0, 0, 1, 1], [], []>} : vector<16x24xbf16>, vector<24x128xbf16>, vector<16x128xf32> -> vector<16x128xf32>
    %68 = vector.extract_strided_slice %45 {offsets = [0, 1], sizes = [24, 128], strides = [1, 1]} : vector<24x256xbf16> to vector<24x128xbf16>
    %c1_46 = arith.constant 1 : index
    %c0_47 = arith.constant 0 : index
    %c0_48 = arith.constant 0 : index
    %69 = vector.load %arg4[%c1_46, %c0_47, %c0_48] : memref<3x16x24xbf16, #tpu.memory_space<vmem>>, vector<1x16x24xbf16>
    %70 = vector.shape_cast %69 : vector<1x16x24xbf16> to vector<16x24xbf16>
    %cst_49 = arith.constant dense<0.000000e+00> : vector<16x128xf32>
    %71 = tpu.matmul %70, %68, %cst_49 {dimension_numbers = #tpu.dot_dimension_numbers<[1], [0], [0], [1], [0, 0, 1, 1], [], []>} : vector<16x24xbf16>, vector<24x128xbf16>, vector<16x128xf32> -> vector<16x128xf32>
    %72 = arith.addf %67, %71 : vector<16x128xf32>
    %73 = vector.extract_strided_slice %48 {offsets = [0, 1], sizes = [24, 128], strides = [1, 1]} : vector<24x256xbf16> to vector<24x128xbf16>
    %c2_50 = arith.constant 2 : index
    %c0_51 = arith.constant 0 : index
    %c0_52 = arith.constant 0 : index
    %74 = vector.load %arg4[%c2_50, %c0_51, %c0_52] : memref<3x16x24xbf16, #tpu.memory_space<vmem>>, vector<1x16x24xbf16>
    %75 = vector.shape_cast %74 : vector<1x16x24xbf16> to vector<16x24xbf16>
    %cst_53 = arith.constant dense<0.000000e+00> : vector<16x128xf32>
    %76 = tpu.matmul %75, %73, %cst_53 {dimension_numbers = #tpu.dot_dimension_numbers<[1], [0], [0], [1], [0, 0, 1, 1], [], []>} : vector<16x24xbf16>, vector<24x128xbf16>, vector<16x128xf32> -> vector<16x128xf32>
    %77 = arith.addf %72, %76 : vector<16x128xf32>
    %78 = arith.maximumf %63, %77 : vector<16x128xf32>
    %c0_54 = arith.constant 0 : index
    %c0_55 = arith.constant 0 : index
    %79 = vector.load %arg5[%c0_54, %c0_55] : memref<16x1xf32, #tpu.memory_space<vmem>>, vector<16x1xf32>
    %80 = vector.broadcast %79 : vector<16x1xf32> to vector<16x128xf32>
    %81 = arith.addf %78, %80 : vector<16x128xf32>
    %cst_56 = arith.constant 0.000000e+00 : f32
    %82 = vector.broadcast %cst_56 : f32 to vector<16x128xf32>
    %83 = arith.maximumf %81, %82 : vector<16x128xf32>
    %84 = arith.truncf %83 : vector<16x128xf32> to vector<16x128xbf16>
    %c0_57 = arith.constant 0 : index
    %c0_58 = arith.constant 0 : index
    %c0_59 = arith.constant 0 : index
    %c0_60 = arith.constant 0 : index
    %85 = vector.load %arg6[%c0_57, %c0_58, %c0_59, %c0_60] : memref<1x1x16x128xbf16, #tpu.memory_space<vmem>>, vector<1x1x16x128xbf16>
    %86 = vector.shape_cast %85 : vector<1x1x16x128xbf16> to vector<16x128xbf16>
    %87 = vector.shape_cast %84 : vector<16x128xbf16> to vector<1x1x16x128xbf16>
    tpu.vector_store %arg6[%c0_57, %c0_58, %c0_59, %c0_60], %87 {strides = array<i32>} : memref<1x1x16x128xbf16, #tpu.memory_space<vmem>>, vector<1x1x16x128xbf16>,
    return
  }
  func.func @transform_0(%arg0: i32, %arg1: i32) -> (i32, i32, i32) {
    %c0_i32 = arith.constant 0 : i32
    %c0_i32_0 = arith.constant 0 : i32
    %c0_i32_1 = arith.constant 0 : i32
    return %arg0, %c0_i32, %c0_i32_0 : i32, i32, i32
  }
  func.func @transform_1(%arg0: i32, %arg1: i32) -> (i32, i32, i32) {
    %c0_i32 = arith.constant 0 : i32
    %c0_i32_0 = arith.constant 0 : i32
    %c0_i32_1 = arith.constant 0 : i32
    return %arg0, %c0_i32, %c0_i32_0 : i32, i32, i32
  }
  func.func @transform_2(%arg0: i32, %arg1: i32) -> (i32, i32, i32) {
    %c0_i32 = arith.constant 0 : i32
    %c0_i32_0 = arith.constant 0 : i32
    %c0_i32_1 = arith.constant 0 : i32
    %c0_i32_2 = arith.constant 0 : i32
    return %c0_i32, %c0_i32_0, %c0_i32_1 : i32, i32, i32
  }
  func.func @transform_3(%arg0: i32, %arg1: i32) -> (i32, i32) {
    %c0_i32 = arith.constant 0 : i32
    %c0_i32_0 = arith.constant 0 : i32
    %c0_i32_1 = arith.constant 0 : i32
    return %c0_i32, %c0_i32_0 : i32, i32
  }
  func.func @transform_4(%arg0: i32, %arg1: i32) -> (i32, i32, i32, i32) {
    %c0_i32 = arith.constant 0 : i32
    %c0_i32_0 = arith.constant 0 : i32
    %c0_i32_1 = arith.constant 0 : i32
    return %arg0, %arg1, %c0_i32, %c0_i32_0 : i32, i32, i32, i32
  }
}

module attributes {stable_mosaic.version = 11 : i64} {
  func.func @_proj_pe_kernel(%arg0: i32, %arg1: memref<16x64xbf16, #tpu.memory_space<vmem>>, %arg2: memref<64x32xbf16, #tpu.memory_space<vmem>>, %arg3: memref<1x32xf32, #tpu.memory_space<vmem>>, %arg4: memref<16x32xf32, #tpu.memory_space<vmem>>, %arg5: memref<16x32xbf16, #tpu.memory_space<vmem>>) attributes {dimension_semantics = [#tpu.dimension_semantics<parallel>], iteration_bounds = array<i64: 2>, scalar_prefetch = 0 : i64, scratch_operands = 0 : i64, tpu.core_type = #tpu.core_type<tc>, window_params = [{transform_indices = @transform_0, window_bounds = array<i64: 16, 64>}, {pipeline_mode = #tpu.pipeline_mode<synchronous>, transform_indices = @transform_1, window_bounds = array<i64: 64, 32>}, {pipeline_mode = #tpu.pipeline_mode<synchronous>, transform_indices = @transform_2, window_bounds = array<i64: 1, 32>}, {pipeline_mode = #tpu.pipeline_mode<synchronous>, transform_indices = @transform_3, window_bounds = array<i64: 16, 32>}, {transform_indices = @transform_4, window_bounds = array<i64: 16, 32>}]} {
    %c0 = arith.constant 0 : index
    %c0_0 = arith.constant 0 : index
    %0 = vector.load %arg1[%c0, %c0_0] : memref<16x64xbf16, #tpu.memory_space<vmem>>, vector<16x64xbf16>
    %c0_1 = arith.constant 0 : index
    %c0_2 = arith.constant 0 : index
    %1 = vector.load %arg2[%c0_1, %c0_2] : memref<64x32xbf16, #tpu.memory_space<vmem>>, vector<64x32xbf16>
    %cst = arith.constant dense<0.000000e+00> : vector<16x32xf32>
    %2 = tpu.matmul %0, %1, %cst {dimension_numbers = #tpu.dot_dimension_numbers<[1], [0], [0], [1], [0, 0, 1, 1], [], []>} : vector<16x64xbf16>, vector<64x32xbf16>, vector<16x32xf32> -> vector<16x32xf32>
    %c0_3 = arith.constant 0 : index
    %c0_4 = arith.constant 0 : index
    %3 = vector.load %arg3[%c0_3, %c0_4] : memref<1x32xf32, #tpu.memory_space<vmem>>, vector<1x32xf32>
    %4 = vector.broadcast %3 : vector<1x32xf32> to vector<16x32xf32>
    %5 = arith.addf %2, %4 : vector<16x32xf32>
    %c0_5 = arith.constant 0 : index
    %c0_6 = arith.constant 0 : index
    %6 = vector.load %arg4[%c0_5, %c0_6] : memref<16x32xf32, #tpu.memory_space<vmem>>, vector<16x32xf32>
    %7 = arith.addf %5, %6 : vector<16x32xf32>
    %8 = arith.truncf %7 : vector<16x32xf32> to vector<16x32xbf16>
    %c0_7 = arith.constant 0 : index
    %c0_8 = arith.constant 0 : index
    %9 = vector.load %arg5[%c0_7, %c0_8] : memref<16x32xbf16, #tpu.memory_space<vmem>>, vector<16x32xbf16>
    tpu.vector_store %arg5[%c0_7, %c0_8], %8 {strides = array<i32>} : memref<16x32xbf16, #tpu.memory_space<vmem>>, vector<16x32xbf16>,
    return
  }
  func.func @transform_0(%arg0: i32) -> (i32, i32) {
    %c0_i32 = arith.constant 0 : i32
    %c0_i32_0 = arith.constant 0 : i32
    return %arg0, %c0_i32 : i32, i32
  }
  func.func @transform_1(%arg0: i32) -> (i32, i32) {
    %c0_i32 = arith.constant 0 : i32
    %c0_i32_0 = arith.constant 0 : i32
    %c0_i32_1 = arith.constant 0 : i32
    return %c0_i32, %c0_i32_0 : i32, i32
  }
  func.func @transform_2(%arg0: i32) -> (i32, i32) {
    %c0_i32 = arith.constant 0 : i32
    %c0_i32_0 = arith.constant 0 : i32
    %c0_i32_1 = arith.constant 0 : i32
    return %c0_i32, %c0_i32_0 : i32, i32
  }
  func.func @transform_3(%arg0: i32) -> (i32, i32) {
    %c0_i32 = arith.constant 0 : i32
    %c0_i32_0 = arith.constant 0 : i32
    %c0_i32_1 = arith.constant 0 : i32
    return %c0_i32, %c0_i32_0 : i32, i32
  }
  func.func @transform_4(%arg0: i32) -> (i32, i32) {
    %c0_i32 = arith.constant 0 : i32
    %c0_i32_0 = arith.constant 0 : i32
    return %arg0, %c0_i32 : i32, i32
  }
}

module attributes {stable_mosaic.version = 11 : i64} {
  func.func @_encoder_layer_kernel(%arg0: i32, %arg1: memref<16x32xbf16, #tpu.memory_space<vmem>>, %arg2: memref<32x96xbf16, #tpu.memory_space<vmem>>, %arg3: memref<1x96xf32, #tpu.memory_space<vmem>>, %arg4: memref<32x32xbf16, #tpu.memory_space<vmem>>, %arg5: memref<1x32xf32, #tpu.memory_space<vmem>>, %arg6: memref<1x32xf32, #tpu.memory_space<vmem>>, %arg7: memref<1x32xf32, #tpu.memory_space<vmem>>, %arg8: memref<32x64xbf16, #tpu.memory_space<vmem>>, %arg9: memref<1x64xf32, #tpu.memory_space<vmem>>, %arg10: memref<64x32xbf16, #tpu.memory_space<vmem>>, %arg11: memref<1x32xf32, #tpu.memory_space<vmem>>, %arg12: memref<1x32xf32, #tpu.memory_space<vmem>>, %arg13: memref<1x32xf32, #tpu.memory_space<vmem>>, %arg14: memref<16x32xbf16, #tpu.memory_space<vmem>>) attributes {dimension_semantics = [#tpu.dimension_semantics<parallel>], iteration_bounds = array<i64: 2>, scalar_prefetch = 0 : i64, scratch_operands = 0 : i64, tpu.core_type = #tpu.core_type<tc>, window_params = [{transform_indices = @transform_0, window_bounds = array<i64: 16, 32>}, {pipeline_mode = #tpu.pipeline_mode<synchronous>, transform_indices = @transform_1, window_bounds = array<i64: 32, 96>}, {pipeline_mode = #tpu.pipeline_mode<synchronous>, transform_indices = @transform_2, window_bounds = array<i64: 1, 96>}, {pipeline_mode = #tpu.pipeline_mode<synchronous>, transform_indices = @transform_3, window_bounds = array<i64: 32, 32>}, {pipeline_mode = #tpu.pipeline_mode<synchronous>, transform_indices = @transform_4, window_bounds = array<i64: 1, 32>}, {pipeline_mode = #tpu.pipeline_mode<synchronous>, transform_indices = @transform_5, window_bounds = array<i64: 1, 32>}, {pipeline_mode = #tpu.pipeline_mode<synchronous>, transform_indices = @transform_6, window_bounds = array<i64: 1, 32>}, {pipeline_mode = #tpu.pipeline_mode<synchronous>, transform_indices = @transform_7, window_bounds = array<i64: 32, 64>}, {pipeline_mode = #tpu.pipeline_mode<synchronous>, transform_indices = @transform_8, window_bounds = array<i64: 1, 64>}, {pipeline_mode = #tpu.pipeline_mode<synchronous>, transform_indices = @transform_9, window_bounds = array<i64: 64, 32>}, {pipeline_mode = #tpu.pipeline_mode<synchronous>, transform_indices = @transform_10, window_bounds = array<i64: 1, 32>}, {pipeline_mode = #tpu.pipeline_mode<synchronous>, transform_indices = @transform_11, window_bounds = array<i64: 1, 32>}, {pipeline_mode = #tpu.pipeline_mode<synchronous>, transform_indices = @transform_12, window_bounds = array<i64: 1, 32>}, {transform_indices = @transform_13, window_bounds = array<i64: 16, 32>}]} {
    %c0 = arith.constant 0 : index
    %c0_0 = arith.constant 0 : index
    %0 = vector.load %arg1[%c0, %c0_0] : memref<16x32xbf16, #tpu.memory_space<vmem>>, vector<16x32xbf16>
    %1 = arith.extf %0 : vector<16x32xbf16> to vector<16x32xf32>
    %c0_1 = arith.constant 0 : index
    %c0_2 = arith.constant 0 : index
    %2 = vector.load %arg2[%c0_1, %c0_2] : memref<32x96xbf16, #tpu.memory_space<vmem>>, vector<32x96xbf16>
    %cst = arith.constant dense<0.000000e+00> : vector<16x96xf32>
    %3 = tpu.matmul %0, %2, %cst {dimension_numbers = #tpu.dot_dimension_numbers<[1], [0], [0], [1], [0, 0, 1, 1], [], []>} : vector<16x32xbf16>, vector<32x96xbf16>, vector<16x96xf32> -> vector<16x96xf32>
    %c0_3 = arith.constant 0 : index
    %c0_4 = arith.constant 0 : index
    %4 = vector.load %arg3[%c0_3, %c0_4] : memref<1x96xf32, #tpu.memory_space<vmem>>, vector<1x96xf32>
    %5 = vector.broadcast %4 : vector<1x96xf32> to vector<16x96xf32>
    %6 = arith.addf %3, %5 : vector<16x96xf32>
    %7 = arith.truncf %6 : vector<16x96xf32> to vector<16x96xbf16>
    %8 = vector.extract_strided_slice %7 {offsets = [0, 0], sizes = [16, 8], strides = [1, 1]} : vector<16x96xbf16> to vector<16x8xbf16>
    %9 = vector.extract_strided_slice %7 {offsets = [0, 32], sizes = [16, 8], strides = [1, 1]} : vector<16x96xbf16> to vector<16x8xbf16>
    %10 = vector.extract_strided_slice %7 {offsets = [0, 64], sizes = [16, 8], strides = [1, 1]} : vector<16x96xbf16> to vector<16x8xbf16>
    %cst_5 = arith.constant dense<0.000000e+00> : vector<16x16xf32>
    %11 = tpu.matmul %8, %9, %cst_5 {dimension_numbers = #tpu.dot_dimension_numbers<[1], [1], [0], [0], [0, 0, 1, 0], [], []>} : vector<16x8xbf16>, vector<16x8xbf16>, vector<16x16xf32> -> vector<16x16xf32>
    %cst_6 = arith.constant 0.353553385 : f32
    %12 = vector.broadcast %cst_6 : f32 to vector<16x16xf32>
    %13 = arith.mulf %11, %12 : vector<16x16xf32>
    %cst_7 = arith.constant dense<0xFF800000> : vector<16xf32>
    %14 = vector.multi_reduction <maximumf>, %13, %cst_7 [1] : vector<16x16xf32> to vector<16xf32>
    %15 = vector.shape_cast %14 : vector<16xf32> to vector<16x1xf32>
    %16 = vector.broadcast %15 : vector<16x1xf32> to vector<16x16xf32>
    %17 = arith.subf %13, %16 : vector<16x16xf32>
    %18 = math.exp %17 : vector<16x16xf32>
    %cst_8 = arith.constant dense<0.000000e+00> : vector<16xf32>
    %19 = vector.multi_reduction <add>, %18, %cst_8 [1] : vector<16x16xf32> to vector<16xf32>
    %20 = vector.shape_cast %19 : vector<16xf32> to vector<16x1xf32>
    %21 = tpu.reciprocal %20 {approx = true} : vector<16x1xf32> -> vector<16x1xf32>
    %22 = vector.broadcast %21 : vector<16x1xf32> to vector<16x16xf32>
    %23 = arith.mulf %18, %22 : vector<16x16xf32>
    %24 = arith.truncf %23 : vector<16x16xf32> to vector<16x16xbf16>
    %cst_9 = arith.constant dense<0.000000e+00> : vector<16x8xf32>
    %25 = tpu.matmul %24, %10, %cst_9 {dimension_numbers = #tpu.dot_dimension_numbers<[1], [0], [0], [1], [0, 0, 1, 1], [], []>} : vector<16x16xbf16>, vector<16x8xbf16>, vector<16x8xf32> -> vector<16x8xf32>
    %26 = arith.truncf %25 : vector<16x8xf32> to vector<16x8xbf16>
    %c0_10 = arith.constant 0 : index
    %c0_11 = arith.constant 0 : index
    %27 = vector.load %arg4[%c0_10, %c0_11] : memref<32x32xbf16, #tpu.memory_space<vmem>>, vector<8x32xbf16>
    %cst_12 = arith.constant dense<0.000000e+00> : vector<16x32xf32>
    %28 = tpu.matmul %26, %27, %cst_12 {dimension_numbers = #tpu.dot_dimension_numbers<[1], [0], [0], [1], [0, 0, 1, 1], [], []>} : vector<16x8xbf16>, vector<8x32xbf16>, vector<16x32xf32> -> vector<16x32xf32>
    %29 = vector.extract_strided_slice %7 {offsets = [0, 8], sizes = [16, 8], strides = [1, 1]} : vector<16x96xbf16> to vector<16x8xbf16>
    %30 = vector.extract_strided_slice %7 {offsets = [0, 40], sizes = [16, 8], strides = [1, 1]} : vector<16x96xbf16> to vector<16x8xbf16>
    %31 = vector.extract_strided_slice %7 {offsets = [0, 72], sizes = [16, 8], strides = [1, 1]} : vector<16x96xbf16> to vector<16x8xbf16>
    %cst_13 = arith.constant dense<0.000000e+00> : vector<16x16xf32>
    %32 = tpu.matmul %29, %30, %cst_13 {dimension_numbers = #tpu.dot_dimension_numbers<[1], [1], [0], [0], [0, 0, 1, 0], [], []>} : vector<16x8xbf16>, vector<16x8xbf16>, vector<16x16xf32> -> vector<16x16xf32>
    %cst_14 = arith.constant 0.353553385 : f32
    %33 = vector.broadcast %cst_14 : f32 to vector<16x16xf32>
    %34 = arith.mulf %32, %33 : vector<16x16xf32>
    %cst_15 = arith.constant dense<0xFF800000> : vector<16xf32>
    %35 = vector.multi_reduction <maximumf>, %34, %cst_15 [1] : vector<16x16xf32> to vector<16xf32>
    %36 = vector.shape_cast %35 : vector<16xf32> to vector<16x1xf32>
    %37 = vector.broadcast %36 : vector<16x1xf32> to vector<16x16xf32>
    %38 = arith.subf %34, %37 : vector<16x16xf32>
    %39 = math.exp %38 : vector<16x16xf32>
    %cst_16 = arith.constant dense<0.000000e+00> : vector<16xf32>
    %40 = vector.multi_reduction <add>, %39, %cst_16 [1] : vector<16x16xf32> to vector<16xf32>
    %41 = vector.shape_cast %40 : vector<16xf32> to vector<16x1xf32>
    %42 = tpu.reciprocal %41 {approx = true} : vector<16x1xf32> -> vector<16x1xf32>
    %43 = vector.broadcast %42 : vector<16x1xf32> to vector<16x16xf32>
    %44 = arith.mulf %39, %43 : vector<16x16xf32>
    %45 = arith.truncf %44 : vector<16x16xf32> to vector<16x16xbf16>
    %cst_17 = arith.constant dense<0.000000e+00> : vector<16x8xf32>
    %46 = tpu.matmul %45, %31, %cst_17 {dimension_numbers = #tpu.dot_dimension_numbers<[1], [0], [0], [1], [0, 0, 1, 1], [], []>} : vector<16x16xbf16>, vector<16x8xbf16>, vector<16x8xf32> -> vector<16x8xf32>
    %47 = arith.truncf %46 : vector<16x8xf32> to vector<16x8xbf16>
    %c8 = arith.constant 8 : index
    %c0_18 = arith.constant 0 : index
    %48 = vector.load %arg4[%c8, %c0_18] : memref<32x32xbf16, #tpu.memory_space<vmem>>, vector<8x32xbf16>
    %cst_19 = arith.constant dense<0.000000e+00> : vector<16x32xf32>
    %49 = tpu.matmul %47, %48, %cst_19 {dimension_numbers = #tpu.dot_dimension_numbers<[1], [0], [0], [1], [0, 0, 1, 1], [], []>} : vector<16x8xbf16>, vector<8x32xbf16>, vector<16x32xf32> -> vector<16x32xf32>
    %50 = arith.addf %28, %49 : vector<16x32xf32>
    %51 = vector.extract_strided_slice %7 {offsets = [0, 16], sizes = [16, 8], strides = [1, 1]} : vector<16x96xbf16> to vector<16x8xbf16>
    %52 = vector.extract_strided_slice %7 {offsets = [0, 48], sizes = [16, 8], strides = [1, 1]} : vector<16x96xbf16> to vector<16x8xbf16>
    %53 = vector.extract_strided_slice %7 {offsets = [0, 80], sizes = [16, 8], strides = [1, 1]} : vector<16x96xbf16> to vector<16x8xbf16>
    %cst_20 = arith.constant dense<0.000000e+00> : vector<16x16xf32>
    %54 = tpu.matmul %51, %52, %cst_20 {dimension_numbers = #tpu.dot_dimension_numbers<[1], [1], [0], [0], [0, 0, 1, 0], [], []>} : vector<16x8xbf16>, vector<16x8xbf16>, vector<16x16xf32> -> vector<16x16xf32>
    %cst_21 = arith.constant 0.353553385 : f32
    %55 = vector.broadcast %cst_21 : f32 to vector<16x16xf32>
    %56 = arith.mulf %54, %55 : vector<16x16xf32>
    %cst_22 = arith.constant dense<0xFF800000> : vector<16xf32>
    %57 = vector.multi_reduction <maximumf>, %56, %cst_22 [1] : vector<16x16xf32> to vector<16xf32>
    %58 = vector.shape_cast %57 : vector<16xf32> to vector<16x1xf32>
    %59 = vector.broadcast %58 : vector<16x1xf32> to vector<16x16xf32>
    %60 = arith.subf %56, %59 : vector<16x16xf32>
    %61 = math.exp %60 : vector<16x16xf32>
    %cst_23 = arith.constant dense<0.000000e+00> : vector<16xf32>
    %62 = vector.multi_reduction <add>, %61, %cst_23 [1] : vector<16x16xf32> to vector<16xf32>
    %63 = vector.shape_cast %62 : vector<16xf32> to vector<16x1xf32>
    %64 = tpu.reciprocal %63 {approx = true} : vector<16x1xf32> -> vector<16x1xf32>
    %65 = vector.broadcast %64 : vector<16x1xf32> to vector<16x16xf32>
    %66 = arith.mulf %61, %65 : vector<16x16xf32>
    %67 = arith.truncf %66 : vector<16x16xf32> to vector<16x16xbf16>
    %cst_24 = arith.constant dense<0.000000e+00> : vector<16x8xf32>
    %68 = tpu.matmul %67, %53, %cst_24 {dimension_numbers = #tpu.dot_dimension_numbers<[1], [0], [0], [1], [0, 0, 1, 1], [], []>} : vector<16x16xbf16>, vector<16x8xbf16>, vector<16x8xf32> -> vector<16x8xf32>
    %69 = arith.truncf %68 : vector<16x8xf32> to vector<16x8xbf16>
    %c16 = arith.constant 16 : index
    %c0_25 = arith.constant 0 : index
    %70 = vector.load %arg4[%c16, %c0_25] : memref<32x32xbf16, #tpu.memory_space<vmem>>, vector<8x32xbf16>
    %cst_26 = arith.constant dense<0.000000e+00> : vector<16x32xf32>
    %71 = tpu.matmul %69, %70, %cst_26 {dimension_numbers = #tpu.dot_dimension_numbers<[1], [0], [0], [1], [0, 0, 1, 1], [], []>} : vector<16x8xbf16>, vector<8x32xbf16>, vector<16x32xf32> -> vector<16x32xf32>
    %72 = arith.addf %50, %71 : vector<16x32xf32>
    %73 = vector.extract_strided_slice %7 {offsets = [0, 24], sizes = [16, 8], strides = [1, 1]} : vector<16x96xbf16> to vector<16x8xbf16>
    %74 = vector.extract_strided_slice %7 {offsets = [0, 56], sizes = [16, 8], strides = [1, 1]} : vector<16x96xbf16> to vector<16x8xbf16>
    %75 = vector.extract_strided_slice %7 {offsets = [0, 88], sizes = [16, 8], strides = [1, 1]} : vector<16x96xbf16> to vector<16x8xbf16>
    %cst_27 = arith.constant dense<0.000000e+00> : vector<16x16xf32>
    %76 = tpu.matmul %73, %74, %cst_27 {dimension_numbers = #tpu.dot_dimension_numbers<[1], [1], [0], [0], [0, 0, 1, 0], [], []>} : vector<16x8xbf16>, vector<16x8xbf16>, vector<16x16xf32> -> vector<16x16xf32>
    %cst_28 = arith.constant 0.353553385 : f32
    %77 = vector.broadcast %cst_28 : f32 to vector<16x16xf32>
    %78 = arith.mulf %76, %77 : vector<16x16xf32>
    %cst_29 = arith.constant dense<0xFF800000> : vector<16xf32>
    %79 = vector.multi_reduction <maximumf>, %78, %cst_29 [1] : vector<16x16xf32> to vector<16xf32>
    %80 = vector.shape_cast %79 : vector<16xf32> to vector<16x1xf32>
    %81 = vector.broadcast %80 : vector<16x1xf32> to vector<16x16xf32>
    %82 = arith.subf %78, %81 : vector<16x16xf32>
    %83 = math.exp %82 : vector<16x16xf32>
    %cst_30 = arith.constant dense<0.000000e+00> : vector<16xf32>
    %84 = vector.multi_reduction <add>, %83, %cst_30 [1] : vector<16x16xf32> to vector<16xf32>
    %85 = vector.shape_cast %84 : vector<16xf32> to vector<16x1xf32>
    %86 = tpu.reciprocal %85 {approx = true} : vector<16x1xf32> -> vector<16x1xf32>
    %87 = vector.broadcast %86 : vector<16x1xf32> to vector<16x16xf32>
    %88 = arith.mulf %83, %87 : vector<16x16xf32>
    %89 = arith.truncf %88 : vector<16x16xf32> to vector<16x16xbf16>
    %cst_31 = arith.constant dense<0.000000e+00> : vector<16x8xf32>
    %90 = tpu.matmul %89, %75, %cst_31 {dimension_numbers = #tpu.dot_dimension_numbers<[1], [0], [0], [1], [0, 0, 1, 1], [], []>} : vector<16x16xbf16>, vector<16x8xbf16>, vector<16x8xf32> -> vector<16x8xf32>
    %91 = arith.truncf %90 : vector<16x8xf32> to vector<16x8xbf16>
    %c24 = arith.constant 24 : index
    %c0_32 = arith.constant 0 : index
    %92 = vector.load %arg4[%c24, %c0_32] : memref<32x32xbf16, #tpu.memory_space<vmem>>, vector<8x32xbf16>
    %cst_33 = arith.constant dense<0.000000e+00> : vector<16x32xf32>
    %93 = tpu.matmul %91, %92, %cst_33 {dimension_numbers = #tpu.dot_dimension_numbers<[1], [0], [0], [1], [0, 0, 1, 1], [], []>} : vector<16x8xbf16>, vector<8x32xbf16>, vector<16x32xf32> -> vector<16x32xf32>
    %94 = arith.addf %72, %93 : vector<16x32xf32>
    %c0_34 = arith.constant 0 : index
    %c0_35 = arith.constant 0 : index
    %95 = vector.load %arg5[%c0_34, %c0_35] : memref<1x32xf32, #tpu.memory_space<vmem>>, vector<1x32xf32>
    %96 = vector.broadcast %95 : vector<1x32xf32> to vector<16x32xf32>
    %97 = arith.addf %94, %96 : vector<16x32xf32>
    %98 = arith.addf %1, %97 : vector<16x32xf32>
    %cst_36 = arith.constant dense<0.000000e+00> : vector<16xf32>
    %99 = vector.multi_reduction <add>, %98, %cst_36 [1] : vector<16x32xf32> to vector<16xf32>
    %100 = vector.shape_cast %99 : vector<16xf32> to vector<16x1xf32>
    %cst_37 = arith.constant 3.200000e+01 : f32
    %101 = vector.broadcast %cst_37 : f32 to vector<16x1xf32>
    %102 = arith.divf %100, %101 : vector<16x1xf32>
    %103 = vector.broadcast %102 : vector<16x1xf32> to vector<16x32xf32>
    %104 = arith.subf %98, %103 : vector<16x32xf32>
    %105 = arith.mulf %104, %104 : vector<16x32xf32>
    %cst_38 = arith.constant dense<0.000000e+00> : vector<16xf32>
    %106 = vector.multi_reduction <add>, %105, %cst_38 [1] : vector<16x32xf32> to vector<16xf32>
    %107 = vector.shape_cast %106 : vector<16xf32> to vector<16x1xf32>
    %cst_39 = arith.constant 3.200000e+01 : f32
    %108 = vector.broadcast %cst_39 : f32 to vector<16x1xf32>
    %109 = arith.divf %107, %108 : vector<16x1xf32>
    %cst_40 = arith.constant 9.99999974E-6 : f32
    %110 = vector.broadcast %cst_40 : f32 to vector<16x1xf32>
    %111 = arith.addf %109, %110 : vector<16x1xf32>
    %112 = math.rsqrt %111 : vector<16x1xf32>
    %113 = vector.broadcast %112 : vector<16x1xf32> to vector<16x32xf32>
    %114 = arith.mulf %104, %113 : vector<16x32xf32>
    %c0_41 = arith.constant 0 : index
    %c0_42 = arith.constant 0 : index
    %115 = vector.load %arg6[%c0_41, %c0_42] : memref<1x32xf32, #tpu.memory_space<vmem>>, vector<1x32xf32>
    %116 = vector.broadcast %115 : vector<1x32xf32> to vector<16x32xf32>
    %117 = arith.mulf %114, %116 : vector<16x32xf32>
    %c0_43 = arith.constant 0 : index
    %c0_44 = arith.constant 0 : index
    %118 = vector.load %arg7[%c0_43, %c0_44] : memref<1x32xf32, #tpu.memory_space<vmem>>, vector<1x32xf32>
    %119 = vector.broadcast %118 : vector<1x32xf32> to vector<16x32xf32>
    %120 = arith.addf %117, %119 : vector<16x32xf32>
    %121 = arith.truncf %120 : vector<16x32xf32> to vector<16x32xbf16>
    %c0_45 = arith.constant 0 : index
    %c0_46 = arith.constant 0 : index
    %122 = vector.load %arg8[%c0_45, %c0_46] : memref<32x64xbf16, #tpu.memory_space<vmem>>, vector<32x64xbf16>
    %cst_47 = arith.constant dense<0.000000e+00> : vector<16x64xf32>
    %123 = tpu.matmul %121, %122, %cst_47 {dimension_numbers = #tpu.dot_dimension_numbers<[1], [0], [0], [1], [0, 0, 1, 1], [], []>} : vector<16x32xbf16>, vector<32x64xbf16>, vector<16x64xf32> -> vector<16x64xf32>
    %c0_48 = arith.constant 0 : index
    %c0_49 = arith.constant 0 : index
    %124 = vector.load %arg9[%c0_48, %c0_49] : memref<1x64xf32, #tpu.memory_space<vmem>>, vector<1x64xf32>
    %125 = vector.broadcast %124 : vector<1x64xf32> to vector<16x64xf32>
    %126 = arith.addf %123, %125 : vector<16x64xf32>
    %cst_50 = arith.constant 0.000000e+00 : f32
    %127 = vector.broadcast %cst_50 : f32 to vector<16x64xf32>
    %128 = arith.maximumf %126, %127 : vector<16x64xf32>
    %129 = arith.truncf %128 : vector<16x64xf32> to vector<16x64xbf16>
    %c0_51 = arith.constant 0 : index
    %c0_52 = arith.constant 0 : index
    %130 = vector.load %arg10[%c0_51, %c0_52] : memref<64x32xbf16, #tpu.memory_space<vmem>>, vector<64x32xbf16>
    %cst_53 = arith.constant dense<0.000000e+00> : vector<16x32xf32>
    %131 = tpu.matmul %129, %130, %cst_53 {dimension_numbers = #tpu.dot_dimension_numbers<[1], [0], [0], [1], [0, 0, 1, 1], [], []>} : vector<16x64xbf16>, vector<64x32xbf16>, vector<16x32xf32> -> vector<16x32xf32>
    %c0_54 = arith.constant 0 : index
    %c0_55 = arith.constant 0 : index
    %132 = vector.load %arg11[%c0_54, %c0_55] : memref<1x32xf32, #tpu.memory_space<vmem>>, vector<1x32xf32>
    %133 = vector.broadcast %132 : vector<1x32xf32> to vector<16x32xf32>
    %134 = arith.addf %131, %133 : vector<16x32xf32>
    %135 = arith.addf %120, %134 : vector<16x32xf32>
    %cst_56 = arith.constant dense<0.000000e+00> : vector<16xf32>
    %136 = vector.multi_reduction <add>, %135, %cst_56 [1] : vector<16x32xf32> to vector<16xf32>
    %137 = vector.shape_cast %136 : vector<16xf32> to vector<16x1xf32>
    %cst_57 = arith.constant 3.200000e+01 : f32
    %138 = vector.broadcast %cst_57 : f32 to vector<16x1xf32>
    %139 = arith.divf %137, %138 : vector<16x1xf32>
    %140 = vector.broadcast %139 : vector<16x1xf32> to vector<16x32xf32>
    %141 = arith.subf %135, %140 : vector<16x32xf32>
    %142 = arith.mulf %141, %141 : vector<16x32xf32>
    %cst_58 = arith.constant dense<0.000000e+00> : vector<16xf32>
    %143 = vector.multi_reduction <add>, %142, %cst_58 [1] : vector<16x32xf32> to vector<16xf32>
    %144 = vector.shape_cast %143 : vector<16xf32> to vector<16x1xf32>
    %cst_59 = arith.constant 3.200000e+01 : f32
    %145 = vector.broadcast %cst_59 : f32 to vector<16x1xf32>
    %146 = arith.divf %144, %145 : vector<16x1xf32>
    %cst_60 = arith.constant 9.99999974E-6 : f32
    %147 = vector.broadcast %cst_60 : f32 to vector<16x1xf32>
    %148 = arith.addf %146, %147 : vector<16x1xf32>
    %149 = math.rsqrt %148 : vector<16x1xf32>
    %150 = vector.broadcast %149 : vector<16x1xf32> to vector<16x32xf32>
    %151 = arith.mulf %141, %150 : vector<16x32xf32>
    %c0_61 = arith.constant 0 : index
    %c0_62 = arith.constant 0 : index
    %152 = vector.load %arg12[%c0_61, %c0_62] : memref<1x32xf32, #tpu.memory_space<vmem>>, vector<1x32xf32>
    %153 = vector.broadcast %152 : vector<1x32xf32> to vector<16x32xf32>
    %154 = arith.mulf %151, %153 : vector<16x32xf32>
    %c0_63 = arith.constant 0 : index
    %c0_64 = arith.constant 0 : index
    %155 = vector.load %arg13[%c0_63, %c0_64] : memref<1x32xf32, #tpu.memory_space<vmem>>, vector<1x32xf32>
    %156 = vector.broadcast %155 : vector<1x32xf32> to vector<16x32xf32>
    %157 = arith.addf %154, %156 : vector<16x32xf32>
    %158 = arith.truncf %157 : vector<16x32xf32> to vector<16x32xbf16>
    %c0_65 = arith.constant 0 : index
    %c0_66 = arith.constant 0 : index
    %159 = vector.load %arg14[%c0_65, %c0_66] : memref<16x32xbf16, #tpu.memory_space<vmem>>, vector<16x32xbf16>
    tpu.vector_store %arg14[%c0_65, %c0_66], %158 {strides = array<i32>} : memref<16x32xbf16, #tpu.memory_space<vmem>>, vector<16x32xbf16>,
    return
  }
  func.func @transform_0(%arg0: i32) -> (i32, i32) {
    %c0_i32 = arith.constant 0 : i32
    %c0_i32_0 = arith.constant 0 : i32
    return %arg0, %c0_i32 : i32, i32
  }
  func.func @transform_1(%arg0: i32) -> (i32, i32) {
    %c0_i32 = arith.constant 0 : i32
    %c0_i32_0 = arith.constant 0 : i32
    %c0_i32_1 = arith.constant 0 : i32
    return %c0_i32, %c0_i32_0 : i32, i32
  }
  func.func @transform_2(%arg0: i32) -> (i32, i32) {
    %c0_i32 = arith.constant 0 : i32
    %c0_i32_0 = arith.constant 0 : i32
    %c0_i32_1 = arith.constant 0 : i32
    return %c0_i32, %c0_i32_0 : i32, i32
  }
  func.func @transform_3(%arg0: i32) -> (i32, i32) {
    %c0_i32 = arith.constant 0 : i32
    %c0_i32_0 = arith.constant 0 : i32
    %c0_i32_1 = arith.constant 0 : i32
    return %c0_i32, %c0_i32_0 : i32, i32
  }
  func.func @transform_4(%arg0: i32) -> (i32, i32) {
    %c0_i32 = arith.constant 0 : i32
    %c0_i32_0 = arith.constant 0 : i32
    %c0_i32_1 = arith.constant 0 : i32
    return %c0_i32, %c0_i32_0 : i32, i32
  }
  func.func @transform_5(%arg0: i32) -> (i32, i32) {
    %c0_i32 = arith.constant 0 : i32
    %c0_i32_0 = arith.constant 0 : i32
    %c0_i32_1 = arith.constant 0 : i32
    return %c0_i32, %c0_i32_0 : i32, i32
  }
  func.func @transform_6(%arg0: i32) -> (i32, i32) {
    %c0_i32 = arith.constant 0 : i32
    %c0_i32_0 = arith.constant 0 : i32
    %c0_i32_1 = arith.constant 0 : i32
    return %c0_i32, %c0_i32_0 : i32, i32
  }
  func.func @transform_7(%arg0: i32) -> (i32, i32) {
    %c0_i32 = arith.constant 0 : i32
    %c0_i32_0 = arith.constant 0 : i32
    %c0_i32_1 = arith.constant 0 : i32
    return %c0_i32, %c0_i32_0 : i32, i32
  }
  func.func @transform_8(%arg0: i32) -> (i32, i32) {
    %c0_i32 = arith.constant 0 : i32
    %c0_i32_0 = arith.constant 0 : i32
    %c0_i32_1 = arith.constant 0 : i32
    return %c0_i32, %c0_i32_0 : i32, i32
  }
  func.func @transform_9(%arg0: i32) -> (i32, i32) {
    %c0_i32 = arith.constant 0 : i32
    %c0_i32_0 = arith.constant 0 : i32
    %c0_i32_1 = arith.constant 0 : i32
    return %c0_i32, %c0_i32_0 : i32, i32
  }
  func.func @transform_10(%arg0: i32) -> (i32, i32) {
    %c0_i32 = arith.constant 0 : i32
    %c0_i32_0 = arith.constant 0 : i32
    %c0_i32_1 = arith.constant 0 : i32
    return %c0_i32, %c0_i32_0 : i32, i32
  }
  func.func @transform_11(%arg0: i32) -> (i32, i32) {
    %c0_i32 = arith.constant 0 : i32
    %c0_i32_0 = arith.constant 0 : i32
    %c0_i32_1 = arith.constant 0 : i32
    return %c0_i32, %c0_i32_0 : i32, i32
  }
  func.func @transform_12(%arg0: i32) -> (i32, i32) {
    %c0_i32 = arith.constant 0 : i32
    %c0_i32_0 = arith.constant 0 : i32
    %c0_i32_1 = arith.constant 0 : i32
    return %c0_i32, %c0_i32_0 : i32, i32
  }
  func.func @transform_13(%arg0: i32) -> (i32, i32) {
    %c0_i32 = arith.constant 0 : i32
    %c0_i32_0 = arith.constant 0 : i32
    return %arg0, %c0_i32 : i32, i32
  }
}

module attributes {stable_mosaic.version = 11 : i64} {
  func.func @_encoder_layer_kernel(%arg0: i32, %arg1: memref<16x32xbf16, #tpu.memory_space<vmem>>, %arg2: memref<32x96xbf16, #tpu.memory_space<vmem>>, %arg3: memref<1x96xf32, #tpu.memory_space<vmem>>, %arg4: memref<32x32xbf16, #tpu.memory_space<vmem>>, %arg5: memref<1x32xf32, #tpu.memory_space<vmem>>, %arg6: memref<1x32xf32, #tpu.memory_space<vmem>>, %arg7: memref<1x32xf32, #tpu.memory_space<vmem>>, %arg8: memref<32x64xbf16, #tpu.memory_space<vmem>>, %arg9: memref<1x64xf32, #tpu.memory_space<vmem>>, %arg10: memref<64x32xbf16, #tpu.memory_space<vmem>>, %arg11: memref<1x32xf32, #tpu.memory_space<vmem>>, %arg12: memref<1x32xf32, #tpu.memory_space<vmem>>, %arg13: memref<1x32xf32, #tpu.memory_space<vmem>>, %arg14: memref<32x128xbf16, #tpu.memory_space<vmem>>, %arg15: memref<1x128xf32, #tpu.memory_space<vmem>>, %arg16: memref<16x128xf32, #tpu.memory_space<vmem>>) attributes {dimension_semantics = [#tpu.dimension_semantics<parallel>], iteration_bounds = array<i64: 2>, scalar_prefetch = 0 : i64, scratch_operands = 0 : i64, tpu.core_type = #tpu.core_type<tc>, window_params = [{transform_indices = @transform_0, window_bounds = array<i64: 16, 32>}, {pipeline_mode = #tpu.pipeline_mode<synchronous>, transform_indices = @transform_1, window_bounds = array<i64: 32, 96>}, {pipeline_mode = #tpu.pipeline_mode<synchronous>, transform_indices = @transform_2, window_bounds = array<i64: 1, 96>}, {pipeline_mode = #tpu.pipeline_mode<synchronous>, transform_indices = @transform_3, window_bounds = array<i64: 32, 32>}, {pipeline_mode = #tpu.pipeline_mode<synchronous>, transform_indices = @transform_4, window_bounds = array<i64: 1, 32>}, {pipeline_mode = #tpu.pipeline_mode<synchronous>, transform_indices = @transform_5, window_bounds = array<i64: 1, 32>}, {pipeline_mode = #tpu.pipeline_mode<synchronous>, transform_indices = @transform_6, window_bounds = array<i64: 1, 32>}, {pipeline_mode = #tpu.pipeline_mode<synchronous>, transform_indices = @transform_7, window_bounds = array<i64: 32, 64>}, {pipeline_mode = #tpu.pipeline_mode<synchronous>, transform_indices = @transform_8, window_bounds = array<i64: 1, 64>}, {pipeline_mode = #tpu.pipeline_mode<synchronous>, transform_indices = @transform_9, window_bounds = array<i64: 64, 32>}, {pipeline_mode = #tpu.pipeline_mode<synchronous>, transform_indices = @transform_10, window_bounds = array<i64: 1, 32>}, {pipeline_mode = #tpu.pipeline_mode<synchronous>, transform_indices = @transform_11, window_bounds = array<i64: 1, 32>}, {pipeline_mode = #tpu.pipeline_mode<synchronous>, transform_indices = @transform_12, window_bounds = array<i64: 1, 32>}, {pipeline_mode = #tpu.pipeline_mode<synchronous>, transform_indices = @transform_13, window_bounds = array<i64: 32, 128>}, {pipeline_mode = #tpu.pipeline_mode<synchronous>, transform_indices = @transform_14, window_bounds = array<i64: 1, 128>}, {transform_indices = @transform_15, window_bounds = array<i64: 16, 128>}]} {
    %c0 = arith.constant 0 : index
    %c0_0 = arith.constant 0 : index
    %0 = vector.load %arg1[%c0, %c0_0] : memref<16x32xbf16, #tpu.memory_space<vmem>>, vector<16x32xbf16>
    %1 = arith.extf %0 : vector<16x32xbf16> to vector<16x32xf32>
    %c0_1 = arith.constant 0 : index
    %c0_2 = arith.constant 0 : index
    %2 = vector.load %arg2[%c0_1, %c0_2] : memref<32x96xbf16, #tpu.memory_space<vmem>>, vector<32x96xbf16>
    %cst = arith.constant dense<0.000000e+00> : vector<16x96xf32>
    %3 = tpu.matmul %0, %2, %cst {dimension_numbers = #tpu.dot_dimension_numbers<[1], [0], [0], [1], [0, 0, 1, 1], [], []>} : vector<16x32xbf16>, vector<32x96xbf16>, vector<16x96xf32> -> vector<16x96xf32>
    %c0_3 = arith.constant 0 : index
    %c0_4 = arith.constant 0 : index
    %4 = vector.load %arg3[%c0_3, %c0_4] : memref<1x96xf32, #tpu.memory_space<vmem>>, vector<1x96xf32>
    %5 = vector.broadcast %4 : vector<1x96xf32> to vector<16x96xf32>
    %6 = arith.addf %3, %5 : vector<16x96xf32>
    %7 = arith.truncf %6 : vector<16x96xf32> to vector<16x96xbf16>
    %8 = vector.extract_strided_slice %7 {offsets = [0, 0], sizes = [16, 8], strides = [1, 1]} : vector<16x96xbf16> to vector<16x8xbf16>
    %9 = vector.extract_strided_slice %7 {offsets = [0, 32], sizes = [16, 8], strides = [1, 1]} : vector<16x96xbf16> to vector<16x8xbf16>
    %10 = vector.extract_strided_slice %7 {offsets = [0, 64], sizes = [16, 8], strides = [1, 1]} : vector<16x96xbf16> to vector<16x8xbf16>
    %cst_5 = arith.constant dense<0.000000e+00> : vector<16x16xf32>
    %11 = tpu.matmul %8, %9, %cst_5 {dimension_numbers = #tpu.dot_dimension_numbers<[1], [1], [0], [0], [0, 0, 1, 0], [], []>} : vector<16x8xbf16>, vector<16x8xbf16>, vector<16x16xf32> -> vector<16x16xf32>
    %cst_6 = arith.constant 0.353553385 : f32
    %12 = vector.broadcast %cst_6 : f32 to vector<16x16xf32>
    %13 = arith.mulf %11, %12 : vector<16x16xf32>
    %cst_7 = arith.constant dense<0xFF800000> : vector<16xf32>
    %14 = vector.multi_reduction <maximumf>, %13, %cst_7 [1] : vector<16x16xf32> to vector<16xf32>
    %15 = vector.shape_cast %14 : vector<16xf32> to vector<16x1xf32>
    %16 = vector.broadcast %15 : vector<16x1xf32> to vector<16x16xf32>
    %17 = arith.subf %13, %16 : vector<16x16xf32>
    %18 = math.exp %17 : vector<16x16xf32>
    %cst_8 = arith.constant dense<0.000000e+00> : vector<16xf32>
    %19 = vector.multi_reduction <add>, %18, %cst_8 [1] : vector<16x16xf32> to vector<16xf32>
    %20 = vector.shape_cast %19 : vector<16xf32> to vector<16x1xf32>
    %21 = tpu.reciprocal %20 {approx = true} : vector<16x1xf32> -> vector<16x1xf32>
    %22 = vector.broadcast %21 : vector<16x1xf32> to vector<16x16xf32>
    %23 = arith.mulf %18, %22 : vector<16x16xf32>
    %24 = arith.truncf %23 : vector<16x16xf32> to vector<16x16xbf16>
    %cst_9 = arith.constant dense<0.000000e+00> : vector<16x8xf32>
    %25 = tpu.matmul %24, %10, %cst_9 {dimension_numbers = #tpu.dot_dimension_numbers<[1], [0], [0], [1], [0, 0, 1, 1], [], []>} : vector<16x16xbf16>, vector<16x8xbf16>, vector<16x8xf32> -> vector<16x8xf32>
    %26 = arith.truncf %25 : vector<16x8xf32> to vector<16x8xbf16>
    %c0_10 = arith.constant 0 : index
    %c0_11 = arith.constant 0 : index
    %27 = vector.load %arg4[%c0_10, %c0_11] : memref<32x32xbf16, #tpu.memory_space<vmem>>, vector<8x32xbf16>
    %cst_12 = arith.constant dense<0.000000e+00> : vector<16x32xf32>
    %28 = tpu.matmul %26, %27, %cst_12 {dimension_numbers = #tpu.dot_dimension_numbers<[1], [0], [0], [1], [0, 0, 1, 1], [], []>} : vector<16x8xbf16>, vector<8x32xbf16>, vector<16x32xf32> -> vector<16x32xf32>
    %29 = vector.extract_strided_slice %7 {offsets = [0, 8], sizes = [16, 8], strides = [1, 1]} : vector<16x96xbf16> to vector<16x8xbf16>
    %30 = vector.extract_strided_slice %7 {offsets = [0, 40], sizes = [16, 8], strides = [1, 1]} : vector<16x96xbf16> to vector<16x8xbf16>
    %31 = vector.extract_strided_slice %7 {offsets = [0, 72], sizes = [16, 8], strides = [1, 1]} : vector<16x96xbf16> to vector<16x8xbf16>
    %cst_13 = arith.constant dense<0.000000e+00> : vector<16x16xf32>
    %32 = tpu.matmul %29, %30, %cst_13 {dimension_numbers = #tpu.dot_dimension_numbers<[1], [1], [0], [0], [0, 0, 1, 0], [], []>} : vector<16x8xbf16>, vector<16x8xbf16>, vector<16x16xf32> -> vector<16x16xf32>
    %cst_14 = arith.constant 0.353553385 : f32
    %33 = vector.broadcast %cst_14 : f32 to vector<16x16xf32>
    %34 = arith.mulf %32, %33 : vector<16x16xf32>
    %cst_15 = arith.constant dense<0xFF800000> : vector<16xf32>
    %35 = vector.multi_reduction <maximumf>, %34, %cst_15 [1] : vector<16x16xf32> to vector<16xf32>
    %36 = vector.shape_cast %35 : vector<16xf32> to vector<16x1xf32>
    %37 = vector.broadcast %36 : vector<16x1xf32> to vector<16x16xf32>
    %38 = arith.subf %34, %37 : vector<16x16xf32>
    %39 = math.exp %38 : vector<16x16xf32>
    %cst_16 = arith.constant dense<0.000000e+00> : vector<16xf32>
    %40 = vector.multi_reduction <add>, %39, %cst_16 [1] : vector<16x16xf32> to vector<16xf32>
    %41 = vector.shape_cast %40 : vector<16xf32> to vector<16x1xf32>
    %42 = tpu.reciprocal %41 {approx = true} : vector<16x1xf32> -> vector<16x1xf32>
    %43 = vector.broadcast %42 : vector<16x1xf32> to vector<16x16xf32>
    %44 = arith.mulf %39, %43 : vector<16x16xf32>
    %45 = arith.truncf %44 : vector<16x16xf32> to vector<16x16xbf16>
    %cst_17 = arith.constant dense<0.000000e+00> : vector<16x8xf32>
    %46 = tpu.matmul %45, %31, %cst_17 {dimension_numbers = #tpu.dot_dimension_numbers<[1], [0], [0], [1], [0, 0, 1, 1], [], []>} : vector<16x16xbf16>, vector<16x8xbf16>, vector<16x8xf32> -> vector<16x8xf32>
    %47 = arith.truncf %46 : vector<16x8xf32> to vector<16x8xbf16>
    %c8 = arith.constant 8 : index
    %c0_18 = arith.constant 0 : index
    %48 = vector.load %arg4[%c8, %c0_18] : memref<32x32xbf16, #tpu.memory_space<vmem>>, vector<8x32xbf16>
    %cst_19 = arith.constant dense<0.000000e+00> : vector<16x32xf32>
    %49 = tpu.matmul %47, %48, %cst_19 {dimension_numbers = #tpu.dot_dimension_numbers<[1], [0], [0], [1], [0, 0, 1, 1], [], []>} : vector<16x8xbf16>, vector<8x32xbf16>, vector<16x32xf32> -> vector<16x32xf32>
    %50 = arith.addf %28, %49 : vector<16x32xf32>
    %51 = vector.extract_strided_slice %7 {offsets = [0, 16], sizes = [16, 8], strides = [1, 1]} : vector<16x96xbf16> to vector<16x8xbf16>
    %52 = vector.extract_strided_slice %7 {offsets = [0, 48], sizes = [16, 8], strides = [1, 1]} : vector<16x96xbf16> to vector<16x8xbf16>
    %53 = vector.extract_strided_slice %7 {offsets = [0, 80], sizes = [16, 8], strides = [1, 1]} : vector<16x96xbf16> to vector<16x8xbf16>
    %cst_20 = arith.constant dense<0.000000e+00> : vector<16x16xf32>
    %54 = tpu.matmul %51, %52, %cst_20 {dimension_numbers = #tpu.dot_dimension_numbers<[1], [1], [0], [0], [0, 0, 1, 0], [], []>} : vector<16x8xbf16>, vector<16x8xbf16>, vector<16x16xf32> -> vector<16x16xf32>
    %cst_21 = arith.constant 0.353553385 : f32
    %55 = vector.broadcast %cst_21 : f32 to vector<16x16xf32>
    %56 = arith.mulf %54, %55 : vector<16x16xf32>
    %cst_22 = arith.constant dense<0xFF800000> : vector<16xf32>
    %57 = vector.multi_reduction <maximumf>, %56, %cst_22 [1] : vector<16x16xf32> to vector<16xf32>
    %58 = vector.shape_cast %57 : vector<16xf32> to vector<16x1xf32>
    %59 = vector.broadcast %58 : vector<16x1xf32> to vector<16x16xf32>
    %60 = arith.subf %56, %59 : vector<16x16xf32>
    %61 = math.exp %60 : vector<16x16xf32>
    %cst_23 = arith.constant dense<0.000000e+00> : vector<16xf32>
    %62 = vector.multi_reduction <add>, %61, %cst_23 [1] : vector<16x16xf32> to vector<16xf32>
    %63 = vector.shape_cast %62 : vector<16xf32> to vector<16x1xf32>
    %64 = tpu.reciprocal %63 {approx = true} : vector<16x1xf32> -> vector<16x1xf32>
    %65 = vector.broadcast %64 : vector<16x1xf32> to vector<16x16xf32>
    %66 = arith.mulf %61, %65 : vector<16x16xf32>
    %67 = arith.truncf %66 : vector<16x16xf32> to vector<16x16xbf16>
    %cst_24 = arith.constant dense<0.000000e+00> : vector<16x8xf32>
    %68 = tpu.matmul %67, %53, %cst_24 {dimension_numbers = #tpu.dot_dimension_numbers<[1], [0], [0], [1], [0, 0, 1, 1], [], []>} : vector<16x16xbf16>, vector<16x8xbf16>, vector<16x8xf32> -> vector<16x8xf32>
    %69 = arith.truncf %68 : vector<16x8xf32> to vector<16x8xbf16>
    %c16 = arith.constant 16 : index
    %c0_25 = arith.constant 0 : index
    %70 = vector.load %arg4[%c16, %c0_25] : memref<32x32xbf16, #tpu.memory_space<vmem>>, vector<8x32xbf16>
    %cst_26 = arith.constant dense<0.000000e+00> : vector<16x32xf32>
    %71 = tpu.matmul %69, %70, %cst_26 {dimension_numbers = #tpu.dot_dimension_numbers<[1], [0], [0], [1], [0, 0, 1, 1], [], []>} : vector<16x8xbf16>, vector<8x32xbf16>, vector<16x32xf32> -> vector<16x32xf32>
    %72 = arith.addf %50, %71 : vector<16x32xf32>
    %73 = vector.extract_strided_slice %7 {offsets = [0, 24], sizes = [16, 8], strides = [1, 1]} : vector<16x96xbf16> to vector<16x8xbf16>
    %74 = vector.extract_strided_slice %7 {offsets = [0, 56], sizes = [16, 8], strides = [1, 1]} : vector<16x96xbf16> to vector<16x8xbf16>
    %75 = vector.extract_strided_slice %7 {offsets = [0, 88], sizes = [16, 8], strides = [1, 1]} : vector<16x96xbf16> to vector<16x8xbf16>
    %cst_27 = arith.constant dense<0.000000e+00> : vector<16x16xf32>
    %76 = tpu.matmul %73, %74, %cst_27 {dimension_numbers = #tpu.dot_dimension_numbers<[1], [1], [0], [0], [0, 0, 1, 0], [], []>} : vector<16x8xbf16>, vector<16x8xbf16>, vector<16x16xf32> -> vector<16x16xf32>
    %cst_28 = arith.constant 0.353553385 : f32
    %77 = vector.broadcast %cst_28 : f32 to vector<16x16xf32>
    %78 = arith.mulf %76, %77 : vector<16x16xf32>
    %cst_29 = arith.constant dense<0xFF800000> : vector<16xf32>
    %79 = vector.multi_reduction <maximumf>, %78, %cst_29 [1] : vector<16x16xf32> to vector<16xf32>
    %80 = vector.shape_cast %79 : vector<16xf32> to vector<16x1xf32>
    %81 = vector.broadcast %80 : vector<16x1xf32> to vector<16x16xf32>
    %82 = arith.subf %78, %81 : vector<16x16xf32>
    %83 = math.exp %82 : vector<16x16xf32>
    %cst_30 = arith.constant dense<0.000000e+00> : vector<16xf32>
    %84 = vector.multi_reduction <add>, %83, %cst_30 [1] : vector<16x16xf32> to vector<16xf32>
    %85 = vector.shape_cast %84 : vector<16xf32> to vector<16x1xf32>
    %86 = tpu.reciprocal %85 {approx = true} : vector<16x1xf32> -> vector<16x1xf32>
    %87 = vector.broadcast %86 : vector<16x1xf32> to vector<16x16xf32>
    %88 = arith.mulf %83, %87 : vector<16x16xf32>
    %89 = arith.truncf %88 : vector<16x16xf32> to vector<16x16xbf16>
    %cst_31 = arith.constant dense<0.000000e+00> : vector<16x8xf32>
    %90 = tpu.matmul %89, %75, %cst_31 {dimension_numbers = #tpu.dot_dimension_numbers<[1], [0], [0], [1], [0, 0, 1, 1], [], []>} : vector<16x16xbf16>, vector<16x8xbf16>, vector<16x8xf32> -> vector<16x8xf32>
    %91 = arith.truncf %90 : vector<16x8xf32> to vector<16x8xbf16>
    %c24 = arith.constant 24 : index
    %c0_32 = arith.constant 0 : index
    %92 = vector.load %arg4[%c24, %c0_32] : memref<32x32xbf16, #tpu.memory_space<vmem>>, vector<8x32xbf16>
    %cst_33 = arith.constant dense<0.000000e+00> : vector<16x32xf32>
    %93 = tpu.matmul %91, %92, %cst_33 {dimension_numbers = #tpu.dot_dimension_numbers<[1], [0], [0], [1], [0, 0, 1, 1], [], []>} : vector<16x8xbf16>, vector<8x32xbf16>, vector<16x32xf32> -> vector<16x32xf32>
    %94 = arith.addf %72, %93 : vector<16x32xf32>
    %c0_34 = arith.constant 0 : index
    %c0_35 = arith.constant 0 : index
    %95 = vector.load %arg5[%c0_34, %c0_35] : memref<1x32xf32, #tpu.memory_space<vmem>>, vector<1x32xf32>
    %96 = vector.broadcast %95 : vector<1x32xf32> to vector<16x32xf32>
    %97 = arith.addf %94, %96 : vector<16x32xf32>
    %98 = arith.addf %1, %97 : vector<16x32xf32>
    %cst_36 = arith.constant dense<0.000000e+00> : vector<16xf32>
    %99 = vector.multi_reduction <add>, %98, %cst_36 [1] : vector<16x32xf32> to vector<16xf32>
    %100 = vector.shape_cast %99 : vector<16xf32> to vector<16x1xf32>
    %cst_37 = arith.constant 3.200000e+01 : f32
    %101 = vector.broadcast %cst_37 : f32 to vector<16x1xf32>
    %102 = arith.divf %100, %101 : vector<16x1xf32>
    %103 = vector.broadcast %102 : vector<16x1xf32> to vector<16x32xf32>
    %104 = arith.subf %98, %103 : vector<16x32xf32>
    %105 = arith.mulf %104, %104 : vector<16x32xf32>
    %cst_38 = arith.constant dense<0.000000e+00> : vector<16xf32>
    %106 = vector.multi_reduction <add>, %105, %cst_38 [1] : vector<16x32xf32> to vector<16xf32>
    %107 = vector.shape_cast %106 : vector<16xf32> to vector<16x1xf32>
    %cst_39 = arith.constant 3.200000e+01 : f32
    %108 = vector.broadcast %cst_39 : f32 to vector<16x1xf32>
    %109 = arith.divf %107, %108 : vector<16x1xf32>
    %cst_40 = arith.constant 9.99999974E-6 : f32
    %110 = vector.broadcast %cst_40 : f32 to vector<16x1xf32>
    %111 = arith.addf %109, %110 : vector<16x1xf32>
    %112 = math.rsqrt %111 : vector<16x1xf32>
    %113 = vector.broadcast %112 : vector<16x1xf32> to vector<16x32xf32>
    %114 = arith.mulf %104, %113 : vector<16x32xf32>
    %c0_41 = arith.constant 0 : index
    %c0_42 = arith.constant 0 : index
    %115 = vector.load %arg6[%c0_41, %c0_42] : memref<1x32xf32, #tpu.memory_space<vmem>>, vector<1x32xf32>
    %116 = vector.broadcast %115 : vector<1x32xf32> to vector<16x32xf32>
    %117 = arith.mulf %114, %116 : vector<16x32xf32>
    %c0_43 = arith.constant 0 : index
    %c0_44 = arith.constant 0 : index
    %118 = vector.load %arg7[%c0_43, %c0_44] : memref<1x32xf32, #tpu.memory_space<vmem>>, vector<1x32xf32>
    %119 = vector.broadcast %118 : vector<1x32xf32> to vector<16x32xf32>
    %120 = arith.addf %117, %119 : vector<16x32xf32>
    %121 = arith.truncf %120 : vector<16x32xf32> to vector<16x32xbf16>
    %c0_45 = arith.constant 0 : index
    %c0_46 = arith.constant 0 : index
    %122 = vector.load %arg8[%c0_45, %c0_46] : memref<32x64xbf16, #tpu.memory_space<vmem>>, vector<32x64xbf16>
    %cst_47 = arith.constant dense<0.000000e+00> : vector<16x64xf32>
    %123 = tpu.matmul %121, %122, %cst_47 {dimension_numbers = #tpu.dot_dimension_numbers<[1], [0], [0], [1], [0, 0, 1, 1], [], []>} : vector<16x32xbf16>, vector<32x64xbf16>, vector<16x64xf32> -> vector<16x64xf32>
    %c0_48 = arith.constant 0 : index
    %c0_49 = arith.constant 0 : index
    %124 = vector.load %arg9[%c0_48, %c0_49] : memref<1x64xf32, #tpu.memory_space<vmem>>, vector<1x64xf32>
    %125 = vector.broadcast %124 : vector<1x64xf32> to vector<16x64xf32>
    %126 = arith.addf %123, %125 : vector<16x64xf32>
    %cst_50 = arith.constant 0.000000e+00 : f32
    %127 = vector.broadcast %cst_50 : f32 to vector<16x64xf32>
    %128 = arith.maximumf %126, %127 : vector<16x64xf32>
    %129 = arith.truncf %128 : vector<16x64xf32> to vector<16x64xbf16>
    %c0_51 = arith.constant 0 : index
    %c0_52 = arith.constant 0 : index
    %130 = vector.load %arg10[%c0_51, %c0_52] : memref<64x32xbf16, #tpu.memory_space<vmem>>, vector<64x32xbf16>
    %cst_53 = arith.constant dense<0.000000e+00> : vector<16x32xf32>
    %131 = tpu.matmul %129, %130, %cst_53 {dimension_numbers = #tpu.dot_dimension_numbers<[1], [0], [0], [1], [0, 0, 1, 1], [], []>} : vector<16x64xbf16>, vector<64x32xbf16>, vector<16x32xf32> -> vector<16x32xf32>
    %c0_54 = arith.constant 0 : index
    %c0_55 = arith.constant 0 : index
    %132 = vector.load %arg11[%c0_54, %c0_55] : memref<1x32xf32, #tpu.memory_space<vmem>>, vector<1x32xf32>
    %133 = vector.broadcast %132 : vector<1x32xf32> to vector<16x32xf32>
    %134 = arith.addf %131, %133 : vector<16x32xf32>
    %135 = arith.addf %120, %134 : vector<16x32xf32>
    %cst_56 = arith.constant dense<0.000000e+00> : vector<16xf32>
    %136 = vector.multi_reduction <add>, %135, %cst_56 [1] : vector<16x32xf32> to vector<16xf32>
    %137 = vector.shape_cast %136 : vector<16xf32> to vector<16x1xf32>
    %cst_57 = arith.constant 3.200000e+01 : f32
    %138 = vector.broadcast %cst_57 : f32 to vector<16x1xf32>
    %139 = arith.divf %137, %138 : vector<16x1xf32>
    %140 = vector.broadcast %139 : vector<16x1xf32> to vector<16x32xf32>
    %141 = arith.subf %135, %140 : vector<16x32xf32>
    %142 = arith.mulf %141, %141 : vector<16x32xf32>
    %cst_58 = arith.constant dense<0.000000e+00> : vector<16xf32>
    %143 = vector.multi_reduction <add>, %142, %cst_58 [1] : vector<16x32xf32> to vector<16xf32>
    %144 = vector.shape_cast %143 : vector<16xf32> to vector<16x1xf32>
    %cst_59 = arith.constant 3.200000e+01 : f32
    %145 = vector.broadcast %cst_59 : f32 to vector<16x1xf32>
    %146 = arith.divf %144, %145 : vector<16x1xf32>
    %cst_60 = arith.constant 9.99999974E-6 : f32
    %147 = vector.broadcast %cst_60 : f32 to vector<16x1xf32>
    %148 = arith.addf %146, %147 : vector<16x1xf32>
    %149 = math.rsqrt %148 : vector<16x1xf32>
    %150 = vector.broadcast %149 : vector<16x1xf32> to vector<16x32xf32>
    %151 = arith.mulf %141, %150 : vector<16x32xf32>
    %c0_61 = arith.constant 0 : index
    %c0_62 = arith.constant 0 : index
    %152 = vector.load %arg12[%c0_61, %c0_62] : memref<1x32xf32, #tpu.memory_space<vmem>>, vector<1x32xf32>
    %153 = vector.broadcast %152 : vector<1x32xf32> to vector<16x32xf32>
    %154 = arith.mulf %151, %153 : vector<16x32xf32>
    %c0_63 = arith.constant 0 : index
    %c0_64 = arith.constant 0 : index
    %155 = vector.load %arg13[%c0_63, %c0_64] : memref<1x32xf32, #tpu.memory_space<vmem>>, vector<1x32xf32>
    %156 = vector.broadcast %155 : vector<1x32xf32> to vector<16x32xf32>
    %157 = arith.addf %154, %156 : vector<16x32xf32>
    %158 = arith.truncf %157 : vector<16x32xf32> to vector<16x32xbf16>
    %c0_65 = arith.constant 0 : index
    %c0_66 = arith.constant 0 : index
    %159 = vector.load %arg14[%c0_65, %c0_66] : memref<32x128xbf16, #tpu.memory_space<vmem>>, vector<32x128xbf16>
    %cst_67 = arith.constant dense<0.000000e+00> : vector<16x128xf32>
    %160 = tpu.matmul %158, %159, %cst_67 {dimension_numbers = #tpu.dot_dimension_numbers<[1], [0], [0], [1], [0, 0, 1, 1], [], []>} : vector<16x32xbf16>, vector<32x128xbf16>, vector<16x128xf32> -> vector<16x128xf32>
    %c0_68 = arith.constant 0 : index
    %c0_69 = arith.constant 0 : index
    %161 = vector.load %arg15[%c0_68, %c0_69] : memref<1x128xf32, #tpu.memory_space<vmem>>, vector<1x128xf32>
    %162 = vector.broadcast %161 : vector<1x128xf32> to vector<16x128xf32>
    %163 = arith.addf %160, %162 : vector<16x128xf32>
    %c0_70 = arith.constant 0 : index
    %c0_71 = arith.constant 0 : index
    %164 = vector.load %arg16[%c0_70, %c0_71] : memref<16x128xf32, #tpu.memory_space<vmem>>, vector<16x128xf32>
    tpu.vector_store %arg16[%c0_70, %c0_71], %163 {strides = array<i32>} : memref<16x128xf32, #tpu.memory_space<vmem>>, vector<16x128xf32>,
    return
  }
  func.func @transform_0(%arg0: i32) -> (i32, i32) {
    %c0_i32 = arith.constant 0 : i32
    %c0_i32_0 = arith.constant 0 : i32
    return %arg0, %c0_i32 : i32, i32
  }
  func.func @transform_1(%arg0: i32) -> (i32, i32) {
    %c0_i32 = arith.constant 0 : i32
    %c0_i32_0 = arith.constant 0 : i32
    %c0_i32_1 = arith.constant 0 : i32
    return %c0_i32, %c0_i32_0 : i32, i32
  }
  func.func @transform_2(%arg0: i32) -> (i32, i32) {
    %c0_i32 = arith.constant 0 : i32
    %c0_i32_0 = arith.constant 0 : i32
    %c0_i32_1 = arith.constant 0 : i32
    return %c0_i32, %c0_i32_0 : i32, i32
  }
  func.func @transform_3(%arg0: i32) -> (i32, i32) {
    %c0_i32 = arith.constant 0 : i32
    %c0_i32_0 = arith.constant 0 : i32
    %c0_i32_1 = arith.constant 0 : i32
    return %c0_i32, %c0_i32_0 : i32, i32
  }
  func.func @transform_4(%arg0: i32) -> (i32, i32) {
    %c0_i32 = arith.constant 0 : i32
    %c0_i32_0 = arith.constant 0 : i32
    %c0_i32_1 = arith.constant 0 : i32
    return %c0_i32, %c0_i32_0 : i32, i32
  }
  func.func @transform_5(%arg0: i32) -> (i32, i32) {
    %c0_i32 = arith.constant 0 : i32
    %c0_i32_0 = arith.constant 0 : i32
    %c0_i32_1 = arith.constant 0 : i32
    return %c0_i32, %c0_i32_0 : i32, i32
  }
  func.func @transform_6(%arg0: i32) -> (i32, i32) {
    %c0_i32 = arith.constant 0 : i32
    %c0_i32_0 = arith.constant 0 : i32
    %c0_i32_1 = arith.constant 0 : i32
    return %c0_i32, %c0_i32_0 : i32, i32
  }
  func.func @transform_7(%arg0: i32) -> (i32, i32) {
    %c0_i32 = arith.constant 0 : i32
    %c0_i32_0 = arith.constant 0 : i32
    %c0_i32_1 = arith.constant 0 : i32
    return %c0_i32, %c0_i32_0 : i32, i32
  }
  func.func @transform_8(%arg0: i32) -> (i32, i32) {
    %c0_i32 = arith.constant 0 : i32
    %c0_i32_0 = arith.constant 0 : i32
    %c0_i32_1 = arith.constant 0 : i32
    return %c0_i32, %c0_i32_0 : i32, i32
  }
  func.func @transform_9(%arg0: i32) -> (i32, i32) {
    %c0_i32 = arith.constant 0 : i32
    %c0_i32_0 = arith.constant 0 : i32
    %c0_i32_1 = arith.constant 0 : i32
    return %c0_i32, %c0_i32_0 : i32, i32
  }
  func.func @transform_10(%arg0: i32) -> (i32, i32) {
    %c0_i32 = arith.constant 0 : i32
    %c0_i32_0 = arith.constant 0 : i32
    %c0_i32_1 = arith.constant 0 : i32
    return %c0_i32, %c0_i32_0 : i32, i32
  }
  func.func @transform_11(%arg0: i32) -> (i32, i32) {
    %c0_i32 = arith.constant 0 : i32
    %c0_i32_0 = arith.constant 0 : i32
    %c0_i32_1 = arith.constant 0 : i32
    return %c0_i32, %c0_i32_0 : i32, i32
  }
  func.func @transform_12(%arg0: i32) -> (i32, i32) {
    %c0_i32 = arith.constant 0 : i32
    %c0_i32_0 = arith.constant 0 : i32
    %c0_i32_1 = arith.constant 0 : i32
    return %c0_i32, %c0_i32_0 : i32, i32
  }
  func.func @transform_13(%arg0: i32) -> (i32, i32) {
    %c0_i32 = arith.constant 0 : i32
    %c0_i32_0 = arith.constant 0 : i32
    %c0_i32_1 = arith.constant 0 : i32
    return %c0_i32, %c0_i32_0 : i32, i32
  }
  func.func @transform_14(%arg0: i32) -> (i32, i32) {
    %c0_i32 = arith.constant 0 : i32
    %c0_i32_0 = arith.constant 0 : i32
    %c0_i32_1 = arith.constant 0 : i32
    return %c0_i32, %c0_i32_0 : i32, i32
  }
  func.func @transform_15(%arg0: i32) -> (i32, i32) {
    %c0_i32 = arith.constant 0 : i32
    %c0_i32_0 = arith.constant 0 : i32
    return %arg0, %c0_i32 : i32, i32
  }
}

</mosaic_0001>

<llo_original>
// kernel: transformer_ocr_forward.5
$region0: #{transformer_ocr_forward.5}
  #allocation0 [shape = 'u32[]', space=smem, size = 0x4, offset = 0x4, fixed_abs, tag = 'smem constant byte address 0x4 - core index']
  #allocation1 [shape = 'u32[144,128]{1,0:T(1,128)}', space=vmem, size = 0x12000, scoped, tag = 'internal scratch']
  %s0 = inlined_call_operand.vmem [shape: bf16[2,144,256], index: 0, kind: input, shape index: {}]
  %s1 = inlined_call_operand.vmem [shape: bf16[2,144,256], index: 1, kind: input, shape index: {}]
  %s2 = inlined_call_operand.vmem [shape: bf16[3,8,24], index: 2, kind: input, shape index: {}]
  %s3 = inlined_call_operand.vmem [shape: f32[8,1], index: 3, kind: input, shape index: {}]
  %s4 = inlined_call_operand.vmem [shape: bf16[2,8,8,128], index: 4, kind: output, shape index: {}]
  %s5 = sld [smem:[#allocation0]]
  $region49: #{transformer_ocr_forward.5} parent=0
    _
  %s7 = ssub.s32 1, %s5
  %s8 = scalar_select 0, %s7, %s5
  loop: start=0, step=1, limit=18
  $region2: #{transformer_ocr_forward.5} parent=0 // loop_pre_header
    _
  $region3: #{transformer_ocr_forward.5} parent=0 // loop_header
    %s10 = sphi 0, %s14
    %p11 = scmp.ge.s32.totalorder %s10, 18
    %s17 = sphi 0, %s29
    %s18 = sphi 0, %s25
    %s19 = sphi 0, %s17
    %s20 = sphi 0, %s18
    %s21 = sphi 0, %s19
    %s22 = sphi 0, %s20
    %s32 = sphi 0, %s34
    %s35 = sphi 0, %s32
    %s36 = sphi 0, %s35
    %s52 = sphi 0, %s36
    %s58 = sphi 0, %s60
    %s61 = sphi 0, %s58
    %s62 = sphi 0, %s61
    %s78 = sphi 0, %s62
    %s82 = sphi 0, %s82
    %s84 = sphi 0, %s82
    %s85 = sphi 0, %s84
    %s99 = sphi 0, %s85
    %s103 = sphi 0, %s103
    %s105 = sphi 0, %s103
    %s106 = sphi 0, %s105
    %s120 = sphi 0, %s106
    %s128 = sphi 0, %s130
    %s131 = sphi 0, %s128
    %s132 = sphi 0, %s131
    %s148 = sphi 0, %s132
  $region4: #{transformer_ocr_forward.5} parent=0 // loop_header_branch
    %13 = sbr.rel (%p11) target = $region8
  $region5: #{transformer_ocr_forward.5} parent=0 // loop_body
    %s15 = ssub.s32 %s10, 1
    %s16 = ssub.s32 %s10, 2
    %s23 = sadd.s32 1, %s18
    %p24 = scmp.ge.s32.totalorder %s23, 8
    %s25 = scalar_select %p24, 0, %s23
    %s26 = sadd.s32 1, %s17
    %s27 = scalar_select %p24, %s26, %s17
    %p28 = scmp.ge.s32.totalorder %s27, 2
    %s29 = scalar_select %p28, 0, %s27
    %s30 = ssub.s32 %s17, %s29
    %p31 = scmp.eq.s32.totalorder %s30, 0
    %s33 = sadd.s32 %s32, 1
    %s34 = scalar_select %p31, %s32, %s33
    %p37 = pneg %p31
    %p38 = scmp.eq.s32.totalorder %s10, 15
    %p39 = por %p37, %p38
    %p40 = scmp.ne.s32.totalorder %s32, %s35
    %p41 = scmp.eq.s32.totalorder %s10, 0
    %p42 = por %p40, %p41
    %p43 = scmp.ne.s32.totalorder %s32, %s35
    %p44 = scmp.eq.s32.totalorder %s15, 15
    %p45 = por %p43, %p44
    %p46 = scmp.ne.s32.totalorder %s35, %s36
    %p47 = scmp.eq.s32.totalorder %s15, 0
    %p48 = por %p46, %p47
    %p49 = scmp.ne.s32.totalorder %s35, %s36
    %p50 = scmp.eq.s32.totalorder %s16, 15
    %p51 = por %p49, %p50
    %p53 = scmp.ne.s32.totalorder %s36, %s52
    %p54 = scmp.eq.s32.totalorder %s16, 0
    %p55 = por %p53, %p54
    %s56 = ssub.s32 %s17, %s29
    %p57 = scmp.eq.s32.totalorder %s56, 0
    %s59 = sadd.s32 %s58, 1
    %s60 = scalar_select %p57, %s58, %s59
    %p63 = pneg %p57
    %p64 = scmp.eq.s32.totalorder %s10, 15
    %p65 = por %p63, %p64
    %p66 = scmp.ne.s32.totalorder %s58, %s61
    %p67 = scmp.eq.s32.totalorder %s10, 0
    %p68 = por %p66, %p67
    %p69 = scmp.ne.s32.totalorder %s58, %s61
    %p70 = scmp.eq.s32.totalorder %s15, 15
    %p71 = por %p69, %p70
    %p72 = scmp.ne.s32.totalorder %s61, %s62
    %p73 = scmp.eq.s32.totalorder %s15, 0
    %p74 = por %p72, %p73
    %p75 = scmp.ne.s32.totalorder %s61, %s62
    %p76 = scmp.eq.s32.totalorder %s16, 15
    %p77 = por %p75, %p76
    %p79 = scmp.ne.s32.totalorder %s62, %s78
    %p80 = scmp.eq.s32.totalorder %s16, 0
    %p81 = por %p79, %p80
    %s83 = sadd.s32 %s82, 1
    %p86 = scmp.eq.s32.totalorder %s10, 15
    %p87 = scmp.ne.s32.totalorder %s82, %s84
    %p88 = scmp.eq.s32.totalorder %s10, 0
    %p89 = por %p87, %p88
    %p90 = scmp.ne.s32.totalorder %s82, %s84
    %p91 = scmp.eq.s32.totalorder %s15, 15
    %p92 = por %p90, %p91
    %p93 = scmp.ne.s32.totalorder %s84, %s85
    %p94 = scmp.eq.s32.totalorder %s15, 0
    %p95 = por %p93, %p94
    %p96 = scmp.ne.s32.totalorder %s84, %s85
    %p97 = scmp.eq.s32.totalorder %s16, 15
    %p98 = por %p96, %p97
    %p100 = scmp.ne.s32.totalorder %s85, %s99
    %p101 = scmp.eq.s32.totalorder %s16, 0
    %p102 = por %p100, %p101
    %s104 = sadd.s32 %s103, 1
    %p107 = scmp.eq.s32.totalorder %s10, 15
    %p108 = scmp.ne.s32.totalorder %s103, %s105
    %p109 = scmp.eq.s32.totalorder %s10, 0
    %p110 = por %p108, %p109
    %p111 = scmp.ne.s32.totalorder %s103, %s105
    %p112 = scmp.eq.s32.totalorder %s15, 15
    %p113 = por %p111, %p112
    %p114 = scmp.ne.s32.totalorder %s105, %s106
    %p115 = scmp.eq.s32.totalorder %s15, 0
    %p116 = por %p114, %p115
    %p117 = scmp.ne.s32.totalorder %s105, %s106
    %p118 = scmp.eq.s32.totalorder %s16, 15
    %p119 = por %p117, %p118
    %p121 = scmp.ne.s32.totalorder %s106, %s120
    %p122 = scmp.eq.s32.totalorder %s16, 0
    %p123 = por %p121, %p122
    %s124 = ssub.s32 %s17, %s29
    %s125 = ssub.s32 %s18, %s25
    %s126 = sor.u32 %s124, %s125
    %p127 = scmp.eq.s32.totalorder %s126, 0
    %s129 = sadd.s32 %s128, 1
    %s130 = scalar_select %p127, %s128, %s129
    %p133 = pneg %p127
    %p134 = scmp.eq.s32.totalorder %s10, 15
    %p135 = por %p133, %p134
    %p136 = scmp.ne.s32.totalorder %s128, %s131
    %p137 = scmp.eq.s32.totalorder %s10, 0
    %p138 = por %p136, %p137
    %p139 = scmp.ne.s32.totalorder %s128, %s131
    %p140 = scmp.eq.s32.totalorder %s15, 15
    %p141 = por %p139, %p140
    %p142 = scmp.ne.s32.totalorder %s131, %s132
    %p143 = scmp.eq.s32.totalorder %s15, 0
    %p144 = por %p142, %p143
    %p145 = scmp.ne.s32.totalorder %s131, %s132
    %p146 = scmp.eq.s32.totalorder %s16, 15
    %p147 = por %p145, %p146
    %p149 = scmp.ne.s32.totalorder %s132, %s148
    %p150 = scmp.eq.s32.totalorder %s16, 0
    %p151 = por %p149, %p150
    %p152 = scmp.le.s32.totalorder 1, %s10
    %p153 = scmp.lt.s32.totalorder %s10, 17
    %p154 = pnand %p152, %p153
    %p155 = pneg %p154
    // Predicated region
    $region9: #{transformer_ocr_forward.5} parent=5 // pred_check
      _
    $region10: #{transformer_ocr_forward.5} parent=5 // pred_check_branch
      %157 = sbr.rel (%p154) target = $region12
    $region11: #{transformer_ocr_forward.5} parent=5 // pred_region
      %s158 = ssub.s32 %s10, 1
      // Predicated region
      $region13: #{transformer_ocr_forward.5} parent=11 // pred_check
        %p159 = pneg %p95
      $region14: #{transformer_ocr_forward.5} parent=11 // pred_check_branch
        %161 = sbr.rel (%p159) target = $region16
      $region15: #{transformer_ocr_forward.5} parent=11 // pred_region
        _
      $region16: #{transformer_ocr_forward.5} parent=11 // pred_fallthru
        _
      // Predicated region
      $region17: #{transformer_ocr_forward.5} parent=11 // pred_check
        %p162 = pneg %p116
      $region18: #{transformer_ocr_forward.5} parent=11 // pred_check_branch
        %164 = sbr.rel (%p162) target = $region20
      $region19: #{transformer_ocr_forward.5} parent=11 // pred_region
        _
      $region20: #{transformer_ocr_forward.5} parent=11 // pred_fallthru
        _
    $region12: #{transformer_ocr_forward.5} parent=5 // pred_fallthru
      _
    %p165 = scmp.lt.s32.totalorder %s10, 16
    // Predicated region
    $region21: #{transformer_ocr_forward.5} parent=5 // pred_check
      %p166 = pneg %p165
    $region22: #{transformer_ocr_forward.5} parent=5 // pred_check_branch
      %168 = sbr.rel (%p166) target = $region24
    $region23: #{transformer_ocr_forward.5} parent=5 // pred_region
      // Predicated region
      $region25: #{transformer_ocr_forward.5} parent=23 // pred_check
        %p169 = pneg %p42
      $region26: #{transformer_ocr_forward.5} parent=23 // pred_check_branch
        %171 = sbr.rel (%p169) target = $region28
      $region27: #{transformer_ocr_forward.5} parent=23 // pred_region
        %p172 = scmp.lt.s32.totalorder %s17, 1
        %s173 = scalar_select %p172, %s17, 1
        %s174 = smul.addr %s173, 36
        %s175 = smul.addr %s174, 4
        %s176 = scalar_lea.vmem %s0, %s175
      $region28: #{transformer_ocr_forward.5} parent=23 // pred_fallthru
        _
      // Predicated region
      $region29: #{transformer_ocr_forward.5} parent=23 // pred_check
        %p177 = pneg %p68
      $region30: #{transformer_ocr_forward.5} parent=23 // pred_check_branch
        %179 = sbr.rel (%p177) target = $region32
      $region31: #{transformer_ocr_forward.5} parent=23 // pred_region
        %p180 = scmp.lt.s32.totalorder %s17, 1
        %s181 = scalar_select %p180, %s17, 1
        %s182 = smul.addr %s181, 36
        %s183 = smul.addr %s182, 4
        %s184 = scalar_lea.vmem %s1, %s183
      $region32: #{transformer_ocr_forward.5} parent=23 // pred_fallthru
        _
    $region24: #{transformer_ocr_forward.5} parent=5 // pred_fallthru
      _
    %p185 = scmp.le.s32.totalorder 1, %s10
    %p186 = scmp.lt.s32.totalorder %s10, 17
    %p187 = pnand %p185, %p186
    %p188 = pneg %p187
    // Predicated region
    $region33: #{transformer_ocr_forward.5} parent=5 // pred_check
      _
    $region34: #{transformer_ocr_forward.5} parent=5 // pred_check_branch
      %190 = sbr.rel (%p187) target = $region36
    $region35: #{transformer_ocr_forward.5} parent=5 // pred_region
      %s191 = ssub.s32 %s10, 1
      %p192 = scmp.lt.s32.totalorder %s19, 1
      %s193 = scalar_select %p192, %s19, 1
      %s194 = smul.addr %s193, 36
      %s195 = smul.addr %s194, 4
      %s196 = scalar_lea.vmem %s0, %s195
      %p197 = pneg %p48
      %p198 = pneg %p45
      %p199 = scmp.lt.s32.totalorder %s19, 1
      %s200 = scalar_select %p199, %s19, 1
      %s201 = smul.addr %s200, 36
      %s202 = smul.addr %s201, 4
      %s203 = scalar_lea.vmem %s1, %s202
      %p204 = pneg %p74
      %p205 = pneg %p71
      %p206 = pneg %p95
      %p207 = pneg %p92
      %p208 = pneg %p116
      %p209 = pneg %p113
      %p210 = pneg %p144
      %p211 = pneg %p141
      %p212 = scmp.lt.s32.totalorder %s19, 1
      %s213 = scalar_select %p212, %s19, 1
      %p214 = scmp.lt.s32.totalorder %s20, 7
      %s215 = scalar_select %p214, %s20, 7
      %s216 = smul.addr %s213, 8
      %s217 = sadd.s32 %s215, %s216
      %s218 = smul.addr %s217, 4
      %s219 = scalar_lea.vmem %s4, %s218
      %p220 = scmp.lt.s32.totalorder %s19, 1
      %s221 = scalar_select %p220, %s19, 1
      %s222 = smul.addr %s221, 36
      %s223 = smul.addr %s222, 4
      %s224 = scalar_lea.vmem %s0, %s223
      %p225 = scmp.lt.s32.totalorder %s19, 1
      %s226 = scalar_select %p225, %s19, 1
      %s227 = smul.addr %s226, 36
      %s228 = smul.addr %s227, 4
      %s229 = scalar_lea.vmem %s1, %s228
      %p230 = scmp.lt.s32.totalorder %s19, 1
      %s231 = scalar_select %p230, %s19, 1
      %p232 = scmp.lt.s32.totalorder %s20, 7
      %s233 = scalar_select %p232, %s20, 7
      %s234 = smul.addr %s231, 8
      %s235 = sadd.s32 %s233, %s234
      %s236 = smul.addr %s235, 4
      %s237 = scalar_lea.vmem %s4, %s236
      %s239 = smul.u32 %s20, 16
      %s240 = sshra.s32 %s239, 3
      %s241 = sand.u32 %s239, 7
      %s242 = smul.u32 %s240, 2
      %s243 = smul.addr %s242, 4
      %s244 = scalar_lea.vmem %s224, %s243
      %v245 = vld [vmem:[%s244] sm:$0xff]
      %v246 = vld [vmem:[%s244 + $0x8] sm:$0xff]
      %v247 = vld [vmem:[%s244 + $0x10] sm:$0xff]
      %s248 = smul.addr %s242, 4
      %s249 = scalar_lea.vmem %s229, %s248
      %v250 = vld [vmem:[%s249] sm:$0xff]
      %v251 = vld [vmem:[%s249 + $0x8] sm:$0xff]
      %v252 = vld [vmem:[%s249 + $0x10] sm:$0xff]
      %v253 = vld [vmem:[%s2] sm:$0xf]
      %s254 = scalar_lea.vmem %s2, 4
      %v255 = vld [vmem:[%s254] sm:$0xf]
      %v259 = vunpack.c.l.b16 %v250
      %v260 = vunpack.c.l.b16 %v251
      %v261 = vunpack.c.l.b16 %v252
      %v262 = vpack.c.b16 %v260, %v259
      %v263 = vpack.c.b16 %v261, %v261
      %vm265 = vcmask 195584
      %v267 = vsel %vm265, %v255, 0
      %vm269 = vcmask 1043456
      %v271 = vsel %vm269, %v263, 0
      %273 = vmatprep.subr.bf16.mxu0 0
      %274 = vmatpush1.bf16.msra.mxu0 0
      %275 = vmatprep.subr.bf16.mxu0 0
      %276 = vmatpush1.bf16.msra.mxu0 0
      %277 = vmatprep.subr.bf16.mxu0 0
      %278 = vmatpush1.bf16.msra.mxu0 0
      %279 = vmatprep.subr.bf16.mxu0 0
      %280 = vmatpush1.bf16.msra.mxu0 0
      %281 = vmatprep.subr.bf16.mxu0 0
      %282 = vmatpush1.bf16.msra.mxu0 0
      %283 = vmatprep.subr.bf16.mxu0 0
      %284 = vmatpush1.bf16.msra.mxu0 0
      %285 = vmatprep.subr.bf16.mxu0 0
      %286 = vmatpush1.bf16.msra.mxu0 %v271
      %287 = vmatprep.subr.bf16.mxu0 0
      %288 = vmatpush1.bf16.msra.mxu0 %v262
      %289 = vmatprep.subr.bf16.mxu0 0
      %290 = vmatpush2.bf16.msra.mxu0 0
      %291 = vmatprep.subr.bf16.mxu0 0
      %292 = vmatpush2.bf16.msra.mxu0 0
      %293 = vmatprep.subr.bf16.mxu0 0
      %294 = vmatpush2.bf16.msra.mxu0 0
      %295 = vmatprep.subr.bf16.mxu0 0
      %296 = vmatpush2.bf16.msra.mxu0 0
      %297 = vmatprep.subr.bf16.mxu0 0
      %298 = vmatpush2.bf16.msra.mxu0 0
      %299 = vmatprep.subr.bf16.mxu0 0
      %300 = vmatpush2.bf16.msra.mxu0 0
      %301 = vmatprep.subr.bf16.mxu0 0
      %302 = vmatpush2.bf16.msra.mxu0 0
      %303 = vmatprep.subr.bf16.mxu0 0
      %304 = vmatpush2.bf16.msra.mxu0 0
      %305 = vmatprep.mubr.bf16.mxu0 0
      %306 = vmatmul.mubr.bf16.gmra.mxu0 %v267
      %v307 = vpop.f32.mrf.mxu0
      %v308 = vadd.f32 0.0, %v307
      %v309 = vpop.f32.mrf.mxu0
      %v310 = vpop.f32.mrf.mxu0
      %v311 = vpop.f32.mrf.mxu0
      %312 = vdwg.mxu0
      %v316 = vunpack.c.l.b16 %v245
      %v317 = vunpack.c.l.b16 %v246
      %v318 = vunpack.c.l.b16 %v247
      %v319 = vpack.c.b16 %v317, %v316
      %v320 = vpack.c.b16 %v318, %v318
      %v323 = vsel %vm265, %v253, 0
      %v326 = vsel %vm269, %v320, 0
      %328 = vmatprep.subr.bf16.mxu0 0
      %329 = vmatpush1.bf16.msra.mxu0 0
      %330 = vmatprep.subr.bf16.mxu0 0
      %331 = vmatpush1.bf16.msra.mxu0 0
      %332 = vmatprep.subr.bf16.mxu0 0
      %333 = vmatpush1.bf16.msra.mxu0 0
      %334 = vmatprep.subr.bf16.mxu0 0
      %335 = vmatpush1.bf16.msra.mxu0 0
      %336 = vmatprep.subr.bf16.mxu0 0
      %337 = vmatpush1.bf16.msra.mxu0 0
      %338 = vmatprep.subr.bf16.mxu0 0
      %339 = vmatpush1.bf16.msra.mxu0 0
      %340 = vmatprep.subr.bf16.mxu0 0
      %341 = vmatpush1.bf16.msra.mxu0 %v326
      %342 = vmatprep.subr.bf16.mxu0 0
      %343 = vmatpush1.bf16.msra.mxu0 %v319
      %344 = vmatprep.subr.bf16.mxu0 0
      %345 = vmatpush2.bf16.msra.mxu0 0
      %346 = vmatprep.subr.bf16.mxu0 0
      %347 = vmatpush2.bf16.msra.mxu0 0
      %348 = vmatprep.subr.bf16.mxu0 0
      %349 = vmatpush2.bf16.msra.mxu0 0
      %350 = vmatprep.subr.bf16.mxu0 0
      %351 = vmatpush2.bf16.msra.mxu0 0
      %352 = vmatprep.subr.bf16.mxu0 0
      %353 = vmatpush2.bf16.msra.mxu0 0
      %354 = vmatprep.subr.bf16.mxu0 0
      %355 = vmatpush2.bf16.msra.mxu0 0
      %356 = vmatprep.subr.bf16.mxu0 0
      %357 = vmatpush2.bf16.msra.mxu0 0
      %358 = vmatprep.subr.bf16.mxu0 0
      %359 = vmatpush2.bf16.msra.mxu0 0
      %360 = vmatprep.mubr.bf16.mxu0 0
      %361 = vmatmul.mubr.bf16.gmra.mxu0 %v323
      %v362 = vpop.f32.mrf.mxu0
      %v363 = vadd.f32 %v308, %v362
      %v364 = vpop.f32.mrf.mxu0
      %v365 = vpop.f32.mrf.mxu0
      %v366 = vpop.f32.mrf.mxu0
      %367 = vdwg.mxu0
      %s368 = scalar_lea.vmem %s2, 8
      %v369 = vld [vmem:[%s368] sm:$0xf]
      %v370 = vunpack.c.h.b16 %v245
      %v371 = vunpack.c.h.b16 %v246
      %v372 = vunpack.c.h.b16 %v247
      %v373 = vpack.c.b16 %v371, %v370
      %v374 = vpack.c.b16 %v372, %v372
      %375 = vrot.lane.b32.xlu0 %v319, 127
      %v376 = vpop.permute.xlu0 %375
      %377 = vrot.lane.b32.xlu0 %v373, 127
      %v378 = vpop.permute.xlu0 %377
      %379 = vrot.lane.b32.xlu0 %v320, 127
      %v380 = vpop.permute.xlu0 %379
      %381 = vrot.lane.b32.xlu0 %v374, 127
      %v382 = vpop.permute.xlu0 %381
      %vm383 = vcmask 1039360
      %v384 = vsel %vm383, %v376, %v378
      %v385 = vsel %vm383, %v380, %v382
      %v388 = vsel %vm265, %v369, 0
      %v391 = vsel %vm269, %v385, 0
      %393 = vmatprep.subr.bf16.mxu0 0
      %394 = vmatpush1.bf16.msra.mxu0 0
      %395 = vmatprep.subr.bf16.mxu0 0
      %396 = vmatpush1.bf16.msra.mxu0 0
      %397 = vmatprep.subr.bf16.mxu0 0
      %398 = vmatpush1.bf16.msra.mxu0 0
      %399 = vmatprep.subr.bf16.mxu0 0
      %400 = vmatpush1.bf16.msra.mxu0 0
      %401 = vmatprep.subr.bf16.mxu0 0
      %402 = vmatpush1.bf16.msra.mxu0 0
      %403 = vmatprep.subr.bf16.mxu0 0
      %404 = vmatpush1.bf16.msra.mxu0 0
      %405 = vmatprep.subr.bf16.mxu0 0
      %406 = vmatpush1.bf16.msra.mxu0 %v391
      %407 = vmatprep.subr.bf16.mxu0 0
      %408 = vmatpush1.bf16.msra.mxu0 %v384
      %409 = vmatprep.subr.bf16.mxu0 0
      %410 = vmatpush2.bf16.msra.mxu0 0
      %411 = vmatprep.subr.bf16.mxu0 0
      %412 = vmatpush2.bf16.msra.mxu0 0
      %413 = vmatprep.subr.bf16.mxu0 0
      %414 = vmatpush2.bf16.msra.mxu0 0
      %415 = vmatprep.subr.bf16.mxu0 0
      %416 = vmatpush2.bf16.msra.mxu0 0
      %417 = vmatprep.subr.bf16.mxu0 0
      %418 = vmatpush2.bf16.msra.mxu0 0
      %419 = vmatprep.subr.bf16.mxu0 0
      %420 = vmatpush2.bf16.msra.mxu0 0
      %421 = vmatprep.subr.bf16.mxu0 0
      %422 = vmatpush2.bf16.msra.mxu0 0
      %423 = vmatprep.subr.bf16.mxu0 0
      %424 = vmatpush2.bf16.msra.mxu0 0
      %425 = vmatprep.mubr.bf16.mxu0 0
      %426 = vmatmul.mubr.bf16.gmra.mxu0 %v388
      %v427 = vpop.f32.mrf.mxu0
      %v428 = vadd.f32 0.0, %v427
      %v429 = vpop.f32.mrf.mxu0
      %v430 = vpop.f32.mrf.mxu0
      %v431 = vpop.f32.mrf.mxu0
      %432 = vdwg.mxu0
      %v433 = vadd.f32 %v363, %v428
      %434 = vmatprep.subr.bf16.mxu0 0
      %435 = vmatpush1.bf16.msra.mxu0 0
      %436 = vmatprep.subr.bf16.mxu0 0
      %437 = vmatpush1.bf16.msra.mxu0 0
      %438 = vmatprep.subr.bf16.mxu0 0
      %439 = vmatpush1.bf16.msra.mxu0 0
      %440 = vmatprep.subr.bf16.mxu0 0
      %441 = vmatpush1.bf16.msra.mxu0 0
      %442 = vmatprep.subr.bf16.mxu0 0
      %443 = vmatpush1.bf16.msra.mxu0 0
      %444 = vmatprep.subr.bf16.mxu0 0
      %445 = vmatpush1.bf16.msra.mxu0 0
      %446 = vmatprep.subr.bf16.mxu0 0
      %447 = vmatpush1.bf16.msra.mxu0 %v391
      %448 = vmatprep.subr.bf16.mxu0 0
      %449 = vmatpush1.bf16.msra.mxu0 %v384
      %450 = vmatprep.subr.bf16.mxu0 0
      %451 = vmatpush2.bf16.msra.mxu0 0
      %452 = vmatprep.subr.bf16.mxu0 0
      %453 = vmatpush2.bf16.msra.mxu0 0
      %454 = vmatprep.subr.bf16.mxu0 0
      %455 = vmatpush2.bf16.msra.mxu0 0
      %456 = vmatprep.subr.bf16.mxu0 0
      %457 = vmatpush2.bf16.msra.mxu0 0
      %458 = vmatprep.subr.bf16.mxu0 0
      %459 = vmatpush2.bf16.msra.mxu0 0
      %460 = vmatprep.subr.bf16.mxu0 0
      %461 = vmatpush2.bf16.msra.mxu0 0
      %462 = vmatprep.subr.bf16.mxu0 0
      %463 = vmatpush2.bf16.msra.mxu0 0
      %464 = vmatprep.subr.bf16.mxu0 0
      %465 = vmatpush2.bf16.msra.mxu0 0
      %466 = vmatprep.mubr.bf16.mxu0 0
      %467 = vmatmul.mubr.bf16.gmra.mxu0 %v267
      %v468 = vpop.f32.mrf.mxu0
      %v469 = vadd.f32 0.0, %v468
      %v470 = vpop.f32.mrf.mxu0
      %v471 = vpop.f32.mrf.mxu0
      %v472 = vpop.f32.mrf.mxu0
      %473 = vdwg.mxu0
      %474 = vmatprep.subr.bf16.mxu0 0
      %475 = vmatpush1.bf16.msra.mxu0 0
      %476 = vmatprep.subr.bf16.mxu0 0
      %477 = vmatpush1.bf16.msra.mxu0 0
      %478 = vmatprep.subr.bf16.mxu0 0
      %479 = vmatpush1.bf16.msra.mxu0 0
      %480 = vmatprep.subr.bf16.mxu0 0
      %481 = vmatpush1.bf16.msra.mxu0 0
      %482 = vmatprep.subr.bf16.mxu0 0
      %483 = vmatpush1.bf16.msra.mxu0 0
      %484 = vmatprep.subr.bf16.mxu0 0
      %485 = vmatpush1.bf16.msra.mxu0 0
      %486 = vmatprep.subr.bf16.mxu0 0
      %487 = vmatpush1.bf16.msra.mxu0 %v271
      %488 = vmatprep.subr.bf16.mxu0 0
      %489 = vmatpush1.bf16.msra.mxu0 %v262
      %490 = vmatprep.subr.bf16.mxu0 0
      %491 = vmatpush2.bf16.msra.mxu0 0
      %492 = vmatprep.subr.bf16.mxu0 0
      %493 = vmatpush2.bf16.msra.mxu0 0
      %494 = vmatprep.subr.bf16.mxu0 0
      %495 = vmatpush2.bf16.msra.mxu0 0
      %496 = vmatprep.subr.bf16.mxu0 0
      %497 = vmatpush2.bf16.msra.mxu0 0
      %498 = vmatprep.subr.bf16.mxu0 0
      %499 = vmatpush2.bf16.msra.mxu0 0
      %500 = vmatprep.subr.bf16.mxu0 0
      %501 = vmatpush2.bf16.msra.mxu0 0
      %502 = vmatprep.subr.bf16.mxu0 0
      %503 = vmatpush2.bf16.msra.mxu0 0
      %504 = vmatprep.subr.bf16.mxu0 0
      %505 = vmatpush2.bf16.msra.mxu0 0
      %506 = vmatprep.mubr.bf16.mxu0 0
      %507 = vmatmul.mubr.bf16.gmra.mxu0 %v323
      %v508 = vpop.f32.mrf.mxu0
      %v509 = vadd.f32 %v469, %v508
      %v510 = vpop.f32.mrf.mxu0
      %v511 = vpop.f32.mrf.mxu0
      %v512 = vpop.f32.mrf.mxu0
      %513 = vdwg.mxu0
      %v514 = vunpack.c.h.b16 %v250
      %v515 = vunpack.c.h.b16 %v251
      %v516 = vunpack.c.h.b16 %v252
      %v517 = vpack.c.b16 %v515, %v514
      %v518 = vpack.c.b16 %v516, %v516
      %519 = vrot.lane.b32.xlu0 %v262, 127
      %v520 = vpop.permute.xlu0 %519
      %521 = vrot.lane.b32.xlu0 %v517, 127
      %v522 = vpop.permute.xlu0 %521
      %523 = vrot.lane.b32.xlu0 %v263, 127
      %v524 = vpop.permute.xlu0 %523
      %525 = vrot.lane.b32.xlu0 %v518, 127
      %v526 = vpop.permute.xlu0 %525
      %v527 = vsel %vm383, %v520, %v522
      %v528 = vsel %vm383, %v524, %v526
      %v531 = vsel %vm269, %v528, 0
      %533 = vmatprep.subr.bf16.mxu0 0
      %534 = vmatpush1.bf16.msra.mxu0 0
      %535 = vmatprep.subr.bf16.mxu0 0
      %536 = vmatpush1.bf16.msra.mxu0 0
      %537 = vmatprep.subr.bf16.mxu0 0
      %538 = vmatpush1.bf16.msra.mxu0 0
      %539 = vmatprep.subr.bf16.mxu0 0
      %540 = vmatpush1.bf16.msra.mxu0 0
      %541 = vmatprep.subr.bf16.mxu0 0
      %542 = vmatpush1.bf16.msra.mxu0 0
      %543 = vmatprep.subr.bf16.mxu0 0
      %544 = vmatpush1.bf16.msra.mxu0 0
      %545 = vmatprep.subr.bf16.mxu0 0
      %546 = vmatpush1.bf16.msra.mxu0 %v531
      %547 = vmatprep.subr.bf16.mxu0 0
      %548 = vmatpush1.bf16.msra.mxu0 %v527
      %549 = vmatprep.subr.bf16.mxu0 0
      %550 = vmatpush2.bf16.msra.mxu0 0
      %551 = vmatprep.subr.bf16.mxu0 0
      %552 = vmatpush2.bf16.msra.mxu0 0
      %553 = vmatprep.subr.bf16.mxu0 0
      %554 = vmatpush2.bf16.msra.mxu0 0
      %555 = vmatprep.subr.bf16.mxu0 0
      %556 = vmatpush2.bf16.msra.mxu0 0
      %557 = vmatprep.subr.bf16.mxu0 0
      %558 = vmatpush2.bf16.msra.mxu0 0
      %559 = vmatprep.subr.bf16.mxu0 0
      %560 = vmatpush2.bf16.msra.mxu0 0
      %561 = vmatprep.subr.bf16.mxu0 0
      %562 = vmatpush2.bf16.msra.mxu0 0
      %563 = vmatprep.subr.bf16.mxu0 0
      %564 = vmatpush2.bf16.msra.mxu0 0
      %565 = vmatprep.mubr.bf16.mxu0 0
      %566 = vmatmul.mubr.bf16.gmra.mxu0 %v388
      %v567 = vpop.f32.mrf.mxu0
      %v568 = vadd.f32 0.0, %v567
      %v569 = vpop.f32.mrf.mxu0
      %v570 = vpop.f32.mrf.mxu0
      %v571 = vpop.f32.mrf.mxu0
      %572 = vdwg.mxu0
      %v573 = vadd.f32 %v509, %v568
      %v574 = vmax.f32 %v433, %v573
      %s575 = smul.u32 %s20, 2
      %s576 = sadd.s32 %s575, 1
      %s577 = smul.u32 %s576, 8
      %s578 = sshra.s32 %s577, 3
      %s579 = sand.u32 %s577, 7
      %s580 = smul.u32 %s578, 2
      %s581 = smul.addr %s580, 4
      %s582 = scalar_lea.vmem %s224, %s581
      %v583 = vld [vmem:[%s582] sm:$0xff]
      %v584 = vld [vmem:[%s582 + $0x8] sm:$0xff]
      %v585 = vld [vmem:[%s582 + $0x10] sm:$0xff]
      %s586 = smul.addr %s580, 4
      %s587 = scalar_lea.vmem %s229, %s586
      %v588 = vld [vmem:[%s587] sm:$0xff]
      %v589 = vld [vmem:[%s587 + $0x8] sm:$0xff]
      %v590 = vld [vmem:[%s587 + $0x10] sm:$0xff]
      %v594 = vunpack.c.l.b16 %v588
      %v595 = vunpack.c.l.b16 %v589
      %v596 = vunpack.c.l.b16 %v590
      %v597 = vpack.c.b16 %v595, %v594
      %v598 = vpack.c.b16 %v596, %v596
      %v601 = vsel %vm269, %v598, 0
      %603 = vmatprep.subr.bf16.mxu0 0
      %604 = vmatpush1.bf16.msra.mxu0 0
      %605 = vmatprep.subr.bf16.mxu0 0
      %606 = vmatpush1.bf16.msra.mxu0 0
      %607 = vmatprep.subr.bf16.mxu0 0
      %608 = vmatpush1.bf16.msra.mxu0 0
      %609 = vmatprep.subr.bf16.mxu0 0
      %610 = vmatpush1.bf16.msra.mxu0 0
      %611 = vmatprep.subr.bf16.mxu0 0
      %612 = vmatpush1.bf16.msra.mxu0 0
      %613 = vmatprep.subr.bf16.mxu0 0
      %614 = vmatpush1.bf16.msra.mxu0 0
      %615 = vmatprep.subr.bf16.mxu0 0
      %616 = vmatpush1.bf16.msra.mxu0 %v601
      %617 = vmatprep.subr.bf16.mxu0 0
      %618 = vmatpush1.bf16.msra.mxu0 %v597
      %619 = vmatprep.subr.bf16.mxu0 0
      %620 = vmatpush2.bf16.msra.mxu0 0
      %621 = vmatprep.subr.bf16.mxu0 0
      %622 = vmatpush2.bf16.msra.mxu0 0
      %623 = vmatprep.subr.bf16.mxu0 0
      %624 = vmatpush2.bf16.msra.mxu0 0
      %625 = vmatprep.subr.bf16.mxu0 0
      %626 = vmatpush2.bf16.msra.mxu0 0
      %627 = vmatprep.subr.bf16.mxu0 0
      %628 = vmatpush2.bf16.msra.mxu0 0
      %629 = vmatprep.subr.bf16.mxu0 0
      %630 = vmatpush2.bf16.msra.mxu0 0
      %631 = vmatprep.subr.bf16.mxu0 0
      %632 = vmatpush2.bf16.msra.mxu0 0
      %633 = vmatprep.subr.bf16.mxu0 0
      %634 = vmatpush2.bf16.msra.mxu0 0
      %635 = vmatprep.mubr.bf16.mxu0 0
      %636 = vmatmul.mubr.bf16.gmra.mxu0 %v267
      %v637 = vpop.f32.mrf.mxu0
      %v638 = vadd.f32 0.0, %v637
      %v639 = vpop.f32.mrf.mxu0
      %v640 = vpop.f32.mrf.mxu0
      %v641 = vpop.f32.mrf.mxu0
      %642 = vdwg.mxu0
      %v646 = vunpack.c.l.b16 %v583
      %v647 = vunpack.c.l.b16 %v584
      %v648 = vunpack.c.l.b16 %v585
      %v649 = vpack.c.b16 %v647, %v646
      %v650 = vpack.c.b16 %v648, %v648
      %v653 = vsel %vm269, %v650, 0
      %655 = vmatprep.subr.bf16.mxu0 0
      %656 = vmatpush1.bf16.msra.mxu0 0
      %657 = vmatprep.subr.bf16.mxu0 0
      %658 = vmatpush1.bf16.msra.mxu0 0
      %659 = vmatprep.subr.bf16.mxu0 0
      %660 = vmatpush1.bf16.msra.mxu0 0
      %661 = vmatprep.subr.bf16.mxu0 0
      %662 = vmatpush1.bf16.msra.mxu0 0
      %663 = vmatprep.subr.bf16.mxu0 0
      %664 = vmatpush1.bf16.msra.mxu0 0
      %665 = vmatprep.subr.bf16.mxu0 0
      %666 = vmatpush1.bf16.msra.mxu0 0
      %667 = vmatprep.subr.bf16.mxu0 0
      %668 = vmatpush1.bf16.msra.mxu0 %v653
      %669 = vmatprep.subr.bf16.mxu0 0
      %670 = vmatpush1.bf16.msra.mxu0 %v649
      %671 = vmatprep.subr.bf16.mxu0 0
      %672 = vmatpush2.bf16.msra.mxu0 0
      %673 = vmatprep.subr.bf16.mxu0 0
      %674 = vmatpush2.bf16.msra.mxu0 0
      %675 = vmatprep.subr.bf16.mxu0 0
      %676 = vmatpush2.bf16.msra.mxu0 0
      %677 = vmatprep.subr.bf16.mxu0 0
      %678 = vmatpush2.bf16.msra.mxu0 0
      %679 = vmatprep.subr.bf16.mxu0 0
      %680 = vmatpush2.bf16.msra.mxu0 0
      %681 = vmatprep.subr.bf16.mxu0 0
      %682 = vmatpush2.bf16.msra.mxu0 0
      %683 = vmatprep.subr.bf16.mxu0 0
      %684 = vmatpush2.bf16.msra.mxu0 0
      %685 = vmatprep.subr.bf16.mxu0 0
      %686 = vmatpush2.bf16.msra.mxu0 0
      %687 = vmatprep.mubr.bf16.mxu0 0
      %688 = vmatmul.mubr.bf16.gmra.mxu0 %v323
      %v689 = vpop.f32.mrf.mxu0
      %v690 = vadd.f32 %v638, %v689
      %v691 = vpop.f32.mrf.mxu0
      %v692 = vpop.f32.mrf.mxu0
      %v693 = vpop.f32.mrf.mxu0
      %694 = vdwg.mxu0
      %v695 = vunpack.c.h.b16 %v583
      %v696 = vunpack.c.h.b16 %v584
      %v697 = vunpack.c.h.b16 %v585
      %v698 = vpack.c.b16 %v696, %v695
      %v699 = vpack.c.b16 %v697, %v697
      %700 = vrot.lane.b32.xlu0 %v649, 127
      %v701 = vpop.permute.xlu0 %700
      %702 = vrot.lane.b32.xlu0 %v698, 127
      %v703 = vpop.permute.xlu0 %702
      %704 = vrot.lane.b32.xlu0 %v650, 127
      %v705 = vpop.permute.xlu0 %704
      %706 = vrot.lane.b32.xlu0 %v699, 127
      %v707 = vpop.permute.xlu0 %706
      %v708 = vsel %vm383, %v701, %v703
      %v709 = vsel %vm383, %v705, %v707
      %v712 = vsel %vm269, %v709, 0
      %714 = vmatprep.subr.bf16.mxu0 0
      %715 = vmatpush1.bf16.msra.mxu0 0
      %716 = vmatprep.subr.bf16.mxu0 0
      %717 = vmatpush1.bf16.msra.mxu0 0
      %718 = vmatprep.subr.bf16.mxu0 0
      %719 = vmatpush1.bf16.msra.mxu0 0
      %720 = vmatprep.subr.bf16.mxu0 0
      %721 = vmatpush1.bf16.msra.mxu0 0
      %722 = vmatprep.subr.bf16.mxu0 0
      %723 = vmatpush1.bf16.msra.mxu0 0
      %724 = vmatprep.subr.bf16.mxu0 0
      %725 = vmatpush1.bf16.msra.mxu0 0
      %726 = vmatprep.subr.bf16.mxu0 0
      %727 = vmatpush1.bf16.msra.mxu0 %v712
      %728 = vmatprep.subr.bf16.mxu0 0
      %729 = vmatpush1.bf16.msra.mxu0 %v708
      %730 = vmatprep.subr.bf16.mxu0 0
      %731 = vmatpush2.bf16.msra.mxu0 0
      %732 = vmatprep.subr.bf16.mxu0 0
      %733 = vmatpush2.bf16.msra.mxu0 0
      %734 = vmatprep.subr.bf16.mxu0 0
      %735 = vmatpush2.bf16.msra.mxu0 0
      %736 = vmatprep.subr.bf16.mxu0 0
      %737 = vmatpush2.bf16.msra.mxu0 0
      %738 = vmatprep.subr.bf16.mxu0 0
      %739 = vmatpush2.bf16.msra.mxu0 0
      %740 = vmatprep.subr.bf16.mxu0 0
      %741 = vmatpush2.bf16.msra.mxu0 0
      %742 = vmatprep.subr.bf16.mxu0 0
      %743 = vmatpush2.bf16.msra.mxu0 0
      %744 = vmatprep.subr.bf16.mxu0 0
      %745 = vmatpush2.bf16.msra.mxu0 0
      %746 = vmatprep.mubr.bf16.mxu0 0
      %747 = vmatmul.mubr.bf16.gmra.mxu0 %v388
      %v748 = vpop.f32.mrf.mxu0
      %v749 = vadd.f32 0.0, %v748
      %v750 = vpop.f32.mrf.mxu0
      %v751 = vpop.f32.mrf.mxu0
      %v752 = vpop.f32.mrf.mxu0
      %753 = vdwg.mxu0
      %v754 = vadd.f32 %v690, %v749
      %v755 = vmax.f32 %v574, %v754
      %756 = vmatprep.subr.bf16.mxu0 0
      %757 = vmatpush1.bf16.msra.mxu0 0
      %758 = vmatprep.subr.bf16.mxu0 0
      %759 = vmatpush1.bf16.msra.mxu0 0
      %760 = vmatprep.subr.bf16.mxu0 0
      %761 = vmatpush1.bf16.msra.mxu0 0
      %762 = vmatprep.subr.bf16.mxu0 0
      %763 = vmatpush1.bf16.msra.mxu0 0
      %764 = vmatprep.subr.bf16.mxu0 0
      %765 = vmatpush1.bf16.msra.mxu0 0
      %766 = vmatprep.subr.bf16.mxu0 0
      %767 = vmatpush1.bf16.msra.mxu0 0
      %768 = vmatprep.subr.bf16.mxu0 0
      %769 = vmatpush1.bf16.msra.mxu0 %v712
      %770 = vmatprep.subr.bf16.mxu0 0
      %771 = vmatpush1.bf16.msra.mxu0 %v708
      %772 = vmatprep.subr.bf16.mxu0 0
      %773 = vmatpush2.bf16.msra.mxu0 0
      %774 = vmatprep.subr.bf16.mxu0 0
      %775 = vmatpush2.bf16.msra.mxu0 0
      %776 = vmatprep.subr.bf16.mxu0 0
      %777 = vmatpush2.bf16.msra.mxu0 0
      %778 = vmatprep.subr.bf16.mxu0 0
      %779 = vmatpush2.bf16.msra.mxu0 0
      %780 = vmatprep.subr.bf16.mxu0 0
      %781 = vmatpush2.bf16.msra.mxu0 0
      %782 = vmatprep.subr.bf16.mxu0 0
      %783 = vmatpush2.bf16.msra.mxu0 0
      %784 = vmatprep.subr.bf16.mxu0 0
      %785 = vmatpush2.bf16.msra.mxu0 0
      %786 = vmatprep.subr.bf16.mxu0 0
      %787 = vmatpush2.bf16.msra.mxu0 0
      %788 = vmatprep.mubr.bf16.mxu0 0
      %789 = vmatmul.mubr.bf16.gmra.mxu0 %v267
      %v790 = vpop.f32.mrf.mxu0
      %v791 = vadd.f32 0.0, %v790
      %v792 = vpop.f32.mrf.mxu0
      %v793 = vpop.f32.mrf.mxu0
      %v794 = vpop.f32.mrf.mxu0
      %795 = vdwg.mxu0
      %796 = vmatprep.subr.bf16.mxu0 0
      %797 = vmatpush1.bf16.msra.mxu0 0
      %798 = vmatprep.subr.bf16.mxu0 0
      %799 = vmatpush1.bf16.msra.mxu0 0
      %800 = vmatprep.subr.bf16.mxu0 0
      %801 = vmatpush1.bf16.msra.mxu0 0
      %802 = vmatprep.subr.bf16.mxu0 0
      %803 = vmatpush1.bf16.msra.mxu0 0
      %804 = vmatprep.subr.bf16.mxu0 0
      %805 = vmatpush1.bf16.msra.mxu0 0
      %806 = vmatprep.subr.bf16.mxu0 0
      %807 = vmatpush1.bf16.msra.mxu0 0
      %808 = vmatprep.subr.bf16.mxu0 0
      %809 = vmatpush1.bf16.msra.mxu0 %v601
      %810 = vmatprep.subr.bf16.mxu0 0
      %811 = vmatpush1.bf16.msra.mxu0 %v597
      %812 = vmatprep.subr.bf16.mxu0 0
      %813 = vmatpush2.bf16.msra.mxu0 0
      %814 = vmatprep.subr.bf16.mxu0 0
      %815 = vmatpush2.bf16.msra.mxu0 0
      %816 = vmatprep.subr.bf16.mxu0 0
      %817 = vmatpush2.bf16.msra.mxu0 0
      %818 = vmatprep.subr.bf16.mxu0 0
      %819 = vmatpush2.bf16.msra.mxu0 0
      %820 = vmatprep.subr.bf16.mxu0 0
      %821 = vmatpush2.bf16.msra.mxu0 0
      %822 = vmatprep.subr.bf16.mxu0 0
      %823 = vmatpush2.bf16.msra.mxu0 0
      %824 = vmatprep.subr.bf16.mxu0 0
      %825 = vmatpush2.bf16.msra.mxu0 0
      %826 = vmatprep.subr.bf16.mxu0 0
      %827 = vmatpush2.bf16.msra.mxu0 0
      %828 = vmatprep.mubr.bf16.mxu0 0
      %829 = vmatmul.mubr.bf16.gmra.mxu0 %v323
      %v830 = vpop.f32.mrf.mxu0
      %v831 = vadd.f32 %v791, %v830
      %v832 = vpop.f32.mrf.mxu0
      %v833 = vpop.f32.mrf.mxu0
      %v834 = vpop.f32.mrf.mxu0
      %835 = vdwg.mxu0
      %v836 = vunpack.c.h.b16 %v588
      %v837 = vunpack.c.h.b16 %v589
      %v838 = vunpack.c.h.b16 %v590
      %v839 = vpack.c.b16 %v837, %v836
      %v840 = vpack.c.b16 %v838, %v838
      %841 = vrot.lane.b32.xlu0 %v597, 127
      %v842 = vpop.permute.xlu0 %841
      %843 = vrot.lane.b32.xlu0 %v839, 127
      %v844 = vpop.permute.xlu0 %843
      %845 = vrot.lane.b32.xlu0 %v598, 127
      %v846 = vpop.permute.xlu0 %845
      %847 = vrot.lane.b32.xlu0 %v840, 127
      %v848 = vpop.permute.xlu0 %847
      %v849 = vsel %vm383, %v842, %v844
      %v850 = vsel %vm383, %v846, %v848
      %v853 = vsel %vm269, %v850, 0
      %855 = vmatprep.subr.bf16.mxu0 0
      %856 = vmatpush1.bf16.msra.mxu0 0
      %857 = vmatprep.subr.bf16.mxu0 0
      %858 = vmatpush1.bf16.msra.mxu0 0
      %859 = vmatprep.subr.bf16.mxu0 0
      %860 = vmatpush1.bf16.msra.mxu0 0
      %861 = vmatprep.subr.bf16.mxu0 0
      %862 = vmatpush1.bf16.msra.mxu0 0
      %863 = vmatprep.subr.bf16.mxu0 0
      %864 = vmatpush1.bf16.msra.mxu0 0
      %865 = vmatprep.subr.bf16.mxu0 0
      %866 = vmatpush1.bf16.msra.mxu0 0
      %867 = vmatprep.subr.bf16.mxu0 0
      %868 = vmatpush1.bf16.msra.mxu0 %v853
      %869 = vmatprep.subr.bf16.mxu0 0
      %870 = vmatpush1.bf16.msra.mxu0 %v849
      %871 = vmatprep.subr.bf16.mxu0 0
      %872 = vmatpush2.bf16.msra.mxu0 0
      %873 = vmatprep.subr.bf16.mxu0 0
      %874 = vmatpush2.bf16.msra.mxu0 0
      %875 = vmatprep.subr.bf16.mxu0 0
      %876 = vmatpush2.bf16.msra.mxu0 0
      %877 = vmatprep.subr.bf16.mxu0 0
      %878 = vmatpush2.bf16.msra.mxu0 0
      %879 = vmatprep.subr.bf16.mxu0 0
      %880 = vmatpush2.bf16.msra.mxu0 0
      %881 = vmatprep.subr.bf16.mxu0 0
      %882 = vmatpush2.bf16.msra.mxu0 0
      %883 = vmatprep.subr.bf16.mxu0 0
      %884 = vmatpush2.bf16.msra.mxu0 0
      %885 = vmatprep.subr.bf16.mxu0 0
      %886 = vmatpush2.bf16.msra.mxu0 0
      %887 = vmatprep.mubr.bf16.mxu0 0
      %888 = vmatmul.mubr.bf16.gmra.mxu0 %v388
      %v889 = vpop.f32.mrf.mxu0
      %v890 = vadd.f32 0.0, %v889
      %v891 = vpop.f32.mrf.mxu0
      %v892 = vpop.f32.mrf.mxu0
      %v893 = vpop.f32.mrf.mxu0
      %894 = vdwg.mxu0
      %v895 = vadd.f32 %v831, %v890
      %v896 = vmax.f32 %v755, %v895
      %v897 = vld [vmem:[%s3] sm:$0xff]
      %899 = vset.pattern.permute.xlu0 0
      %900 = vperm.xlu0 %899, %v897
      %v901 = vpop.permute.xlu0 %900
      %v903 = vadd.f32 %v896, %v901
      %v904 = vmax.f32 %v903, 0.0
      %v905 = vpack.c.bf16 %v904, %v904
      %906 = vst [vmem:[%s237] sm:$0xf] %v905
      %p907 = scmp.lt.s32.totalorder %s19, 1
      %s908 = scalar_select %p907, %s19, 1
      %p909 = scmp.lt.s32.totalorder %s20, 7
      %s910 = scalar_select %p909, %s20, 7
      %s911 = smul.addr %s908, 8
      %s912 = sadd.s32 %s910, %s911
      %s913 = smul.addr %s912, 4
      %s914 = scalar_lea.vmem %s4, %s913
      // Predicated region
      $region37: #{transformer_ocr_forward.5} parent=35 // pred_check
        %p915 = pneg %p141
      $region38: #{transformer_ocr_forward.5} parent=35 // pred_check_branch
        %917 = sbr.rel (%p915) target = $region40
      $region39: #{transformer_ocr_forward.5} parent=35 // pred_region
        _
      $region40: #{transformer_ocr_forward.5} parent=35 // pred_fallthru
        _
    $region36: #{transformer_ocr_forward.5} parent=5 // pred_fallthru
      _
    %p918 = scmp.le.s32.totalorder 2, %s10
    // Predicated region
    $region41: #{transformer_ocr_forward.5} parent=5 // pred_check
      %p919 = pneg %p918
    $region42: #{transformer_ocr_forward.5} parent=5 // pred_check_branch
      %921 = sbr.rel (%p919) target = $region44
    $region43: #{transformer_ocr_forward.5} parent=5 // pred_region
      %s922 = ssub.s32 %s10, 2
      // Predicated region
      $region45: #{transformer_ocr_forward.5} parent=43 // pred_check
        %p923 = pneg %p147
      $region46: #{transformer_ocr_forward.5} parent=43 // pred_check_branch
        %925 = sbr.rel (%p923) target = $region48
      $region47: #{transformer_ocr_forward.5} parent=43 // pred_region
        %p926 = scmp.lt.s32.totalorder %s21, 1
        %s927 = scalar_select %p926, %s21, 1
        %p928 = scmp.lt.s32.totalorder %s22, 7
        %s929 = scalar_select %p928, %s22, 7
        %s930 = smul.addr %s927, 8
        %s931 = sadd.s32 %s929, %s930
        %s932 = smul.addr %s931, 4
        %s933 = scalar_lea.vmem %s4, %s932
      $region48: #{transformer_ocr_forward.5} parent=43 // pred_fallthru
        _
    $region44: #{transformer_ocr_forward.5} parent=5 // pred_fallthru
      _
  $region6: #{transformer_ocr_forward.5} parent=0 // loop_footer
    %s14 = sadd.s32 1, %s10
  $region7: #{transformer_ocr_forward.5} parent=0 // loop_footer_branch
    %9 = sbr.rel target = $region3
  $region8: #{transformer_ocr_forward.5} parent=0 // loop_exit
    _

// kernel: transformer_ocr_forward.6
$region0: #{transformer_ocr_forward.6}
  #allocation0 [shape = 'u32[]', space=smem, size = 0x4, offset = 0x4, fixed_abs, tag = 'smem constant byte address 0x4 - core index']
  #allocation1 [shape = 'u32[144,128]{1,0:T(1,128)}', space=vmem, size = 0x12000, scoped, tag = 'internal scratch']
  %s0 = inlined_call_operand.vmem [shape: bf16[2,80,256], index: 0, kind: input, shape index: {}]
  %s1 = inlined_call_operand.vmem [shape: bf16[2,80,256], index: 1, kind: input, shape index: {}]
  %s2 = inlined_call_operand.vmem [shape: bf16[3,16,24], index: 2, kind: input, shape index: {}]
  %s3 = inlined_call_operand.vmem [shape: f32[16,1], index: 3, kind: input, shape index: {}]
  %s4 = inlined_call_operand.vmem [shape: bf16[2,4,16,128], index: 4, kind: output, shape index: {}]
  %s5 = sld [smem:[#allocation0]]
  $region49: #{transformer_ocr_forward.6} parent=0
    _
  %s7 = ssub.s32 1, %s5
  %s8 = scalar_select 0, %s7, %s5
  loop: start=0, step=1, limit=10
  $region2: #{transformer_ocr_forward.6} parent=0 // loop_pre_header
    _
  $region3: #{transformer_ocr_forward.6} parent=0 // loop_header
    %s10 = sphi 0, %s14
    %p11 = scmp.ge.s32.totalorder %s10, 10
    %s17 = sphi 0, %s29
    %s18 = sphi 0, %s25
    %s19 = sphi 0, %s17
    %s20 = sphi 0, %s18
    %s21 = sphi 0, %s19
    %s22 = sphi 0, %s20
    %s32 = sphi 0, %s34
    %s35 = sphi 0, %s32
    %s36 = sphi 0, %s35
    %s52 = sphi 0, %s36
    %s58 = sphi 0, %s60
    %s61 = sphi 0, %s58
    %s62 = sphi 0, %s61
    %s78 = sphi 0, %s62
    %s82 = sphi 0, %s82
    %s84 = sphi 0, %s82
    %s85 = sphi 0, %s84
    %s99 = sphi 0, %s85
    %s103 = sphi 0, %s103
    %s105 = sphi 0, %s103
    %s106 = sphi 0, %s105
    %s120 = sphi 0, %s106
    %s128 = sphi 0, %s130
    %s131 = sphi 0, %s128
    %s132 = sphi 0, %s131
    %s148 = sphi 0, %s132
  $region4: #{transformer_ocr_forward.6} parent=0 // loop_header_branch
    %13 = sbr.rel (%p11) target = $region8
  $region5: #{transformer_ocr_forward.6} parent=0 // loop_body
    %s15 = ssub.s32 %s10, 1
    %s16 = ssub.s32 %s10, 2
    %s23 = sadd.s32 1, %s18
    %p24 = scmp.ge.s32.totalorder %s23, 4
    %s25 = scalar_select %p24, 0, %s23
    %s26 = sadd.s32 1, %s17
    %s27 = scalar_select %p24, %s26, %s17
    %p28 = scmp.ge.s32.totalorder %s27, 2
    %s29 = scalar_select %p28, 0, %s27
    %s30 = ssub.s32 %s17, %s29
    %p31 = scmp.eq.s32.totalorder %s30, 0
    %s33 = sadd.s32 %s32, 1
    %s34 = scalar_select %p31, %s32, %s33
    %p37 = pneg %p31
    %p38 = scmp.eq.s32.totalorder %s10, 7
    %p39 = por %p37, %p38
    %p40 = scmp.ne.s32.totalorder %s32, %s35
    %p41 = scmp.eq.s32.totalorder %s10, 0
    %p42 = por %p40, %p41
    %p43 = scmp.ne.s32.totalorder %s32, %s35
    %p44 = scmp.eq.s32.totalorder %s15, 7
    %p45 = por %p43, %p44
    %p46 = scmp.ne.s32.totalorder %s35, %s36
    %p47 = scmp.eq.s32.totalorder %s15, 0
    %p48 = por %p46, %p47
    %p49 = scmp.ne.s32.totalorder %s35, %s36
    %p50 = scmp.eq.s32.totalorder %s16, 7
    %p51 = por %p49, %p50
    %p53 = scmp.ne.s32.totalorder %s36, %s52
    %p54 = scmp.eq.s32.totalorder %s16, 0
    %p55 = por %p53, %p54
    %s56 = ssub.s32 %s17, %s29
    %p57 = scmp.eq.s32.totalorder %s56, 0
    %s59 = sadd.s32 %s58, 1
    %s60 = scalar_select %p57, %s58, %s59
    %p63 = pneg %p57
    %p64 = scmp.eq.s32.totalorder %s10, 7
    %p65 = por %p63, %p64
    %p66 = scmp.ne.s32.totalorder %s58, %s61
    %p67 = scmp.eq.s32.totalorder %s10, 0
    %p68 = por %p66, %p67
    %p69 = scmp.ne.s32.totalorder %s58, %s61
    %p70 = scmp.eq.s32.totalorder %s15, 7
    %p71 = por %p69, %p70
    %p72 = scmp.ne.s32.totalorder %s61, %s62
    %p73 = scmp.eq.s32.totalorder %s15, 0
    %p74 = por %p72, %p73
    %p75 = scmp.ne.s32.totalorder %s61, %s62
    %p76 = scmp.eq.s32.totalorder %s16, 7
    %p77 = por %p75, %p76
    %p79 = scmp.ne.s32.totalorder %s62, %s78
    %p80 = scmp.eq.s32.totalorder %s16, 0
    %p81 = por %p79, %p80
    %s83 = sadd.s32 %s82, 1
    %p86 = scmp.eq.s32.totalorder %s10, 7
    %p87 = scmp.ne.s32.totalorder %s82, %s84
    %p88 = scmp.eq.s32.totalorder %s10, 0
    %p89 = por %p87, %p88
    %p90 = scmp.ne.s32.totalorder %s82, %s84
    %p91 = scmp.eq.s32.totalorder %s15, 7
    %p92 = por %p90, %p91
    %p93 = scmp.ne.s32.totalorder %s84, %s85
    %p94 = scmp.eq.s32.totalorder %s15, 0
    %p95 = por %p93, %p94
    %p96 = scmp.ne.s32.totalorder %s84, %s85
    %p97 = scmp.eq.s32.totalorder %s16, 7
    %p98 = por %p96, %p97
    %p100 = scmp.ne.s32.totalorder %s85, %s99
    %p101 = scmp.eq.s32.totalorder %s16, 0
    %p102 = por %p100, %p101
    %s104 = sadd.s32 %s103, 1
    %p107 = scmp.eq.s32.totalorder %s10, 7
    %p108 = scmp.ne.s32.totalorder %s103, %s105
    %p109 = scmp.eq.s32.totalorder %s10, 0
    %p110 = por %p108, %p109
    %p111 = scmp.ne.s32.totalorder %s103, %s105
    %p112 = scmp.eq.s32.totalorder %s15, 7
    %p113 = por %p111, %p112
    %p114 = scmp.ne.s32.totalorder %s105, %s106
    %p115 = scmp.eq.s32.totalorder %s15, 0
    %p116 = por %p114, %p115
    %p117 = scmp.ne.s32.totalorder %s105, %s106
    %p118 = scmp.eq.s32.totalorder %s16, 7
    %p119 = por %p117, %p118
    %p121 = scmp.ne.s32.totalorder %s106, %s120
    %p122 = scmp.eq.s32.totalorder %s16, 0
    %p123 = por %p121, %p122
    %s124 = ssub.s32 %s17, %s29
    %s125 = ssub.s32 %s18, %s25
    %s126 = sor.u32 %s124, %s125
    %p127 = scmp.eq.s32.totalorder %s126, 0
    %s129 = sadd.s32 %s128, 1
    %s130 = scalar_select %p127, %s128, %s129
    %p133 = pneg %p127
    %p134 = scmp.eq.s32.totalorder %s10, 7
    %p135 = por %p133, %p134
    %p136 = scmp.ne.s32.totalorder %s128, %s131
    %p137 = scmp.eq.s32.totalorder %s10, 0
    %p138 = por %p136, %p137
    %p139 = scmp.ne.s32.totalorder %s128, %s131
    %p140 = scmp.eq.s32.totalorder %s15, 7
    %p141 = por %p139, %p140
    %p142 = scmp.ne.s32.totalorder %s131, %s132
    %p143 = scmp.eq.s32.totalorder %s15, 0
    %p144 = por %p142, %p143
    %p145 = scmp.ne.s32.totalorder %s131, %s132
    %p146 = scmp.eq.s32.totalorder %s16, 7
    %p147 = por %p145, %p146
    %p149 = scmp.ne.s32.totalorder %s132, %s148
    %p150 = scmp.eq.s32.totalorder %s16, 0
    %p151 = por %p149, %p150
    %p152 = scmp.le.s32.totalorder 1, %s10
    %p153 = scmp.lt.s32.totalorder %s10, 9
    %p154 = pnand %p152, %p153
    %p155 = pneg %p154
    // Predicated region
    $region9: #{transformer_ocr_forward.6} parent=5 // pred_check
      _
    $region10: #{transformer_ocr_forward.6} parent=5 // pred_check_branch
      %157 = sbr.rel (%p154) target = $region12
    $region11: #{transformer_ocr_forward.6} parent=5 // pred_region
      %s158 = ssub.s32 %s10, 1
      // Predicated region
      $region13: #{transformer_ocr_forward.6} parent=11 // pred_check
        %p159 = pneg %p95
      $region14: #{transformer_ocr_forward.6} parent=11 // pred_check_branch
        %161 = sbr.rel (%p159) target = $region16
      $region15: #{transformer_ocr_forward.6} parent=11 // pred_region
        _
      $region16: #{transformer_ocr_forward.6} parent=11 // pred_fallthru
        _
      // Predicated region
      $region17: #{transformer_ocr_forward.6} parent=11 // pred_check
        %p162 = pneg %p116
      $region18: #{transformer_ocr_forward.6} parent=11 // pred_check_branch
        %164 = sbr.rel (%p162) target = $region20
      $region19: #{transformer_ocr_forward.6} parent=11 // pred_region
        _
      $region20: #{transformer_ocr_forward.6} parent=11 // pred_fallthru
        _
    $region12: #{transformer_ocr_forward.6} parent=5 // pred_fallthru
      _
    %p165 = scmp.lt.s32.totalorder %s10, 8
    // Predicated region
    $region21: #{transformer_ocr_forward.6} parent=5 // pred_check
      %p166 = pneg %p165
    $region22: #{transformer_ocr_forward.6} parent=5 // pred_check_branch
      %168 = sbr.rel (%p166) target = $region24
    $region23: #{transformer_ocr_forward.6} parent=5 // pred_region
      // Predicated region
      $region25: #{transformer_ocr_forward.6} parent=23 // pred_check
        %p169 = pneg %p42
      $region26: #{transformer_ocr_forward.6} parent=23 // pred_check_branch
        %171 = sbr.rel (%p169) target = $region28
      $region27: #{transformer_ocr_forward.6} parent=23 // pred_region
        %p172 = scmp.lt.s32.totalorder %s17, 1
        %s173 = scalar_select %p172, %s17, 1
        %s174 = smul.addr %s173, 20
        %s175 = smul.addr %s174, 4
        %s176 = scalar_lea.vmem %s0, %s175
      $region28: #{transformer_ocr_forward.6} parent=23 // pred_fallthru
        _
      // Predicated region
      $region29: #{transformer_ocr_forward.6} parent=23 // pred_check
        %p177 = pneg %p68
      $region30: #{transformer_ocr_forward.6} parent=23 // pred_check_branch
        %179 = sbr.rel (%p177) target = $region32
      $region31: #{transformer_ocr_forward.6} parent=23 // pred_region
        %p180 = scmp.lt.s32.totalorder %s17, 1
        %s181 = scalar_select %p180, %s17, 1
        %s182 = smul.addr %s181, 20
        %s183 = smul.addr %s182, 4
        %s184 = scalar_lea.vmem %s1, %s183
      $region32: #{transformer_ocr_forward.6} parent=23 // pred_fallthru
        _
    $region24: #{transformer_ocr_forward.6} parent=5 // pred_fallthru
      _
    %p185 = scmp.le.s32.totalorder 1, %s10
    %p186 = scmp.lt.s32.totalorder %s10, 9
    %p187 = pnand %p185, %p186
    %p188 = pneg %p187
    // Predicated region
    $region33: #{transformer_ocr_forward.6} parent=5 // pred_check
      _
    $region34: #{transformer_ocr_forward.6} parent=5 // pred_check_branch
      %190 = sbr.rel (%p187) target = $region36
    $region35: #{transformer_ocr_forward.6} parent=5 // pred_region
      %s191 = ssub.s32 %s10, 1
      %p192 = scmp.lt.s32.totalorder %s19, 1
      %s193 = scalar_select %p192, %s19, 1
      %s194 = smul.addr %s193, 20
      %s195 = smul.addr %s194, 4
      %s196 = scalar_lea.vmem %s0, %s195
      %p197 = pneg %p48
      %p198 = pneg %p45
      %p199 = scmp.lt.s32.totalorder %s19, 1
      %s200 = scalar_select %p199, %s19, 1
      %s201 = smul.addr %s200, 20
      %s202 = smul.addr %s201, 4
      %s203 = scalar_lea.vmem %s1, %s202
      %p204 = pneg %p74
      %p205 = pneg %p71
      %p206 = pneg %p95
      %p207 = pneg %p92
      %p208 = pneg %p116
      %p209 = pneg %p113
      %p210 = pneg %p144
      %p211 = pneg %p141
      %p212 = scmp.lt.s32.totalorder %s19, 1
      %s213 = scalar_select %p212, %s19, 1
      %p214 = scmp.lt.s32.totalorder %s20, 3
      %s215 = scalar_select %p214, %s20, 3
      %s216 = smul.addr %s215, 2
      %s217 = smul.addr %s213, 8
      %s218 = sadd.s32 %s216, %s217
      %s219 = smul.addr %s218, 4
      %s220 = scalar_lea.vmem %s4, %s219
      %p221 = scmp.lt.s32.totalorder %s19, 1
      %s222 = scalar_select %p221, %s19, 1
      %s223 = smul.addr %s222, 20
      %s224 = smul.addr %s223, 4
      %s225 = scalar_lea.vmem %s0, %s224
      %p226 = scmp.lt.s32.totalorder %s19, 1
      %s227 = scalar_select %p226, %s19, 1
      %s228 = smul.addr %s227, 20
      %s229 = smul.addr %s228, 4
      %s230 = scalar_lea.vmem %s1, %s229
      %p231 = scmp.lt.s32.totalorder %s19, 1
      %s232 = scalar_select %p231, %s19, 1
      %p233 = scmp.lt.s32.totalorder %s20, 3
      %s234 = scalar_select %p233, %s20, 3
      %s235 = smul.addr %s234, 2
      %s236 = smul.addr %s232, 8
      %s237 = sadd.s32 %s235, %s236
      %s238 = smul.addr %s237, 4
      %s239 = scalar_lea.vmem %s4, %s238
      %s241 = smul.u32 %s20, 16
      %s242 = sshra.s32 %s241, 3
      %s243 = sand.u32 %s241, 7
      %s244 = smul.u32 %s242, 2
      %s245 = smul.addr %s244, 4
      %s246 = scalar_lea.vmem %s225, %s245
      %v247 = vld [vmem:[%s246] sm:$0xff]
      %v248 = vld [vmem:[%s246 + $0x8] sm:$0xff]
      %v249 = vld [vmem:[%s246 + $0x10] sm:$0xff]
      %s250 = smul.addr %s244, 4
      %s251 = scalar_lea.vmem %s230, %s250
      %v252 = vld [vmem:[%s251] sm:$0xff]
      %v253 = vld [vmem:[%s251 + $0x8] sm:$0xff]
      %v254 = vld [vmem:[%s251 + $0x10] sm:$0xff]
      %v255 = vld [vmem:[%s2] sm:$0xf]
      %v256 = vld [vmem:[%s2 + $0x4] sm:$0xf]
      %s257 = scalar_lea.vmem %s2, 8
      %v258 = vld [vmem:[%s257] sm:$0xf]
      %v259 = vld [vmem:[%s257 + $0x4] sm:$0xf]
      %v262 = vunpack.c.l.b16 %v258
      %v263 = vunpack.c.l.b16 %v259
      %v264 = vpack.c.b16 %v263, %v262
      %v268 = vunpack.c.l.b16 %v252
      %v269 = vunpack.c.l.b16 %v253
      %v270 = vunpack.c.l.b16 %v254
      %v271 = vpack.c.b16 %v269, %v268
      %v272 = vpack.c.b16 %v270, %v270
      %vm274 = vcmask 195584
      %v276 = vsel %vm274, %v264, 0
      %vm278 = vcmask 1043456
      %v280 = vsel %vm278, %v272, 0
      %282 = vmatprep.subr.bf16.mxu0 0
      %283 = vmatpush1.bf16.msra.mxu0 0
      %284 = vmatprep.subr.bf16.mxu0 0
      %285 = vmatpush1.bf16.msra.mxu0 0
      %286 = vmatprep.subr.bf16.mxu0 0
      %287 = vmatpush1.bf16.msra.mxu0 0
      %288 = vmatprep.subr.bf16.mxu0 0
      %289 = vmatpush1.bf16.msra.mxu0 0
      %290 = vmatprep.subr.bf16.mxu0 0
      %291 = vmatpush1.bf16.msra.mxu0 0
      %292 = vmatprep.subr.bf16.mxu0 0
      %293 = vmatpush1.bf16.msra.mxu0 0
      %294 = vmatprep.subr.bf16.mxu0 0
      %295 = vmatpush1.bf16.msra.mxu0 %v280
      %296 = vmatprep.subr.bf16.mxu0 0
      %297 = vmatpush1.bf16.msra.mxu0 %v271
      %298 = vmatprep.subr.bf16.mxu0 0
      %299 = vmatpush2.bf16.msra.mxu0 0
      %300 = vmatprep.subr.bf16.mxu0 0
      %301 = vmatpush2.bf16.msra.mxu0 0
      %302 = vmatprep.subr.bf16.mxu0 0
      %303 = vmatpush2.bf16.msra.mxu0 0
      %304 = vmatprep.subr.bf16.mxu0 0
      %305 = vmatpush2.bf16.msra.mxu0 0
      %306 = vmatprep.subr.bf16.mxu0 0
      %307 = vmatpush2.bf16.msra.mxu0 0
      %308 = vmatprep.subr.bf16.mxu0 0
      %309 = vmatpush2.bf16.msra.mxu0 0
      %310 = vmatprep.subr.bf16.mxu0 0
      %311 = vmatpush2.bf16.msra.mxu0 0
      %312 = vmatprep.subr.bf16.mxu0 0
      %313 = vmatpush2.bf16.msra.mxu0 0
      %314 = vmatprep.mubr.bf16.mxu0 0
      %315 = vmatmul.mubr.bf16.gmra.mxu0 %v276
      %v316 = vpop.f32.mrf.mxu0
      %v317 = vadd.f32 0.0, %v316
      %v318 = vpop.f32.mrf.mxu0
      %v319 = vpop.f32.mrf.mxu0
      %v320 = vadd.f32 0.0, %v319
      %v321 = vpop.f32.mrf.mxu0
      %322 = vdwg.mxu0
      %v325 = vunpack.c.l.b16 %v255
      %v326 = vunpack.c.l.b16 %v256
      %v327 = vpack.c.b16 %v326, %v325
      %v331 = vunpack.c.l.b16 %v247
      %v332 = vunpack.c.l.b16 %v248
      %v333 = vunpack.c.l.b16 %v249
      %v334 = vpack.c.b16 %v332, %v331
      %v335 = vpack.c.b16 %v333, %v333
      %v338 = vsel %vm274, %v327, 0
      %v341 = vsel %vm278, %v335, 0
      %343 = vmatprep.subr.bf16.mxu0 0
      %344 = vmatpush1.bf16.msra.mxu0 0
      %345 = vmatprep.subr.bf16.mxu0 0
      %346 = vmatpush1.bf16.msra.mxu0 0
      %347 = vmatprep.subr.bf16.mxu0 0
      %348 = vmatpush1.bf16.msra.mxu0 0
      %349 = vmatprep.subr.bf16.mxu0 0
      %350 = vmatpush1.bf16.msra.mxu0 0
      %351 = vmatprep.subr.bf16.mxu0 0
      %352 = vmatpush1.bf16.msra.mxu0 0
      %353 = vmatprep.subr.bf16.mxu0 0
      %354 = vmatpush1.bf16.msra.mxu0 0
      %355 = vmatprep.subr.bf16.mxu0 0
      %356 = vmatpush1.bf16.msra.mxu0 %v341
      %357 = vmatprep.subr.bf16.mxu0 0
      %358 = vmatpush1.bf16.msra.mxu0 %v334
      %359 = vmatprep.subr.bf16.mxu0 0
      %360 = vmatpush2.bf16.msra.mxu0 0
      %361 = vmatprep.subr.bf16.mxu0 0
      %362 = vmatpush2.bf16.msra.mxu0 0
      %363 = vmatprep.subr.bf16.mxu0 0
      %364 = vmatpush2.bf16.msra.mxu0 0
      %365 = vmatprep.subr.bf16.mxu0 0
      %366 = vmatpush2.bf16.msra.mxu0 0
      %367 = vmatprep.subr.bf16.mxu0 0
      %368 = vmatpush2.bf16.msra.mxu0 0
      %369 = vmatprep.subr.bf16.mxu0 0
      %370 = vmatpush2.bf16.msra.mxu0 0
      %371 = vmatprep.subr.bf16.mxu0 0
      %372 = vmatpush2.bf16.msra.mxu0 0
      %373 = vmatprep.subr.bf16.mxu0 0
      %374 = vmatpush2.bf16.msra.mxu0 0
      %375 = vmatprep.mubr.bf16.mxu0 0
      %376 = vmatmul.mubr.bf16.gmra.mxu0 %v338
      %v377 = vpop.f32.mrf.mxu0
      %v378 = vadd.f32 %v317, %v377
      %v379 = vpop.f32.mrf.mxu0
      %v380 = vpop.f32.mrf.mxu0
      %v381 = vadd.f32 %v320, %v380
      %v382 = vpop.f32.mrf.mxu0
      %383 = vdwg.mxu0
      %s384 = scalar_lea.vmem %s2, 16
      %v385 = vld [vmem:[%s384] sm:$0xf]
      %v386 = vld [vmem:[%s384 + $0x4] sm:$0xf]
      %v389 = vunpack.c.l.b16 %v385
      %v390 = vunpack.c.l.b16 %v386
      %v391 = vpack.c.b16 %v390, %v389
      %v392 = vunpack.c.h.b16 %v247
      %v393 = vunpack.c.h.b16 %v248
      %v394 = vunpack.c.h.b16 %v249
      %v395 = vpack.c.b16 %v393, %v392
      %v396 = vpack.c.b16 %v394, %v394
      %397 = vrot.lane.b32.xlu0 %v334, 127
      %v398 = vpop.permute.xlu0 %397
      %399 = vrot.lane.b32.xlu0 %v395, 127
      %v400 = vpop.permute.xlu0 %399
      %401 = vrot.lane.b32.xlu0 %v335, 127
      %v402 = vpop.permute.xlu0 %401
      %403 = vrot.lane.b32.xlu0 %v396, 127
      %v404 = vpop.permute.xlu0 %403
      %vm405 = vcmask 1039360
      %v406 = vsel %vm405, %v398, %v400
      %v407 = vsel %vm405, %v402, %v404
      %v410 = vsel %vm274, %v391, 0
      %v413 = vsel %vm278, %v407, 0
      %415 = vmatprep.subr.bf16.mxu0 0
      %416 = vmatpush1.bf16.msra.mxu0 0
      %417 = vmatprep.subr.bf16.mxu0 0
      %418 = vmatpush1.bf16.msra.mxu0 0
      %419 = vmatprep.subr.bf16.mxu0 0
      %420 = vmatpush1.bf16.msra.mxu0 0
      %421 = vmatprep.subr.bf16.mxu0 0
      %422 = vmatpush1.bf16.msra.mxu0 0
      %423 = vmatprep.subr.bf16.mxu0 0
      %424 = vmatpush1.bf16.msra.mxu0 0
      %425 = vmatprep.subr.bf16.mxu0 0
      %426 = vmatpush1.bf16.msra.mxu0 0
      %427 = vmatprep.subr.bf16.mxu0 0
      %428 = vmatpush1.bf16.msra.mxu0 %v413
      %429 = vmatprep.subr.bf16.mxu0 0
      %430 = vmatpush1.bf16.msra.mxu0 %v406
      %431 = vmatprep.subr.bf16.mxu0 0
      %432 = vmatpush2.bf16.msra.mxu0 0
      %433 = vmatprep.subr.bf16.mxu0 0
      %434 = vmatpush2.bf16.msra.mxu0 0
      %435 = vmatprep.subr.bf16.mxu0 0
      %436 = vmatpush2.bf16.msra.mxu0 0
      %437 = vmatprep.subr.bf16.mxu0 0
      %438 = vmatpush2.bf16.msra.mxu0 0
      %439 = vmatprep.subr.bf16.mxu0 0
      %440 = vmatpush2.bf16.msra.mxu0 0
      %441 = vmatprep.subr.bf16.mxu0 0
      %442 = vmatpush2.bf16.msra.mxu0 0
      %443 = vmatprep.subr.bf16.mxu0 0
      %444 = vmatpush2.bf16.msra.mxu0 0
      %445 = vmatprep.subr.bf16.mxu0 0
      %446 = vmatpush2.bf16.msra.mxu0 0
      %447 = vmatprep.mubr.bf16.mxu0 0
      %448 = vmatmul.mubr.bf16.gmra.mxu0 %v410
      %v449 = vpop.f32.mrf.mxu0
      %v450 = vadd.f32 0.0, %v449
      %v451 = vpop.f32.mrf.mxu0
      %v452 = vpop.f32.mrf.mxu0
      %v453 = vadd.f32 0.0, %v452
      %v454 = vpop.f32.mrf.mxu0
      %455 = vdwg.mxu0
      %v456 = vadd.f32 %v378, %v450
      %v457 = vadd.f32 %v381, %v453
      %458 = vmatprep.subr.bf16.mxu0 0
      %459 = vmatpush1.bf16.msra.mxu0 0
      %460 = vmatprep.subr.bf16.mxu0 0
      %461 = vmatpush1.bf16.msra.mxu0 0
      %462 = vmatprep.subr.bf16.mxu0 0
      %463 = vmatpush1.bf16.msra.mxu0 0
      %464 = vmatprep.subr.bf16.mxu0 0
      %465 = vmatpush1.bf16.msra.mxu0 0
      %466 = vmatprep.subr.bf16.mxu0 0
      %467 = vmatpush1.bf16.msra.mxu0 0
      %468 = vmatprep.subr.bf16.mxu0 0
      %469 = vmatpush1.bf16.msra.mxu0 0
      %470 = vmatprep.subr.bf16.mxu0 0
      %471 = vmatpush1.bf16.msra.mxu0 %v413
      %472 = vmatprep.subr.bf16.mxu0 0
      %473 = vmatpush1.bf16.msra.mxu0 %v406
      %474 = vmatprep.subr.bf16.mxu0 0
      %475 = vmatpush2.bf16.msra.mxu0 0
      %476 = vmatprep.subr.bf16.mxu0 0
      %477 = vmatpush2.bf16.msra.mxu0 0
      %478 = vmatprep.subr.bf16.mxu0 0
      %479 = vmatpush2.bf16.msra.mxu0 0
      %480 = vmatprep.subr.bf16.mxu0 0
      %481 = vmatpush2.bf16.msra.mxu0 0
      %482 = vmatprep.subr.bf16.mxu0 0
      %483 = vmatpush2.bf16.msra.mxu0 0
      %484 = vmatprep.subr.bf16.mxu0 0
      %485 = vmatpush2.bf16.msra.mxu0 0
      %486 = vmatprep.subr.bf16.mxu0 0
      %487 = vmatpush2.bf16.msra.mxu0 0
      %488 = vmatprep.subr.bf16.mxu0 0
      %489 = vmatpush2.bf16.msra.mxu0 0
      %490 = vmatprep.mubr.bf16.mxu0 0
      %491 = vmatmul.mubr.bf16.gmra.mxu0 %v276
      %v492 = vpop.f32.mrf.mxu0
      %v493 = vadd.f32 0.0, %v492
      %v494 = vpop.f32.mrf.mxu0
      %v495 = vpop.f32.mrf.mxu0
      %v496 = vadd.f32 0.0, %v495
      %v497 = vpop.f32.mrf.mxu0
      %498 = vdwg.mxu0
      %499 = vmatprep.subr.bf16.mxu0 0
      %500 = vmatpush1.bf16.msra.mxu0 0
      %501 = vmatprep.subr.bf16.mxu0 0
      %502 = vmatpush1.bf16.msra.mxu0 0
      %503 = vmatprep.subr.bf16.mxu0 0
      %504 = vmatpush1.bf16.msra.mxu0 0
      %505 = vmatprep.subr.bf16.mxu0 0
      %506 = vmatpush1.bf16.msra.mxu0 0
      %507 = vmatprep.subr.bf16.mxu0 0
      %508 = vmatpush1.bf16.msra.mxu0 0
      %509 = vmatprep.subr.bf16.mxu0 0
      %510 = vmatpush1.bf16.msra.mxu0 0
      %511 = vmatprep.subr.bf16.mxu0 0
      %512 = vmatpush1.bf16.msra.mxu0 %v280
      %513 = vmatprep.subr.bf16.mxu0 0
      %514 = vmatpush1.bf16.msra.mxu0 %v271
      %515 = vmatprep.subr.bf16.mxu0 0
      %516 = vmatpush2.bf16.msra.mxu0 0
      %517 = vmatprep.subr.bf16.mxu0 0
      %518 = vmatpush2.bf16.msra.mxu0 0
      %519 = vmatprep.subr.bf16.mxu0 0
      %520 = vmatpush2.bf16.msra.mxu0 0
      %521 = vmatprep.subr.bf16.mxu0 0
      %522 = vmatpush2.bf16.msra.mxu0 0
      %523 = vmatprep.subr.bf16.mxu0 0
      %524 = vmatpush2.bf16.msra.mxu0 0
      %525 = vmatprep.subr.bf16.mxu0 0
      %526 = vmatpush2.bf16.msra.mxu0 0
      %527 = vmatprep.subr.bf16.mxu0 0
      %528 = vmatpush2.bf16.msra.mxu0 0
      %529 = vmatprep.subr.bf16.mxu0 0
      %530 = vmatpush2.bf16.msra.mxu0 0
      %531 = vmatprep.mubr.bf16.mxu0 0
      %532 = vmatmul.mubr.bf16.gmra.mxu0 %v338
      %v533 = vpop.f32.mrf.mxu0
      %v534 = vadd.f32 %v493, %v533
      %v535 = vpop.f32.mrf.mxu0
      %v536 = vpop.f32.mrf.mxu0
      %v537 = vadd.f32 %v496, %v536
      %v538 = vpop.f32.mrf.mxu0
      %539 = vdwg.mxu0
      %v540 = vunpack.c.h.b16 %v252
      %v541 = vunpack.c.h.b16 %v253
      %v542 = vunpack.c.h.b16 %v254
      %v543 = vpack.c.b16 %v541, %v540
      %v544 = vpack.c.b16 %v542, %v542
      %545 = vrot.lane.b32.xlu0 %v271, 127
      %v546 = vpop.permute.xlu0 %545
      %547 = vrot.lane.b32.xlu0 %v543, 127
      %v548 = vpop.permute.xlu0 %547
      %549 = vrot.lane.b32.xlu0 %v272, 127
      %v550 = vpop.permute.xlu0 %549
      %551 = vrot.lane.b32.xlu0 %v544, 127
      %v552 = vpop.permute.xlu0 %551
      %v553 = vsel %vm405, %v546, %v548
      %v554 = vsel %vm405, %v550, %v552
      %v557 = vsel %vm278, %v554, 0
      %559 = vmatprep.subr.bf16.mxu0 0
      %560 = vmatpush1.bf16.msra.mxu0 0
      %561 = vmatprep.subr.bf16.mxu0 0
      %562 = vmatpush1.bf16.msra.mxu0 0
      %563 = vmatprep.subr.bf16.mxu0 0
      %564 = vmatpush1.bf16.msra.mxu0 0
      %565 = vmatprep.subr.bf16.mxu0 0
      %566 = vmatpush1.bf16.msra.mxu0 0
      %567 = vmatprep.subr.bf16.mxu0 0
      %568 = vmatpush1.bf16.msra.mxu0 0
      %569 = vmatprep.subr.bf16.mxu0 0
      %570 = vmatpush1.bf16.msra.mxu0 0
      %571 = vmatprep.subr.bf16.mxu0 0
      %572 = vmatpush1.bf16.msra.mxu0 %v557
      %573 = vmatprep.subr.bf16.mxu0 0
      %574 = vmatpush1.bf16.msra.mxu0 %v553
      %575 = vmatprep.subr.bf16.mxu0 0
      %576 = vmatpush2.bf16.msra.mxu0 0
      %577 = vmatprep.subr.bf16.mxu0 0
      %578 = vmatpush2.bf16.msra.mxu0 0
      %579 = vmatprep.subr.bf16.mxu0 0
      %580 = vmatpush2.bf16.msra.mxu0 0
      %581 = vmatprep.subr.bf16.mxu0 0
      %582 = vmatpush2.bf16.msra.mxu0 0
      %583 = vmatprep.subr.bf16.mxu0 0
      %584 = vmatpush2.bf16.msra.mxu0 0
      %585 = vmatprep.subr.bf16.mxu0 0
      %586 = vmatpush2.bf16.msra.mxu0 0
      %587 = vmatprep.subr.bf16.mxu0 0
      %588 = vmatpush2.bf16.msra.mxu0 0
      %589 = vmatprep.subr.bf16.mxu0 0
      %590 = vmatpush2.bf16.msra.mxu0 0
      %591 = vmatprep.mubr.bf16.mxu0 0
      %592 = vmatmul.mubr.bf16.gmra.mxu0 %v410
      %v593 = vpop.f32.mrf.mxu0
      %v594 = vadd.f32 0.0, %v593
      %v595 = vpop.f32.mrf.mxu0
      %v596 = vpop.f32.mrf.mxu0
      %v597 = vadd.f32 0.0, %v596
      %v598 = vpop.f32.mrf.mxu0
      %599 = vdwg.mxu0
      %v600 = vadd.f32 %v534, %v594
      %v601 = vadd.f32 %v537, %v597
      %v602 = vmax.f32 %v456, %v600
      %v603 = vmax.f32 %v457, %v601
      %s604 = smul.u32 %s20, 2
      %s605 = sadd.s32 %s604, 1
      %s606 = smul.u32 %s605, 8
      %s607 = sshra.s32 %s606, 3
      %s608 = sand.u32 %s606, 7
      %s609 = smul.u32 %s607, 2
      %s610 = smul.addr %s609, 4
      %s611 = scalar_lea.vmem %s225, %s610
      %v612 = vld [vmem:[%s611] sm:$0xff]
      %v613 = vld [vmem:[%s611 + $0x8] sm:$0xff]
      %v614 = vld [vmem:[%s611 + $0x10] sm:$0xff]
      %s615 = smul.addr %s609, 4
      %s616 = scalar_lea.vmem %s230, %s615
      %v617 = vld [vmem:[%s616] sm:$0xff]
      %v618 = vld [vmem:[%s616 + $0x8] sm:$0xff]
      %v619 = vld [vmem:[%s616 + $0x10] sm:$0xff]
      %v623 = vunpack.c.l.b16 %v617
      %v624 = vunpack.c.l.b16 %v618
      %v625 = vunpack.c.l.b16 %v619
      %v626 = vpack.c.b16 %v624, %v623
      %v627 = vpack.c.b16 %v625, %v625
      %v630 = vsel %vm278, %v627, 0
      %632 = vmatprep.subr.bf16.mxu0 0
      %633 = vmatpush1.bf16.msra.mxu0 0
      %634 = vmatprep.subr.bf16.mxu0 0
      %635 = vmatpush1.bf16.msra.mxu0 0
      %636 = vmatprep.subr.bf16.mxu0 0
      %637 = vmatpush1.bf16.msra.mxu0 0
      %638 = vmatprep.subr.bf16.mxu0 0
      %639 = vmatpush1.bf16.msra.mxu0 0
      %640 = vmatprep.subr.bf16.mxu0 0
      %641 = vmatpush1.bf16.msra.mxu0 0
      %642 = vmatprep.subr.bf16.mxu0 0
      %643 = vmatpush1.bf16.msra.mxu0 0
      %644 = vmatprep.subr.bf16.mxu0 0
      %645 = vmatpush1.bf16.msra.mxu0 %v630
      %646 = vmatprep.subr.bf16.mxu0 0
      %647 = vmatpush1.bf16.msra.mxu0 %v626
      %648 = vmatprep.subr.bf16.mxu0 0
      %649 = vmatpush2.bf16.msra.mxu0 0
      %650 = vmatprep.subr.bf16.mxu0 0
      %651 = vmatpush2.bf16.msra.mxu0 0
      %652 = vmatprep.subr.bf16.mxu0 0
      %653 = vmatpush2.bf16.msra.mxu0 0
      %654 = vmatprep.subr.bf16.mxu0 0
      %655 = vmatpush2.bf16.msra.mxu0 0
      %656 = vmatprep.subr.bf16.mxu0 0
      %657 = vmatpush2.bf16.msra.mxu0 0
      %658 = vmatprep.subr.bf16.mxu0 0
      %659 = vmatpush2.bf16.msra.mxu0 0
      %660 = vmatprep.subr.bf16.mxu0 0
      %661 = vmatpush2.bf16.msra.mxu0 0
      %662 = vmatprep.subr.bf16.mxu0 0
      %663 = vmatpush2.bf16.msra.mxu0 0
      %664 = vmatprep.mubr.bf16.mxu0 0
      %665 = vmatmul.mubr.bf16.gmra.mxu0 %v276
      %v666 = vpop.f32.mrf.mxu0
      %v667 = vadd.f32 0.0, %v666
      %v668 = vpop.f32.mrf.mxu0
      %v669 = vpop.f32.mrf.mxu0
      %v670 = vadd.f32 0.0, %v669
      %v671 = vpop.f32.mrf.mxu0
      %672 = vdwg.mxu0
      %v676 = vunpack.c.l.b16 %v612
      %v677 = vunpack.c.l.b16 %v613
      %v678 = vunpack.c.l.b16 %v614
      %v679 = vpack.c.b16 %v677, %v676
      %v680 = vpack.c.b16 %v678, %v678
      %v683 = vsel %vm278, %v680, 0
      %685 = vmatprep.subr.bf16.mxu0 0
      %686 = vmatpush1.bf16.msra.mxu0 0
      %687 = vmatprep.subr.bf16.mxu0 0
      %688 = vmatpush1.bf16.msra.mxu0 0
      %689 = vmatprep.subr.bf16.mxu0 0
      %690 = vmatpush1.bf16.msra.mxu0 0
      %691 = vmatprep.subr.bf16.mxu0 0
      %692 = vmatpush1.bf16.msra.mxu0 0
      %693 = vmatprep.subr.bf16.mxu0 0
      %694 = vmatpush1.bf16.msra.mxu0 0
      %695 = vmatprep.subr.bf16.mxu0 0
      %696 = vmatpush1.bf16.msra.mxu0 0
      %697 = vmatprep.subr.bf16.mxu0 0
      %698 = vmatpush1.bf16.msra.mxu0 %v683
      %699 = vmatprep.subr.bf16.mxu0 0
      %700 = vmatpush1.bf16.msra.mxu0 %v679
      %701 = vmatprep.subr.bf16.mxu0 0
      %702 = vmatpush2.bf16.msra.mxu0 0
      %703 = vmatprep.subr.bf16.mxu0 0
      %704 = vmatpush2.bf16.msra.mxu0 0
      %705 = vmatprep.subr.bf16.mxu0 0
      %706 = vmatpush2.bf16.msra.mxu0 0
      %707 = vmatprep.subr.bf16.mxu0 0
      %708 = vmatpush2.bf16.msra.mxu0 0
      %709 = vmatprep.subr.bf16.mxu0 0
      %710 = vmatpush2.bf16.msra.mxu0 0
      %711 = vmatprep.subr.bf16.mxu0 0
      %712 = vmatpush2.bf16.msra.mxu0 0
      %713 = vmatprep.subr.bf16.mxu0 0
      %714 = vmatpush2.bf16.msra.mxu0 0
      %715 = vmatprep.subr.bf16.mxu0 0
      %716 = vmatpush2.bf16.msra.mxu0 0
      %717 = vmatprep.mubr.bf16.mxu0 0
      %718 = vmatmul.mubr.bf16.gmra.mxu0 %v338
      %v719 = vpop.f32.mrf.mxu0
      %v720 = vadd.f32 %v667, %v719
      %v721 = vpop.f32.mrf.mxu0
      %v722 = vpop.f32.mrf.mxu0
      %v723 = vadd.f32 %v670, %v722
      %v724 = vpop.f32.mrf.mxu0
      %725 = vdwg.mxu0
      %v726 = vunpack.c.h.b16 %v612
      %v727 = vunpack.c.h.b16 %v613
      %v728 = vunpack.c.h.b16 %v614
      %v729 = vpack.c.b16 %v727, %v726
      %v730 = vpack.c.b16 %v728, %v728
      %731 = vrot.lane.b32.xlu0 %v679, 127
      %v732 = vpop.permute.xlu0 %731
      %733 = vrot.lane.b32.xlu0 %v729, 127
      %v734 = vpop.permute.xlu0 %733
      %735 = vrot.lane.b32.xlu0 %v680, 127
      %v736 = vpop.permute.xlu0 %735
      %737 = vrot.lane.b32.xlu0 %v730, 127
      %v738 = vpop.permute.xlu0 %737
      %v739 = vsel %vm405, %v732, %v734
      %v740 = vsel %vm405, %v736, %v738
      %v743 = vsel %vm278, %v740, 0
      %745 = vmatprep.subr.bf16.mxu0 0
      %746 = vmatpush1.bf16.msra.mxu0 0
      %747 = vmatprep.subr.bf16.mxu0 0
      %748 = vmatpush1.bf16.msra.mxu0 0
      %749 = vmatprep.subr.bf16.mxu0 0
      %750 = vmatpush1.bf16.msra.mxu0 0
      %751 = vmatprep.subr.bf16.mxu0 0
      %752 = vmatpush1.bf16.msra.mxu0 0
      %753 = vmatprep.subr.bf16.mxu0 0
      %754 = vmatpush1.bf16.msra.mxu0 0
      %755 = vmatprep.subr.bf16.mxu0 0
      %756 = vmatpush1.bf16.msra.mxu0 0
      %757 = vmatprep.subr.bf16.mxu0 0
      %758 = vmatpush1.bf16.msra.mxu0 %v743
      %759 = vmatprep.subr.bf16.mxu0 0
      %760 = vmatpush1.bf16.msra.mxu0 %v739
      %761 = vmatprep.subr.bf16.mxu0 0
      %762 = vmatpush2.bf16.msra.mxu0 0
      %763 = vmatprep.subr.bf16.mxu0 0
      %764 = vmatpush2.bf16.msra.mxu0 0
      %765 = vmatprep.subr.bf16.mxu0 0
      %766 = vmatpush2.bf16.msra.mxu0 0
      %767 = vmatprep.subr.bf16.mxu0 0
      %768 = vmatpush2.bf16.msra.mxu0 0
      %769 = vmatprep.subr.bf16.mxu0 0
      %770 = vmatpush2.bf16.msra.mxu0 0
      %771 = vmatprep.subr.bf16.mxu0 0
      %772 = vmatpush2.bf16.msra.mxu0 0
      %773 = vmatprep.subr.bf16.mxu0 0
      %774 = vmatpush2.bf16.msra.mxu0 0
      %775 = vmatprep.subr.bf16.mxu0 0
      %776 = vmatpush2.bf16.msra.mxu0 0
      %777 = vmatprep.mubr.bf16.mxu0 0
      %778 = vmatmul.mubr.bf16.gmra.mxu0 %v410
      %v779 = vpop.f32.mrf.mxu0
      %v780 = vadd.f32 0.0, %v779
      %v781 = vpop.f32.mrf.mxu0
      %v782 = vpop.f32.mrf.mxu0
      %v783 = vadd.f32 0.0, %v782
      %v784 = vpop.f32.mrf.mxu0
      %785 = vdwg.mxu0
      %v786 = vadd.f32 %v720, %v780
      %v787 = vadd.f32 %v723, %v783
      %v788 = vmax.f32 %v602, %v786
      %v789 = vmax.f32 %v603, %v787
      %790 = vmatprep.subr.bf16.mxu0 0
      %791 = vmatpush1.bf16.msra.mxu0 0
      %792 = vmatprep.subr.bf16.mxu0 0
      %793 = vmatpush1.bf16.msra.mxu0 0
      %794 = vmatprep.subr.bf16.mxu0 0
      %795 = vmatpush1.bf16.msra.mxu0 0
      %796 = vmatprep.subr.bf16.mxu0 0
      %797 = vmatpush1.bf16.msra.mxu0 0
      %798 = vmatprep.subr.bf16.mxu0 0
      %799 = vmatpush1.bf16.msra.mxu0 0
      %800 = vmatprep.subr.bf16.mxu0 0
      %801 = vmatpush1.bf16.msra.mxu0 0
      %802 = vmatprep.subr.bf16.mxu0 0
      %803 = vmatpush1.bf16.msra.mxu0 %v743
      %804 = vmatprep.subr.bf16.mxu0 0
      %805 = vmatpush1.bf16.msra.mxu0 %v739
      %806 = vmatprep.subr.bf16.mxu0 0
      %807 = vmatpush2.bf16.msra.mxu0 0
      %808 = vmatprep.subr.bf16.mxu0 0
      %809 = vmatpush2.bf16.msra.mxu0 0
      %810 = vmatprep.subr.bf16.mxu0 0
      %811 = vmatpush2.bf16.msra.mxu0 0
      %812 = vmatprep.subr.bf16.mxu0 0
      %813 = vmatpush2.bf16.msra.mxu0 0
      %814 = vmatprep.subr.bf16.mxu0 0
      %815 = vmatpush2.bf16.msra.mxu0 0
      %816 = vmatprep.subr.bf16.mxu0 0
      %817 = vmatpush2.bf16.msra.mxu0 0
      %818 = vmatprep.subr.bf16.mxu0 0
      %819 = vmatpush2.bf16.msra.mxu0 0
      %820 = vmatprep.subr.bf16.mxu0 0
      %821 = vmatpush2.bf16.msra.mxu0 0
      %822 = vmatprep.mubr.bf16.mxu0 0
      %823 = vmatmul.mubr.bf16.gmra.mxu0 %v276
      %v824 = vpop.f32.mrf.mxu0
      %v825 = vadd.f32 0.0, %v824
      %v826 = vpop.f32.mrf.mxu0
      %v827 = vpop.f32.mrf.mxu0
      %v828 = vadd.f32 0.0, %v827
      %v829 = vpop.f32.mrf.mxu0
      %830 = vdwg.mxu0
      %831 = vmatprep.subr.bf16.mxu0 0
      %832 = vmatpush1.bf16.msra.mxu0 0
      %833 = vmatprep.subr.bf16.mxu0 0
      %834 = vmatpush1.bf16.msra.mxu0 0
      %835 = vmatprep.subr.bf16.mxu0 0
      %836 = vmatpush1.bf16.msra.mxu0 0
      %837 = vmatprep.subr.bf16.mxu0 0
      %838 = vmatpush1.bf16.msra.mxu0 0
      %839 = vmatprep.subr.bf16.mxu0 0
      %840 = vmatpush1.bf16.msra.mxu0 0
      %841 = vmatprep.subr.bf16.mxu0 0
      %842 = vmatpush1.bf16.msra.mxu0 0
      %843 = vmatprep.subr.bf16.mxu0 0
      %844 = vmatpush1.bf16.msra.mxu0 %v630
      %845 = vmatprep.subr.bf16.mxu0 0
      %846 = vmatpush1.bf16.msra.mxu0 %v626
      %847 = vmatprep.subr.bf16.mxu0 0
      %848 = vmatpush2.bf16.msra.mxu0 0
      %849 = vmatprep.subr.bf16.mxu0 0
      %850 = vmatpush2.bf16.msra.mxu0 0
      %851 = vmatprep.subr.bf16.mxu0 0
      %852 = vmatpush2.bf16.msra.mxu0 0
      %853 = vmatprep.subr.bf16.mxu0 0
      %854 = vmatpush2.bf16.msra.mxu0 0
      %855 = vmatprep.subr.bf16.mxu0 0
      %856 = vmatpush2.bf16.msra.mxu0 0
      %857 = vmatprep.subr.bf16.mxu0 0
      %858 = vmatpush2.bf16.msra.mxu0 0
      %859 = vmatprep.subr.bf16.mxu0 0
      %860 = vmatpush2.bf16.msra.mxu0 0
      %861 = vmatprep.subr.bf16.mxu0 0
      %862 = vmatpush2.bf16.msra.mxu0 0
      %863 = vmatprep.mubr.bf16.mxu0 0
      %864 = vmatmul.mubr.bf16.gmra.mxu0 %v338
      %v865 = vpop.f32.mrf.mxu0
      %v866 = vadd.f32 %v825, %v865
      %v867 = vpop.f32.mrf.mxu0
      %v868 = vpop.f32.mrf.mxu0
      %v869 = vadd.f32 %v828, %v868
      %v870 = vpop.f32.mrf.mxu0
      %871 = vdwg.mxu0
      %v872 = vunpack.c.h.b16 %v617
      %v873 = vunpack.c.h.b16 %v618
      %v874 = vunpack.c.h.b16 %v619
      %v875 = vpack.c.b16 %v873, %v872
      %v876 = vpack.c.b16 %v874, %v874
      %877 = vrot.lane.b32.xlu0 %v626, 127
      %v878 = vpop.permute.xlu0 %877
      %879 = vrot.lane.b32.xlu0 %v875, 127
      %v880 = vpop.permute.xlu0 %879
      %881 = vrot.lane.b32.xlu0 %v627, 127
      %v882 = vpop.permute.xlu0 %881
      %883 = vrot.lane.b32.xlu0 %v876, 127
      %v884 = vpop.permute.xlu0 %883
      %v885 = vsel %vm405, %v878, %v880
      %v886 = vsel %vm405, %v882, %v884
      %v889 = vsel %vm278, %v886, 0
      %891 = vmatprep.subr.bf16.mxu0 0
      %892 = vmatpush1.bf16.msra.mxu0 0
      %893 = vmatprep.subr.bf16.mxu0 0
      %894 = vmatpush1.bf16.msra.mxu0 0
      %895 = vmatprep.subr.bf16.mxu0 0
      %896 = vmatpush1.bf16.msra.mxu0 0
      %897 = vmatprep.subr.bf16.mxu0 0
      %898 = vmatpush1.bf16.msra.mxu0 0
      %899 = vmatprep.subr.bf16.mxu0 0
      %900 = vmatpush1.bf16.msra.mxu0 0
      %901 = vmatprep.subr.bf16.mxu0 0
      %902 = vmatpush1.bf16.msra.mxu0 0
      %903 = vmatprep.subr.bf16.mxu0 0
      %904 = vmatpush1.bf16.msra.mxu0 %v889
      %905 = vmatprep.subr.bf16.mxu0 0
      %906 = vmatpush1.bf16.msra.mxu0 %v885
      %907 = vmatprep.subr.bf16.mxu0 0
      %908 = vmatpush2.bf16.msra.mxu0 0
      %909 = vmatprep.subr.bf16.mxu0 0
      %910 = vmatpush2.bf16.msra.mxu0 0
      %911 = vmatprep.subr.bf16.mxu0 0
      %912 = vmatpush2.bf16.msra.mxu0 0
      %913 = vmatprep.subr.bf16.mxu0 0
      %914 = vmatpush2.bf16.msra.mxu0 0
      %915 = vmatprep.subr.bf16.mxu0 0
      %916 = vmatpush2.bf16.msra.mxu0 0
      %917 = vmatprep.subr.bf16.mxu0 0
      %918 = vmatpush2.bf16.msra.mxu0 0
      %919 = vmatprep.subr.bf16.mxu0 0
      %920 = vmatpush2.bf16.msra.mxu0 0
      %921 = vmatprep.subr.bf16.mxu0 0
      %922 = vmatpush2.bf16.msra.mxu0 0
      %923 = vmatprep.mubr.bf16.mxu0 0
      %924 = vmatmul.mubr.bf16.gmra.mxu0 %v410
      %v925 = vpop.f32.mrf.mxu0
      %v926 = vadd.f32 0.0, %v925
      %v927 = vpop.f32.mrf.mxu0
      %v928 = vpop.f32.mrf.mxu0
      %v929 = vadd.f32 0.0, %v928
      %v930 = vpop.f32.mrf.mxu0
      %931 = vdwg.mxu0
      %v932 = vadd.f32 %v866, %v926
      %v933 = vadd.f32 %v869, %v929
      %v934 = vmax.f32 %v788, %v932
      %v935 = vmax.f32 %v789, %v933
      %v936 = vld [vmem:[%s3] sm:$0xff]
      %v937 = vld [vmem:[%s3 + $0x8] sm:$0xff]
      %939 = vset.pattern.permute.xlu0 0
      %940 = vperm.xlu0 %939, %v936
      %v941 = vpop.permute.xlu0 %940
      %944 = vset.pattern.permute.xlu0 0
      %945 = vperm.xlu0 %944, %v937
      %v946 = vpop.permute.xlu0 %945
      %v948 = vadd.f32 %v934, %v941
      %v949 = vadd.f32 %v935, %v946
      %v950 = vmax.f32 %v948, 0.0
      %v951 = vmax.f32 %v949, 0.0
      %v952 = vpack.c.bf16 %v951, %v950
      %v954 = vunpack.c.l.b16 %v952
      %v955 = vunpack.c.h.b16 %v952
      %v956 = vpack.c.b16 %v954, %v954
      %v957 = vpack.c.b16 %v955, %v955
      %960 = vst [vmem:[%s239] sm:$0xf] %v956
      %961 = vst [vmem:[%s239 + $0x4] sm:$0xf] %v957
      %p962 = scmp.lt.s32.totalorder %s19, 1
      %s963 = scalar_select %p962, %s19, 1
      %p964 = scmp.lt.s32.totalorder %s20, 3
      %s965 = scalar_select %p964, %s20, 3
      %s966 = smul.addr %s965, 2
      %s967 = smul.addr %s963, 8
      %s968 = sadd.s32 %s966, %s967
      %s969 = smul.addr %s968, 4
      %s970 = scalar_lea.vmem %s4, %s969
      // Predicated region
      $region37: #{transformer_ocr_forward.6} parent=35 // pred_check
        %p971 = pneg %p141
      $region38: #{transformer_ocr_forward.6} parent=35 // pred_check_branch
        %973 = sbr.rel (%p971) target = $region40
      $region39: #{transformer_ocr_forward.6} parent=35 // pred_region
        _
      $region40: #{transformer_ocr_forward.6} parent=35 // pred_fallthru
        _
    $region36: #{transformer_ocr_forward.6} parent=5 // pred_fallthru
      _
    %p974 = scmp.le.s32.totalorder 2, %s10
    // Predicated region
    $region41: #{transformer_ocr_forward.6} parent=5 // pred_check
      %p975 = pneg %p974
    $region42: #{transformer_ocr_forward.6} parent=5 // pred_check_branch
      %977 = sbr.rel (%p975) target = $region44
    $region43: #{transformer_ocr_forward.6} parent=5 // pred_region
      %s978 = ssub.s32 %s10, 2
      // Predicated region
      $region45: #{transformer_ocr_forward.6} parent=43 // pred_check
        %p979 = pneg %p147
      $region46: #{transformer_ocr_forward.6} parent=43 // pred_check_branch
        %981 = sbr.rel (%p979) target = $region48
      $region47: #{transformer_ocr_forward.6} parent=43 // pred_region
        %p982 = scmp.lt.s32.totalorder %s21, 1
        %s983 = scalar_select %p982, %s21, 1
        %p984 = scmp.lt.s32.totalorder %s22, 3
        %s985 = scalar_select %p984, %s22, 3
        %s986 = smul.addr %s985, 2
        %s987 = smul.addr %s983, 8
        %s988 = sadd.s32 %s986, %s987
        %s989 = smul.addr %s988, 4
        %s990 = scalar_lea.vmem %s4, %s989
      $region48: #{transformer_ocr_forward.6} parent=43 // pred_fallthru
        _
    $region44: #{transformer_ocr_forward.6} parent=5 // pred_fallthru
      _
  $region6: #{transformer_ocr_forward.6} parent=0 // loop_footer
    %s14 = sadd.s32 1, %s10
  $region7: #{transformer_ocr_forward.6} parent=0 // loop_footer_branch
    %9 = sbr.rel target = $region3
  $region8: #{transformer_ocr_forward.6} parent=0 // loop_exit
    _

// kernel: transformer_ocr_forward.7
$region0: #{transformer_ocr_forward.7}
  #allocation0 [shape = 'u32[]', space=smem, size = 0x4, offset = 0x4, fixed_abs, tag = 'smem constant byte address 0x4 - core index']
  #allocation1 [shape = 'u32[144,128]{1,0:T(1,128)}', space=vmem, size = 0x12000, scoped, tag = 'internal scratch']
  %s0 = inlined_call_operand.vmem [shape: bf16[32,64], index: 0, kind: input, shape index: {}]
  %s1 = inlined_call_operand.vmem [shape: bf16[64,32], index: 1, kind: input, shape index: {}]
  %s2 = inlined_call_operand.vmem [shape: f32[1,32], index: 2, kind: input, shape index: {}]
  %s3 = inlined_call_operand.vmem [shape: f32[16,32], index: 3, kind: input, shape index: {}]
  %s4 = inlined_call_operand.vmem [shape: bf16[32,32], index: 4, kind: output, shape index: {}]
  %s5 = sld [smem:[#allocation0]]
  $region49: #{transformer_ocr_forward.7} parent=0
    _
  %s7 = ssub.s32 1, %s5
  %s8 = scalar_select 0, %s7, %s5
  loop: start=0, step=1, limit=4
  $region2: #{transformer_ocr_forward.7} parent=0 // loop_pre_header
    _
  $region3: #{transformer_ocr_forward.7} parent=0 // loop_header
    %s10 = sphi 0, %s14
    %p11 = scmp.ge.s32.totalorder %s10, 4
    %s20 = sphi 0, %s22
    %s23 = sphi 0, %s20
    %s24 = sphi 0, %s23
    %s40 = sphi 0, %s24
    %s44 = sphi 0, %s44
    %s46 = sphi 0, %s44
    %s47 = sphi 0, %s46
    %s61 = sphi 0, %s47
    %s65 = sphi 0, %s65
    %s67 = sphi 0, %s65
    %s68 = sphi 0, %s67
    %s82 = sphi 0, %s68
    %s86 = sphi 0, %s86
    %s88 = sphi 0, %s86
    %s89 = sphi 0, %s88
    %s103 = sphi 0, %s89
    %s109 = sphi 0, %s111
    %s112 = sphi 0, %s109
    %s113 = sphi 0, %s112
    %s129 = sphi 0, %s113
  $region4: #{transformer_ocr_forward.7} parent=0 // loop_header_branch
    %13 = sbr.rel (%p11) target = $region8
  $region5: #{transformer_ocr_forward.7} parent=0 // loop_body
    %s15 = ssub.s32 %s10, 1
    %s16 = ssub.s32 %s10, 2
    %s17 = sadd.s32 %s10, 1
    %s18 = ssub.s32 %s10, %s17
    %p19 = scmp.eq.s32.totalorder %s18, 0
    %s21 = sadd.s32 %s20, 1
    %s22 = scalar_select %p19, %s20, %s21
    %p25 = pneg %p19
    %p26 = scmp.eq.s32.totalorder %s10, 1
    %p27 = por %p25, %p26
    %p28 = scmp.ne.s32.totalorder %s20, %s23
    %p29 = scmp.eq.s32.totalorder %s10, 0
    %p30 = por %p28, %p29
    %p31 = scmp.ne.s32.totalorder %s20, %s23
    %p32 = scmp.eq.s32.totalorder %s15, 1
    %p33 = por %p31, %p32
    %p34 = scmp.ne.s32.totalorder %s23, %s24
    %p35 = scmp.eq.s32.totalorder %s15, 0
    %p36 = por %p34, %p35
    %p37 = scmp.ne.s32.totalorder %s23, %s24
    %p38 = scmp.eq.s32.totalorder %s16, 1
    %p39 = por %p37, %p38
    %p41 = scmp.ne.s32.totalorder %s24, %s40
    %p42 = scmp.eq.s32.totalorder %s16, 0
    %p43 = por %p41, %p42
    %s45 = sadd.s32 %s44, 1
    %p48 = scmp.eq.s32.totalorder %s10, 1
    %p49 = scmp.ne.s32.totalorder %s44, %s46
    %p50 = scmp.eq.s32.totalorder %s10, 0
    %p51 = por %p49, %p50
    %p52 = scmp.ne.s32.totalorder %s44, %s46
    %p53 = scmp.eq.s32.totalorder %s15, 1
    %p54 = por %p52, %p53
    %p55 = scmp.ne.s32.totalorder %s46, %s47
    %p56 = scmp.eq.s32.totalorder %s15, 0
    %p57 = por %p55, %p56
    %p58 = scmp.ne.s32.totalorder %s46, %s47
    %p59 = scmp.eq.s32.totalorder %s16, 1
    %p60 = por %p58, %p59
    %p62 = scmp.ne.s32.totalorder %s47, %s61
    %p63 = scmp.eq.s32.totalorder %s16, 0
    %p64 = por %p62, %p63
    %s66 = sadd.s32 %s65, 1
    %p69 = scmp.eq.s32.totalorder %s10, 1
    %p70 = scmp.ne.s32.totalorder %s65, %s67
    %p71 = scmp.eq.s32.totalorder %s10, 0
    %p72 = por %p70, %p71
    %p73 = scmp.ne.s32.totalorder %s65, %s67
    %p74 = scmp.eq.s32.totalorder %s15, 1
    %p75 = por %p73, %p74
    %p76 = scmp.ne.s32.totalorder %s67, %s68
    %p77 = scmp.eq.s32.totalorder %s15, 0
    %p78 = por %p76, %p77
    %p79 = scmp.ne.s32.totalorder %s67, %s68
    %p80 = scmp.eq.s32.totalorder %s16, 1
    %p81 = por %p79, %p80
    %p83 = scmp.ne.s32.totalorder %s68, %s82
    %p84 = scmp.eq.s32.totalorder %s16, 0
    %p85 = por %p83, %p84
    %s87 = sadd.s32 %s86, 1
    %p90 = scmp.eq.s32.totalorder %s10, 1
    %p91 = scmp.ne.s32.totalorder %s86, %s88
    %p92 = scmp.eq.s32.totalorder %s10, 0
    %p93 = por %p91, %p92
    %p94 = scmp.ne.s32.totalorder %s86, %s88
    %p95 = scmp.eq.s32.totalorder %s15, 1
    %p96 = por %p94, %p95
    %p97 = scmp.ne.s32.totalorder %s88, %s89
    %p98 = scmp.eq.s32.totalorder %s15, 0
    %p99 = por %p97, %p98
    %p100 = scmp.ne.s32.totalorder %s88, %s89
    %p101 = scmp.eq.s32.totalorder %s16, 1
    %p102 = por %p100, %p101
    %p104 = scmp.ne.s32.totalorder %s89, %s103
    %p105 = scmp.eq.s32.totalorder %s16, 0
    %p106 = por %p104, %p105
    %s107 = ssub.s32 %s10, %s17
    %p108 = scmp.eq.s32.totalorder %s107, 0
    %s110 = sadd.s32 %s109, 1
    %s111 = scalar_select %p108, %s109, %s110
    %p114 = pneg %p108
    %p115 = scmp.eq.s32.totalorder %s10, 1
    %p116 = por %p114, %p115
    %p117 = scmp.ne.s32.totalorder %s109, %s112
    %p118 = scmp.eq.s32.totalorder %s10, 0
    %p119 = por %p117, %p118
    %p120 = scmp.ne.s32.totalorder %s109, %s112
    %p121 = scmp.eq.s32.totalorder %s15, 1
    %p122 = por %p120, %p121
    %p123 = scmp.ne.s32.totalorder %s112, %s113
    %p124 = scmp.eq.s32.totalorder %s15, 0
    %p125 = por %p123, %p124
    %p126 = scmp.ne.s32.totalorder %s112, %s113
    %p127 = scmp.eq.s32.totalorder %s16, 1
    %p128 = por %p126, %p127
    %p130 = scmp.ne.s32.totalorder %s113, %s129
    %p131 = scmp.eq.s32.totalorder %s16, 0
    %p132 = por %p130, %p131
    %p133 = scmp.le.s32.totalorder 1, %s10
    %p134 = scmp.lt.s32.totalorder %s10, 3
    %p135 = pnand %p133, %p134
    %p136 = pneg %p135
    // Predicated region
    $region9: #{transformer_ocr_forward.7} parent=5 // pred_check
      _
    $region10: #{transformer_ocr_forward.7} parent=5 // pred_check_branch
      %138 = sbr.rel (%p135) target = $region12
    $region11: #{transformer_ocr_forward.7} parent=5 // pred_region
      %s139 = ssub.s32 %s10, 1
      // Predicated region
      $region13: #{transformer_ocr_forward.7} parent=11 // pred_check
        %p140 = pneg %p57
      $region14: #{transformer_ocr_forward.7} parent=11 // pred_check_branch
        %142 = sbr.rel (%p140) target = $region16
      $region15: #{transformer_ocr_forward.7} parent=11 // pred_region
        _
      $region16: #{transformer_ocr_forward.7} parent=11 // pred_fallthru
        _
      // Predicated region
      $region17: #{transformer_ocr_forward.7} parent=11 // pred_check
        %p143 = pneg %p78
      $region18: #{transformer_ocr_forward.7} parent=11 // pred_check_branch
        %145 = sbr.rel (%p143) target = $region20
      $region19: #{transformer_ocr_forward.7} parent=11 // pred_region
        _
      $region20: #{transformer_ocr_forward.7} parent=11 // pred_fallthru
        _
      // Predicated region
      $region21: #{transformer_ocr_forward.7} parent=11 // pred_check
        %p146 = pneg %p99
      $region22: #{transformer_ocr_forward.7} parent=11 // pred_check_branch
        %148 = sbr.rel (%p146) target = $region24
      $region23: #{transformer_ocr_forward.7} parent=11 // pred_region
        _
      $region24: #{transformer_ocr_forward.7} parent=11 // pred_fallthru
        _
    $region12: #{transformer_ocr_forward.7} parent=5 // pred_fallthru
      _
    %p149 = scmp.lt.s32.totalorder %s10, 2
    // Predicated region
    $region25: #{transformer_ocr_forward.7} parent=5 // pred_check
      %p150 = pneg %p149
    $region26: #{transformer_ocr_forward.7} parent=5 // pred_check_branch
      %152 = sbr.rel (%p150) target = $region28
    $region27: #{transformer_ocr_forward.7} parent=5 // pred_region
      // Predicated region
      $region29: #{transformer_ocr_forward.7} parent=27 // pred_check
        %p153 = pneg %p30
      $region30: #{transformer_ocr_forward.7} parent=27 // pred_check_branch
        %155 = sbr.rel (%p153) target = $region32
      $region31: #{transformer_ocr_forward.7} parent=27 // pred_region
        %s156 = smul.u32 2, %s10
        %p157 = scmp.lt.s32.totalorder %s156, 3
        %s158 = scalar_select %p157, %s156, 3
        %s159 = smul.addr %s158, 4
        %s160 = scalar_lea.vmem %s0, %s159
        %s161 = smul.u32 2, %s10
      $region32: #{transformer_ocr_forward.7} parent=27 // pred_fallthru
        _
    $region28: #{transformer_ocr_forward.7} parent=5 // pred_fallthru
      _
    %p162 = scmp.le.s32.totalorder 1, %s10
    %p163 = scmp.lt.s32.totalorder %s10, 3
    %p164 = pnand %p162, %p163
    %p165 = pneg %p164
    // Predicated region
    $region33: #{transformer_ocr_forward.7} parent=5 // pred_check
      _
    $region34: #{transformer_ocr_forward.7} parent=5 // pred_check_branch
      %167 = sbr.rel (%p164) target = $region36
    $region35: #{transformer_ocr_forward.7} parent=5 // pred_region
      %s168 = ssub.s32 %s10, 1
      %s169 = smul.u32 2, %s15
      %p170 = scmp.lt.s32.totalorder %s169, 3
      %s171 = scalar_select %p170, %s169, 3
      %s172 = smul.addr %s171, 4
      %s173 = scalar_lea.vmem %s0, %s172
      %p174 = pneg %p36
      %p175 = pneg %p33
      %p176 = pneg %p57
      %p177 = pneg %p54
      %p178 = pneg %p78
      %p179 = pneg %p75
      %p180 = pneg %p99
      %p181 = pneg %p96
      %p182 = pneg %p125
      %p183 = pneg %p122
      %s184 = smul.u32 2, %s15
      %p185 = scmp.lt.s32.totalorder %s184, 3
      %s186 = scalar_select %p185, %s184, 3
      %s187 = smul.addr %s186, 4
      %s188 = scalar_lea.vmem %s4, %s187
      %s189 = smul.u32 2, %s15
      %p190 = scmp.lt.s32.totalorder %s189, 3
      %s191 = scalar_select %p190, %s189, 3
      %s192 = smul.addr %s191, 4
      %s193 = scalar_lea.vmem %s0, %s192
      %s194 = smul.u32 2, %s15
      %s195 = smul.u32 2, %s15
      %p196 = scmp.lt.s32.totalorder %s195, 3
      %s197 = scalar_select %p196, %s195, 3
      %s198 = smul.addr %s197, 4
      %s199 = scalar_lea.vmem %s4, %s198
      %s200 = smul.u32 2, %s15
      %v202 = vld [vmem:[%s193] sm:$0xf]
      %v203 = vld [vmem:[%s193 + $0x4] sm:$0xf]
      %v204 = vld [vmem:[%s1] sm:$0xf]
      %v205 = vld [vmem:[%s1 + $0x4] sm:$0xf]
      %v206 = vld [vmem:[%s1 + $0x8] sm:$0xf]
      %v207 = vld [vmem:[%s1 + $0xc] sm:$0xf]
      %v208 = vld [vmem:[%s1 + $0x10] sm:$0xf]
      %v209 = vld [vmem:[%s1 + $0x14] sm:$0xf]
      %v210 = vld [vmem:[%s1 + $0x18] sm:$0xf]
      %v211 = vld [vmem:[%s1 + $0x1c] sm:$0xf]
      %v212 = vld [vmem:[%s2] sm:$0x1]
      %v214 = vlaneseq
      %v215 = vshrl.u32 %v214, 7
      %v216 = vsub.s32 0, %v215
      %v217 = vrot.slane %v212, %v216
      %v221 = vunpack.c.l.b16 %v202
      %v222 = vunpack.c.l.b16 %v203
      %v223 = vpack.c.b16 %v222, %v221
      %v232 = vunpack.c.l.b16 %v204
      %v233 = vunpack.c.l.b16 %v205
      %v234 = vunpack.c.l.b16 %v206
      %v235 = vunpack.c.l.b16 %v207
      %v236 = vunpack.c.l.b16 %v208
      %v237 = vunpack.c.l.b16 %v209
      %v238 = vunpack.c.l.b16 %v210
      %v239 = vunpack.c.l.b16 %v211
      %v240 = vpack.c.b16 %v233, %v232
      %v241 = vpack.c.b16 %v235, %v234
      %v242 = vpack.c.b16 %v237, %v236
      %v243 = vpack.c.b16 %v239, %v238
      %vm248 = vcmask 523264
      %v250 = vsel %vm248, %v223, 0
      %252 = vmatprep.subr.bf16.mxu0 0
      %253 = vmatpush1.bf16.msra.mxu0 0
      %254 = vmatprep.subr.bf16.mxu0 0
      %255 = vmatpush1.bf16.msra.mxu0 0
      %256 = vmatprep.subr.bf16.mxu0 0
      %257 = vmatpush1.bf16.msra.mxu0 0
      %258 = vmatprep.subr.bf16.mxu0 0
      %259 = vmatpush1.bf16.msra.mxu0 0
      %260 = vmatprep.subr.bf16.mxu0 0
      %261 = vmatpush1.bf16.msra.mxu0 %v243
      %262 = vmatprep.subr.bf16.mxu0 0
      %263 = vmatpush1.bf16.msra.mxu0 %v242
      %264 = vmatprep.subr.bf16.mxu0 0
      %265 = vmatpush1.bf16.msra.mxu0 %v241
      %266 = vmatprep.subr.bf16.mxu0 0
      %267 = vmatpush1.bf16.msra.mxu0 %v240
      %268 = vmatprep.subr.bf16.mxu0 0
      %269 = vmatpush2.bf16.msra.mxu0 0
      %270 = vmatprep.subr.bf16.mxu0 0
      %271 = vmatpush2.bf16.msra.mxu0 0
      %272 = vmatprep.subr.bf16.mxu0 0
      %273 = vmatpush2.bf16.msra.mxu0 0
      %274 = vmatprep.subr.bf16.mxu0 0
      %275 = vmatpush2.bf16.msra.mxu0 0
      %276 = vmatprep.subr.bf16.mxu0 0
      %277 = vmatpush2.bf16.msra.mxu0 0
      %278 = vmatprep.subr.bf16.mxu0 0
      %279 = vmatpush2.bf16.msra.mxu0 0
      %280 = vmatprep.subr.bf16.mxu0 0
      %281 = vmatpush2.bf16.msra.mxu0 0
      %282 = vmatprep.subr.bf16.mxu0 0
      %283 = vmatpush2.bf16.msra.mxu0 0
      %284 = vmatprep.mubr.bf16.mxu0 0
      %285 = vmatmul.mubr.bf16.gmra.mxu0 %v250
      %v286 = vpop.f32.mrf.mxu0
      %v287 = vadd.f32 %v217, %v286
      %v288 = vpop.f32.mrf.mxu0
      %v289 = vpop.f32.mrf.mxu0
      %v290 = vadd.f32 %v217, %v289
      %v291 = vpop.f32.mrf.mxu0
      %292 = vdwg.mxu0
      %v293 = vld [vmem:[%s3] sm:$0xff]
      %v294 = vld [vmem:[%s3 + $0x8] sm:$0xff]
      %v295 = vadd.f32 %v287, %v293
      %v296 = vadd.f32 %v290, %v294
      %v297 = vpack.c.bf16 %v296, %v295
      %v299 = vunpack.c.l.b16 %v297
      %v300 = vunpack.c.h.b16 %v297
      %v301 = vpack.c.b16 %v299, %v299
      %v302 = vpack.c.b16 %v300, %v300
      %vm305 = vcmask 257024
      %306 = vst.msk [vmem:[%s199] sm:$0xf] %vm305, %v301
      %307 = vst.msk [vmem:[%s199 + $0x4] sm:$0xf] %vm305, %v302
      %s308 = smul.u32 2, %s15
      %p309 = scmp.lt.s32.totalorder %s308, 3
      %s310 = scalar_select %p309, %s308, 3
      %s311 = smul.addr %s310, 4
      %s312 = scalar_lea.vmem %s4, %s311
      // Predicated region
      $region37: #{transformer_ocr_forward.7} parent=35 // pred_check
        %p313 = pneg %p122
      $region38: #{transformer_ocr_forward.7} parent=35 // pred_check_branch
        %315 = sbr.rel (%p313) target = $region40
      $region39: #{transformer_ocr_forward.7} parent=35 // pred_region
        %s316 = smul.u32 2, %s15
      $region40: #{transformer_ocr_forward.7} parent=35 // pred_fallthru
        _
    $region36: #{transformer_ocr_forward.7} parent=5 // pred_fallthru
      _
    %p317 = scmp.le.s32.totalorder 2, %s10
    // Predicated region
    $region41: #{transformer_ocr_forward.7} parent=5 // pred_check
      %p318 = pneg %p317
    $region42: #{transformer_ocr_forward.7} parent=5 // pred_check_branch
      %320 = sbr.rel (%p318) target = $region44
    $region43: #{transformer_ocr_forward.7} parent=5 // pred_region
      %s321 = ssub.s32 %s10, 2
      // Predicated region
      $region45: #{transformer_ocr_forward.7} parent=43 // pred_check
        %p322 = pneg %p128
      $region46: #{transformer_ocr_forward.7} parent=43 // pred_check_branch
        %324 = sbr.rel (%p322) target = $region48
      $region47: #{transformer_ocr_forward.7} parent=43 // pred_region
        %s325 = smul.u32 2, %s16
        %p326 = scmp.lt.s32.totalorder %s325, 3
        %s327 = scalar_select %p326, %s325, 3
        %s328 = smul.addr %s327, 4
        %s329 = scalar_lea.vmem %s4, %s328
      $region48: #{transformer_ocr_forward.7} parent=43 // pred_fallthru
        _
    $region44: #{transformer_ocr_forward.7} parent=5 // pred_fallthru
      _
  $region6: #{transformer_ocr_forward.7} parent=0 // loop_footer
    %s14 = sadd.s32 1, %s10
  $region7: #{transformer_ocr_forward.7} parent=0 // loop_footer_branch
    %9 = sbr.rel target = $region3
  $region8: #{transformer_ocr_forward.7} parent=0 // loop_exit
    _

// kernel: transformer_ocr_forward.8
$region0: #{transformer_ocr_forward.8}
  #allocation0 [shape = 'u32[]', space=smem, size = 0x4, offset = 0x4, fixed_abs, tag = 'smem constant byte address 0x4 - core index']
  #allocation1 [shape = 'u32[144,128]{1,0:T(1,128)}', space=vmem, size = 0x12000, scoped, tag = 'internal scratch']
  %s0 = inlined_call_operand.vmem [shape: bf16[32,32], index: 0, kind: input, shape index: {}]
  %s1 = inlined_call_operand.vmem [shape: bf16[32,96], index: 1, kind: input, shape index: {}]
  %s2 = inlined_call_operand.vmem [shape: f32[1,96], index: 2, kind: input, shape index: {}]
  %s3 = inlined_call_operand.vmem [shape: bf16[32,32], index: 3, kind: input, shape index: {}]
  %s4 = inlined_call_operand.vmem [shape: f32[1,32], index: 4, kind: input, shape index: {}]
  %s5 = inlined_call_operand.vmem [shape: f32[1,32], index: 5, kind: input, shape index: {}]
  %s6 = inlined_call_operand.vmem [shape: f32[1,32], index: 6, kind: input, shape index: {}]
  %s7 = inlined_call_operand.vmem [shape: bf16[32,64], index: 7, kind: input, shape index: {}]
  %s8 = inlined_call_operand.vmem [shape: f32[1,64], index: 8, kind: input, shape index: {}]
  %s9 = inlined_call_operand.vmem [shape: bf16[64,32], index: 9, kind: input, shape index: {}]
  %s10 = inlined_call_operand.vmem [shape: f32[1,32], index: 10, kind: input, shape index: {}]
  %s11 = inlined_call_operand.vmem [shape: f32[1,32], index: 11, kind: input, shape index: {}]
  %s12 = inlined_call_operand.vmem [shape: f32[1,32], index: 12, kind: input, shape index: {}]
  %s13 = inlined_call_operand.vmem [shape: bf16[32,32], index: 13, kind: output, shape index: {}]
  %s14 = sld [smem:[#allocation0]]
  $region85: #{transformer_ocr_forward.8} parent=0
    _
  %s16 = ssub.s32 1, %s14
  %s17 = scalar_select 0, %s16, %s14
  loop: start=0, step=1, limit=4
  $region2: #{transformer_ocr_forward.8} parent=0 // loop_pre_header
    _
  $region3: #{transformer_ocr_forward.8} parent=0 // loop_header
    %s19 = sphi 0, %s23
    %p20 = scmp.ge.s32.totalorder %s19, 4
    %s29 = sphi 0, %s31
    %s32 = sphi 0, %s29
    %s33 = sphi 0, %s32
    %s49 = sphi 0, %s33
    %s53 = sphi 0, %s53
    %s55 = sphi 0, %s53
    %s56 = sphi 0, %s55
    %s70 = sphi 0, %s56
    %s74 = sphi 0, %s74
    %s76 = sphi 0, %s74
    %s77 = sphi 0, %s76
    %s91 = sphi 0, %s77
    %s95 = sphi 0, %s95
    %s97 = sphi 0, %s95
    %s98 = sphi 0, %s97
    %s112 = sphi 0, %s98
    %s116 = sphi 0, %s116
    %s118 = sphi 0, %s116
    %s119 = sphi 0, %s118
    %s133 = sphi 0, %s119
    %s137 = sphi 0, %s137
    %s139 = sphi 0, %s137
    %s140 = sphi 0, %s139
    %s154 = sphi 0, %s140
    %s158 = sphi 0, %s158
    %s160 = sphi 0, %s158
    %s161 = sphi 0, %s160
    %s175 = sphi 0, %s161
    %s179 = sphi 0, %s179
    %s181 = sphi 0, %s179
    %s182 = sphi 0, %s181
    %s196 = sphi 0, %s182
    %s200 = sphi 0, %s200
    %s202 = sphi 0, %s200
    %s203 = sphi 0, %s202
    %s217 = sphi 0, %s203
    %s221 = sphi 0, %s221
    %s223 = sphi 0, %s221
    %s224 = sphi 0, %s223
    %s238 = sphi 0, %s224
    %s242 = sphi 0, %s242
    %s244 = sphi 0, %s242
    %s245 = sphi 0, %s244
    %s259 = sphi 0, %s245
    %s263 = sphi 0, %s263
    %s265 = sphi 0, %s263
    %s266 = sphi 0, %s265
    %s280 = sphi 0, %s266
    %s284 = sphi 0, %s284
    %s286 = sphi 0, %s284
    %s287 = sphi 0, %s286
    %s301 = sphi 0, %s287
    %s307 = sphi 0, %s309
    %s310 = sphi 0, %s307
    %s311 = sphi 0, %s310
    %s327 = sphi 0, %s311
  $region4: #{transformer_ocr_forward.8} parent=0 // loop_header_branch
    %22 = sbr.rel (%p20) target = $region8
  $region5: #{transformer_ocr_forward.8} parent=0 // loop_body
    %s24 = ssub.s32 %s19, 1
    %s25 = ssub.s32 %s19, 2
    %s26 = sadd.s32 %s19, 1
    %s27 = ssub.s32 %s19, %s26
    %p28 = scmp.eq.s32.totalorder %s27, 0
    %s30 = sadd.s32 %s29, 1
    %s31 = scalar_select %p28, %s29, %s30
    %p34 = pneg %p28
    %p35 = scmp.eq.s32.totalorder %s19, 1
    %p36 = por %p34, %p35
    %p37 = scmp.ne.s32.totalorder %s29, %s32
    %p38 = scmp.eq.s32.totalorder %s19, 0
    %p39 = por %p37, %p38
    %p40 = scmp.ne.s32.totalorder %s29, %s32
    %p41 = scmp.eq.s32.totalorder %s24, 1
    %p42 = por %p40, %p41
    %p43 = scmp.ne.s32.totalorder %s32, %s33
    %p44 = scmp.eq.s32.totalorder %s24, 0
    %p45 = por %p43, %p44
    %p46 = scmp.ne.s32.totalorder %s32, %s33
    %p47 = scmp.eq.s32.totalorder %s25, 1
    %p48 = por %p46, %p47
    %p50 = scmp.ne.s32.totalorder %s33, %s49
    %p51 = scmp.eq.s32.totalorder %s25, 0
    %p52 = por %p50, %p51
    %s54 = sadd.s32 %s53, 1
    %p57 = scmp.eq.s32.totalorder %s19, 1
    %p58 = scmp.ne.s32.totalorder %s53, %s55
    %p59 = scmp.eq.s32.totalorder %s19, 0
    %p60 = por %p58, %p59
    %p61 = scmp.ne.s32.totalorder %s53, %s55
    %p62 = scmp.eq.s32.totalorder %s24, 1
    %p63 = por %p61, %p62
    %p64 = scmp.ne.s32.totalorder %s55, %s56
    %p65 = scmp.eq.s32.totalorder %s24, 0
    %p66 = por %p64, %p65
    %p67 = scmp.ne.s32.totalorder %s55, %s56
    %p68 = scmp.eq.s32.totalorder %s25, 1
    %p69 = por %p67, %p68
    %p71 = scmp.ne.s32.totalorder %s56, %s70
    %p72 = scmp.eq.s32.totalorder %s25, 0
    %p73 = por %p71, %p72
    %s75 = sadd.s32 %s74, 1
    %p78 = scmp.eq.s32.totalorder %s19, 1
    %p79 = scmp.ne.s32.totalorder %s74, %s76
    %p80 = scmp.eq.s32.totalorder %s19, 0
    %p81 = por %p79, %p80
    %p82 = scmp.ne.s32.totalorder %s74, %s76
    %p83 = scmp.eq.s32.totalorder %s24, 1
    %p84 = por %p82, %p83
    %p85 = scmp.ne.s32.totalorder %s76, %s77
    %p86 = scmp.eq.s32.totalorder %s24, 0
    %p87 = por %p85, %p86
    %p88 = scmp.ne.s32.totalorder %s76, %s77
    %p89 = scmp.eq.s32.totalorder %s25, 1
    %p90 = por %p88, %p89
    %p92 = scmp.ne.s32.totalorder %s77, %s91
    %p93 = scmp.eq.s32.totalorder %s25, 0
    %p94 = por %p92, %p93
    %s96 = sadd.s32 %s95, 1
    %p99 = scmp.eq.s32.totalorder %s19, 1
    %p100 = scmp.ne.s32.totalorder %s95, %s97
    %p101 = scmp.eq.s32.totalorder %s19, 0
    %p102 = por %p100, %p101
    %p103 = scmp.ne.s32.totalorder %s95, %s97
    %p104 = scmp.eq.s32.totalorder %s24, 1
    %p105 = por %p103, %p104
    %p106 = scmp.ne.s32.totalorder %s97, %s98
    %p107 = scmp.eq.s32.totalorder %s24, 0
    %p108 = por %p106, %p107
    %p109 = scmp.ne.s32.totalorder %s97, %s98
    %p110 = scmp.eq.s32.totalorder %s25, 1
    %p111 = por %p109, %p110
    %p113 = scmp.ne.s32.totalorder %s98, %s112
    %p114 = scmp.eq.s32.totalorder %s25, 0
    %p115 = por %p113, %p114
    %s117 = sadd.s32 %s116, 1
    %p120 = scmp.eq.s32.totalorder %s19, 1
    %p121 = scmp.ne.s32.totalorder %s116, %s118
    %p122 = scmp.eq.s32.totalorder %s19, 0
    %p123 = por %p121, %p122
    %p124 = scmp.ne.s32.totalorder %s116, %s118
    %p125 = scmp.eq.s32.totalorder %s24, 1
    %p126 = por %p124, %p125
    %p127 = scmp.ne.s32.totalorder %s118, %s119
    %p128 = scmp.eq.s32.totalorder %s24, 0
    %p129 = por %p127, %p128
    %p130 = scmp.ne.s32.totalorder %s118, %s119
    %p131 = scmp.eq.s32.totalorder %s25, 1
    %p132 = por %p130, %p131
    %p134 = scmp.ne.s32.totalorder %s119, %s133
    %p135 = scmp.eq.s32.totalorder %s25, 0
    %p136 = por %p134, %p135
    %s138 = sadd.s32 %s137, 1
    %p141 = scmp.eq.s32.totalorder %s19, 1
    %p142 = scmp.ne.s32.totalorder %s137, %s139
    %p143 = scmp.eq.s32.totalorder %s19, 0
    %p144 = por %p142, %p143
    %p145 = scmp.ne.s32.totalorder %s137, %s139
    %p146 = scmp.eq.s32.totalorder %s24, 1
    %p147 = por %p145, %p146
    %p148 = scmp.ne.s32.totalorder %s139, %s140
    %p149 = scmp.eq.s32.totalorder %s24, 0
    %p150 = por %p148, %p149
    %p151 = scmp.ne.s32.totalorder %s139, %s140
    %p152 = scmp.eq.s32.totalorder %s25, 1
    %p153 = por %p151, %p152
    %p155 = scmp.ne.s32.totalorder %s140, %s154
    %p156 = scmp.eq.s32.totalorder %s25, 0
    %p157 = por %p155, %p156
    %s159 = sadd.s32 %s158, 1
    %p162 = scmp.eq.s32.totalorder %s19, 1
    %p163 = scmp.ne.s32.totalorder %s158, %s160
    %p164 = scmp.eq.s32.totalorder %s19, 0
    %p165 = por %p163, %p164
    %p166 = scmp.ne.s32.totalorder %s158, %s160
    %p167 = scmp.eq.s32.totalorder %s24, 1
    %p168 = por %p166, %p167
    %p169 = scmp.ne.s32.totalorder %s160, %s161
    %p170 = scmp.eq.s32.totalorder %s24, 0
    %p171 = por %p169, %p170
    %p172 = scmp.ne.s32.totalorder %s160, %s161
    %p173 = scmp.eq.s32.totalorder %s25, 1
    %p174 = por %p172, %p173
    %p176 = scmp.ne.s32.totalorder %s161, %s175
    %p177 = scmp.eq.s32.totalorder %s25, 0
    %p178 = por %p176, %p177
    %s180 = sadd.s32 %s179, 1
    %p183 = scmp.eq.s32.totalorder %s19, 1
    %p184 = scmp.ne.s32.totalorder %s179, %s181
    %p185 = scmp.eq.s32.totalorder %s19, 0
    %p186 = por %p184, %p185
    %p187 = scmp.ne.s32.totalorder %s179, %s181
    %p188 = scmp.eq.s32.totalorder %s24, 1
    %p189 = por %p187, %p188
    %p190 = scmp.ne.s32.totalorder %s181, %s182
    %p191 = scmp.eq.s32.totalorder %s24, 0
    %p192 = por %p190, %p191
    %p193 = scmp.ne.s32.totalorder %s181, %s182
    %p194 = scmp.eq.s32.totalorder %s25, 1
    %p195 = por %p193, %p194
    %p197 = scmp.ne.s32.totalorder %s182, %s196
    %p198 = scmp.eq.s32.totalorder %s25, 0
    %p199 = por %p197, %p198
    %s201 = sadd.s32 %s200, 1
    %p204 = scmp.eq.s32.totalorder %s19, 1
    %p205 = scmp.ne.s32.totalorder %s200, %s202
    %p206 = scmp.eq.s32.totalorder %s19, 0
    %p207 = por %p205, %p206
    %p208 = scmp.ne.s32.totalorder %s200, %s202
    %p209 = scmp.eq.s32.totalorder %s24, 1
    %p210 = por %p208, %p209
    %p211 = scmp.ne.s32.totalorder %s202, %s203
    %p212 = scmp.eq.s32.totalorder %s24, 0
    %p213 = por %p211, %p212
    %p214 = scmp.ne.s32.totalorder %s202, %s203
    %p215 = scmp.eq.s32.totalorder %s25, 1
    %p216 = por %p214, %p215
    %p218 = scmp.ne.s32.totalorder %s203, %s217
    %p219 = scmp.eq.s32.totalorder %s25, 0
    %p220 = por %p218, %p219
    %s222 = sadd.s32 %s221, 1
    %p225 = scmp.eq.s32.totalorder %s19, 1
    %p226 = scmp.ne.s32.totalorder %s221, %s223
    %p227 = scmp.eq.s32.totalorder %s19, 0
    %p228 = por %p226, %p227
    %p229 = scmp.ne.s32.totalorder %s221, %s223
    %p230 = scmp.eq.s32.totalorder %s24, 1
    %p231 = por %p229, %p230
    %p232 = scmp.ne.s32.totalorder %s223, %s224
    %p233 = scmp.eq.s32.totalorder %s24, 0
    %p234 = por %p232, %p233
    %p235 = scmp.ne.s32.totalorder %s223, %s224
    %p236 = scmp.eq.s32.totalorder %s25, 1
    %p237 = por %p235, %p236
    %p239 = scmp.ne.s32.totalorder %s224, %s238
    %p240 = scmp.eq.s32.totalorder %s25, 0
    %p241 = por %p239, %p240
    %s243 = sadd.s32 %s242, 1
    %p246 = scmp.eq.s32.totalorder %s19, 1
    %p247 = scmp.ne.s32.totalorder %s242, %s244
    %p248 = scmp.eq.s32.totalorder %s19, 0
    %p249 = por %p247, %p248
    %p250 = scmp.ne.s32.totalorder %s242, %s244
    %p251 = scmp.eq.s32.totalorder %s24, 1
    %p252 = por %p250, %p251
    %p253 = scmp.ne.s32.totalorder %s244, %s245
    %p254 = scmp.eq.s32.totalorder %s24, 0
    %p255 = por %p253, %p254
    %p256 = scmp.ne.s32.totalorder %s244, %s245
    %p257 = scmp.eq.s32.totalorder %s25, 1
    %p258 = por %p256, %p257
    %p260 = scmp.ne.s32.totalorder %s245, %s259
    %p261 = scmp.eq.s32.totalorder %s25, 0
    %p262 = por %p260, %p261
    %s264 = sadd.s32 %s263, 1
    %p267 = scmp.eq.s32.totalorder %s19, 1
    %p268 = scmp.ne.s32.totalorder %s263, %s265
    %p269 = scmp.eq.s32.totalorder %s19, 0
    %p270 = por %p268, %p269
    %p271 = scmp.ne.s32.totalorder %s263, %s265
    %p272 = scmp.eq.s32.totalorder %s24, 1
    %p273 = por %p271, %p272
    %p274 = scmp.ne.s32.totalorder %s265, %s266
    %p275 = scmp.eq.s32.totalorder %s24, 0
    %p276 = por %p274, %p275
    %p277 = scmp.ne.s32.totalorder %s265, %s266
    %p278 = scmp.eq.s32.totalorder %s25, 1
    %p279 = por %p277, %p278
    %p281 = scmp.ne.s32.totalorder %s266, %s280
    %p282 = scmp.eq.s32.totalorder %s25, 0
    %p283 = por %p281, %p282
    %s285 = sadd.s32 %s284, 1
    %p288 = scmp.eq.s32.totalorder %s19, 1
    %p289 = scmp.ne.s32.totalorder %s284, %s286
    %p290 = scmp.eq.s32.totalorder %s19, 0
    %p291 = por %p289, %p290
    %p292 = scmp.ne.s32.totalorder %s284, %s286
    %p293 = scmp.eq.s32.totalorder %s24, 1
    %p294 = por %p292, %p293
    %p295 = scmp.ne.s32.totalorder %s286, %s287
    %p296 = scmp.eq.s32.totalorder %s24, 0
    %p297 = por %p295, %p296
    %p298 = scmp.ne.s32.totalorder %s286, %s287
    %p299 = scmp.eq.s32.totalorder %s25, 1
    %p300 = por %p298, %p299
    %p302 = scmp.ne.s32.totalorder %s287, %s301
    %p303 = scmp.eq.s32.totalorder %s25, 0
    %p304 = por %p302, %p303
    %s305 = ssub.s32 %s19, %s26
    %p306 = scmp.eq.s32.totalorder %s305, 0
    %s308 = sadd.s32 %s307, 1
    %s309 = scalar_select %p306, %s307, %s308
    %p312 = pneg %p306
    %p313 = scmp.eq.s32.totalorder %s19, 1
    %p314 = por %p312, %p313
    %p315 = scmp.ne.s32.totalorder %s307, %s310
    %p316 = scmp.eq.s32.totalorder %s19, 0
    %p317 = por %p315, %p316
    %p318 = scmp.ne.s32.totalorder %s307, %s310
    %p319 = scmp.eq.s32.totalorder %s24, 1
    %p320 = por %p318, %p319
    %p321 = scmp.ne.s32.totalorder %s310, %s311
    %p322 = scmp.eq.s32.totalorder %s24, 0
    %p323 = por %p321, %p322
    %p324 = scmp.ne.s32.totalorder %s310, %s311
    %p325 = scmp.eq.s32.totalorder %s25, 1
    %p326 = por %p324, %p325
    %p328 = scmp.ne.s32.totalorder %s311, %s327
    %p329 = scmp.eq.s32.totalorder %s25, 0
    %p330 = por %p328, %p329
    %p331 = scmp.le.s32.totalorder 1, %s19
    %p332 = scmp.lt.s32.totalorder %s19, 3
    %p333 = pnand %p331, %p332
    %p334 = pneg %p333
    // Predicated region
    $region9: #{transformer_ocr_forward.8} parent=5 // pred_check
      _
    $region10: #{transformer_ocr_forward.8} parent=5 // pred_check_branch
      %336 = sbr.rel (%p333) target = $region12
    $region11: #{transformer_ocr_forward.8} parent=5 // pred_region
      %s337 = ssub.s32 %s19, 1
      // Predicated region
      $region13: #{transformer_ocr_forward.8} parent=11 // pred_check
        %p338 = pneg %p66
      $region14: #{transformer_ocr_forward.8} parent=11 // pred_check_branch
        %340 = sbr.rel (%p338) target = $region16
      $region15: #{transformer_ocr_forward.8} parent=11 // pred_region
        _
      $region16: #{transformer_ocr_forward.8} parent=11 // pred_fallthru
        _
      // Predicated region
      $region17: #{transformer_ocr_forward.8} parent=11 // pred_check
        %p341 = pneg %p87
      $region18: #{transformer_ocr_forward.8} parent=11 // pred_check_branch
        %343 = sbr.rel (%p341) target = $region20
      $region19: #{transformer_ocr_forward.8} parent=11 // pred_region
        _
      $region20: #{transformer_ocr_forward.8} parent=11 // pred_fallthru
        _
      // Predicated region
      $region21: #{transformer_ocr_forward.8} parent=11 // pred_check
        %p344 = pneg %p108
      $region22: #{transformer_ocr_forward.8} parent=11 // pred_check_branch
        %346 = sbr.rel (%p344) target = $region24
      $region23: #{transformer_ocr_forward.8} parent=11 // pred_region
        _
      $region24: #{transformer_ocr_forward.8} parent=11 // pred_fallthru
        _
      // Predicated region
      $region25: #{transformer_ocr_forward.8} parent=11 // pred_check
        %p347 = pneg %p129
      $region26: #{transformer_ocr_forward.8} parent=11 // pred_check_branch
        %349 = sbr.rel (%p347) target = $region28
      $region27: #{transformer_ocr_forward.8} parent=11 // pred_region
        _
      $region28: #{transformer_ocr_forward.8} parent=11 // pred_fallthru
        _
      // Predicated region
      $region29: #{transformer_ocr_forward.8} parent=11 // pred_check
        %p350 = pneg %p150
      $region30: #{transformer_ocr_forward.8} parent=11 // pred_check_branch
        %352 = sbr.rel (%p350) target = $region32
      $region31: #{transformer_ocr_forward.8} parent=11 // pred_region
        _
      $region32: #{transformer_ocr_forward.8} parent=11 // pred_fallthru
        _
      // Predicated region
      $region33: #{transformer_ocr_forward.8} parent=11 // pred_check
        %p353 = pneg %p171
      $region34: #{transformer_ocr_forward.8} parent=11 // pred_check_branch
        %355 = sbr.rel (%p353) target = $region36
      $region35: #{transformer_ocr_forward.8} parent=11 // pred_region
        _
      $region36: #{transformer_ocr_forward.8} parent=11 // pred_fallthru
        _
      // Predicated region
      $region37: #{transformer_ocr_forward.8} parent=11 // pred_check
        %p356 = pneg %p192
      $region38: #{transformer_ocr_forward.8} parent=11 // pred_check_branch
        %358 = sbr.rel (%p356) target = $region40
      $region39: #{transformer_ocr_forward.8} parent=11 // pred_region
        _
      $region40: #{transformer_ocr_forward.8} parent=11 // pred_fallthru
        _
      // Predicated region
      $region41: #{transformer_ocr_forward.8} parent=11 // pred_check
        %p359 = pneg %p213
      $region42: #{transformer_ocr_forward.8} parent=11 // pred_check_branch
        %361 = sbr.rel (%p359) target = $region44
      $region43: #{transformer_ocr_forward.8} parent=11 // pred_region
        _
      $region44: #{transformer_ocr_forward.8} parent=11 // pred_fallthru
        _
      // Predicated region
      $region45: #{transformer_ocr_forward.8} parent=11 // pred_check
        %p362 = pneg %p234
      $region46: #{transformer_ocr_forward.8} parent=11 // pred_check_branch
        %364 = sbr.rel (%p362) target = $region48
      $region47: #{transformer_ocr_forward.8} parent=11 // pred_region
        _
      $region48: #{transformer_ocr_forward.8} parent=11 // pred_fallthru
        _
      // Predicated region
      $region49: #{transformer_ocr_forward.8} parent=11 // pred_check
        %p365 = pneg %p255
      $region50: #{transformer_ocr_forward.8} parent=11 // pred_check_branch
        %367 = sbr.rel (%p365) target = $region52
      $region51: #{transformer_ocr_forward.8} parent=11 // pred_region
        _
      $region52: #{transformer_ocr_forward.8} parent=11 // pred_fallthru
        _
      // Predicated region
      $region53: #{transformer_ocr_forward.8} parent=11 // pred_check
        %p368 = pneg %p276
      $region54: #{transformer_ocr_forward.8} parent=11 // pred_check_branch
        %370 = sbr.rel (%p368) target = $region56
      $region55: #{transformer_ocr_forward.8} parent=11 // pred_region
        _
      $region56: #{transformer_ocr_forward.8} parent=11 // pred_fallthru
        _
      // Predicated region
      $region57: #{transformer_ocr_forward.8} parent=11 // pred_check
        %p371 = pneg %p297
      $region58: #{transformer_ocr_forward.8} parent=11 // pred_check_branch
        %373 = sbr.rel (%p371) target = $region60
      $region59: #{transformer_ocr_forward.8} parent=11 // pred_region
        _
      $region60: #{transformer_ocr_forward.8} parent=11 // pred_fallthru
        _
    $region12: #{transformer_ocr_forward.8} parent=5 // pred_fallthru
      _
    %p374 = scmp.lt.s32.totalorder %s19, 2
    // Predicated region
    $region61: #{transformer_ocr_forward.8} parent=5 // pred_check
      %p375 = pneg %p374
    $region62: #{transformer_ocr_forward.8} parent=5 // pred_check_branch
      %377 = sbr.rel (%p375) target = $region64
    $region63: #{transformer_ocr_forward.8} parent=5 // pred_region
      // Predicated region
      $region65: #{transformer_ocr_forward.8} parent=63 // pred_check
        %p378 = pneg %p39
      $region66: #{transformer_ocr_forward.8} parent=63 // pred_check_branch
        %380 = sbr.rel (%p378) target = $region68
      $region67: #{transformer_ocr_forward.8} parent=63 // pred_region
        %s381 = smul.u32 2, %s19
        %p382 = scmp.lt.s32.totalorder %s381, 3
        %s383 = scalar_select %p382, %s381, 3
        %s384 = smul.addr %s383, 4
        %s385 = scalar_lea.vmem %s0, %s384
        %s386 = smul.u32 2, %s19
      $region68: #{transformer_ocr_forward.8} parent=63 // pred_fallthru
        _
    $region64: #{transformer_ocr_forward.8} parent=5 // pred_fallthru
      _
    %p387 = scmp.le.s32.totalorder 1, %s19
    %p388 = scmp.lt.s32.totalorder %s19, 3
    %p389 = pnand %p387, %p388
    %p390 = pneg %p389
    // Predicated region
    $region69: #{transformer_ocr_forward.8} parent=5 // pred_check
      _
    $region70: #{transformer_ocr_forward.8} parent=5 // pred_check_branch
      %392 = sbr.rel (%p389) target = $region72
    $region71: #{transformer_ocr_forward.8} parent=5 // pred_region
      %s393 = ssub.s32 %s19, 1
      %s394 = smul.u32 2, %s24
      %p395 = scmp.lt.s32.totalorder %s394, 3
      %s396 = scalar_select %p395, %s394, 3
      %s397 = smul.addr %s396, 4
      %s398 = scalar_lea.vmem %s0, %s397
      %p399 = pneg %p45
      %p400 = pneg %p42
      %p401 = pneg %p66
      %p402 = pneg %p63
      %p403 = pneg %p87
      %p404 = pneg %p84
      %p405 = pneg %p108
      %p406 = pneg %p105
      %p407 = pneg %p129
      %p408 = pneg %p126
      %p409 = pneg %p150
      %p410 = pneg %p147
      %p411 = pneg %p171
      %p412 = pneg %p168
      %p413 = pneg %p192
      %p414 = pneg %p189
      %p415 = pneg %p213
      %p416 = pneg %p210
      %p417 = pneg %p234
      %p418 = pneg %p231
      %p419 = pneg %p255
      %p420 = pneg %p252
      %p421 = pneg %p276
      %p422 = pneg %p273
      %p423 = pneg %p297
      %p424 = pneg %p294
      %p425 = pneg %p323
      %p426 = pneg %p320
      %s427 = smul.u32 2, %s24
      %p428 = scmp.lt.s32.totalorder %s427, 3
      %s429 = scalar_select %p428, %s427, 3
      %s430 = smul.addr %s429, 4
      %s431 = scalar_lea.vmem %s13, %s430
      %s432 = smul.u32 2, %s24
      %p433 = scmp.lt.s32.totalorder %s432, 3
      %s434 = scalar_select %p433, %s432, 3
      %s435 = smul.addr %s434, 4
      %s436 = scalar_lea.vmem %s0, %s435
      %s437 = smul.u32 2, %s24
      %s438 = smul.u32 2, %s24
      %p439 = scmp.lt.s32.totalorder %s438, 3
      %s440 = scalar_select %p439, %s438, 3
      %s441 = smul.addr %s440, 4
      %s442 = scalar_lea.vmem %s13, %s441
      %s443 = smul.u32 2, %s24
      %v445 = vld [vmem:[%s436] sm:$0xf]
      %v446 = vld [vmem:[%s436 + $0x4] sm:$0xf]
      %v447 = vunpack.c.l.bf16 %v445
      %v448 = vunpack.c.l.bf16 %v446
      %v449 = vld [vmem:[%s1] sm:$0xf]
      %v450 = vld [vmem:[%s1 + $0x4] sm:$0xf]
      %v451 = vld [vmem:[%s1 + $0x8] sm:$0xf]
      %v452 = vld [vmem:[%s1 + $0xc] sm:$0xf]
      %v453 = vld [vmem:[%s2] sm:$0x1]
      %v455 = vlaneseq
      %v456 = vshrl.u32 %v455, 7
      %v457 = vsub.s32 0, %v456
      %v458 = vrot.slane %v453, %v457
      %v462 = vunpack.c.l.b16 %v445
      %v463 = vunpack.c.l.b16 %v446
      %v464 = vpack.c.b16 %v463, %v462
      %v469 = vunpack.c.l.b16 %v449
      %v470 = vunpack.c.l.b16 %v450
      %v471 = vunpack.c.l.b16 %v451
      %v472 = vunpack.c.l.b16 %v452
      %v473 = vpack.c.b16 %v470, %v469
      %v474 = vpack.c.b16 %v472, %v471
      %vm477 = vcmask 261120
      %v479 = vsel %vm477, %v464, 0
      %481 = vmatprep.subr.bf16.mxu0 0
      %482 = vmatpush1.bf16.msra.mxu0 0
      %483 = vmatprep.subr.bf16.mxu0 0
      %484 = vmatpush1.bf16.msra.mxu0 0
      %485 = vmatprep.subr.bf16.mxu0 0
      %486 = vmatpush1.bf16.msra.mxu0 0
      %487 = vmatprep.subr.bf16.mxu0 0
      %488 = vmatpush1.bf16.msra.mxu0 0
      %489 = vmatprep.subr.bf16.mxu0 0
      %490 = vmatpush1.bf16.msra.mxu0 0
      %491 = vmatprep.subr.bf16.mxu0 0
      %492 = vmatpush1.bf16.msra.mxu0 0
      %493 = vmatprep.subr.bf16.mxu0 0
      %494 = vmatpush1.bf16.msra.mxu0 %v474
      %495 = vmatprep.subr.bf16.mxu0 0
      %496 = vmatpush1.bf16.msra.mxu0 %v473
      %497 = vmatprep.subr.bf16.mxu0 0
      %498 = vmatpush2.bf16.msra.mxu0 0
      %499 = vmatprep.subr.bf16.mxu0 0
      %500 = vmatpush2.bf16.msra.mxu0 0
      %501 = vmatprep.subr.bf16.mxu0 0
      %502 = vmatpush2.bf16.msra.mxu0 0
      %503 = vmatprep.subr.bf16.mxu0 0
      %504 = vmatpush2.bf16.msra.mxu0 0
      %505 = vmatprep.subr.bf16.mxu0 0
      %506 = vmatpush2.bf16.msra.mxu0 0
      %507 = vmatprep.subr.bf16.mxu0 0
      %508 = vmatpush2.bf16.msra.mxu0 0
      %509 = vmatprep.subr.bf16.mxu0 0
      %510 = vmatpush2.bf16.msra.mxu0 0
      %511 = vmatprep.subr.bf16.mxu0 0
      %512 = vmatpush2.bf16.msra.mxu0 0
      %513 = vmatprep.mubr.bf16.mxu0 0
      %514 = vmatmul.mubr.bf16.gmra.mxu0 %v479
      %v515 = vpop.f32.mrf.mxu0
      %v516 = vadd.f32 %v458, %v515
      %v517 = vpop.f32.mrf.mxu0
      %v518 = vpop.f32.mrf.mxu0
      %v519 = vadd.f32 %v458, %v518
      %v520 = vpop.f32.mrf.mxu0
      %521 = vdwg.mxu0
      %v522 = vpack.c.bf16 %v519, %v516
      %524 = vrot.lane.b32.xlu0 %v522, 96
      %v525 = vpop.permute.xlu0 %524
      %vm526 = vcmask 64512
      %v528 = vsel %vm526, %v522, 0
      %v531 = vsel %vm526, %v525, 0
      %533 = vmatprep.subr.bf16.mxu0 0
      %534 = vmatpush1.bf16.xpose.msra.mxu0 0
      %535 = vmatprep.subr.bf16.mxu0 0
      %536 = vmatpush1.bf16.xpose.msra.mxu0 0
      %537 = vmatprep.subr.bf16.mxu0 0
      %538 = vmatpush1.bf16.xpose.msra.mxu0 0
      %539 = vmatprep.subr.bf16.mxu0 0
      %540 = vmatpush1.bf16.xpose.msra.mxu0 0
      %541 = vmatprep.subr.bf16.mxu0 0
      %542 = vmatpush1.bf16.xpose.msra.mxu0 0
      %543 = vmatprep.subr.bf16.mxu0 0
      %544 = vmatpush1.bf16.xpose.msra.mxu0 0
      %545 = vmatprep.subr.bf16.mxu0 0
      %546 = vmatpush1.bf16.xpose.msra.mxu0 0
      %547 = vmatprep.subr.bf16.mxu0 0
      %548 = vmatpush1.bf16.xpose.msra.mxu0 %v531
      %549 = vmatprep.subr.bf16.mxu0 0
      %550 = vmatpush2.bf16.xpose.msra.mxu0 0
      %551 = vmatprep.subr.bf16.mxu0 0
      %552 = vmatpush2.bf16.xpose.msra.mxu0 0
      %553 = vmatprep.subr.bf16.mxu0 0
      %554 = vmatpush2.bf16.xpose.msra.mxu0 0
      %555 = vmatprep.subr.bf16.mxu0 0
      %556 = vmatpush2.bf16.xpose.msra.mxu0 0
      %557 = vmatprep.subr.bf16.mxu0 0
      %558 = vmatpush2.bf16.xpose.msra.mxu0 0
      %559 = vmatprep.subr.bf16.mxu0 0
      %560 = vmatpush2.bf16.xpose.msra.mxu0 0
      %561 = vmatprep.subr.bf16.mxu0 0
      %562 = vmatpush2.bf16.xpose.msra.mxu0 0
      %563 = vmatprep.subr.bf16.mxu0 0
      %564 = vmatpush2.bf16.xpose.msra.mxu0 0
      %565 = vmatprep.mubr.bf16.mxu0 0
      %566 = vmatmul.mubr.bf16.gmra.mxu0 %v528
      %v567 = vpop.f32.mrf.mxu0
      %v568 = vadd.f32 0.0, %v567
      %v569 = vpop.f32.mrf.mxu0
      %v570 = vpop.f32.mrf.mxu0
      %v571 = vadd.f32 0.0, %v570
      %v572 = vpop.f32.mrf.mxu0
      %573 = vdwg.mxu0
      %v574 = vmul.f32 %v568, 0.35355338
      %v575 = vmul.f32 %v571, 0.35355338
      %vm576 = vcmask 130048
      %v577 = vsel %vm576, %v574, -inf
      %578 = vmax.xlane.f32.xlu0 %v577
      %v579 = vpop.xlane.xlu0 %578
      %v580 = vsel %vm576, %v575, -inf
      %581 = vmax.xlane.f32.xlu0 %v580
      %v582 = vpop.xlane.xlu0 %581
      %v583 = vsub.f32 %v574, %v579
      %v584 = vsub.f32 %v575, %v582
      %v585 = vmul.f32 %v583, 1.442695
      %v586 = vpow.pop %v585
      %v587 = vmul.f32 %v584, 1.442695
      %v588 = vpow.pop %v587
      %v589 = vsel %vm576, %v586, 0.0
      %590 = vadd.xlane.f32.xlu0 %v589
      %v591 = vpop.xlane.xlu0 %590
      %v592 = vsel %vm576, %v588, 0.0
      %593 = vadd.xlane.f32.xlu0 %v592
      %v594 = vpop.xlane.xlu0 %593
      %v595 = vrcp.pop %v591
      %v596 = vrcp.pop %v594
      %v597 = vmul.f32 %v586, %v595
      %v598 = vmul.f32 %v588, %v596
      %v599 = vpack.c.bf16 %v598, %v597
      %600 = vrot.lane.b32.xlu0 %v522, 64
      %v601 = vpop.permute.xlu0 %600
      %v604 = vsel %vm576, %v599, 0
      %606 = vmatprep.subr.bf16.mxu0 0
      %607 = vmatpush1.bf16.msra.mxu0 0
      %608 = vmatprep.subr.bf16.mxu0 0
      %609 = vmatpush1.bf16.msra.mxu0 0
      %610 = vmatprep.subr.bf16.mxu0 0
      %611 = vmatpush1.bf16.msra.mxu0 0
      %612 = vmatprep.subr.bf16.mxu0 0
      %613 = vmatpush1.bf16.msra.mxu0 0
      %614 = vmatprep.subr.bf16.mxu0 0
      %615 = vmatpush1.bf16.msra.mxu0 0
      %616 = vmatprep.subr.bf16.mxu0 0
      %617 = vmatpush1.bf16.msra.mxu0 0
      %618 = vmatprep.subr.bf16.mxu0 0
      %619 = vmatpush1.bf16.msra.mxu0 0
      %620 = vmatprep.subr.bf16.mxu0 0
      %621 = vmatpush1.bf16.msra.mxu0 %v601
      %622 = vmatprep.subr.bf16.mxu0 0
      %623 = vmatpush2.bf16.msra.mxu0 0
      %624 = vmatprep.subr.bf16.mxu0 0
      %625 = vmatpush2.bf16.msra.mxu0 0
      %626 = vmatprep.subr.bf16.mxu0 0
      %627 = vmatpush2.bf16.msra.mxu0 0
      %628 = vmatprep.subr.bf16.mxu0 0
      %629 = vmatpush2.bf16.msra.mxu0 0
      %630 = vmatprep.subr.bf16.mxu0 0
      %631 = vmatpush2.bf16.msra.mxu0 0
      %632 = vmatprep.subr.bf16.mxu0 0
      %633 = vmatpush2.bf16.msra.mxu0 0
      %634 = vmatprep.subr.bf16.mxu0 0
      %635 = vmatpush2.bf16.msra.mxu0 0
      %636 = vmatprep.subr.bf16.mxu0 0
      %637 = vmatpush2.bf16.msra.mxu0 0
      %638 = vmatprep.mubr.bf16.mxu0 0
      %639 = vmatmul.mubr.bf16.gmra.mxu0 %v604
      %v640 = vpop.f32.mrf.mxu0
      %v641 = vadd.f32 0.0, %v640
      %v642 = vpop.f32.mrf.mxu0
      %v643 = vpop.f32.mrf.mxu0
      %v644 = vadd.f32 0.0, %v643
      %v645 = vpop.f32.mrf.mxu0
      %646 = vdwg.mxu0
      %v647 = vpack.c.bf16 %v644, %v641
      %v648 = vld [vmem:[%s3] sm:$0xf]
      %649 = vrot.lane.b32.xlu0 %v522, 120
      %v650 = vpop.permute.xlu0 %649
      %651 = vrot.lane.b32.xlu0 %v522, 88
      %v652 = vpop.permute.xlu0 %651
      %v654 = vsel %vm526, %v650, 0
      %v657 = vsel %vm526, %v652, 0
      %659 = vmatprep.subr.bf16.mxu0 0
      %660 = vmatpush1.bf16.xpose.msra.mxu0 0
      %661 = vmatprep.subr.bf16.mxu0 0
      %662 = vmatpush1.bf16.xpose.msra.mxu0 0
      %663 = vmatprep.subr.bf16.mxu0 0
      %664 = vmatpush1.bf16.xpose.msra.mxu0 0
      %665 = vmatprep.subr.bf16.mxu0 0
      %666 = vmatpush1.bf16.xpose.msra.mxu0 0
      %667 = vmatprep.subr.bf16.mxu0 0
      %668 = vmatpush1.bf16.xpose.msra.mxu0 0
      %669 = vmatprep.subr.bf16.mxu0 0
      %670 = vmatpush1.bf16.xpose.msra.mxu0 0
      %671 = vmatprep.subr.bf16.mxu0 0
      %672 = vmatpush1.bf16.xpose.msra.mxu0 0
      %673 = vmatprep.subr.bf16.mxu0 0
      %674 = vmatpush1.bf16.xpose.msra.mxu0 %v657
      %675 = vmatprep.subr.bf16.mxu0 0
      %676 = vmatpush2.bf16.xpose.msra.mxu0 0
      %677 = vmatprep.subr.bf16.mxu0 0
      %678 = vmatpush2.bf16.xpose.msra.mxu0 0
      %679 = vmatprep.subr.bf16.mxu0 0
      %680 = vmatpush2.bf16.xpose.msra.mxu0 0
      %681 = vmatprep.subr.bf16.mxu0 0
      %682 = vmatpush2.bf16.xpose.msra.mxu0 0
      %683 = vmatprep.subr.bf16.mxu0 0
      %684 = vmatpush2.bf16.xpose.msra.mxu0 0
      %685 = vmatprep.subr.bf16.mxu0 0
      %686 = vmatpush2.bf16.xpose.msra.mxu0 0
      %687 = vmatprep.subr.bf16.mxu0 0
      %688 = vmatpush2.bf16.xpose.msra.mxu0 0
      %689 = vmatprep.subr.bf16.mxu0 0
      %690 = vmatpush2.bf16.xpose.msra.mxu0 0
      %691 = vmatprep.mubr.bf16.mxu0 0
      %692 = vmatmul.mubr.bf16.gmra.mxu0 %v654
      %v693 = vpop.f32.mrf.mxu0
      %v694 = vadd.f32 0.0, %v693
      %v695 = vpop.f32.mrf.mxu0
      %v696 = vpop.f32.mrf.mxu0
      %v697 = vadd.f32 0.0, %v696
      %v698 = vpop.f32.mrf.mxu0
      %699 = vdwg.mxu0
      %v700 = vmul.f32 %v694, 0.35355338
      %v701 = vmul.f32 %v697, 0.35355338
      %v702 = vsel %vm576, %v700, -inf
      %703 = vmax.xlane.f32.xlu0 %v702
      %v704 = vpop.xlane.xlu0 %703
      %v705 = vsel %vm576, %v701, -inf
      %706 = vmax.xlane.f32.xlu0 %v705
      %v707 = vpop.xlane.xlu0 %706
      %v708 = vsub.f32 %v700, %v704
      %v709 = vsub.f32 %v701, %v707
      %v710 = vmul.f32 %v708, 1.442695
      %v711 = vpow.pop %v710
      %v712 = vmul.f32 %v709, 1.442695
      %v713 = vpow.pop %v712
      %v714 = vsel %vm576, %v711, 0.0
      %715 = vadd.xlane.f32.xlu0 %v714
      %v716 = vpop.xlane.xlu0 %715
      %v717 = vsel %vm576, %v713, 0.0
      %718 = vadd.xlane.f32.xlu0 %v717
      %v719 = vpop.xlane.xlu0 %718
      %v720 = vrcp.pop %v716
      %v721 = vrcp.pop %v719
      %v722 = vmul.f32 %v711, %v720
      %v723 = vmul.f32 %v713, %v721
      %v724 = vpack.c.bf16 %v723, %v722
      %725 = vrot.lane.b32.xlu0 %v522, 56
      %v726 = vpop.permute.xlu0 %725
      %v729 = vsel %vm576, %v724, 0
      %731 = vmatprep.subr.bf16.mxu0 0
      %732 = vmatpush1.bf16.msra.mxu0 0
      %733 = vmatprep.subr.bf16.mxu0 0
      %734 = vmatpush1.bf16.msra.mxu0 0
      %735 = vmatprep.subr.bf16.mxu0 0
      %736 = vmatpush1.bf16.msra.mxu0 0
      %737 = vmatprep.subr.bf16.mxu0 0
      %738 = vmatpush1.bf16.msra.mxu0 0
      %739 = vmatprep.subr.bf16.mxu0 0
      %740 = vmatpush1.bf16.msra.mxu0 0
      %741 = vmatprep.subr.bf16.mxu0 0
      %742 = vmatpush1.bf16.msra.mxu0 0
      %743 = vmatprep.subr.bf16.mxu0 0
      %744 = vmatpush1.bf16.msra.mxu0 0
      %745 = vmatprep.subr.bf16.mxu0 0
      %746 = vmatpush1.bf16.msra.mxu0 %v726
      %747 = vmatprep.subr.bf16.mxu0 0
      %748 = vmatpush2.bf16.msra.mxu0 0
      %749 = vmatprep.subr.bf16.mxu0 0
      %750 = vmatpush2.bf16.msra.mxu0 0
      %751 = vmatprep.subr.bf16.mxu0 0
      %752 = vmatpush2.bf16.msra.mxu0 0
      %753 = vmatprep.subr.bf16.mxu0 0
      %754 = vmatpush2.bf16.msra.mxu0 0
      %755 = vmatprep.subr.bf16.mxu0 0
      %756 = vmatpush2.bf16.msra.mxu0 0
      %757 = vmatprep.subr.bf16.mxu0 0
      %758 = vmatpush2.bf16.msra.mxu0 0
      %759 = vmatprep.subr.bf16.mxu0 0
      %760 = vmatpush2.bf16.msra.mxu0 0
      %761 = vmatprep.subr.bf16.mxu0 0
      %762 = vmatpush2.bf16.msra.mxu0 0
      %763 = vmatprep.mubr.bf16.mxu0 0
      %764 = vmatmul.mubr.bf16.gmra.mxu0 %v729
      %v765 = vpop.f32.mrf.mxu0
      %v766 = vadd.f32 0.0, %v765
      %v767 = vpop.f32.mrf.mxu0
      %v768 = vpop.f32.mrf.mxu0
      %v769 = vadd.f32 0.0, %v768
      %v770 = vpop.f32.mrf.mxu0
      %771 = vdwg.mxu0
      %v772 = vpack.c.bf16 %v769, %v766
      %v773 = vld [vmem:[%s3 + $0x4] sm:$0xf]
      %v775 = vsel %vm526, %v772, 0
      %vm777 = vcmask 1043456
      %v779 = vsel %vm777, %v773, 0
      %781 = vmatprep.subr.bf16.mxu0 0
      %782 = vmatpush1.bf16.msra.mxu0 0
      %783 = vmatprep.subr.bf16.mxu0 0
      %784 = vmatpush1.bf16.msra.mxu0 0
      %785 = vmatprep.subr.bf16.mxu0 0
      %786 = vmatpush1.bf16.msra.mxu0 0
      %787 = vmatprep.subr.bf16.mxu0 0
      %788 = vmatpush1.bf16.msra.mxu0 0
      %789 = vmatprep.subr.bf16.mxu0 0
      %790 = vmatpush1.bf16.msra.mxu0 0
      %791 = vmatprep.subr.bf16.mxu0 0
      %792 = vmatpush1.bf16.msra.mxu0 0
      %793 = vmatprep.subr.bf16.mxu0 0
      %794 = vmatpush1.bf16.msra.mxu0 0
      %795 = vmatprep.subr.bf16.mxu0 0
      %796 = vmatpush1.bf16.msra.mxu0 %v779
      %797 = vmatprep.subr.bf16.mxu0 0
      %798 = vmatpush2.bf16.msra.mxu0 0
      %799 = vmatprep.subr.bf16.mxu0 0
      %800 = vmatpush2.bf16.msra.mxu0 0
      %801 = vmatprep.subr.bf16.mxu0 0
      %802 = vmatpush2.bf16.msra.mxu0 0
      %803 = vmatprep.subr.bf16.mxu0 0
      %804 = vmatpush2.bf16.msra.mxu0 0
      %805 = vmatprep.subr.bf16.mxu0 0
      %806 = vmatpush2.bf16.msra.mxu0 0
      %807 = vmatprep.subr.bf16.mxu0 0
      %808 = vmatpush2.bf16.msra.mxu0 0
      %809 = vmatprep.subr.bf16.mxu0 0
      %810 = vmatpush2.bf16.msra.mxu0 0
      %811 = vmatprep.subr.bf16.mxu0 0
      %812 = vmatpush2.bf16.msra.mxu0 0
      %813 = vmatprep.mubr.bf16.mxu0 0
      %814 = vmatmul.mubr.bf16.gmra.mxu0 %v775
      %v815 = vpop.f32.mrf.mxu0
      %v816 = vadd.f32 0.0, %v815
      %v817 = vpop.f32.mrf.mxu0
      %v818 = vpop.f32.mrf.mxu0
      %v819 = vadd.f32 0.0, %v818
      %v820 = vpop.f32.mrf.mxu0
      %821 = vdwg.mxu0
      %v823 = vsel %vm526, %v647, 0
      %v826 = vsel %vm777, %v648, 0
      %828 = vmatprep.subr.bf16.mxu0 0
      %829 = vmatpush1.bf16.msra.mxu0 0
      %830 = vmatprep.subr.bf16.mxu0 0
      %831 = vmatpush1.bf16.msra.mxu0 0
      %832 = vmatprep.subr.bf16.mxu0 0
      %833 = vmatpush1.bf16.msra.mxu0 0
      %834 = vmatprep.subr.bf16.mxu0 0
      %835 = vmatpush1.bf16.msra.mxu0 0
      %836 = vmatprep.subr.bf16.mxu0 0
      %837 = vmatpush1.bf16.msra.mxu0 0
      %838 = vmatprep.subr.bf16.mxu0 0
      %839 = vmatpush1.bf16.msra.mxu0 0
      %840 = vmatprep.subr.bf16.mxu0 0
      %841 = vmatpush1.bf16.msra.mxu0 0
      %842 = vmatprep.subr.bf16.mxu0 0
      %843 = vmatpush1.bf16.msra.mxu0 %v826
      %844 = vmatprep.subr.bf16.mxu0 0
      %845 = vmatpush2.bf16.msra.mxu0 0
      %846 = vmatprep.subr.bf16.mxu0 0
      %847 = vmatpush2.bf16.msra.mxu0 0
      %848 = vmatprep.subr.bf16.mxu0 0
      %849 = vmatpush2.bf16.msra.mxu0 0
      %850 = vmatprep.subr.bf16.mxu0 0
      %851 = vmatpush2.bf16.msra.mxu0 0
      %852 = vmatprep.subr.bf16.mxu0 0
      %853 = vmatpush2.bf16.msra.mxu0 0
      %854 = vmatprep.subr.bf16.mxu0 0
      %855 = vmatpush2.bf16.msra.mxu0 0
      %856 = vmatprep.subr.bf16.mxu0 0
      %857 = vmatpush2.bf16.msra.mxu0 0
      %858 = vmatprep.subr.bf16.mxu0 0
      %859 = vmatpush2.bf16.msra.mxu0 0
      %860 = vmatprep.mubr.bf16.mxu0 0
      %861 = vmatmul.mubr.bf16.gmra.mxu0 %v823
      %v862 = vpop.f32.mrf.mxu0
      %v863 = vadd.f32 %v816, %v862
      %v864 = vpop.f32.mrf.mxu0
      %v865 = vpop.f32.mrf.mxu0
      %v866 = vadd.f32 %v819, %v865
      %v867 = vpop.f32.mrf.mxu0
      %868 = vdwg.mxu0
      %869 = vrot.lane.b32.xlu0 %v522, 112
      %v870 = vpop.permute.xlu0 %869
      %871 = vrot.lane.b32.xlu0 %v522, 80
      %v872 = vpop.permute.xlu0 %871
      %v874 = vsel %vm526, %v870, 0
      %v877 = vsel %vm526, %v872, 0
      %879 = vmatprep.subr.bf16.mxu0 0
      %880 = vmatpush1.bf16.xpose.msra.mxu0 0
      %881 = vmatprep.subr.bf16.mxu0 0
      %882 = vmatpush1.bf16.xpose.msra.mxu0 0
      %883 = vmatprep.subr.bf16.mxu0 0
      %884 = vmatpush1.bf16.xpose.msra.mxu0 0
      %885 = vmatprep.subr.bf16.mxu0 0
      %886 = vmatpush1.bf16.xpose.msra.mxu0 0
      %887 = vmatprep.subr.bf16.mxu0 0
      %888 = vmatpush1.bf16.xpose.msra.mxu0 0
      %889 = vmatprep.subr.bf16.mxu0 0
      %890 = vmatpush1.bf16.xpose.msra.mxu0 0
      %891 = vmatprep.subr.bf16.mxu0 0
      %892 = vmatpush1.bf16.xpose.msra.mxu0 0
      %893 = vmatprep.subr.bf16.mxu0 0
      %894 = vmatpush1.bf16.xpose.msra.mxu0 %v877
      %895 = vmatprep.subr.bf16.mxu0 0
      %896 = vmatpush2.bf16.xpose.msra.mxu0 0
      %897 = vmatprep.subr.bf16.mxu0 0
      %898 = vmatpush2.bf16.xpose.msra.mxu0 0
      %899 = vmatprep.subr.bf16.mxu0 0
      %900 = vmatpush2.bf16.xpose.msra.mxu0 0
      %901 = vmatprep.subr.bf16.mxu0 0
      %902 = vmatpush2.bf16.xpose.msra.mxu0 0
      %903 = vmatprep.subr.bf16.mxu0 0
      %904 = vmatpush2.bf16.xpose.msra.mxu0 0
      %905 = vmatprep.subr.bf16.mxu0 0
      %906 = vmatpush2.bf16.xpose.msra.mxu0 0
      %907 = vmatprep.subr.bf16.mxu0 0
      %908 = vmatpush2.bf16.xpose.msra.mxu0 0
      %909 = vmatprep.subr.bf16.mxu0 0
      %910 = vmatpush2.bf16.xpose.msra.mxu0 0
      %911 = vmatprep.mubr.bf16.mxu0 0
      %912 = vmatmul.mubr.bf16.gmra.mxu0 %v874
      %v913 = vpop.f32.mrf.mxu0
      %v914 = vadd.f32 0.0, %v913
      %v915 = vpop.f32.mrf.mxu0
      %v916 = vpop.f32.mrf.mxu0
      %v917 = vadd.f32 0.0, %v916
      %v918 = vpop.f32.mrf.mxu0
      %919 = vdwg.mxu0
      %v920 = vmul.f32 %v914, 0.35355338
      %v921 = vmul.f32 %v917, 0.35355338
      %v922 = vsel %vm576, %v920, -inf
      %923 = vmax.xlane.f32.xlu0 %v922
      %v924 = vpop.xlane.xlu0 %923
      %v925 = vsel %vm576, %v921, -inf
      %926 = vmax.xlane.f32.xlu0 %v925
      %v927 = vpop.xlane.xlu0 %926
      %v928 = vsub.f32 %v920, %v924
      %v929 = vsub.f32 %v921, %v927
      %v930 = vmul.f32 %v928, 1.442695
      %v931 = vpow.pop %v930
      %v932 = vmul.f32 %v929, 1.442695
      %v933 = vpow.pop %v932
      %v934 = vsel %vm576, %v931, 0.0
      %935 = vadd.xlane.f32.xlu0 %v934
      %v936 = vpop.xlane.xlu0 %935
      %v937 = vsel %vm576, %v933, 0.0
      %938 = vadd.xlane.f32.xlu0 %v937
      %v939 = vpop.xlane.xlu0 %938
      %v940 = vrcp.pop %v936
      %v941 = vrcp.pop %v939
      %v942 = vmul.f32 %v931, %v940
      %v943 = vmul.f32 %v933, %v941
      %v944 = vpack.c.bf16 %v943, %v942
      %945 = vrot.lane.b32.xlu0 %v522, 48
      %v946 = vpop.permute.xlu0 %945
      %v949 = vsel %vm576, %v944, 0
      %951 = vmatprep.subr.bf16.mxu0 0
      %952 = vmatpush1.bf16.msra.mxu0 0
      %953 = vmatprep.subr.bf16.mxu0 0
      %954 = vmatpush1.bf16.msra.mxu0 0
      %955 = vmatprep.subr.bf16.mxu0 0
      %956 = vmatpush1.bf16.msra.mxu0 0
      %957 = vmatprep.subr.bf16.mxu0 0
      %958 = vmatpush1.bf16.msra.mxu0 0
      %959 = vmatprep.subr.bf16.mxu0 0
      %960 = vmatpush1.bf16.msra.mxu0 0
      %961 = vmatprep.subr.bf16.mxu0 0
      %962 = vmatpush1.bf16.msra.mxu0 0
      %963 = vmatprep.subr.bf16.mxu0 0
      %964 = vmatpush1.bf16.msra.mxu0 0
      %965 = vmatprep.subr.bf16.mxu0 0
      %966 = vmatpush1.bf16.msra.mxu0 %v946
      %967 = vmatprep.subr.bf16.mxu0 0
      %968 = vmatpush2.bf16.msra.mxu0 0
      %969 = vmatprep.subr.bf16.mxu0 0
      %970 = vmatpush2.bf16.msra.mxu0 0
      %971 = vmatprep.subr.bf16.mxu0 0
      %972 = vmatpush2.bf16.msra.mxu0 0
      %973 = vmatprep.subr.bf16.mxu0 0
      %974 = vmatpush2.bf16.msra.mxu0 0
      %975 = vmatprep.subr.bf16.mxu0 0
      %976 = vmatpush2.bf16.msra.mxu0 0
      %977 = vmatprep.subr.bf16.mxu0 0
      %978 = vmatpush2.bf16.msra.mxu0 0
      %979 = vmatprep.subr.bf16.mxu0 0
      %980 = vmatpush2.bf16.msra.mxu0 0
      %981 = vmatprep.subr.bf16.mxu0 0
      %982 = vmatpush2.bf16.msra.mxu0 0
      %983 = vmatprep.mubr.bf16.mxu0 0
      %984 = vmatmul.mubr.bf16.gmra.mxu0 %v949
      %v985 = vpop.f32.mrf.mxu0
      %v986 = vadd.f32 0.0, %v985
      %v987 = vpop.f32.mrf.mxu0
      %v988 = vpop.f32.mrf.mxu0
      %v989 = vadd.f32 0.0, %v988
      %v990 = vpop.f32.mrf.mxu0
      %991 = vdwg.mxu0
      %v992 = vpack.c.bf16 %v989, %v986
      %v993 = vld [vmem:[%s3 + $0x8] sm:$0xf]
      %v995 = vsel %vm526, %v992, 0
      %v998 = vsel %vm777, %v993, 0
      %1000 = vmatprep.subr.bf16.mxu0 0
      %1001 = vmatpush1.bf16.msra.mxu0 0
      %1002 = vmatprep.subr.bf16.mxu0 0
      %1003 = vmatpush1.bf16.msra.mxu0 0
      %1004 = vmatprep.subr.bf16.mxu0 0
      %1005 = vmatpush1.bf16.msra.mxu0 0
      %1006 = vmatprep.subr.bf16.mxu0 0
      %1007 = vmatpush1.bf16.msra.mxu0 0
      %1008 = vmatprep.subr.bf16.mxu0 0
      %1009 = vmatpush1.bf16.msra.mxu0 0
      %1010 = vmatprep.subr.bf16.mxu0 0
      %1011 = vmatpush1.bf16.msra.mxu0 0
      %1012 = vmatprep.subr.bf16.mxu0 0
      %1013 = vmatpush1.bf16.msra.mxu0 0
      %1014 = vmatprep.subr.bf16.mxu0 0
      %1015 = vmatpush1.bf16.msra.mxu0 %v998
      %1016 = vmatprep.subr.bf16.mxu0 0
      %1017 = vmatpush2.bf16.msra.mxu0 0
      %1018 = vmatprep.subr.bf16.mxu0 0
      %1019 = vmatpush2.bf16.msra.mxu0 0
      %1020 = vmatprep.subr.bf16.mxu0 0
      %1021 = vmatpush2.bf16.msra.mxu0 0
      %1022 = vmatprep.subr.bf16.mxu0 0
      %1023 = vmatpush2.bf16.msra.mxu0 0
      %1024 = vmatprep.subr.bf16.mxu0 0
      %1025 = vmatpush2.bf16.msra.mxu0 0
      %1026 = vmatprep.subr.bf16.mxu0 0
      %1027 = vmatpush2.bf16.msra.mxu0 0
      %1028 = vmatprep.subr.bf16.mxu0 0
      %1029 = vmatpush2.bf16.msra.mxu0 0
      %1030 = vmatprep.subr.bf16.mxu0 0
      %1031 = vmatpush2.bf16.msra.mxu0 0
      %1032 = vmatprep.mubr.bf16.mxu0 0
      %1033 = vmatmul.mubr.bf16.gmra.mxu0 %v995
      %v1034 = vpop.f32.mrf.mxu0
      %v1035 = vadd.f32 0.0, %v1034
      %v1036 = vpop.f32.mrf.mxu0
      %v1037 = vpop.f32.mrf.mxu0
      %v1038 = vadd.f32 0.0, %v1037
      %v1039 = vpop.f32.mrf.mxu0
      %1040 = vdwg.mxu0
      %v1041 = vadd.f32 %v863, %v1035
      %v1042 = vadd.f32 %v866, %v1038
      %1043 = vrot.lane.b32.xlu0 %v522, 104
      %v1044 = vpop.permute.xlu0 %1043
      %1045 = vrot.lane.b32.xlu0 %v522, 72
      %v1046 = vpop.permute.xlu0 %1045
      %v1048 = vsel %vm526, %v1044, 0
      %v1051 = vsel %vm526, %v1046, 0
      %1053 = vmatprep.subr.bf16.mxu0 0
      %1054 = vmatpush1.bf16.xpose.msra.mxu0 0
      %1055 = vmatprep.subr.bf16.mxu0 0
      %1056 = vmatpush1.bf16.xpose.msra.mxu0 0
      %1057 = vmatprep.subr.bf16.mxu0 0
      %1058 = vmatpush1.bf16.xpose.msra.mxu0 0
      %1059 = vmatprep.subr.bf16.mxu0 0
      %1060 = vmatpush1.bf16.xpose.msra.mxu0 0
      %1061 = vmatprep.subr.bf16.mxu0 0
      %1062 = vmatpush1.bf16.xpose.msra.mxu0 0
      %1063 = vmatprep.subr.bf16.mxu0 0
      %1064 = vmatpush1.bf16.xpose.msra.mxu0 0
      %1065 = vmatprep.subr.bf16.mxu0 0
      %1066 = vmatpush1.bf16.xpose.msra.mxu0 0
      %1067 = vmatprep.subr.bf16.mxu0 0
      %1068 = vmatpush1.bf16.xpose.msra.mxu0 %v1051
      %1069 = vmatprep.subr.bf16.mxu0 0
      %1070 = vmatpush2.bf16.xpose.msra.mxu0 0
      %1071 = vmatprep.subr.bf16.mxu0 0
      %1072 = vmatpush2.bf16.xpose.msra.mxu0 0
      %1073 = vmatprep.subr.bf16.mxu0 0
      %1074 = vmatpush2.bf16.xpose.msra.mxu0 0
      %1075 = vmatprep.subr.bf16.mxu0 0
      %1076 = vmatpush2.bf16.xpose.msra.mxu0 0
      %1077 = vmatprep.subr.bf16.mxu0 0
      %1078 = vmatpush2.bf16.xpose.msra.mxu0 0
      %1079 = vmatprep.subr.bf16.mxu0 0
      %1080 = vmatpush2.bf16.xpose.msra.mxu0 0
      %1081 = vmatprep.subr.bf16.mxu0 0
      %1082 = vmatpush2.bf16.xpose.msra.mxu0 0
      %1083 = vmatprep.subr.bf16.mxu0 0
      %1084 = vmatpush2.bf16.xpose.msra.mxu0 0
      %1085 = vmatprep.mubr.bf16.mxu0 0
      %1086 = vmatmul.mubr.bf16.gmra.mxu0 %v1048
      %v1087 = vpop.f32.mrf.mxu0
      %v1088 = vadd.f32 0.0, %v1087
      %v1089 = vpop.f32.mrf.mxu0
      %v1090 = vpop.f32.mrf.mxu0
      %v1091 = vadd.f32 0.0, %v1090
      %v1092 = vpop.f32.mrf.mxu0
      %1093 = vdwg.mxu0
      %v1094 = vmul.f32 %v1088, 0.35355338
      %v1095 = vmul.f32 %v1091, 0.35355338
      %v1096 = vsel %vm576, %v1094, -inf
      %1097 = vmax.xlane.f32.xlu0 %v1096
      %v1098 = vpop.xlane.xlu0 %1097
      %v1099 = vsel %vm576, %v1095, -inf
      %1100 = vmax.xlane.f32.xlu0 %v1099
      %v1101 = vpop.xlane.xlu0 %1100
      %v1102 = vsub.f32 %v1094, %v1098
      %v1103 = vsub.f32 %v1095, %v1101
      %v1104 = vmul.f32 %v1102, 1.442695
      %v1105 = vpow.pop %v1104
      %v1106 = vmul.f32 %v1103, 1.442695
      %v1107 = vpow.pop %v1106
      %v1108 = vsel %vm576, %v1105, 0.0
      %1109 = vadd.xlane.f32.xlu0 %v1108
      %v1110 = vpop.xlane.xlu0 %1109
      %v1111 = vsel %vm576, %v1107, 0.0
      %1112 = vadd.xlane.f32.xlu0 %v1111
      %v1113 = vpop.xlane.xlu0 %1112
      %v1114 = vrcp.pop %v1110
      %v1115 = vrcp.pop %v1113
      %v1116 = vmul.f32 %v1105, %v1114
      %v1117 = vmul.f32 %v1107, %v1115
      %v1118 = vpack.c.bf16 %v1117, %v1116
      %1119 = vrot.lane.b32.xlu0 %v522, 40
      %v1120 = vpop.permute.xlu0 %1119
      %v1123 = vsel %vm576, %v1118, 0
      %1125 = vmatprep.subr.bf16.mxu0 0
      %1126 = vmatpush1.bf16.msra.mxu0 0
      %1127 = vmatprep.subr.bf16.mxu0 0
      %1128 = vmatpush1.bf16.msra.mxu0 0
      %1129 = vmatprep.subr.bf16.mxu0 0
      %1130 = vmatpush1.bf16.msra.mxu0 0
      %1131 = vmatprep.subr.bf16.mxu0 0
      %1132 = vmatpush1.bf16.msra.mxu0 0
      %1133 = vmatprep.subr.bf16.mxu0 0
      %1134 = vmatpush1.bf16.msra.mxu0 0
      %1135 = vmatprep.subr.bf16.mxu0 0
      %1136 = vmatpush1.bf16.msra.mxu0 0
      %1137 = vmatprep.subr.bf16.mxu0 0
      %1138 = vmatpush1.bf16.msra.mxu0 0
      %1139 = vmatprep.subr.bf16.mxu0 0
      %1140 = vmatpush1.bf16.msra.mxu0 %v1120
      %1141 = vmatprep.subr.bf16.mxu0 0
      %1142 = vmatpush2.bf16.msra.mxu0 0
      %1143 = vmatprep.subr.bf16.mxu0 0
      %1144 = vmatpush2.bf16.msra.mxu0 0
      %1145 = vmatprep.subr.bf16.mxu0 0
      %1146 = vmatpush2.bf16.msra.mxu0 0
      %1147 = vmatprep.subr.bf16.mxu0 0
      %1148 = vmatpush2.bf16.msra.mxu0 0
      %1149 = vmatprep.subr.bf16.mxu0 0
      %1150 = vmatpush2.bf16.msra.mxu0 0
      %1151 = vmatprep.subr.bf16.mxu0 0
      %1152 = vmatpush2.bf16.msra.mxu0 0
      %1153 = vmatprep.subr.bf16.mxu0 0
      %1154 = vmatpush2.bf16.msra.mxu0 0
      %1155 = vmatprep.subr.bf16.mxu0 0
      %1156 = vmatpush2.bf16.msra.mxu0 0
      %1157 = vmatprep.mubr.bf16.mxu0 0
      %1158 = vmatmul.mubr.bf16.gmra.mxu0 %v1123
      %v1159 = vpop.f32.mrf.mxu0
      %v1160 = vadd.f32 0.0, %v1159
      %v1161 = vpop.f32.mrf.mxu0
      %v1162 = vpop.f32.mrf.mxu0
      %v1163 = vadd.f32 0.0, %v1162
      %v1164 = vpop.f32.mrf.mxu0
      %1165 = vdwg.mxu0
      %v1166 = vpack.c.bf16 %v1163, %v1160
      %v1167 = vld [vmem:[%s3 + $0xc] sm:$0xf]
      %v1169 = vsel %vm526, %v1166, 0
      %v1172 = vsel %vm777, %v1167, 0
      %1174 = vmatprep.subr.bf16.mxu0 0
      %1175 = vmatpush1.bf16.msra.mxu0 0
      %1176 = vmatprep.subr.bf16.mxu0 0
      %1177 = vmatpush1.bf16.msra.mxu0 0
      %1178 = vmatprep.subr.bf16.mxu0 0
      %1179 = vmatpush1.bf16.msra.mxu0 0
      %1180 = vmatprep.subr.bf16.mxu0 0
      %1181 = vmatpush1.bf16.msra.mxu0 0
      %1182 = vmatprep.subr.bf16.mxu0 0
      %1183 = vmatpush1.bf16.msra.mxu0 0
      %1184 = vmatprep.subr.bf16.mxu0 0
      %1185 = vmatpush1.bf16.msra.mxu0 0
      %1186 = vmatprep.subr.bf16.mxu0 0
      %1187 = vmatpush1.bf16.msra.mxu0 0
      %1188 = vmatprep.subr.bf16.mxu0 0
      %1189 = vmatpush1.bf16.msra.mxu0 %v1172
      %1190 = vmatprep.subr.bf16.mxu0 0
      %1191 = vmatpush2.bf16.msra.mxu0 0
      %1192 = vmatprep.subr.bf16.mxu0 0
      %1193 = vmatpush2.bf16.msra.mxu0 0
      %1194 = vmatprep.subr.bf16.mxu0 0
      %1195 = vmatpush2.bf16.msra.mxu0 0
      %1196 = vmatprep.subr.bf16.mxu0 0
      %1197 = vmatpush2.bf16.msra.mxu0 0
      %1198 = vmatprep.subr.bf16.mxu0 0
      %1199 = vmatpush2.bf16.msra.mxu0 0
      %1200 = vmatprep.subr.bf16.mxu0 0
      %1201 = vmatpush2.bf16.msra.mxu0 0
      %1202 = vmatprep.subr.bf16.mxu0 0
      %1203 = vmatpush2.bf16.msra.mxu0 0
      %1204 = vmatprep.subr.bf16.mxu0 0
      %1205 = vmatpush2.bf16.msra.mxu0 0
      %1206 = vmatprep.mubr.bf16.mxu0 0
      %1207 = vmatmul.mubr.bf16.gmra.mxu0 %v1169
      %v1208 = vpop.f32.mrf.mxu0
      %v1209 = vadd.f32 0.0, %v1208
      %v1210 = vpop.f32.mrf.mxu0
      %v1211 = vpop.f32.mrf.mxu0
      %v1212 = vadd.f32 0.0, %v1211
      %v1213 = vpop.f32.mrf.mxu0
      %1214 = vdwg.mxu0
      %v1215 = vadd.f32 %v1041, %v1209
      %v1216 = vadd.f32 %v1042, %v1212
      %v1217 = vld [vmem:[%s4] sm:$0x1]
      %v1219 = vlaneseq
      %v1220 = vshrl.u32 %v1219, 7
      %v1221 = vsub.s32 0, %v1220
      %v1222 = vrot.slane %v1217, %v1221
      %v1224 = vadd.f32 %v1215, %v1222
      %v1225 = vadd.f32 %v1216, %v1222
      %v1226 = vadd.f32 %v447, %v1224
      %v1227 = vadd.f32 %v448, %v1225
      %v1228 = vsel %vm477, %v1226, 0.0
      %1229 = vadd.xlane.f32.xlu0 %v1228
      %v1230 = vpop.xlane.xlu0 %1229
      %v1231 = vsel %vm477, %v1227, 0.0
      %1232 = vadd.xlane.f32.xlu0 %v1231
      %v1233 = vpop.xlane.xlu0 %1232
      %v1234 = vrcp.pop 32.0
      %v1235 = vmul.f32 %v1230, %v1234
      %v1236 = vmul.f32 %v1233, %v1234
      %v1237 = vsub.f32 %v1226, %v1235
      %v1238 = vsub.f32 %v1227, %v1236
      %v1239 = vmul.f32 %v1237, %v1237
      %v1240 = vmul.f32 %v1238, %v1238
      %v1241 = vsel %vm477, %v1239, 0.0
      %1242 = vadd.xlane.f32.xlu0 %v1241
      %v1243 = vpop.xlane.xlu0 %1242
      %v1244 = vsel %vm477, %v1240, 0.0
      %1245 = vadd.xlane.f32.xlu0 %v1244
      %v1246 = vpop.xlane.xlu0 %1245
      %v1247 = vmul.f32 %v1243, %v1234
      %v1248 = vmul.f32 %v1246, %v1234
      %v1249 = vadd.f32 %v1247, 1e-05
      %v1250 = vadd.f32 %v1248, 1e-05
      %v1251 = vrsqrt.pop %v1249
      %v1252 = vrsqrt.pop %v1250
      %v1253 = vmul.f32 %v1237, %v1251
      %v1254 = vmul.f32 %v1238, %v1252
      %v1255 = vld [vmem:[%s5] sm:$0x1]
      %v1257 = vlaneseq
      %v1258 = vshrl.u32 %v1257, 7
      %v1259 = vsub.s32 0, %v1258
      %v1260 = vrot.slane %v1255, %v1259
      %v1262 = vmul.f32 %v1253, %v1260
      %v1263 = vmul.f32 %v1254, %v1260
      %v1264 = vld [vmem:[%s6] sm:$0x1]
      %v1266 = vlaneseq
      %v1267 = vshrl.u32 %v1266, 7
      %v1268 = vsub.s32 0, %v1267
      %v1269 = vrot.slane %v1264, %v1268
      %v1271 = vadd.f32 %v1262, %v1269
      %v1272 = vadd.f32 %v1263, %v1269
      %v1273 = vpack.c.bf16 %v1272, %v1271
      %v1274 = vld [vmem:[%s7] sm:$0xf]
      %v1275 = vld [vmem:[%s7 + $0x4] sm:$0xf]
      %v1276 = vld [vmem:[%s7 + $0x8] sm:$0xf]
      %v1277 = vld [vmem:[%s7 + $0xc] sm:$0xf]
      %v1278 = vld [vmem:[%s8] sm:$0x1]
      %v1280 = vlaneseq
      %v1281 = vshrl.u32 %v1280, 7
      %v1282 = vsub.s32 0, %v1281
      %v1283 = vrot.slane %v1278, %v1282
      %v1289 = vunpack.c.l.b16 %v1274
      %v1290 = vunpack.c.l.b16 %v1275
      %v1291 = vunpack.c.l.b16 %v1276
      %v1292 = vunpack.c.l.b16 %v1277
      %v1293 = vpack.c.b16 %v1290, %v1289
      %v1294 = vpack.c.b16 %v1292, %v1291
      %v1298 = vsel %vm477, %v1273, 0
      %1300 = vmatprep.subr.bf16.mxu0 0
      %1301 = vmatpush1.bf16.msra.mxu0 0
      %1302 = vmatprep.subr.bf16.mxu0 0
      %1303 = vmatpush1.bf16.msra.mxu0 0
      %1304 = vmatprep.subr.bf16.mxu0 0
      %1305 = vmatpush1.bf16.msra.mxu0 0
      %1306 = vmatprep.subr.bf16.mxu0 0
      %1307 = vmatpush1.bf16.msra.mxu0 0
      %1308 = vmatprep.subr.bf16.mxu0 0
      %1309 = vmatpush1.bf16.msra.mxu0 0
      %1310 = vmatprep.subr.bf16.mxu0 0
      %1311 = vmatpush1.bf16.msra.mxu0 0
      %1312 = vmatprep.subr.bf16.mxu0 0
      %1313 = vmatpush1.bf16.msra.mxu0 %v1294
      %1314 = vmatprep.subr.bf16.mxu0 0
      %1315 = vmatpush1.bf16.msra.mxu0 %v1293
      %1316 = vmatprep.subr.bf16.mxu0 0
      %1317 = vmatpush2.bf16.msra.mxu0 0
      %1318 = vmatprep.subr.bf16.mxu0 0
      %1319 = vmatpush2.bf16.msra.mxu0 0
      %1320 = vmatprep.subr.bf16.mxu0 0
      %1321 = vmatpush2.bf16.msra.mxu0 0
      %1322 = vmatprep.subr.bf16.mxu0 0
      %1323 = vmatpush2.bf16.msra.mxu0 0
      %1324 = vmatprep.subr.bf16.mxu0 0
      %1325 = vmatpush2.bf16.msra.mxu0 0
      %1326 = vmatprep.subr.bf16.mxu0 0
      %1327 = vmatpush2.bf16.msra.mxu0 0
      %1328 = vmatprep.subr.bf16.mxu0 0
      %1329 = vmatpush2.bf16.msra.mxu0 0
      %1330 = vmatprep.subr.bf16.mxu0 0
      %1331 = vmatpush2.bf16.msra.mxu0 0
      %1332 = vmatprep.mubr.bf16.mxu0 0
      %1333 = vmatmul.mubr.bf16.gmra.mxu0 %v1298
      %v1334 = vpop.f32.mrf.mxu0
      %v1335 = vadd.f32 %v1283, %v1334
      %v1336 = vpop.f32.mrf.mxu0
      %v1337 = vpop.f32.mrf.mxu0
      %v1338 = vadd.f32 %v1283, %v1337
      %v1339 = vpop.f32.mrf.mxu0
      %1340 = vdwg.mxu0
      %v1341 = vmax.f32 %v1335, 0.0
      %v1342 = vmax.f32 %v1338, 0.0
      %v1343 = vpack.c.bf16 %v1342, %v1341
      %v1344 = vld [vmem:[%s9] sm:$0xf]
      %v1345 = vld [vmem:[%s9 + $0x4] sm:$0xf]
      %v1346 = vld [vmem:[%s9 + $0x8] sm:$0xf]
      %v1347 = vld [vmem:[%s9 + $0xc] sm:$0xf]
      %v1348 = vld [vmem:[%s9 + $0x10] sm:$0xf]
      %v1349 = vld [vmem:[%s9 + $0x14] sm:$0xf]
      %v1350 = vld [vmem:[%s9 + $0x18] sm:$0xf]
      %v1351 = vld [vmem:[%s9 + $0x1c] sm:$0xf]
      %v1352 = vld [vmem:[%s10] sm:$0x1]
      %v1354 = vlaneseq
      %v1355 = vshrl.u32 %v1354, 7
      %v1356 = vsub.s32 0, %v1355
      %v1357 = vrot.slane %v1352, %v1356
      %v1367 = vunpack.c.l.b16 %v1344
      %v1368 = vunpack.c.l.b16 %v1345
      %v1369 = vunpack.c.l.b16 %v1346
      %v1370 = vunpack.c.l.b16 %v1347
      %v1371 = vunpack.c.l.b16 %v1348
      %v1372 = vunpack.c.l.b16 %v1349
      %v1373 = vunpack.c.l.b16 %v1350
      %v1374 = vunpack.c.l.b16 %v1351
      %v1375 = vpack.c.b16 %v1368, %v1367
      %v1376 = vpack.c.b16 %v1370, %v1369
      %v1377 = vpack.c.b16 %v1372, %v1371
      %v1378 = vpack.c.b16 %v1374, %v1373
      %vm1383 = vcmask 523264
      %v1385 = vsel %vm1383, %v1343, 0
      %1387 = vmatprep.subr.bf16.mxu0 0
      %1388 = vmatpush1.bf16.msra.mxu0 0
      %1389 = vmatprep.subr.bf16.mxu0 0
      %1390 = vmatpush1.bf16.msra.mxu0 0
      %1391 = vmatprep.subr.bf16.mxu0 0
      %1392 = vmatpush1.bf16.msra.mxu0 0
      %1393 = vmatprep.subr.bf16.mxu0 0
      %1394 = vmatpush1.bf16.msra.mxu0 0
      %1395 = vmatprep.subr.bf16.mxu0 0
      %1396 = vmatpush1.bf16.msra.mxu0 %v1378
      %1397 = vmatprep.subr.bf16.mxu0 0
      %1398 = vmatpush1.bf16.msra.mxu0 %v1377
      %1399 = vmatprep.subr.bf16.mxu0 0
      %1400 = vmatpush1.bf16.msra.mxu0 %v1376
      %1401 = vmatprep.subr.bf16.mxu0 0
      %1402 = vmatpush1.bf16.msra.mxu0 %v1375
      %1403 = vmatprep.subr.bf16.mxu0 0
      %1404 = vmatpush2.bf16.msra.mxu0 0
      %1405 = vmatprep.subr.bf16.mxu0 0
      %1406 = vmatpush2.bf16.msra.mxu0 0
      %1407 = vmatprep.subr.bf16.mxu0 0
      %1408 = vmatpush2.bf16.msra.mxu0 0
      %1409 = vmatprep.subr.bf16.mxu0 0
      %1410 = vmatpush2.bf16.msra.mxu0 0
      %1411 = vmatprep.subr.bf16.mxu0 0
      %1412 = vmatpush2.bf16.msra.mxu0 0
      %1413 = vmatprep.subr.bf16.mxu0 0
      %1414 = vmatpush2.bf16.msra.mxu0 0
      %1415 = vmatprep.subr.bf16.mxu0 0
      %1416 = vmatpush2.bf16.msra.mxu0 0
      %1417 = vmatprep.subr.bf16.mxu0 0
      %1418 = vmatpush2.bf16.msra.mxu0 0
      %1419 = vmatprep.mubr.bf16.mxu0 0
      %1420 = vmatmul.mubr.bf16.gmra.mxu0 %v1385
      %v1421 = vpop.f32.mrf.mxu0
      %v1422 = vadd.f32 %v1357, %v1421
      %v1423 = vpop.f32.mrf.mxu0
      %v1424 = vpop.f32.mrf.mxu0
      %v1425 = vadd.f32 %v1357, %v1424
      %v1426 = vpop.f32.mrf.mxu0
      %1427 = vdwg.mxu0
      %v1428 = vadd.f32 %v1271, %v1422
      %v1429 = vadd.f32 %v1272, %v1425
      %v1430 = vsel %vm477, %v1428, 0.0
      %1431 = vadd.xlane.f32.xlu0 %v1430
      %v1432 = vpop.xlane.xlu0 %1431
      %v1433 = vsel %vm477, %v1429, 0.0
      %1434 = vadd.xlane.f32.xlu0 %v1433
      %v1435 = vpop.xlane.xlu0 %1434
      %v1436 = vmul.f32 %v1432, %v1234
      %v1437 = vmul.f32 %v1435, %v1234
      %v1438 = vsub.f32 %v1428, %v1436
      %v1439 = vsub.f32 %v1429, %v1437
      %v1440 = vmul.f32 %v1438, %v1438
      %v1441 = vmul.f32 %v1439, %v1439
      %v1442 = vsel %vm477, %v1440, 0.0
      %1443 = vadd.xlane.f32.xlu0 %v1442
      %v1444 = vpop.xlane.xlu0 %1443
      %v1445 = vsel %vm477, %v1441, 0.0
      %1446 = vadd.xlane.f32.xlu0 %v1445
      %v1447 = vpop.xlane.xlu0 %1446
      %v1448 = vmul.f32 %v1444, %v1234
      %v1449 = vmul.f32 %v1447, %v1234
      %v1450 = vadd.f32 %v1448, 1e-05
      %v1451 = vadd.f32 %v1449, 1e-05
      %v1452 = vrsqrt.pop %v1450
      %v1453 = vrsqrt.pop %v1451
      %v1454 = vmul.f32 %v1438, %v1452
      %v1455 = vmul.f32 %v1439, %v1453
      %v1456 = vld [vmem:[%s11] sm:$0x1]
      %v1458 = vlaneseq
      %v1459 = vshrl.u32 %v1458, 7
      %v1460 = vsub.s32 0, %v1459
      %v1461 = vrot.slane %v1456, %v1460
      %v1463 = vmul.f32 %v1454, %v1461
      %v1464 = vmul.f32 %v1455, %v1461
      %v1465 = vld [vmem:[%s12] sm:$0x1]
      %v1467 = vlaneseq
      %v1468 = vshrl.u32 %v1467, 7
      %v1469 = vsub.s32 0, %v1468
      %v1470 = vrot.slane %v1465, %v1469
      %v1472 = vadd.f32 %v1463, %v1470
      %v1473 = vadd.f32 %v1464, %v1470
      %v1474 = vpack.c.bf16 %v1473, %v1472
      %v1476 = vunpack.c.l.b16 %v1474
      %v1477 = vunpack.c.h.b16 %v1474
      %v1478 = vpack.c.b16 %v1476, %v1476
      %v1479 = vpack.c.b16 %v1477, %v1477
      %vm1482 = vcmask 257024
      %1483 = vst.msk [vmem:[%s442] sm:$0xf] %vm1482, %v1478
      %1484 = vst.msk [vmem:[%s442 + $0x4] sm:$0xf] %vm1482, %v1479
      %s1485 = smul.u32 2, %s24
      %p1486 = scmp.lt.s32.totalorder %s1485, 3
      %s1487 = scalar_select %p1486, %s1485, 3
      %s1488 = smul.addr %s1487, 4
      %s1489 = scalar_lea.vmem %s13, %s1488
      // Predicated region
      $region73: #{transformer_ocr_forward.8} parent=71 // pred_check
        %p1490 = pneg %p320
      $region74: #{transformer_ocr_forward.8} parent=71 // pred_check_branch
        %1492 = sbr.rel (%p1490) target = $region76
      $region75: #{transformer_ocr_forward.8} parent=71 // pred_region
        %s1493 = smul.u32 2, %s24
      $region76: #{transformer_ocr_forward.8} parent=71 // pred_fallthru
        _
    $region72: #{transformer_ocr_forward.8} parent=5 // pred_fallthru
      _
    %p1494 = scmp.le.s32.totalorder 2, %s19
    // Predicated region
    $region77: #{transformer_ocr_forward.8} parent=5 // pred_check
      %p1495 = pneg %p1494
    $region78: #{transformer_ocr_forward.8} parent=5 // pred_check_branch
      %1497 = sbr.rel (%p1495) target = $region80
    $region79: #{transformer_ocr_forward.8} parent=5 // pred_region
      %s1498 = ssub.s32 %s19, 2
      // Predicated region
      $region81: #{transformer_ocr_forward.8} parent=79 // pred_check
        %p1499 = pneg %p326
      $region82: #{transformer_ocr_forward.8} parent=79 // pred_check_branch
        %1501 = sbr.rel (%p1499) target = $region84
      $region83: #{transformer_ocr_forward.8} parent=79 // pred_region
        %s1502 = smul.u32 2, %s25
        %p1503 = scmp.lt.s32.totalorder %s1502, 3
        %s1504 = scalar_select %p1503, %s1502, 3
        %s1505 = smul.addr %s1504, 4
        %s1506 = scalar_lea.vmem %s13, %s1505
      $region84: #{transformer_ocr_forward.8} parent=79 // pred_fallthru
        _
    $region80: #{transformer_ocr_forward.8} parent=5 // pred_fallthru
      _
  $region6: #{transformer_ocr_forward.8} parent=0 // loop_footer
    %s23 = sadd.s32 1, %s19
  $region7: #{transformer_ocr_forward.8} parent=0 // loop_footer_branch
    %18 = sbr.rel target = $region3
  $region8: #{transformer_ocr_forward.8} parent=0 // loop_exit
    _

// kernel: transformer_ocr_forward.9
$region0: #{transformer_ocr_forward.9}
  #allocation0 [shape = 'u32[]', space=smem, size = 0x4, offset = 0x4, fixed_abs, tag = 'smem constant byte address 0x4 - core index']
  #allocation1 [shape = 'u32[144,128]{1,0:T(1,128)}', space=vmem, size = 0x12000, scoped, tag = 'internal scratch']
  %s0 = inlined_call_operand.vmem [shape: bf16[32,32], index: 0, kind: input, shape index: {}]
  %s1 = inlined_call_operand.vmem [shape: bf16[32,96], index: 1, kind: input, shape index: {}]
  %s2 = inlined_call_operand.vmem [shape: f32[1,96], index: 2, kind: input, shape index: {}]
  %s3 = inlined_call_operand.vmem [shape: bf16[32,32], index: 3, kind: input, shape index: {}]
  %s4 = inlined_call_operand.vmem [shape: f32[1,32], index: 4, kind: input, shape index: {}]
  %s5 = inlined_call_operand.vmem [shape: f32[1,32], index: 5, kind: input, shape index: {}]
  %s6 = inlined_call_operand.vmem [shape: f32[1,32], index: 6, kind: input, shape index: {}]
  %s7 = inlined_call_operand.vmem [shape: bf16[32,64], index: 7, kind: input, shape index: {}]
  %s8 = inlined_call_operand.vmem [shape: f32[1,64], index: 8, kind: input, shape index: {}]
  %s9 = inlined_call_operand.vmem [shape: bf16[64,32], index: 9, kind: input, shape index: {}]
  %s10 = inlined_call_operand.vmem [shape: f32[1,32], index: 10, kind: input, shape index: {}]
  %s11 = inlined_call_operand.vmem [shape: f32[1,32], index: 11, kind: input, shape index: {}]
  %s12 = inlined_call_operand.vmem [shape: f32[1,32], index: 12, kind: input, shape index: {}]
  %s13 = inlined_call_operand.vmem [shape: bf16[32,128], index: 13, kind: input, shape index: {}]
  %s14 = inlined_call_operand.vmem [shape: f32[1,128], index: 14, kind: input, shape index: {}]
  %s15 = inlined_call_operand.hbm [shape: f32[32,128], index: 15, kind: output, shape index: {}]
  %s16 = sld [smem:[#allocation0]]
  $region93: #{transformer_ocr_forward.9} parent=0
    _
  %s18 = ssub.s32 1, %s16
  %s19 = scalar_select 0, %s18, %s16
  $region1: #{transformer_ocr_forward.9} parent=0
    #allocation2 [shape = 'u8[16384]{0}', space=vmem, size = 0x4000, scoped, tag = 'output window, operand 0']
    #allocation3 [shape = 's32[2]{0}', space=sflag, size = 0x8, scoped, tag = 'scoped memory for transformer_ocr_forward.9']
    %20 = vsyncpa [#allocation3], 0
    %s21 = scalar_lea.sflag [#allocation3], 1
    %22 = vsyncpa %s21, 0
    loop: start=0, step=1, limit=4
    $region2: #{transformer_ocr_forward.9} parent=1 // loop_pre_header
      _
    $region3: #{transformer_ocr_forward.9} parent=1 // loop_header
      %s24 = sphi 0, %s28
      %p25 = scmp.ge.s32.totalorder %s24, 4
      %s34 = sphi 0, %s36
      %s37 = sphi 0, %s34
      %s38 = sphi 0, %s37
      %s54 = sphi 0, %s38
      %s58 = sphi 0, %s58
      %s60 = sphi 0, %s58
      %s61 = sphi 0, %s60
      %s75 = sphi 0, %s61
      %s79 = sphi 0, %s79
      %s81 = sphi 0, %s79
      %s82 = sphi 0, %s81
      %s96 = sphi 0, %s82
      %s100 = sphi 0, %s100
      %s102 = sphi 0, %s100
      %s103 = sphi 0, %s102
      %s117 = sphi 0, %s103
      %s121 = sphi 0, %s121
      %s123 = sphi 0, %s121
      %s124 = sphi 0, %s123
      %s138 = sphi 0, %s124
      %s142 = sphi 0, %s142
      %s144 = sphi 0, %s142
      %s145 = sphi 0, %s144
      %s159 = sphi 0, %s145
      %s163 = sphi 0, %s163
      %s165 = sphi 0, %s163
      %s166 = sphi 0, %s165
      %s180 = sphi 0, %s166
      %s184 = sphi 0, %s184
      %s186 = sphi 0, %s184
      %s187 = sphi 0, %s186
      %s201 = sphi 0, %s187
      %s205 = sphi 0, %s205
      %s207 = sphi 0, %s205
      %s208 = sphi 0, %s207
      %s222 = sphi 0, %s208
      %s226 = sphi 0, %s226
      %s228 = sphi 0, %s226
      %s229 = sphi 0, %s228
      %s243 = sphi 0, %s229
      %s247 = sphi 0, %s247
      %s249 = sphi 0, %s247
      %s250 = sphi 0, %s249
      %s264 = sphi 0, %s250
      %s268 = sphi 0, %s268
      %s270 = sphi 0, %s268
      %s271 = sphi 0, %s270
      %s285 = sphi 0, %s271
      %s289 = sphi 0, %s289
      %s291 = sphi 0, %s289
      %s292 = sphi 0, %s291
      %s306 = sphi 0, %s292
      %s310 = sphi 0, %s310
      %s312 = sphi 0, %s310
      %s313 = sphi 0, %s312
      %s327 = sphi 0, %s313
      %s331 = sphi 0, %s331
      %s333 = sphi 0, %s331
      %s334 = sphi 0, %s333
      %s348 = sphi 0, %s334
      %s354 = sphi 0, %s356
      %s357 = sphi 0, %s354
      %s358 = sphi 0, %s357
      %s374 = sphi 0, %s358
    $region4: #{transformer_ocr_forward.9} parent=1 // loop_header_branch
      %27 = sbr.rel (%p25) target = $region8
    $region5: #{transformer_ocr_forward.9} parent=1 // loop_body
      %s29 = ssub.s32 %s24, 1
      %s30 = ssub.s32 %s24, 2
      %s31 = sadd.s32 %s24, 1
      %s32 = ssub.s32 %s24, %s31
      %p33 = scmp.eq.s32.totalorder %s32, 0
      %s35 = sadd.s32 %s34, 1
      %s36 = scalar_select %p33, %s34, %s35
      %p39 = pneg %p33
      %p40 = scmp.eq.s32.totalorder %s24, 1
      %p41 = por %p39, %p40
      %p42 = scmp.ne.s32.totalorder %s34, %s37
      %p43 = scmp.eq.s32.totalorder %s24, 0
      %p44 = por %p42, %p43
      %p45 = scmp.ne.s32.totalorder %s34, %s37
      %p46 = scmp.eq.s32.totalorder %s29, 1
      %p47 = por %p45, %p46
      %p48 = scmp.ne.s32.totalorder %s37, %s38
      %p49 = scmp.eq.s32.totalorder %s29, 0
      %p50 = por %p48, %p49
      %p51 = scmp.ne.s32.totalorder %s37, %s38
      %p52 = scmp.eq.s32.totalorder %s30, 1
      %p53 = por %p51, %p52
      %p55 = scmp.ne.s32.totalorder %s38, %s54
      %p56 = scmp.eq.s32.totalorder %s30, 0
      %p57 = por %p55, %p56
      %s59 = sadd.s32 %s58, 1
      %p62 = scmp.eq.s32.totalorder %s24, 1
      %p63 = scmp.ne.s32.totalorder %s58, %s60
      %p64 = scmp.eq.s32.totalorder %s24, 0
      %p65 = por %p63, %p64
      %p66 = scmp.ne.s32.totalorder %s58, %s60
      %p67 = scmp.eq.s32.totalorder %s29, 1
      %p68 = por %p66, %p67
      %p69 = scmp.ne.s32.totalorder %s60, %s61
      %p70 = scmp.eq.s32.totalorder %s29, 0
      %p71 = por %p69, %p70
      %p72 = scmp.ne.s32.totalorder %s60, %s61
      %p73 = scmp.eq.s32.totalorder %s30, 1
      %p74 = por %p72, %p73
      %p76 = scmp.ne.s32.totalorder %s61, %s75
      %p77 = scmp.eq.s32.totalorder %s30, 0
      %p78 = por %p76, %p77
      %s80 = sadd.s32 %s79, 1
      %p83 = scmp.eq.s32.totalorder %s24, 1
      %p84 = scmp.ne.s32.totalorder %s79, %s81
      %p85 = scmp.eq.s32.totalorder %s24, 0
      %p86 = por %p84, %p85
      %p87 = scmp.ne.s32.totalorder %s79, %s81
      %p88 = scmp.eq.s32.totalorder %s29, 1
      %p89 = por %p87, %p88
      %p90 = scmp.ne.s32.totalorder %s81, %s82
      %p91 = scmp.eq.s32.totalorder %s29, 0
      %p92 = por %p90, %p91
      %p93 = scmp.ne.s32.totalorder %s81, %s82
      %p94 = scmp.eq.s32.totalorder %s30, 1
      %p95 = por %p93, %p94
      %p97 = scmp.ne.s32.totalorder %s82, %s96
      %p98 = scmp.eq.s32.totalorder %s30, 0
      %p99 = por %p97, %p98
      %s101 = sadd.s32 %s100, 1
      %p104 = scmp.eq.s32.totalorder %s24, 1
      %p105 = scmp.ne.s32.totalorder %s100, %s102
      %p106 = scmp.eq.s32.totalorder %s24, 0
      %p107 = por %p105, %p106
      %p108 = scmp.ne.s32.totalorder %s100, %s102
      %p109 = scmp.eq.s32.totalorder %s29, 1
      %p110 = por %p108, %p109
      %p111 = scmp.ne.s32.totalorder %s102, %s103
      %p112 = scmp.eq.s32.totalorder %s29, 0
      %p113 = por %p111, %p112
      %p114 = scmp.ne.s32.totalorder %s102, %s103
      %p115 = scmp.eq.s32.totalorder %s30, 1
      %p116 = por %p114, %p115
      %p118 = scmp.ne.s32.totalorder %s103, %s117
      %p119 = scmp.eq.s32.totalorder %s30, 0
      %p120 = por %p118, %p119
      %s122 = sadd.s32 %s121, 1
      %p125 = scmp.eq.s32.totalorder %s24, 1
      %p126 = scmp.ne.s32.totalorder %s121, %s123
      %p127 = scmp.eq.s32.totalorder %s24, 0
      %p128 = por %p126, %p127
      %p129 = scmp.ne.s32.totalorder %s121, %s123
      %p130 = scmp.eq.s32.totalorder %s29, 1
      %p131 = por %p129, %p130
      %p132 = scmp.ne.s32.totalorder %s123, %s124
      %p133 = scmp.eq.s32.totalorder %s29, 0
      %p134 = por %p132, %p133
      %p135 = scmp.ne.s32.totalorder %s123, %s124
      %p136 = scmp.eq.s32.totalorder %s30, 1
      %p137 = por %p135, %p136
      %p139 = scmp.ne.s32.totalorder %s124, %s138
      %p140 = scmp.eq.s32.totalorder %s30, 0
      %p141 = por %p139, %p140
      %s143 = sadd.s32 %s142, 1
      %p146 = scmp.eq.s32.totalorder %s24, 1
      %p147 = scmp.ne.s32.totalorder %s142, %s144
      %p148 = scmp.eq.s32.totalorder %s24, 0
      %p149 = por %p147, %p148
      %p150 = scmp.ne.s32.totalorder %s142, %s144
      %p151 = scmp.eq.s32.totalorder %s29, 1
      %p152 = por %p150, %p151
      %p153 = scmp.ne.s32.totalorder %s144, %s145
      %p154 = scmp.eq.s32.totalorder %s29, 0
      %p155 = por %p153, %p154
      %p156 = scmp.ne.s32.totalorder %s144, %s145
      %p157 = scmp.eq.s32.totalorder %s30, 1
      %p158 = por %p156, %p157
      %p160 = scmp.ne.s32.totalorder %s145, %s159
      %p161 = scmp.eq.s32.totalorder %s30, 0
      %p162 = por %p160, %p161
      %s164 = sadd.s32 %s163, 1
      %p167 = scmp.eq.s32.totalorder %s24, 1
      %p168 = scmp.ne.s32.totalorder %s163, %s165
      %p169 = scmp.eq.s32.totalorder %s24, 0
      %p170 = por %p168, %p169
      %p171 = scmp.ne.s32.totalorder %s163, %s165
      %p172 = scmp.eq.s32.totalorder %s29, 1
      %p173 = por %p171, %p172
      %p174 = scmp.ne.s32.totalorder %s165, %s166
      %p175 = scmp.eq.s32.totalorder %s29, 0
      %p176 = por %p174, %p175
      %p177 = scmp.ne.s32.totalorder %s165, %s166
      %p178 = scmp.eq.s32.totalorder %s30, 1
      %p179 = por %p177, %p178
      %p181 = scmp.ne.s32.totalorder %s166, %s180
      %p182 = scmp.eq.s32.totalorder %s30, 0
      %p183 = por %p181, %p182
      %s185 = sadd.s32 %s184, 1
      %p188 = scmp.eq.s32.totalorder %s24, 1
      %p189 = scmp.ne.s32.totalorder %s184, %s186
      %p190 = scmp.eq.s32.totalorder %s24, 0
      %p191 = por %p189, %p190
      %p192 = scmp.ne.s32.totalorder %s184, %s186
      %p193 = scmp.eq.s32.totalorder %s29, 1
      %p194 = por %p192, %p193
      %p195 = scmp.ne.s32.totalorder %s186, %s187
      %p196 = scmp.eq.s32.totalorder %s29, 0
      %p197 = por %p195, %p196
      %p198 = scmp.ne.s32.totalorder %s186, %s187
      %p199 = scmp.eq.s32.totalorder %s30, 1
      %p200 = por %p198, %p199
      %p202 = scmp.ne.s32.totalorder %s187, %s201
      %p203 = scmp.eq.s32.totalorder %s30, 0
      %p204 = por %p202, %p203
      %s206 = sadd.s32 %s205, 1
      %p209 = scmp.eq.s32.totalorder %s24, 1
      %p210 = scmp.ne.s32.totalorder %s205, %s207
      %p211 = scmp.eq.s32.totalorder %s24, 0
      %p212 = por %p210, %p211
      %p213 = scmp.ne.s32.totalorder %s205, %s207
      %p214 = scmp.eq.s32.totalorder %s29, 1
      %p215 = por %p213, %p214
      %p216 = scmp.ne.s32.totalorder %s207, %s208
      %p217 = scmp.eq.s32.totalorder %s29, 0
      %p218 = por %p216, %p217
      %p219 = scmp.ne.s32.totalorder %s207, %s208
      %p220 = scmp.eq.s32.totalorder %s30, 1
      %p221 = por %p219, %p220
      %p223 = scmp.ne.s32.totalorder %s208, %s222
      %p224 = scmp.eq.s32.totalorder %s30, 0
      %p225 = por %p223, %p224
      %s227 = sadd.s32 %s226, 1
      %p230 = scmp.eq.s32.totalorder %s24, 1
      %p231 = scmp.ne.s32.totalorder %s226, %s228
      %p232 = scmp.eq.s32.totalorder %s24, 0
      %p233 = por %p231, %p232
      %p234 = scmp.ne.s32.totalorder %s226, %s228
      %p235 = scmp.eq.s32.totalorder %s29, 1
      %p236 = por %p234, %p235
      %p237 = scmp.ne.s32.totalorder %s228, %s229
      %p238 = scmp.eq.s32.totalorder %s29, 0
      %p239 = por %p237, %p238
      %p240 = scmp.ne.s32.totalorder %s228, %s229
      %p241 = scmp.eq.s32.totalorder %s30, 1
      %p242 = por %p240, %p241
      %p244 = scmp.ne.s32.totalorder %s229, %s243
      %p245 = scmp.eq.s32.totalorder %s30, 0
      %p246 = por %p244, %p245
      %s248 = sadd.s32 %s247, 1
      %p251 = scmp.eq.s32.totalorder %s24, 1
      %p252 = scmp.ne.s32.totalorder %s247, %s249
      %p253 = scmp.eq.s32.totalorder %s24, 0
      %p254 = por %p252, %p253
      %p255 = scmp.ne.s32.totalorder %s247, %s249
      %p256 = scmp.eq.s32.totalorder %s29, 1
      %p257 = por %p255, %p256
      %p258 = scmp.ne.s32.totalorder %s249, %s250
      %p259 = scmp.eq.s32.totalorder %s29, 0
      %p260 = por %p258, %p259
      %p261 = scmp.ne.s32.totalorder %s249, %s250
      %p262 = scmp.eq.s32.totalorder %s30, 1
      %p263 = por %p261, %p262
      %p265 = scmp.ne.s32.totalorder %s250, %s264
      %p266 = scmp.eq.s32.totalorder %s30, 0
      %p267 = por %p265, %p266
      %s269 = sadd.s32 %s268, 1
      %p272 = scmp.eq.s32.totalorder %s24, 1
      %p273 = scmp.ne.s32.totalorder %s268, %s270
      %p274 = scmp.eq.s32.totalorder %s24, 0
      %p275 = por %p273, %p274
      %p276 = scmp.ne.s32.totalorder %s268, %s270
      %p277 = scmp.eq.s32.totalorder %s29, 1
      %p278 = por %p276, %p277
      %p279 = scmp.ne.s32.totalorder %s270, %s271
      %p280 = scmp.eq.s32.totalorder %s29, 0
      %p281 = por %p279, %p280
      %p282 = scmp.ne.s32.totalorder %s270, %s271
      %p283 = scmp.eq.s32.totalorder %s30, 1
      %p284 = por %p282, %p283
      %p286 = scmp.ne.s32.totalorder %s271, %s285
      %p287 = scmp.eq.s32.totalorder %s30, 0
      %p288 = por %p286, %p287
      %s290 = sadd.s32 %s289, 1
      %p293 = scmp.eq.s32.totalorder %s24, 1
      %p294 = scmp.ne.s32.totalorder %s289, %s291
      %p295 = scmp.eq.s32.totalorder %s24, 0
      %p296 = por %p294, %p295
      %p297 = scmp.ne.s32.totalorder %s289, %s291
      %p298 = scmp.eq.s32.totalorder %s29, 1
      %p299 = por %p297, %p298
      %p300 = scmp.ne.s32.totalorder %s291, %s292
      %p301 = scmp.eq.s32.totalorder %s29, 0
      %p302 = por %p300, %p301
      %p303 = scmp.ne.s32.totalorder %s291, %s292
      %p304 = scmp.eq.s32.totalorder %s30, 1
      %p305 = por %p303, %p304
      %p307 = scmp.ne.s32.totalorder %s292, %s306
      %p308 = scmp.eq.s32.totalorder %s30, 0
      %p309 = por %p307, %p308
      %s311 = sadd.s32 %s310, 1
      %p314 = scmp.eq.s32.totalorder %s24, 1
      %p315 = scmp.ne.s32.totalorder %s310, %s312
      %p316 = scmp.eq.s32.totalorder %s24, 0
      %p317 = por %p315, %p316
      %p318 = scmp.ne.s32.totalorder %s310, %s312
      %p319 = scmp.eq.s32.totalorder %s29, 1
      %p320 = por %p318, %p319
      %p321 = scmp.ne.s32.totalorder %s312, %s313
      %p322 = scmp.eq.s32.totalorder %s29, 0
      %p323 = por %p321, %p322
      %p324 = scmp.ne.s32.totalorder %s312, %s313
      %p325 = scmp.eq.s32.totalorder %s30, 1
      %p326 = por %p324, %p325
      %p328 = scmp.ne.s32.totalorder %s313, %s327
      %p329 = scmp.eq.s32.totalorder %s30, 0
      %p330 = por %p328, %p329
      %s332 = sadd.s32 %s331, 1
      %p335 = scmp.eq.s32.totalorder %s24, 1
      %p336 = scmp.ne.s32.totalorder %s331, %s333
      %p337 = scmp.eq.s32.totalorder %s24, 0
      %p338 = por %p336, %p337
      %p339 = scmp.ne.s32.totalorder %s331, %s333
      %p340 = scmp.eq.s32.totalorder %s29, 1
      %p341 = por %p339, %p340
      %p342 = scmp.ne.s32.totalorder %s333, %s334
      %p343 = scmp.eq.s32.totalorder %s29, 0
      %p344 = por %p342, %p343
      %p345 = scmp.ne.s32.totalorder %s333, %s334
      %p346 = scmp.eq.s32.totalorder %s30, 1
      %p347 = por %p345, %p346
      %p349 = scmp.ne.s32.totalorder %s334, %s348
      %p350 = scmp.eq.s32.totalorder %s30, 0
      %p351 = por %p349, %p350
      %s352 = ssub.s32 %s24, %s31
      %p353 = scmp.eq.s32.totalorder %s352, 0
      %s355 = sadd.s32 %s354, 1
      %s356 = scalar_select %p353, %s354, %s355
      %p359 = pneg %p353
      %p360 = scmp.eq.s32.totalorder %s24, 1
      %p361 = por %p359, %p360
      %p362 = scmp.ne.s32.totalorder %s354, %s357
      %p363 = scmp.eq.s32.totalorder %s24, 0
      %p364 = por %p362, %p363
      %p365 = scmp.ne.s32.totalorder %s354, %s357
      %p366 = scmp.eq.s32.totalorder %s29, 1
      %p367 = por %p365, %p366
      %p368 = scmp.ne.s32.totalorder %s357, %s358
      %p369 = scmp.eq.s32.totalorder %s29, 0
      %p370 = por %p368, %p369
      %p371 = scmp.ne.s32.totalorder %s357, %s358
      %p372 = scmp.eq.s32.totalorder %s30, 1
      %p373 = por %p371, %p372
      %p375 = scmp.ne.s32.totalorder %s358, %s374
      %p376 = scmp.eq.s32.totalorder %s30, 0
      %p377 = por %p375, %p376
      %p378 = scmp.le.s32.totalorder 1, %s24
      %p379 = scmp.lt.s32.totalorder %s24, 3
      %p380 = pnand %p378, %p379
      %p381 = pneg %p380
      // Predicated region
      $region9: #{transformer_ocr_forward.9} parent=5 // pred_check
        _
      $region10: #{transformer_ocr_forward.9} parent=5 // pred_check_branch
        %383 = sbr.rel (%p380) target = $region12
      $region11: #{transformer_ocr_forward.9} parent=5 // pred_region
        %s384 = ssub.s32 %s24, 1
        // Predicated region
        $region13: #{transformer_ocr_forward.9} parent=11 // pred_check
          %p385 = pneg %p71
        $region14: #{transformer_ocr_forward.9} parent=11 // pred_check_branch
          %387 = sbr.rel (%p385) target = $region16
        $region15: #{transformer_ocr_forward.9} parent=11 // pred_region
          _
        $region16: #{transformer_ocr_forward.9} parent=11 // pred_fallthru
          _
        // Predicated region
        $region17: #{transformer_ocr_forward.9} parent=11 // pred_check
          %p388 = pneg %p92
        $region18: #{transformer_ocr_forward.9} parent=11 // pred_check_branch
          %390 = sbr.rel (%p388) target = $region20
        $region19: #{transformer_ocr_forward.9} parent=11 // pred_region
          _
        $region20: #{transformer_ocr_forward.9} parent=11 // pred_fallthru
          _
        // Predicated region
        $region21: #{transformer_ocr_forward.9} parent=11 // pred_check
          %p391 = pneg %p113
        $region22: #{transformer_ocr_forward.9} parent=11 // pred_check_branch
          %393 = sbr.rel (%p391) target = $region24
        $region23: #{transformer_ocr_forward.9} parent=11 // pred_region
          _
        $region24: #{transformer_ocr_forward.9} parent=11 // pred_fallthru
          _
        // Predicated region
        $region25: #{transformer_ocr_forward.9} parent=11 // pred_check
          %p394 = pneg %p134
        $region26: #{transformer_ocr_forward.9} parent=11 // pred_check_branch
          %396 = sbr.rel (%p394) target = $region28
        $region27: #{transformer_ocr_forward.9} parent=11 // pred_region
          _
        $region28: #{transformer_ocr_forward.9} parent=11 // pred_fallthru
          _
        // Predicated region
        $region29: #{transformer_ocr_forward.9} parent=11 // pred_check
          %p397 = pneg %p155
        $region30: #{transformer_ocr_forward.9} parent=11 // pred_check_branch
          %399 = sbr.rel (%p397) target = $region32
        $region31: #{transformer_ocr_forward.9} parent=11 // pred_region
          _
        $region32: #{transformer_ocr_forward.9} parent=11 // pred_fallthru
          _
        // Predicated region
        $region33: #{transformer_ocr_forward.9} parent=11 // pred_check
          %p400 = pneg %p176
        $region34: #{transformer_ocr_forward.9} parent=11 // pred_check_branch
          %402 = sbr.rel (%p400) target = $region36
        $region35: #{transformer_ocr_forward.9} parent=11 // pred_region
          _
        $region36: #{transformer_ocr_forward.9} parent=11 // pred_fallthru
          _
        // Predicated region
        $region37: #{transformer_ocr_forward.9} parent=11 // pred_check
          %p403 = pneg %p197
        $region38: #{transformer_ocr_forward.9} parent=11 // pred_check_branch
          %405 = sbr.rel (%p403) target = $region40
        $region39: #{transformer_ocr_forward.9} parent=11 // pred_region
          _
        $region40: #{transformer_ocr_forward.9} parent=11 // pred_fallthru
          _
        // Predicated region
        $region41: #{transformer_ocr_forward.9} parent=11 // pred_check
          %p406 = pneg %p218
        $region42: #{transformer_ocr_forward.9} parent=11 // pred_check_branch
          %408 = sbr.rel (%p406) target = $region44
        $region43: #{transformer_ocr_forward.9} parent=11 // pred_region
          _
        $region44: #{transformer_ocr_forward.9} parent=11 // pred_fallthru
          _
        // Predicated region
        $region45: #{transformer_ocr_forward.9} parent=11 // pred_check
          %p409 = pneg %p239
        $region46: #{transformer_ocr_forward.9} parent=11 // pred_check_branch
          %411 = sbr.rel (%p409) target = $region48
        $region47: #{transformer_ocr_forward.9} parent=11 // pred_region
          _
        $region48: #{transformer_ocr_forward.9} parent=11 // pred_fallthru
          _
        // Predicated region
        $region49: #{transformer_ocr_forward.9} parent=11 // pred_check
          %p412 = pneg %p260
        $region50: #{transformer_ocr_forward.9} parent=11 // pred_check_branch
          %414 = sbr.rel (%p412) target = $region52
        $region51: #{transformer_ocr_forward.9} parent=11 // pred_region
          _
        $region52: #{transformer_ocr_forward.9} parent=11 // pred_fallthru
          _
        // Predicated region
        $region53: #{transformer_ocr_forward.9} parent=11 // pred_check
          %p415 = pneg %p281
        $region54: #{transformer_ocr_forward.9} parent=11 // pred_check_branch
          %417 = sbr.rel (%p415) target = $region56
        $region55: #{transformer_ocr_forward.9} parent=11 // pred_region
          _
        $region56: #{transformer_ocr_forward.9} parent=11 // pred_fallthru
          _
        // Predicated region
        $region57: #{transformer_ocr_forward.9} parent=11 // pred_check
          %p418 = pneg %p302
        $region58: #{transformer_ocr_forward.9} parent=11 // pred_check_branch
          %420 = sbr.rel (%p418) target = $region60
        $region59: #{transformer_ocr_forward.9} parent=11 // pred_region
          _
        $region60: #{transformer_ocr_forward.9} parent=11 // pred_fallthru
          _
        // Predicated region
        $region61: #{transformer_ocr_forward.9} parent=11 // pred_check
          %p421 = pneg %p323
        $region62: #{transformer_ocr_forward.9} parent=11 // pred_check_branch
          %423 = sbr.rel (%p421) target = $region64
        $region63: #{transformer_ocr_forward.9} parent=11 // pred_region
          _
        $region64: #{transformer_ocr_forward.9} parent=11 // pred_fallthru
          _
        // Predicated region
        $region65: #{transformer_ocr_forward.9} parent=11 // pred_check
          %p424 = pneg %p344
        $region66: #{transformer_ocr_forward.9} parent=11 // pred_check_branch
          %426 = sbr.rel (%p424) target = $region68
        $region67: #{transformer_ocr_forward.9} parent=11 // pred_region
          _
        $region68: #{transformer_ocr_forward.9} parent=11 // pred_fallthru
          _
      $region12: #{transformer_ocr_forward.9} parent=5 // pred_fallthru
        _
      %p427 = scmp.lt.s32.totalorder %s24, 2
      // Predicated region
      $region69: #{transformer_ocr_forward.9} parent=5 // pred_check
        %p428 = pneg %p427
      $region70: #{transformer_ocr_forward.9} parent=5 // pred_check_branch
        %430 = sbr.rel (%p428) target = $region72
      $region71: #{transformer_ocr_forward.9} parent=5 // pred_region
        // Predicated region
        $region73: #{transformer_ocr_forward.9} parent=71 // pred_check
          %p431 = pneg %p44
        $region74: #{transformer_ocr_forward.9} parent=71 // pred_check_branch
          %433 = sbr.rel (%p431) target = $region76
        $region75: #{transformer_ocr_forward.9} parent=71 // pred_region
          %s434 = smul.u32 2, %s24
          %p435 = scmp.lt.s32.totalorder %s434, 3
          %s436 = scalar_select %p435, %s434, 3
          %s437 = smul.addr %s436, 4
          %s438 = scalar_lea.vmem %s0, %s437
          %s439 = smul.u32 2, %s24
        $region76: #{transformer_ocr_forward.9} parent=71 // pred_fallthru
          _
      $region72: #{transformer_ocr_forward.9} parent=5 // pred_fallthru
        _
      %p440 = scmp.le.s32.totalorder 1, %s24
      %p441 = scmp.lt.s32.totalorder %s24, 3
      %p442 = pnand %p440, %p441
      %p443 = pneg %p442
      // Predicated region
      $region77: #{transformer_ocr_forward.9} parent=5 // pred_check
        _
      $region78: #{transformer_ocr_forward.9} parent=5 // pred_check_branch
        %445 = sbr.rel (%p442) target = $region80
      $region79: #{transformer_ocr_forward.9} parent=5 // pred_region
        %s446 = ssub.s32 %s24, 1
        %s447 = smul.u32 2, %s29
        %p448 = scmp.lt.s32.totalorder %s447, 3
        %s449 = scalar_select %p448, %s447, 3
        %s450 = smul.addr %s449, 4
        %s451 = scalar_lea.vmem %s0, %s450
        %p452 = pneg %p50
        %p453 = pneg %p47
        %p454 = pneg %p71
        %p455 = pneg %p68
        %p456 = pneg %p92
        %p457 = pneg %p89
        %p458 = pneg %p113
        %p459 = pneg %p110
        %p460 = pneg %p134
        %p461 = pneg %p131
        %p462 = pneg %p155
        %p463 = pneg %p152
        %p464 = pneg %p176
        %p465 = pneg %p173
        %p466 = pneg %p197
        %p467 = pneg %p194
        %p468 = pneg %p218
        %p469 = pneg %p215
        %p470 = pneg %p239
        %p471 = pneg %p236
        %p472 = pneg %p260
        %p473 = pneg %p257
        %p474 = pneg %p281
        %p475 = pneg %p278
        %p476 = pneg %p302
        %p477 = pneg %p299
        %p478 = pneg %p323
        %p479 = pneg %p320
        %p480 = pneg %p344
        %p481 = pneg %p341
        %p482 = pneg %p370
        %p483 = pneg %p367
        %s484 = sand.u32 %s357, 1
        %s485 = scalar_lea.sflag [#allocation3], %s484
        %s486 = sand.u32 %s357, 1
        %s487 = smul.addr %s486, 16
        %s488 = scalar_lea.vmem [#allocation2], %s487
        %s489 = smul.u32 2, %s29
        %p490 = scmp.lt.s32.totalorder %s489, 3
        %s491 = scalar_select %p490, %s489, 3
        %s492 = smul.addr %s491, 4
        %s493 = scalar_lea.vmem %s0, %s492
        %s494 = smul.u32 2, %s29
        %s495 = smul.u32 2, %s29
        %v497 = vld [vmem:[%s493] sm:$0xf]
        %v498 = vld [vmem:[%s493 + $0x4] sm:$0xf]
        %v499 = vunpack.c.l.bf16 %v497
        %v500 = vunpack.c.l.bf16 %v498
        %v501 = vld [vmem:[%s1] sm:$0xf]
        %v502 = vld [vmem:[%s1 + $0x4] sm:$0xf]
        %v503 = vld [vmem:[%s1 + $0x8] sm:$0xf]
        %v504 = vld [vmem:[%s1 + $0xc] sm:$0xf]
        %v505 = vld [vmem:[%s2] sm:$0x1]
        %v507 = vlaneseq
        %v508 = vshrl.u32 %v507, 7
        %v509 = vsub.s32 0, %v508
        %v510 = vrot.slane %v505, %v509
        %v514 = vunpack.c.l.b16 %v497
        %v515 = vunpack.c.l.b16 %v498
        %v516 = vpack.c.b16 %v515, %v514
        %v521 = vunpack.c.l.b16 %v501
        %v522 = vunpack.c.l.b16 %v502
        %v523 = vunpack.c.l.b16 %v503
        %v524 = vunpack.c.l.b16 %v504
        %v525 = vpack.c.b16 %v522, %v521
        %v526 = vpack.c.b16 %v524, %v523
        %vm529 = vcmask 261120
        %v531 = vsel %vm529, %v516, 0
        %533 = vmatprep.subr.bf16.mxu0 0
        %534 = vmatpush1.bf16.msra.mxu0 0
        %535 = vmatprep.subr.bf16.mxu0 0
        %536 = vmatpush1.bf16.msra.mxu0 0
        %537 = vmatprep.subr.bf16.mxu0 0
        %538 = vmatpush1.bf16.msra.mxu0 0
        %539 = vmatprep.subr.bf16.mxu0 0
        %540 = vmatpush1.bf16.msra.mxu0 0
        %541 = vmatprep.subr.bf16.mxu0 0
        %542 = vmatpush1.bf16.msra.mxu0 0
        %543 = vmatprep.subr.bf16.mxu0 0
        %544 = vmatpush1.bf16.msra.mxu0 0
        %545 = vmatprep.subr.bf16.mxu0 0
        %546 = vmatpush1.bf16.msra.mxu0 %v526
        %547 = vmatprep.subr.bf16.mxu0 0
        %548 = vmatpush1.bf16.msra.mxu0 %v525
        %549 = vmatprep.subr.bf16.mxu0 0
        %550 = vmatpush2.bf16.msra.mxu0 0
        %551 = vmatprep.subr.bf16.mxu0 0
        %552 = vmatpush2.bf16.msra.mxu0 0
        %553 = vmatprep.subr.bf16.mxu0 0
        %554 = vmatpush2.bf16.msra.mxu0 0
        %555 = vmatprep.subr.bf16.mxu0 0
        %556 = vmatpush2.bf16.msra.mxu0 0
        %557 = vmatprep.subr.bf16.mxu0 0
        %558 = vmatpush2.bf16.msra.mxu0 0
        %559 = vmatprep.subr.bf16.mxu0 0
        %560 = vmatpush2.bf16.msra.mxu0 0
        %561 = vmatprep.subr.bf16.mxu0 0
        %562 = vmatpush2.bf16.msra.mxu0 0
        %563 = vmatprep.subr.bf16.mxu0 0
        %564 = vmatpush2.bf16.msra.mxu0 0
        %565 = vmatprep.mubr.bf16.mxu0 0
        %566 = vmatmul.mubr.bf16.gmra.mxu0 %v531
        %v567 = vpop.f32.mrf.mxu0
        %v568 = vadd.f32 %v510, %v567
        %v569 = vpop.f32.mrf.mxu0
        %v570 = vpop.f32.mrf.mxu0
        %v571 = vadd.f32 %v510, %v570
        %v572 = vpop.f32.mrf.mxu0
        %573 = vdwg.mxu0
        %v574 = vpack.c.bf16 %v571, %v568
        %576 = vrot.lane.b32.xlu0 %v574, 96
        %v577 = vpop.permute.xlu0 %576
        %vm578 = vcmask 64512
        %v580 = vsel %vm578, %v574, 0
        %v583 = vsel %vm578, %v577, 0
        %585 = vmatprep.subr.bf16.mxu0 0
        %586 = vmatpush1.bf16.xpose.msra.mxu0 0
        %587 = vmatprep.subr.bf16.mxu0 0
        %588 = vmatpush1.bf16.xpose.msra.mxu0 0
        %589 = vmatprep.subr.bf16.mxu0 0
        %590 = vmatpush1.bf16.xpose.msra.mxu0 0
        %591 = vmatprep.subr.bf16.mxu0 0
        %592 = vmatpush1.bf16.xpose.msra.mxu0 0
        %593 = vmatprep.subr.bf16.mxu0 0
        %594 = vmatpush1.bf16.xpose.msra.mxu0 0
        %595 = vmatprep.subr.bf16.mxu0 0
        %596 = vmatpush1.bf16.xpose.msra.mxu0 0
        %597 = vmatprep.subr.bf16.mxu0 0
        %598 = vmatpush1.bf16.xpose.msra.mxu0 0
        %599 = vmatprep.subr.bf16.mxu0 0
        %600 = vmatpush1.bf16.xpose.msra.mxu0 %v583
        %601 = vmatprep.subr.bf16.mxu0 0
        %602 = vmatpush2.bf16.xpose.msra.mxu0 0
        %603 = vmatprep.subr.bf16.mxu0 0
        %604 = vmatpush2.bf16.xpose.msra.mxu0 0
        %605 = vmatprep.subr.bf16.mxu0 0
        %606 = vmatpush2.bf16.xpose.msra.mxu0 0
        %607 = vmatprep.subr.bf16.mxu0 0
        %608 = vmatpush2.bf16.xpose.msra.mxu0 0
        %609 = vmatprep.subr.bf16.mxu0 0
        %610 = vmatpush2.bf16.xpose.msra.mxu0 0
        %611 = vmatprep.subr.bf16.mxu0 0
        %612 = vmatpush2.bf16.xpose.msra.mxu0 0
        %613 = vmatprep.subr.bf16.mxu0 0
        %614 = vmatpush2.bf16.xpose.msra.mxu0 0
        %615 = vmatprep.subr.bf16.mxu0 0
        %616 = vmatpush2.bf16.xpose.msra.mxu0 0
        %617 = vmatprep.mubr.bf16.mxu0 0
        %618 = vmatmul.mubr.bf16.gmra.mxu0 %v580
        %v619 = vpop.f32.mrf.mxu0
        %v620 = vadd.f32 0.0, %v619
        %v621 = vpop.f32.mrf.mxu0
        %v622 = vpop.f32.mrf.mxu0
        %v623 = vadd.f32 0.0, %v622
        %v624 = vpop.f32.mrf.mxu0
        %625 = vdwg.mxu0
        %v626 = vmul.f32 %v620, 0.35355338
        %v627 = vmul.f32 %v623, 0.35355338
        %vm628 = vcmask 130048
        %v629 = vsel %vm628, %v626, -inf
        %630 = vmax.xlane.f32.xlu0 %v629
        %v631 = vpop.xlane.xlu0 %630
        %v632 = vsel %vm628, %v627, -inf
        %633 = vmax.xlane.f32.xlu0 %v632
        %v634 = vpop.xlane.xlu0 %633
        %v635 = vsub.f32 %v626, %v631
        %v636 = vsub.f32 %v627, %v634
        %v637 = vmul.f32 %v635, 1.442695
        %v638 = vpow.pop %v637
        %v639 = vmul.f32 %v636, 1.442695
        %v640 = vpow.pop %v639
        %v641 = vsel %vm628, %v638, 0.0
        %642 = vadd.xlane.f32.xlu0 %v641
        %v643 = vpop.xlane.xlu0 %642
        %v644 = vsel %vm628, %v640, 0.0
        %645 = vadd.xlane.f32.xlu0 %v644
        %v646 = vpop.xlane.xlu0 %645
        %v647 = vrcp.pop %v643
        %v648 = vrcp.pop %v646
        %v649 = vmul.f32 %v638, %v647
        %v650 = vmul.f32 %v640, %v648
        %v651 = vpack.c.bf16 %v650, %v649
        %652 = vrot.lane.b32.xlu0 %v574, 64
        %v653 = vpop.permute.xlu0 %652
        %v656 = vsel %vm628, %v651, 0
        %658 = vmatprep.subr.bf16.mxu0 0
        %659 = vmatpush1.bf16.msra.mxu0 0
        %660 = vmatprep.subr.bf16.mxu0 0
        %661 = vmatpush1.bf16.msra.mxu0 0
        %662 = vmatprep.subr.bf16.mxu0 0
        %663 = vmatpush1.bf16.msra.mxu0 0
        %664 = vmatprep.subr.bf16.mxu0 0
        %665 = vmatpush1.bf16.msra.mxu0 0
        %666 = vmatprep.subr.bf16.mxu0 0
        %667 = vmatpush1.bf16.msra.mxu0 0
        %668 = vmatprep.subr.bf16.mxu0 0
        %669 = vmatpush1.bf16.msra.mxu0 0
        %670 = vmatprep.subr.bf16.mxu0 0
        %671 = vmatpush1.bf16.msra.mxu0 0
        %672 = vmatprep.subr.bf16.mxu0 0
        %673 = vmatpush1.bf16.msra.mxu0 %v653
        %674 = vmatprep.subr.bf16.mxu0 0
        %675 = vmatpush2.bf16.msra.mxu0 0
        %676 = vmatprep.subr.bf16.mxu0 0
        %677 = vmatpush2.bf16.msra.mxu0 0
        %678 = vmatprep.subr.bf16.mxu0 0
        %679 = vmatpush2.bf16.msra.mxu0 0
        %680 = vmatprep.subr.bf16.mxu0 0
        %681 = vmatpush2.bf16.msra.mxu0 0
        %682 = vmatprep.subr.bf16.mxu0 0
        %683 = vmatpush2.bf16.msra.mxu0 0
        %684 = vmatprep.subr.bf16.mxu0 0
        %685 = vmatpush2.bf16.msra.mxu0 0
        %686 = vmatprep.subr.bf16.mxu0 0
        %687 = vmatpush2.bf16.msra.mxu0 0
        %688 = vmatprep.subr.bf16.mxu0 0
        %689 = vmatpush2.bf16.msra.mxu0 0
        %690 = vmatprep.mubr.bf16.mxu0 0
        %691 = vmatmul.mubr.bf16.gmra.mxu0 %v656
        %v692 = vpop.f32.mrf.mxu0
        %v693 = vadd.f32 0.0, %v692
        %v694 = vpop.f32.mrf.mxu0
        %v695 = vpop.f32.mrf.mxu0
        %v696 = vadd.f32 0.0, %v695
        %v697 = vpop.f32.mrf.mxu0
        %698 = vdwg.mxu0
        %v699 = vpack.c.bf16 %v696, %v693
        %v700 = vld [vmem:[%s3] sm:$0xf]
        %701 = vrot.lane.b32.xlu0 %v574, 120
        %v702 = vpop.permute.xlu0 %701
        %703 = vrot.lane.b32.xlu0 %v574, 88
        %v704 = vpop.permute.xlu0 %703
        %v706 = vsel %vm578, %v702, 0
        %v709 = vsel %vm578, %v704, 0
        %711 = vmatprep.subr.bf16.mxu0 0
        %712 = vmatpush1.bf16.xpose.msra.mxu0 0
        %713 = vmatprep.subr.bf16.mxu0 0
        %714 = vmatpush1.bf16.xpose.msra.mxu0 0
        %715 = vmatprep.subr.bf16.mxu0 0
        %716 = vmatpush1.bf16.xpose.msra.mxu0 0
        %717 = vmatprep.subr.bf16.mxu0 0
        %718 = vmatpush1.bf16.xpose.msra.mxu0 0
        %719 = vmatprep.subr.bf16.mxu0 0
        %720 = vmatpush1.bf16.xpose.msra.mxu0 0
        %721 = vmatprep.subr.bf16.mxu0 0
        %722 = vmatpush1.bf16.xpose.msra.mxu0 0
        %723 = vmatprep.subr.bf16.mxu0 0
        %724 = vmatpush1.bf16.xpose.msra.mxu0 0
        %725 = vmatprep.subr.bf16.mxu0 0
        %726 = vmatpush1.bf16.xpose.msra.mxu0 %v709
        %727 = vmatprep.subr.bf16.mxu0 0
        %728 = vmatpush2.bf16.xpose.msra.mxu0 0
        %729 = vmatprep.subr.bf16.mxu0 0
        %730 = vmatpush2.bf16.xpose.msra.mxu0 0
        %731 = vmatprep.subr.bf16.mxu0 0
        %732 = vmatpush2.bf16.xpose.msra.mxu0 0
        %733 = vmatprep.subr.bf16.mxu0 0
        %734 = vmatpush2.bf16.xpose.msra.mxu0 0
        %735 = vmatprep.subr.bf16.mxu0 0
        %736 = vmatpush2.bf16.xpose.msra.mxu0 0
        %737 = vmatprep.subr.bf16.mxu0 0
        %738 = vmatpush2.bf16.xpose.msra.mxu0 0
        %739 = vmatprep.subr.bf16.mxu0 0
        %740 = vmatpush2.bf16.xpose.msra.mxu0 0
        %741 = vmatprep.subr.bf16.mxu0 0
        %742 = vmatpush2.bf16.xpose.msra.mxu0 0
        %743 = vmatprep.mubr.bf16.mxu0 0
        %744 = vmatmul.mubr.bf16.gmra.mxu0 %v706
        %v745 = vpop.f32.mrf.mxu0
        %v746 = vadd.f32 0.0, %v745
        %v747 = vpop.f32.mrf.mxu0
        %v748 = vpop.f32.mrf.mxu0
        %v749 = vadd.f32 0.0, %v748
        %v750 = vpop.f32.mrf.mxu0
        %751 = vdwg.mxu0
        %v752 = vmul.f32 %v746, 0.35355338
        %v753 = vmul.f32 %v749, 0.35355338
        %v754 = vsel %vm628, %v752, -inf
        %755 = vmax.xlane.f32.xlu0 %v754
        %v756 = vpop.xlane.xlu0 %755
        %v757 = vsel %vm628, %v753, -inf
        %758 = vmax.xlane.f32.xlu0 %v757
        %v759 = vpop.xlane.xlu0 %758
        %v760 = vsub.f32 %v752, %v756
        %v761 = vsub.f32 %v753, %v759
        %v762 = vmul.f32 %v760, 1.442695
        %v763 = vpow.pop %v762
        %v764 = vmul.f32 %v761, 1.442695
        %v765 = vpow.pop %v764
        %v766 = vsel %vm628, %v763, 0.0
        %767 = vadd.xlane.f32.xlu0 %v766
        %v768 = vpop.xlane.xlu0 %767
        %v769 = vsel %vm628, %v765, 0.0
        %770 = vadd.xlane.f32.xlu0 %v769
        %v771 = vpop.xlane.xlu0 %770
        %v772 = vrcp.pop %v768
        %v773 = vrcp.pop %v771
        %v774 = vmul.f32 %v763, %v772
        %v775 = vmul.f32 %v765, %v773
        %v776 = vpack.c.bf16 %v775, %v774
        %777 = vrot.lane.b32.xlu0 %v574, 56
        %v778 = vpop.permute.xlu0 %777
        %v781 = vsel %vm628, %v776, 0
        %783 = vmatprep.subr.bf16.mxu0 0
        %784 = vmatpush1.bf16.msra.mxu0 0
        %785 = vmatprep.subr.bf16.mxu0 0
        %786 = vmatpush1.bf16.msra.mxu0 0
        %787 = vmatprep.subr.bf16.mxu0 0
        %788 = vmatpush1.bf16.msra.mxu0 0
        %789 = vmatprep.subr.bf16.mxu0 0
        %790 = vmatpush1.bf16.msra.mxu0 0
        %791 = vmatprep.subr.bf16.mxu0 0
        %792 = vmatpush1.bf16.msra.mxu0 0
        %793 = vmatprep.subr.bf16.mxu0 0
        %794 = vmatpush1.bf16.msra.mxu0 0
        %795 = vmatprep.subr.bf16.mxu0 0
        %796 = vmatpush1.bf16.msra.mxu0 0
        %797 = vmatprep.subr.bf16.mxu0 0
        %798 = vmatpush1.bf16.msra.mxu0 %v778
        %799 = vmatprep.subr.bf16.mxu0 0
        %800 = vmatpush2.bf16.msra.mxu0 0
        %801 = vmatprep.subr.bf16.mxu0 0
        %802 = vmatpush2.bf16.msra.mxu0 0
        %803 = vmatprep.subr.bf16.mxu0 0
        %804 = vmatpush2.bf16.msra.mxu0 0
        %805 = vmatprep.subr.bf16.mxu0 0
        %806 = vmatpush2.bf16.msra.mxu0 0
        %807 = vmatprep.subr.bf16.mxu0 0
        %808 = vmatpush2.bf16.msra.mxu0 0
        %809 = vmatprep.subr.bf16.mxu0 0
        %810 = vmatpush2.bf16.msra.mxu0 0
        %811 = vmatprep.subr.bf16.mxu0 0
        %812 = vmatpush2.bf16.msra.mxu0 0
        %813 = vmatprep.subr.bf16.mxu0 0
        %814 = vmatpush2.bf16.msra.mxu0 0
        %815 = vmatprep.mubr.bf16.mxu0 0
        %816 = vmatmul.mubr.bf16.gmra.mxu0 %v781
        %v817 = vpop.f32.mrf.mxu0
        %v818 = vadd.f32 0.0, %v817
        %v819 = vpop.f32.mrf.mxu0
        %v820 = vpop.f32.mrf.mxu0
        %v821 = vadd.f32 0.0, %v820
        %v822 = vpop.f32.mrf.mxu0
        %823 = vdwg.mxu0
        %v824 = vpack.c.bf16 %v821, %v818
        %v825 = vld [vmem:[%s3 + $0x4] sm:$0xf]
        %v827 = vsel %vm578, %v824, 0
        %vm829 = vcmask 1043456
        %v831 = vsel %vm829, %v825, 0
        %833 = vmatprep.subr.bf16.mxu0 0
        %834 = vmatpush1.bf16.msra.mxu0 0
        %835 = vmatprep.subr.bf16.mxu0 0
        %836 = vmatpush1.bf16.msra.mxu0 0
        %837 = vmatprep.subr.bf16.mxu0 0
        %838 = vmatpush1.bf16.msra.mxu0 0
        %839 = vmatprep.subr.bf16.mxu0 0
        %840 = vmatpush1.bf16.msra.mxu0 0
        %841 = vmatprep.subr.bf16.mxu0 0
        %842 = vmatpush1.bf16.msra.mxu0 0
        %843 = vmatprep.subr.bf16.mxu0 0
        %844 = vmatpush1.bf16.msra.mxu0 0
        %845 = vmatprep.subr.bf16.mxu0 0
        %846 = vmatpush1.bf16.msra.mxu0 0
        %847 = vmatprep.subr.bf16.mxu0 0
        %848 = vmatpush1.bf16.msra.mxu0 %v831
        %849 = vmatprep.subr.bf16.mxu0 0
        %850 = vmatpush2.bf16.msra.mxu0 0
        %851 = vmatprep.subr.bf16.mxu0 0
        %852 = vmatpush2.bf16.msra.mxu0 0
        %853 = vmatprep.subr.bf16.mxu0 0
        %854 = vmatpush2.bf16.msra.mxu0 0
        %855 = vmatprep.subr.bf16.mxu0 0
        %856 = vmatpush2.bf16.msra.mxu0 0
        %857 = vmatprep.subr.bf16.mxu0 0
        %858 = vmatpush2.bf16.msra.mxu0 0
        %859 = vmatprep.subr.bf16.mxu0 0
        %860 = vmatpush2.bf16.msra.mxu0 0
        %861 = vmatprep.subr.bf16.mxu0 0
        %862 = vmatpush2.bf16.msra.mxu0 0
        %863 = vmatprep.subr.bf16.mxu0 0
        %864 = vmatpush2.bf16.msra.mxu0 0
        %865 = vmatprep.mubr.bf16.mxu0 0
        %866 = vmatmul.mubr.bf16.gmra.mxu0 %v827
        %v867 = vpop.f32.mrf.mxu0
        %v868 = vadd.f32 0.0, %v867
        %v869 = vpop.f32.mrf.mxu0
        %v870 = vpop.f32.mrf.mxu0
        %v871 = vadd.f32 0.0, %v870
        %v872 = vpop.f32.mrf.mxu0
        %873 = vdwg.mxu0
        %v875 = vsel %vm578, %v699, 0
        %v878 = vsel %vm829, %v700, 0
        %880 = vmatprep.subr.bf16.mxu0 0
        %881 = vmatpush1.bf16.msra.mxu0 0
        %882 = vmatprep.subr.bf16.mxu0 0
        %883 = vmatpush1.bf16.msra.mxu0 0
        %884 = vmatprep.subr.bf16.mxu0 0
        %885 = vmatpush1.bf16.msra.mxu0 0
        %886 = vmatprep.subr.bf16.mxu0 0
        %887 = vmatpush1.bf16.msra.mxu0 0
        %888 = vmatprep.subr.bf16.mxu0 0
        %889 = vmatpush1.bf16.msra.mxu0 0
        %890 = vmatprep.subr.bf16.mxu0 0
        %891 = vmatpush1.bf16.msra.mxu0 0
        %892 = vmatprep.subr.bf16.mxu0 0
        %893 = vmatpush1.bf16.msra.mxu0 0
        %894 = vmatprep.subr.bf16.mxu0 0
        %895 = vmatpush1.bf16.msra.mxu0 %v878
        %896 = vmatprep.subr.bf16.mxu0 0
        %897 = vmatpush2.bf16.msra.mxu0 0
        %898 = vmatprep.subr.bf16.mxu0 0
        %899 = vmatpush2.bf16.msra.mxu0 0
        %900 = vmatprep.subr.bf16.mxu0 0
        %901 = vmatpush2.bf16.msra.mxu0 0
        %902 = vmatprep.subr.bf16.mxu0 0
        %903 = vmatpush2.bf16.msra.mxu0 0
        %904 = vmatprep.subr.bf16.mxu0 0
        %905 = vmatpush2.bf16.msra.mxu0 0
        %906 = vmatprep.subr.bf16.mxu0 0
        %907 = vmatpush2.bf16.msra.mxu0 0
        %908 = vmatprep.subr.bf16.mxu0 0
        %909 = vmatpush2.bf16.msra.mxu0 0
        %910 = vmatprep.subr.bf16.mxu0 0
        %911 = vmatpush2.bf16.msra.mxu0 0
        %912 = vmatprep.mubr.bf16.mxu0 0
        %913 = vmatmul.mubr.bf16.gmra.mxu0 %v875
        %v914 = vpop.f32.mrf.mxu0
        %v915 = vadd.f32 %v868, %v914
        %v916 = vpop.f32.mrf.mxu0
        %v917 = vpop.f32.mrf.mxu0
        %v918 = vadd.f32 %v871, %v917
        %v919 = vpop.f32.mrf.mxu0
        %920 = vdwg.mxu0
        %921 = vrot.lane.b32.xlu0 %v574, 112
        %v922 = vpop.permute.xlu0 %921
        %923 = vrot.lane.b32.xlu0 %v574, 80
        %v924 = vpop.permute.xlu0 %923
        %v926 = vsel %vm578, %v922, 0
        %v929 = vsel %vm578, %v924, 0
        %931 = vmatprep.subr.bf16.mxu0 0
        %932 = vmatpush1.bf16.xpose.msra.mxu0 0
        %933 = vmatprep.subr.bf16.mxu0 0
        %934 = vmatpush1.bf16.xpose.msra.mxu0 0
        %935 = vmatprep.subr.bf16.mxu0 0
        %936 = vmatpush1.bf16.xpose.msra.mxu0 0
        %937 = vmatprep.subr.bf16.mxu0 0
        %938 = vmatpush1.bf16.xpose.msra.mxu0 0
        %939 = vmatprep.subr.bf16.mxu0 0
        %940 = vmatpush1.bf16.xpose.msra.mxu0 0
        %941 = vmatprep.subr.bf16.mxu0 0
        %942 = vmatpush1.bf16.xpose.msra.mxu0 0
        %943 = vmatprep.subr.bf16.mxu0 0
        %944 = vmatpush1.bf16.xpose.msra.mxu0 0
        %945 = vmatprep.subr.bf16.mxu0 0
        %946 = vmatpush1.bf16.xpose.msra.mxu0 %v929
        %947 = vmatprep.subr.bf16.mxu0 0
        %948 = vmatpush2.bf16.xpose.msra.mxu0 0
        %949 = vmatprep.subr.bf16.mxu0 0
        %950 = vmatpush2.bf16.xpose.msra.mxu0 0
        %951 = vmatprep.subr.bf16.mxu0 0
        %952 = vmatpush2.bf16.xpose.msra.mxu0 0
        %953 = vmatprep.subr.bf16.mxu0 0
        %954 = vmatpush2.bf16.xpose.msra.mxu0 0
        %955 = vmatprep.subr.bf16.mxu0 0
        %956 = vmatpush2.bf16.xpose.msra.mxu0 0
        %957 = vmatprep.subr.bf16.mxu0 0
        %958 = vmatpush2.bf16.xpose.msra.mxu0 0
        %959 = vmatprep.subr.bf16.mxu0 0
        %960 = vmatpush2.bf16.xpose.msra.mxu0 0
        %961 = vmatprep.subr.bf16.mxu0 0
        %962 = vmatpush2.bf16.xpose.msra.mxu0 0
        %963 = vmatprep.mubr.bf16.mxu0 0
        %964 = vmatmul.mubr.bf16.gmra.mxu0 %v926
        %v965 = vpop.f32.mrf.mxu0
        %v966 = vadd.f32 0.0, %v965
        %v967 = vpop.f32.mrf.mxu0
        %v968 = vpop.f32.mrf.mxu0
        %v969 = vadd.f32 0.0, %v968
        %v970 = vpop.f32.mrf.mxu0
        %971 = vdwg.mxu0
        %v972 = vmul.f32 %v966, 0.35355338
        %v973 = vmul.f32 %v969, 0.35355338
        %v974 = vsel %vm628, %v972, -inf
        %975 = vmax.xlane.f32.xlu0 %v974
        %v976 = vpop.xlane.xlu0 %975
        %v977 = vsel %vm628, %v973, -inf
        %978 = vmax.xlane.f32.xlu0 %v977
        %v979 = vpop.xlane.xlu0 %978
        %v980 = vsub.f32 %v972, %v976
        %v981 = vsub.f32 %v973, %v979
        %v982 = vmul.f32 %v980, 1.442695
        %v983 = vpow.pop %v982
        %v984 = vmul.f32 %v981, 1.442695
        %v985 = vpow.pop %v984
        %v986 = vsel %vm628, %v983, 0.0
        %987 = vadd.xlane.f32.xlu0 %v986
        %v988 = vpop.xlane.xlu0 %987
        %v989 = vsel %vm628, %v985, 0.0
        %990 = vadd.xlane.f32.xlu0 %v989
        %v991 = vpop.xlane.xlu0 %990
        %v992 = vrcp.pop %v988
        %v993 = vrcp.pop %v991
        %v994 = vmul.f32 %v983, %v992
        %v995 = vmul.f32 %v985, %v993
        %v996 = vpack.c.bf16 %v995, %v994
        %997 = vrot.lane.b32.xlu0 %v574, 48
        %v998 = vpop.permute.xlu0 %997
        %v1001 = vsel %vm628, %v996, 0
        %1003 = vmatprep.subr.bf16.mxu0 0
        %1004 = vmatpush1.bf16.msra.mxu0 0
        %1005 = vmatprep.subr.bf16.mxu0 0
        %1006 = vmatpush1.bf16.msra.mxu0 0
        %1007 = vmatprep.subr.bf16.mxu0 0
        %1008 = vmatpush1.bf16.msra.mxu0 0
        %1009 = vmatprep.subr.bf16.mxu0 0
        %1010 = vmatpush1.bf16.msra.mxu0 0
        %1011 = vmatprep.subr.bf16.mxu0 0
        %1012 = vmatpush1.bf16.msra.mxu0 0
        %1013 = vmatprep.subr.bf16.mxu0 0
        %1014 = vmatpush1.bf16.msra.mxu0 0
        %1015 = vmatprep.subr.bf16.mxu0 0
        %1016 = vmatpush1.bf16.msra.mxu0 0
        %1017 = vmatprep.subr.bf16.mxu0 0
        %1018 = vmatpush1.bf16.msra.mxu0 %v998
        %1019 = vmatprep.subr.bf16.mxu0 0
        %1020 = vmatpush2.bf16.msra.mxu0 0
        %1021 = vmatprep.subr.bf16.mxu0 0
        %1022 = vmatpush2.bf16.msra.mxu0 0
        %1023 = vmatprep.subr.bf16.mxu0 0
        %1024 = vmatpush2.bf16.msra.mxu0 0
        %1025 = vmatprep.subr.bf16.mxu0 0
        %1026 = vmatpush2.bf16.msra.mxu0 0
        %1027 = vmatprep.subr.bf16.mxu0 0
        %1028 = vmatpush2.bf16.msra.mxu0 0
        %1029 = vmatprep.subr.bf16.mxu0 0
        %1030 = vmatpush2.bf16.msra.mxu0 0
        %1031 = vmatprep.subr.bf16.mxu0 0
        %1032 = vmatpush2.bf16.msra.mxu0 0
        %1033 = vmatprep.subr.bf16.mxu0 0
        %1034 = vmatpush2.bf16.msra.mxu0 0
        %1035 = vmatprep.mubr.bf16.mxu0 0
        %1036 = vmatmul.mubr.bf16.gmra.mxu0 %v1001
        %v1037 = vpop.f32.mrf.mxu0
        %v1038 = vadd.f32 0.0, %v1037
        %v1039 = vpop.f32.mrf.mxu0
        %v1040 = vpop.f32.mrf.mxu0
        %v1041 = vadd.f32 0.0, %v1040
        %v1042 = vpop.f32.mrf.mxu0
        %1043 = vdwg.mxu0
        %v1044 = vpack.c.bf16 %v1041, %v1038
        %v1045 = vld [vmem:[%s3 + $0x8] sm:$0xf]
        %v1047 = vsel %vm578, %v1044, 0
        %v1050 = vsel %vm829, %v1045, 0
        %1052 = vmatprep.subr.bf16.mxu0 0
        %1053 = vmatpush1.bf16.msra.mxu0 0
        %1054 = vmatprep.subr.bf16.mxu0 0
        %1055 = vmatpush1.bf16.msra.mxu0 0
        %1056 = vmatprep.subr.bf16.mxu0 0
        %1057 = vmatpush1.bf16.msra.mxu0 0
        %1058 = vmatprep.subr.bf16.mxu0 0
        %1059 = vmatpush1.bf16.msra.mxu0 0
        %1060 = vmatprep.subr.bf16.mxu0 0
        %1061 = vmatpush1.bf16.msra.mxu0 0
        %1062 = vmatprep.subr.bf16.mxu0 0
        %1063 = vmatpush1.bf16.msra.mxu0 0
        %1064 = vmatprep.subr.bf16.mxu0 0
        %1065 = vmatpush1.bf16.msra.mxu0 0
        %1066 = vmatprep.subr.bf16.mxu0 0
        %1067 = vmatpush1.bf16.msra.mxu0 %v1050
        %1068 = vmatprep.subr.bf16.mxu0 0
        %1069 = vmatpush2.bf16.msra.mxu0 0
        %1070 = vmatprep.subr.bf16.mxu0 0
        %1071 = vmatpush2.bf16.msra.mxu0 0
        %1072 = vmatprep.subr.bf16.mxu0 0
        %1073 = vmatpush2.bf16.msra.mxu0 0
        %1074 = vmatprep.subr.bf16.mxu0 0
        %1075 = vmatpush2.bf16.msra.mxu0 0
        %1076 = vmatprep.subr.bf16.mxu0 0
        %1077 = vmatpush2.bf16.msra.mxu0 0
        %1078 = vmatprep.subr.bf16.mxu0 0
        %1079 = vmatpush2.bf16.msra.mxu0 0
        %1080 = vmatprep.subr.bf16.mxu0 0
        %1081 = vmatpush2.bf16.msra.mxu0 0
        %1082 = vmatprep.subr.bf16.mxu0 0
        %1083 = vmatpush2.bf16.msra.mxu0 0
        %1084 = vmatprep.mubr.bf16.mxu0 0
        %1085 = vmatmul.mubr.bf16.gmra.mxu0 %v1047
        %v1086 = vpop.f32.mrf.mxu0
        %v1087 = vadd.f32 0.0, %v1086
        %v1088 = vpop.f32.mrf.mxu0
        %v1089 = vpop.f32.mrf.mxu0
        %v1090 = vadd.f32 0.0, %v1089
        %v1091 = vpop.f32.mrf.mxu0
        %1092 = vdwg.mxu0
        %v1093 = vadd.f32 %v915, %v1087
        %v1094 = vadd.f32 %v918, %v1090
        %1095 = vrot.lane.b32.xlu0 %v574, 104
        %v1096 = vpop.permute.xlu0 %1095
        %1097 = vrot.lane.b32.xlu0 %v574, 72
        %v1098 = vpop.permute.xlu0 %1097
        %v1100 = vsel %vm578, %v1096, 0
        %v1103 = vsel %vm578, %v1098, 0
        %1105 = vmatprep.subr.bf16.mxu0 0
        %1106 = vmatpush1.bf16.xpose.msra.mxu0 0
        %1107 = vmatprep.subr.bf16.mxu0 0
        %1108 = vmatpush1.bf16.xpose.msra.mxu0 0
        %1109 = vmatprep.subr.bf16.mxu0 0
        %1110 = vmatpush1.bf16.xpose.msra.mxu0 0
        %1111 = vmatprep.subr.bf16.mxu0 0
        %1112 = vmatpush1.bf16.xpose.msra.mxu0 0
        %1113 = vmatprep.subr.bf16.mxu0 0
        %1114 = vmatpush1.bf16.xpose.msra.mxu0 0
        %1115 = vmatprep.subr.bf16.mxu0 0
        %1116 = vmatpush1.bf16.xpose.msra.mxu0 0
        %1117 = vmatprep.subr.bf16.mxu0 0
        %1118 = vmatpush1.bf16.xpose.msra.mxu0 0
        %1119 = vmatprep.subr.bf16.mxu0 0
        %1120 = vmatpush1.bf16.xpose.msra.mxu0 %v1103
        %1121 = vmatprep.subr.bf16.mxu0 0
        %1122 = vmatpush2.bf16.xpose.msra.mxu0 0
        %1123 = vmatprep.subr.bf16.mxu0 0
        %1124 = vmatpush2.bf16.xpose.msra.mxu0 0
        %1125 = vmatprep.subr.bf16.mxu0 0
        %1126 = vmatpush2.bf16.xpose.msra.mxu0 0
        %1127 = vmatprep.subr.bf16.mxu0 0
        %1128 = vmatpush2.bf16.xpose.msra.mxu0 0
        %1129 = vmatprep.subr.bf16.mxu0 0
        %1130 = vmatpush2.bf16.xpose.msra.mxu0 0
        %1131 = vmatprep.subr.bf16.mxu0 0
        %1132 = vmatpush2.bf16.xpose.msra.mxu0 0
        %1133 = vmatprep.subr.bf16.mxu0 0
        %1134 = vmatpush2.bf16.xpose.msra.mxu0 0
        %1135 = vmatprep.subr.bf16.mxu0 0
        %1136 = vmatpush2.bf16.xpose.msra.mxu0 0
        %1137 = vmatprep.mubr.bf16.mxu0 0
        %1138 = vmatmul.mubr.bf16.gmra.mxu0 %v1100
        %v1139 = vpop.f32.mrf.mxu0
        %v1140 = vadd.f32 0.0, %v1139
        %v1141 = vpop.f32.mrf.mxu0
        %v1142 = vpop.f32.mrf.mxu0
        %v1143 = vadd.f32 0.0, %v1142
        %v1144 = vpop.f32.mrf.mxu0
        %1145 = vdwg.mxu0
        %v1146 = vmul.f32 %v1140, 0.35355338
        %v1147 = vmul.f32 %v1143, 0.35355338
        %v1148 = vsel %vm628, %v1146, -inf
        %1149 = vmax.xlane.f32.xlu0 %v1148
        %v1150 = vpop.xlane.xlu0 %1149
        %v1151 = vsel %vm628, %v1147, -inf
        %1152 = vmax.xlane.f32.xlu0 %v1151
        %v1153 = vpop.xlane.xlu0 %1152
        %v1154 = vsub.f32 %v1146, %v1150
        %v1155 = vsub.f32 %v1147, %v1153
        %v1156 = vmul.f32 %v1154, 1.442695
        %v1157 = vpow.pop %v1156
        %v1158 = vmul.f32 %v1155, 1.442695
        %v1159 = vpow.pop %v1158
        %v1160 = vsel %vm628, %v1157, 0.0
        %1161 = vadd.xlane.f32.xlu0 %v1160
        %v1162 = vpop.xlane.xlu0 %1161
        %v1163 = vsel %vm628, %v1159, 0.0
        %1164 = vadd.xlane.f32.xlu0 %v1163
        %v1165 = vpop.xlane.xlu0 %1164
        %v1166 = vrcp.pop %v1162
        %v1167 = vrcp.pop %v1165
        %v1168 = vmul.f32 %v1157, %v1166
        %v1169 = vmul.f32 %v1159, %v1167
        %v1170 = vpack.c.bf16 %v1169, %v1168
        %1171 = vrot.lane.b32.xlu0 %v574, 40
        %v1172 = vpop.permute.xlu0 %1171
        %v1175 = vsel %vm628, %v1170, 0
        %1177 = vmatprep.subr.bf16.mxu0 0
        %1178 = vmatpush1.bf16.msra.mxu0 0
        %1179 = vmatprep.subr.bf16.mxu0 0
        %1180 = vmatpush1.bf16.msra.mxu0 0
        %1181 = vmatprep.subr.bf16.mxu0 0
        %1182 = vmatpush1.bf16.msra.mxu0 0
        %1183 = vmatprep.subr.bf16.mxu0 0
        %1184 = vmatpush1.bf16.msra.mxu0 0
        %1185 = vmatprep.subr.bf16.mxu0 0
        %1186 = vmatpush1.bf16.msra.mxu0 0
        %1187 = vmatprep.subr.bf16.mxu0 0
        %1188 = vmatpush1.bf16.msra.mxu0 0
        %1189 = vmatprep.subr.bf16.mxu0 0
        %1190 = vmatpush1.bf16.msra.mxu0 0
        %1191 = vmatprep.subr.bf16.mxu0 0
        %1192 = vmatpush1.bf16.msra.mxu0 %v1172
        %1193 = vmatprep.subr.bf16.mxu0 0
        %1194 = vmatpush2.bf16.msra.mxu0 0
        %1195 = vmatprep.subr.bf16.mxu0 0
        %1196 = vmatpush2.bf16.msra.mxu0 0
        %1197 = vmatprep.subr.bf16.mxu0 0
        %1198 = vmatpush2.bf16.msra.mxu0 0
        %1199 = vmatprep.subr.bf16.mxu0 0
        %1200 = vmatpush2.bf16.msra.mxu0 0
        %1201 = vmatprep.subr.bf16.mxu0 0
        %1202 = vmatpush2.bf16.msra.mxu0 0
        %1203 = vmatprep.subr.bf16.mxu0 0
        %1204 = vmatpush2.bf16.msra.mxu0 0
        %1205 = vmatprep.subr.bf16.mxu0 0
        %1206 = vmatpush2.bf16.msra.mxu0 0
        %1207 = vmatprep.subr.bf16.mxu0 0
        %1208 = vmatpush2.bf16.msra.mxu0 0
        %1209 = vmatprep.mubr.bf16.mxu0 0
        %1210 = vmatmul.mubr.bf16.gmra.mxu0 %v1175
        %v1211 = vpop.f32.mrf.mxu0
        %v1212 = vadd.f32 0.0, %v1211
        %v1213 = vpop.f32.mrf.mxu0
        %v1214 = vpop.f32.mrf.mxu0
        %v1215 = vadd.f32 0.0, %v1214
        %v1216 = vpop.f32.mrf.mxu0
        %1217 = vdwg.mxu0
        %v1218 = vpack.c.bf16 %v1215, %v1212
        %v1219 = vld [vmem:[%s3 + $0xc] sm:$0xf]
        %v1221 = vsel %vm578, %v1218, 0
        %v1224 = vsel %vm829, %v1219, 0
        %1226 = vmatprep.subr.bf16.mxu0 0
        %1227 = vmatpush1.bf16.msra.mxu0 0
        %1228 = vmatprep.subr.bf16.mxu0 0
        %1229 = vmatpush1.bf16.msra.mxu0 0
        %1230 = vmatprep.subr.bf16.mxu0 0
        %1231 = vmatpush1.bf16.msra.mxu0 0
        %1232 = vmatprep.subr.bf16.mxu0 0
        %1233 = vmatpush1.bf16.msra.mxu0 0
        %1234 = vmatprep.subr.bf16.mxu0 0
        %1235 = vmatpush1.bf16.msra.mxu0 0
        %1236 = vmatprep.subr.bf16.mxu0 0
        %1237 = vmatpush1.bf16.msra.mxu0 0
        %1238 = vmatprep.subr.bf16.mxu0 0
        %1239 = vmatpush1.bf16.msra.mxu0 0
        %1240 = vmatprep.subr.bf16.mxu0 0
        %1241 = vmatpush1.bf16.msra.mxu0 %v1224
        %1242 = vmatprep.subr.bf16.mxu0 0
        %1243 = vmatpush2.bf16.msra.mxu0 0
        %1244 = vmatprep.subr.bf16.mxu0 0
        %1245 = vmatpush2.bf16.msra.mxu0 0
        %1246 = vmatprep.subr.bf16.mxu0 0
        %1247 = vmatpush2.bf16.msra.mxu0 0
        %1248 = vmatprep.subr.bf16.mxu0 0
        %1249 = vmatpush2.bf16.msra.mxu0 0
        %1250 = vmatprep.subr.bf16.mxu0 0
        %1251 = vmatpush2.bf16.msra.mxu0 0
        %1252 = vmatprep.subr.bf16.mxu0 0
        %1253 = vmatpush2.bf16.msra.mxu0 0
        %1254 = vmatprep.subr.bf16.mxu0 0
        %1255 = vmatpush2.bf16.msra.mxu0 0
        %1256 = vmatprep.subr.bf16.mxu0 0
        %1257 = vmatpush2.bf16.msra.mxu0 0
        %1258 = vmatprep.mubr.bf16.mxu0 0
        %1259 = vmatmul.mubr.bf16.gmra.mxu0 %v1221
        %v1260 = vpop.f32.mrf.mxu0
        %v1261 = vadd.f32 0.0, %v1260
        %v1262 = vpop.f32.mrf.mxu0
        %v1263 = vpop.f32.mrf.mxu0
        %v1264 = vadd.f32 0.0, %v1263
        %v1265 = vpop.f32.mrf.mxu0
        %1266 = vdwg.mxu0
        %v1267 = vadd.f32 %v1093, %v1261
        %v1268 = vadd.f32 %v1094, %v1264
        %v1269 = vld [vmem:[%s4] sm:$0x1]
        %v1271 = vlaneseq
        %v1272 = vshrl.u32 %v1271, 7
        %v1273 = vsub.s32 0, %v1272
        %v1274 = vrot.slane %v1269, %v1273
        %v1276 = vadd.f32 %v1267, %v1274
        %v1277 = vadd.f32 %v1268, %v1274
        %v1278 = vadd.f32 %v499, %v1276
        %v1279 = vadd.f32 %v500, %v1277
        %v1280 = vsel %vm529, %v1278, 0.0
        %1281 = vadd.xlane.f32.xlu0 %v1280
        %v1282 = vpop.xlane.xlu0 %1281
        %v1283 = vsel %vm529, %v1279, 0.0
        %1284 = vadd.xlane.f32.xlu0 %v1283
        %v1285 = vpop.xlane.xlu0 %1284
        %v1286 = vrcp.pop 32.0
        %v1287 = vmul.f32 %v1282, %v1286
        %v1288 = vmul.f32 %v1285, %v1286
        %v1289 = vsub.f32 %v1278, %v1287
        %v1290 = vsub.f32 %v1279, %v1288
        %v1291 = vmul.f32 %v1289, %v1289
        %v1292 = vmul.f32 %v1290, %v1290
        %v1293 = vsel %vm529, %v1291, 0.0
        %1294 = vadd.xlane.f32.xlu0 %v1293
        %v1295 = vpop.xlane.xlu0 %1294
        %v1296 = vsel %vm529, %v1292, 0.0
        %1297 = vadd.xlane.f32.xlu0 %v1296
        %v1298 = vpop.xlane.xlu0 %1297
        %v1299 = vmul.f32 %v1295, %v1286
        %v1300 = vmul.f32 %v1298, %v1286
        %v1301 = vadd.f32 %v1299, 1e-05
        %v1302 = vadd.f32 %v1300, 1e-05
        %v1303 = vrsqrt.pop %v1301
        %v1304 = vrsqrt.pop %v1302
        %v1305 = vmul.f32 %v1289, %v1303
        %v1306 = vmul.f32 %v1290, %v1304
        %v1307 = vld [vmem:[%s5] sm:$0x1]
        %v1309 = vlaneseq
        %v1310 = vshrl.u32 %v1309, 7
        %v1311 = vsub.s32 0, %v1310
        %v1312 = vrot.slane %v1307, %v1311
        %v1314 = vmul.f32 %v1305, %v1312
        %v1315 = vmul.f32 %v1306, %v1312
        %v1316 = vld [vmem:[%s6] sm:$0x1]
        %v1318 = vlaneseq
        %v1319 = vshrl.u32 %v1318, 7
        %v1320 = vsub.s32 0, %v1319
        %v1321 = vrot.slane %v1316, %v1320
        %v1323 = vadd.f32 %v1314, %v1321
        %v1324 = vadd.f32 %v1315, %v1321
        %v1325 = vpack.c.bf16 %v1324, %v1323
        %v1326 = vld [vmem:[%s7] sm:$0xf]
        %v1327 = vld [vmem:[%s7 + $0x4] sm:$0xf]
        %v1328 = vld [vmem:[%s7 + $0x8] sm:$0xf]
        %v1329 = vld [vmem:[%s7 + $0xc] sm:$0xf]
        %v1330 = vld [vmem:[%s8] sm:$0x1]
        %v1332 = vlaneseq
        %v1333 = vshrl.u32 %v1332, 7
        %v1334 = vsub.s32 0, %v1333
        %v1335 = vrot.slane %v1330, %v1334
        %v1341 = vunpack.c.l.b16 %v1326
        %v1342 = vunpack.c.l.b16 %v1327
        %v1343 = vunpack.c.l.b16 %v1328
        %v1344 = vunpack.c.l.b16 %v1329
        %v1345 = vpack.c.b16 %v1342, %v1341
        %v1346 = vpack.c.b16 %v1344, %v1343
        %v1350 = vsel %vm529, %v1325, 0
        %1352 = vmatprep.subr.bf16.mxu0 0
        %1353 = vmatpush1.bf16.msra.mxu0 0
        %1354 = vmatprep.subr.bf16.mxu0 0
        %1355 = vmatpush1.bf16.msra.mxu0 0
        %1356 = vmatprep.subr.bf16.mxu0 0
        %1357 = vmatpush1.bf16.msra.mxu0 0
        %1358 = vmatprep.subr.bf16.mxu0 0
        %1359 = vmatpush1.bf16.msra.mxu0 0
        %1360 = vmatprep.subr.bf16.mxu0 0
        %1361 = vmatpush1.bf16.msra.mxu0 0
        %1362 = vmatprep.subr.bf16.mxu0 0
        %1363 = vmatpush1.bf16.msra.mxu0 0
        %1364 = vmatprep.subr.bf16.mxu0 0
        %1365 = vmatpush1.bf16.msra.mxu0 %v1346
        %1366 = vmatprep.subr.bf16.mxu0 0
        %1367 = vmatpush1.bf16.msra.mxu0 %v1345
        %1368 = vmatprep.subr.bf16.mxu0 0
        %1369 = vmatpush2.bf16.msra.mxu0 0
        %1370 = vmatprep.subr.bf16.mxu0 0
        %1371 = vmatpush2.bf16.msra.mxu0 0
        %1372 = vmatprep.subr.bf16.mxu0 0
        %1373 = vmatpush2.bf16.msra.mxu0 0
        %1374 = vmatprep.subr.bf16.mxu0 0
        %1375 = vmatpush2.bf16.msra.mxu0 0
        %1376 = vmatprep.subr.bf16.mxu0 0
        %1377 = vmatpush2.bf16.msra.mxu0 0
        %1378 = vmatprep.subr.bf16.mxu0 0
        %1379 = vmatpush2.bf16.msra.mxu0 0
        %1380 = vmatprep.subr.bf16.mxu0 0
        %1381 = vmatpush2.bf16.msra.mxu0 0
        %1382 = vmatprep.subr.bf16.mxu0 0
        %1383 = vmatpush2.bf16.msra.mxu0 0
        %1384 = vmatprep.mubr.bf16.mxu0 0
        %1385 = vmatmul.mubr.bf16.gmra.mxu0 %v1350
        %v1386 = vpop.f32.mrf.mxu0
        %v1387 = vadd.f32 %v1335, %v1386
        %v1388 = vpop.f32.mrf.mxu0
        %v1389 = vpop.f32.mrf.mxu0
        %v1390 = vadd.f32 %v1335, %v1389
        %v1391 = vpop.f32.mrf.mxu0
        %1392 = vdwg.mxu0
        %v1393 = vmax.f32 %v1387, 0.0
        %v1394 = vmax.f32 %v1390, 0.0
        %v1395 = vpack.c.bf16 %v1394, %v1393
        %v1396 = vld [vmem:[%s9] sm:$0xf]
        %v1397 = vld [vmem:[%s9 + $0x4] sm:$0xf]
        %v1398 = vld [vmem:[%s9 + $0x8] sm:$0xf]
        %v1399 = vld [vmem:[%s9 + $0xc] sm:$0xf]
        %v1400 = vld [vmem:[%s9 + $0x10] sm:$0xf]
        %v1401 = vld [vmem:[%s9 + $0x14] sm:$0xf]
        %v1402 = vld [vmem:[%s9 + $0x18] sm:$0xf]
        %v1403 = vld [vmem:[%s9 + $0x1c] sm:$0xf]
        %v1404 = vld [vmem:[%s10] sm:$0x1]
        %v1406 = vlaneseq
        %v1407 = vshrl.u32 %v1406, 7
        %v1408 = vsub.s32 0, %v1407
        %v1409 = vrot.slane %v1404, %v1408
        %v1419 = vunpack.c.l.b16 %v1396
        %v1420 = vunpack.c.l.b16 %v1397
        %v1421 = vunpack.c.l.b16 %v1398
        %v1422 = vunpack.c.l.b16 %v1399
        %v1423 = vunpack.c.l.b16 %v1400
        %v1424 = vunpack.c.l.b16 %v1401
        %v1425 = vunpack.c.l.b16 %v1402
        %v1426 = vunpack.c.l.b16 %v1403
        %v1427 = vpack.c.b16 %v1420, %v1419
        %v1428 = vpack.c.b16 %v1422, %v1421
        %v1429 = vpack.c.b16 %v1424, %v1423
        %v1430 = vpack.c.b16 %v1426, %v1425
        %vm1435 = vcmask 523264
        %v1437 = vsel %vm1435, %v1395, 0
        %1439 = vmatprep.subr.bf16.mxu0 0
        %1440 = vmatpush1.bf16.msra.mxu0 0
        %1441 = vmatprep.subr.bf16.mxu0 0
        %1442 = vmatpush1.bf16.msra.mxu0 0
        %1443 = vmatprep.subr.bf16.mxu0 0
        %1444 = vmatpush1.bf16.msra.mxu0 0
        %1445 = vmatprep.subr.bf16.mxu0 0
        %1446 = vmatpush1.bf16.msra.mxu0 0
        %1447 = vmatprep.subr.bf16.mxu0 0
        %1448 = vmatpush1.bf16.msra.mxu0 %v1430
        %1449 = vmatprep.subr.bf16.mxu0 0
        %1450 = vmatpush1.bf16.msra.mxu0 %v1429
        %1451 = vmatprep.subr.bf16.mxu0 0
        %1452 = vmatpush1.bf16.msra.mxu0 %v1428
        %1453 = vmatprep.subr.bf16.mxu0 0
        %1454 = vmatpush1.bf16.msra.mxu0 %v1427
        %1455 = vmatprep.subr.bf16.mxu0 0
        %1456 = vmatpush2.bf16.msra.mxu0 0
        %1457 = vmatprep.subr.bf16.mxu0 0
        %1458 = vmatpush2.bf16.msra.mxu0 0
        %1459 = vmatprep.subr.bf16.mxu0 0
        %1460 = vmatpush2.bf16.msra.mxu0 0
        %1461 = vmatprep.subr.bf16.mxu0 0
        %1462 = vmatpush2.bf16.msra.mxu0 0
        %1463 = vmatprep.subr.bf16.mxu0 0
        %1464 = vmatpush2.bf16.msra.mxu0 0
        %1465 = vmatprep.subr.bf16.mxu0 0
        %1466 = vmatpush2.bf16.msra.mxu0 0
        %1467 = vmatprep.subr.bf16.mxu0 0
        %1468 = vmatpush2.bf16.msra.mxu0 0
        %1469 = vmatprep.subr.bf16.mxu0 0
        %1470 = vmatpush2.bf16.msra.mxu0 0
        %1471 = vmatprep.mubr.bf16.mxu0 0
        %1472 = vmatmul.mubr.bf16.gmra.mxu0 %v1437
        %v1473 = vpop.f32.mrf.mxu0
        %v1474 = vadd.f32 %v1409, %v1473
        %v1475 = vpop.f32.mrf.mxu0
        %v1476 = vpop.f32.mrf.mxu0
        %v1477 = vadd.f32 %v1409, %v1476
        %v1478 = vpop.f32.mrf.mxu0
        %1479 = vdwg.mxu0
        %v1480 = vadd.f32 %v1323, %v1474
        %v1481 = vadd.f32 %v1324, %v1477
        %v1482 = vsel %vm529, %v1480, 0.0
        %1483 = vadd.xlane.f32.xlu0 %v1482
        %v1484 = vpop.xlane.xlu0 %1483
        %v1485 = vsel %vm529, %v1481, 0.0
        %1486 = vadd.xlane.f32.xlu0 %v1485
        %v1487 = vpop.xlane.xlu0 %1486
        %v1488 = vmul.f32 %v1484, %v1286
        %v1489 = vmul.f32 %v1487, %v1286
        %v1490 = vsub.f32 %v1480, %v1488
        %v1491 = vsub.f32 %v1481, %v1489
        %v1492 = vmul.f32 %v1490, %v1490
        %v1493 = vmul.f32 %v1491, %v1491
        %v1494 = vsel %vm529, %v1492, 0.0
        %1495 = vadd.xlane.f32.xlu0 %v1494
        %v1496 = vpop.xlane.xlu0 %1495
        %v1497 = vsel %vm529, %v1493, 0.0
        %1498 = vadd.xlane.f32.xlu0 %v1497
        %v1499 = vpop.xlane.xlu0 %1498
        %v1500 = vmul.f32 %v1496, %v1286
        %v1501 = vmul.f32 %v1499, %v1286
        %v1502 = vadd.f32 %v1500, 1e-05
        %v1503 = vadd.f32 %v1501, 1e-05
        %v1504 = vrsqrt.pop %v1502
        %v1505 = vrsqrt.pop %v1503
        %v1506 = vmul.f32 %v1490, %v1504
        %v1507 = vmul.f32 %v1491, %v1505
        %v1508 = vld [vmem:[%s11] sm:$0x1]
        %v1510 = vlaneseq
        %v1511 = vshrl.u32 %v1510, 7
        %v1512 = vsub.s32 0, %v1511
        %v1513 = vrot.slane %v1508, %v1512
        %v1515 = vmul.f32 %v1506, %v1513
        %v1516 = vmul.f32 %v1507, %v1513
        %v1517 = vld [vmem:[%s12] sm:$0x1]
        %v1519 = vlaneseq
        %v1520 = vshrl.u32 %v1519, 7
        %v1521 = vsub.s32 0, %v1520
        %v1522 = vrot.slane %v1517, %v1521
        %v1524 = vadd.f32 %v1515, %v1522
        %v1525 = vadd.f32 %v1516, %v1522
        %v1526 = vpack.c.bf16 %v1525, %v1524
        %v1527 = vld [vmem:[%s13] sm:$0xf]
        %v1528 = vld [vmem:[%s13 + $0x4] sm:$0xf]
        %v1529 = vld [vmem:[%s13 + $0x8] sm:$0xf]
        %v1530 = vld [vmem:[%s13 + $0xc] sm:$0xf]
        %v1531 = vld [vmem:[%s14] sm:$0x1]
        %v1533 = vlaneseq
        %v1534 = vshrl.u32 %v1533, 7
        %v1535 = vsub.s32 0, %v1534
        %v1536 = vrot.slane %v1531, %v1535
        %v1542 = vunpack.c.l.b16 %v1527
        %v1543 = vunpack.c.l.b16 %v1528
        %v1544 = vunpack.c.l.b16 %v1529
        %v1545 = vunpack.c.l.b16 %v1530
        %v1546 = vpack.c.b16 %v1543, %v1542
        %v1547 = vpack.c.b16 %v1545, %v1544
        %v1551 = vsel %vm529, %v1526, 0
        %1553 = vmatprep.subr.bf16.mxu0 0
        %1554 = vmatpush1.bf16.msra.mxu0 0
        %1555 = vmatprep.subr.bf16.mxu0 0
        %1556 = vmatpush1.bf16.msra.mxu0 0
        %1557 = vmatprep.subr.bf16.mxu0 0
        %1558 = vmatpush1.bf16.msra.mxu0 0
        %1559 = vmatprep.subr.bf16.mxu0 0
        %1560 = vmatpush1.bf16.msra.mxu0 0
        %1561 = vmatprep.subr.bf16.mxu0 0
        %1562 = vmatpush1.bf16.msra.mxu0 0
        %1563 = vmatprep.subr.bf16.mxu0 0
        %1564 = vmatpush1.bf16.msra.mxu0 0
        %1565 = vmatprep.subr.bf16.mxu0 0
        %1566 = vmatpush1.bf16.msra.mxu0 %v1547
        %1567 = vmatprep.subr.bf16.mxu0 0
        %1568 = vmatpush1.bf16.msra.mxu0 %v1546
        %1569 = vmatprep.subr.bf16.mxu0 0
        %1570 = vmatpush2.bf16.msra.mxu0 0
        %1571 = vmatprep.subr.bf16.mxu0 0
        %1572 = vmatpush2.bf16.msra.mxu0 0
        %1573 = vmatprep.subr.bf16.mxu0 0
        %1574 = vmatpush2.bf16.msra.mxu0 0
        %1575 = vmatprep.subr.bf16.mxu0 0
        %1576 = vmatpush2.bf16.msra.mxu0 0
        %1577 = vmatprep.subr.bf16.mxu0 0
        %1578 = vmatpush2.bf16.msra.mxu0 0
        %1579 = vmatprep.subr.bf16.mxu0 0
        %1580 = vmatpush2.bf16.msra.mxu0 0
        %1581 = vmatprep.subr.bf16.mxu0 0
        %1582 = vmatpush2.bf16.msra.mxu0 0
        %1583 = vmatprep.subr.bf16.mxu0 0
        %1584 = vmatpush2.bf16.msra.mxu0 0
        %1585 = vmatprep.mubr.bf16.mxu0 0
        %1586 = vmatmul.mubr.bf16.gmra.mxu0 %v1551
        %v1587 = vpop.f32.mrf.mxu0
        %v1588 = vadd.f32 %v1536, %v1587
        %v1589 = vpop.f32.mrf.mxu0
        %v1590 = vpop.f32.mrf.mxu0
        %v1591 = vadd.f32 %v1536, %v1590
        %v1592 = vpop.f32.mrf.mxu0
        %1593 = vdwg.mxu0
        %1594 = vst [vmem:[%s488] sm:$0xff] %v1588
        %1595 = vst [vmem:[%s488 + $0x8] sm:$0xff] %v1591
        %s1596 = sand.u32 %s357, 1
        %s1597 = scalar_lea.sflag [#allocation3], %s1596
        %s1598 = sand.u32 %s357, 1
        %s1599 = smul.addr %s1598, 16
        %s1600 = scalar_lea.vmem [#allocation2], %s1599
        // Predicated region
        $region81: #{transformer_ocr_forward.9} parent=79 // pred_check
          %p1601 = pneg %p367
        $region82: #{transformer_ocr_forward.9} parent=79 // pred_check_branch
          %1603 = sbr.rel (%p1601) target = $region84
        $region83: #{transformer_ocr_forward.9} parent=79 // pred_region
          %s1604 = smul.u32 2, %s29
          %s1606 = ssub.s32 256, 256
          %1607 = vsyncadd %s1597, %s1606
          %s1608 = smul.addr %s1604, 128
          %s1609 = scalar_lea.hbm %s15, %s1608
          %s1610 = sshll.u32 %s1600, 4
          %s1611 = int_to_ptr.vmem [resolvable:$true] %s1610
          %1616 = dma.vmem_to_hbm [thread:$0]  %s1611, 256, %s1609, %s1597, 128, 128, 8
        $region84: #{transformer_ocr_forward.9} parent=79 // pred_fallthru
          _
      $region80: #{transformer_ocr_forward.9} parent=5 // pred_fallthru
        _
      %p1617 = scmp.le.s32.totalorder 2, %s24
      // Predicated region
      $region85: #{transformer_ocr_forward.9} parent=5 // pred_check
        %p1618 = pneg %p1617
      $region86: #{transformer_ocr_forward.9} parent=5 // pred_check_branch
        %1620 = sbr.rel (%p1618) target = $region88
      $region87: #{transformer_ocr_forward.9} parent=5 // pred_region
        %s1621 = ssub.s32 %s24, 2
        // Predicated region
        $region89: #{transformer_ocr_forward.9} parent=87 // pred_check
          %p1622 = pneg %p373
        $region90: #{transformer_ocr_forward.9} parent=87 // pred_check_branch
          %1624 = sbr.rel (%p1622) target = $region92
        $region91: #{transformer_ocr_forward.9} parent=87 // pred_region
          %s1625 = sand.u32 %s358, 1
          %s1626 = scalar_lea.sflag [#allocation3], %s1625
          %s1627 = sand.u32 %s358, 1
          %s1628 = smul.addr %s1627, 16
          %s1629 = scalar_lea.vmem [#allocation2], %s1628
          %1630 = dma.done %s1626, 256
        $region92: #{transformer_ocr_forward.9} parent=87 // pred_fallthru
          _
      $region88: #{transformer_ocr_forward.9} parent=5 // pred_fallthru
        _
    $region6: #{transformer_ocr_forward.9} parent=1 // loop_footer
      %s28 = sadd.s32 1, %s24
    $region7: #{transformer_ocr_forward.9} parent=1 // loop_footer_branch
      %23 = sbr.rel target = $region3
    $region8: #{transformer_ocr_forward.9} parent=1 // loop_exit
      _
    %1631 = vsyncpa [#allocation3], 1
    %s1632 = scalar_lea.sflag [#allocation3], 1
    %1633 = vsyncpa %s1632, 1

</llo_original>
